<compile_context>
chip_gen: v7x
topology: tpu7x:2x2x1
jax: 0.10.0
libtpu: 0.0.40
codegen_flags: <defaults>
</compile_context>

<pallas_src>
import jax
import jax.numpy as jnp
from jax.experimental import pallas as pl
from jax.experimental.pallas import tpu as pltpu


def _fused_kernel(p1_ref, p2_ref, c_ref,
                  wp1_ref, wp2_ref, wc_ref,
                  bp1_ref, bp2_ref, bc_ref,
                  out_ref):
    """Refs: activations (TM, F) streamed, weights (F, F) / biases (1, F) resident,
    output (TM, 1)."""
    prec = jax.lax.Precision.HIGHEST  # pin full-f32 MXU accumulation

    p1_lin = jnp.dot(p1_ref[...], wp1_ref[...],
                     preferred_element_type=jnp.float32,
                     precision=prec) + bp1_ref[...]
    p2_lin = jnp.dot(p2_ref[...], wp2_ref[...],
                     preferred_element_type=jnp.float32,
                     precision=prec) + bp2_ref[...]
    c_lin = jnp.dot(c_ref[...], wc_ref[...],
                    preferred_element_type=jnp.float32,
                    precision=prec) + bc_ref[...]

    p1d = jnp.clip(p1_lin, -1.0, 1.0)     # Hardtanh  (VPU)
    p2d = jnp.clip(p2_lin, -1.0, 1.0)     # Hardtanh  (VPU)
    cd = jax.nn.sigmoid(c_lin)            # Sigmoid   (EUP)

    y = jnp.sum(p1d * p2d * cd, axis=1, keepdims=True)   # (TM, 1)
    out_ref[...] = jax.nn.sigmoid(y)


def simple_text_model_forward(p1, p2, c, params, *, tm=2048):
    """params: dict with wp1, bp1, wp2, bp2, wc, bc (weights stored [F_in, F_out])."""
    n, f = p1.shape

    # Row tile: one full block if the batch fits (grid of 1, zero pipeline
    # overhead); otherwise a multiple of 8 rows (sublane rule).  Pallas masks
    # the ragged final block, and the math is purely row-wise, so no padding of
    # the inputs is ever needed.
    if n <= tm:
        tm = n
    else:
        tm = max(8, (tm // 8) * 8)
    grid_n = pl.cdiv(n, tm)

    act_spec = pl.BlockSpec((tm, f), lambda i: (i, 0))   # streamed per grid step
    w_spec = pl.BlockSpec((f, f), lambda i: (0, 0))      # VMEM-resident
    b_spec = pl.BlockSpec((1, f), lambda i: (0, 0))      # VMEM-resident

    return pl.pallas_call(
        _fused_kernel,
        out_shape=jax.ShapeDtypeStruct((n, 1), jnp.float32),
        grid=(grid_n,),
        in_specs=[act_spec, act_spec, act_spec,
                  w_spec, w_spec, w_spec,
                  b_spec, b_spec, b_spec],
        out_specs=pl.BlockSpec((tm, 1), lambda i: (i, 0)),
        compiler_params=pltpu.CompilerParams(
            # Row blocks are fully independent -> shard across TensorCores on
            # multi-TC parts (v7x); near-neutral on single-TC v5e/v6e.
            dimension_semantics=("parallel",),
        ),
    )(p1, p2, c,
      params["wp1"], params["wp2"], params["wc"],
      params["bp1"], params["bp2"], params["bc"])


def init_params(key, n_features):
    """Deterministic PyTorch-Linear-style init (uniform +/- 1/sqrt(fan_in))."""
    bound = 1.0 / jnp.sqrt(jnp.float32(n_features))
    keys = jax.random.split(key, 6)

    def u(k, shape):
        return jax.random.uniform(k, shape, jnp.float32, minval=-bound, maxval=bound)

    return {
        # stored pre-transposed: [F_in, F_out]  (so forward is x @ W + b)
        "wp1": u(keys[0], (n_features, n_features)),
        "bp1": u(keys[1], (1, n_features)),
        "wp2": u(keys[2], (n_features, n_features)),
        "bp2": u(keys[3], (1, n_features)),
        "wc":  u(keys[4], (n_features, n_features)),
        "bc":  u(keys[5], (1, n_features)),
    }


def reference_forward(p1, p2, c, params):
    """Pure-JAX reference matching the original PyTorch math (f32 throughout)."""
    prec = jax.lax.Precision.HIGHEST
    p1d = jnp.clip(jnp.dot(p1, params["wp1"], precision=prec) + params["bp1"], -1.0, 1.0)
    p2d = jnp.clip(jnp.dot(p2, params["wp2"], precision=prec) + params["bp2"], -1.0, 1.0)
    cd = jax.nn.sigmoid(jnp.dot(c, params["wc"], precision=prec) + params["bc"])
    y = jnp.sum(p1d * p2d * cd, axis=1, keepdims=True)
    return jax.nn.sigmoid(y)


if __name__ == "__main__":
    key = jax.random.PRNGKey(0)
    N, F = 256, 32  # batch of text examples, 32 features each

    k_p1, k_p2, k_c, k_params = jax.random.split(key, 4)
    p1 = jax.random.normal(k_p1, (N, F), jnp.float32)
    p2 = jax.random.normal(k_p2, (N, F), jnp.float32)
    c = jax.random.normal(k_c, (N, F), jnp.float32)
    params = init_params(k_params, F)

    ref = reference_forward(p1, p2, c, params)

    # Default tile -> single grid step at this batch size (no pipeline overhead).
    out = simple_text_model_forward(p1, p2, c, params)
    out = jax.block_until_ready(out)
    assert out.shape == (N, 1)
    assert jnp.allclose(out, ref, atol=1e-5, rtol=1e-5)

    # Also exercise the row-tiled streaming path (4 grid steps, resident weights).
    out_tiled = simple_text_model_forward(p1, p2, c, params, tm=64)
    out_tiled = jax.block_until_ready(out_tiled)
    assert jnp.allclose(out_tiled, ref, atol=1e-5, rtol=1e-5)

    print("KERNEL_OK")
</pallas_src>

<mosaic_0001>
module attributes {stable_mosaic.version = 11 : i64} {
  func.func @_fused_kernel(%arg0: i32, %arg1: memref<256x32xf32, #tpu.memory_space<vmem>>, %arg2: memref<256x32xf32, #tpu.memory_space<vmem>>, %arg3: memref<256x32xf32, #tpu.memory_space<vmem>>, %arg4: memref<32x32xf32, #tpu.memory_space<vmem>>, %arg5: memref<32x32xf32, #tpu.memory_space<vmem>>, %arg6: memref<32x32xf32, #tpu.memory_space<vmem>>, %arg7: memref<1x32xf32, #tpu.memory_space<vmem>>, %arg8: memref<1x32xf32, #tpu.memory_space<vmem>>, %arg9: memref<1x32xf32, #tpu.memory_space<vmem>>, %arg10: memref<256x1xf32, #tpu.memory_space<vmem>>) attributes {dimension_semantics = [#tpu.dimension_semantics<parallel>], iteration_bounds = array<i64: 1>, scalar_prefetch = 0 : i64, scratch_operands = 0 : i64, tpu.core_type = #tpu.core_type<tc>, window_params = [{transform_indices = @transform_0, window_bounds = array<i64: 256, 32>}, {transform_indices = @transform_1, window_bounds = array<i64: 256, 32>}, {transform_indices = @transform_2, window_bounds = array<i64: 256, 32>}, {pipeline_mode = #tpu.pipeline_mode<synchronous>, transform_indices = @transform_3, window_bounds = array<i64: 32, 32>}, {pipeline_mode = #tpu.pipeline_mode<synchronous>, transform_indices = @transform_4, window_bounds = array<i64: 32, 32>}, {pipeline_mode = #tpu.pipeline_mode<synchronous>, transform_indices = @transform_5, window_bounds = array<i64: 32, 32>}, {pipeline_mode = #tpu.pipeline_mode<synchronous>, transform_indices = @transform_6, window_bounds = array<i64: 1, 32>}, {pipeline_mode = #tpu.pipeline_mode<synchronous>, transform_indices = @transform_7, window_bounds = array<i64: 1, 32>}, {pipeline_mode = #tpu.pipeline_mode<synchronous>, transform_indices = @transform_8, window_bounds = array<i64: 1, 32>}, {transform_indices = @transform_9, window_bounds = array<i64: 256, 1>}]} {
    %c0 = arith.constant 0 : index
    %c0_0 = arith.constant 0 : index
    %0 = vector.load %arg1[%c0, %c0_0] : memref<256x32xf32, #tpu.memory_space<vmem>>, vector<256x32xf32>
    %c0_1 = arith.constant 0 : index
    %c0_2 = arith.constant 0 : index
    %1 = vector.load %arg4[%c0_1, %c0_2] : memref<32x32xf32, #tpu.memory_space<vmem>>, vector<32x32xf32>
    %cst = arith.constant dense<0.000000e+00> : vector<256x32xf32>
    %2 = tpu.matmul %0, %1, %cst {dimension_numbers = #tpu.dot_dimension_numbers<[1], [0], [0], [1], [0, 0, 1, 1], [], []>, precision = #tpu.contract_precision<fp32>} : vector<256x32xf32>, vector<32x32xf32>, vector<256x32xf32> -> vector<256x32xf32>
    %c0_3 = arith.constant 0 : index
    %c0_4 = arith.constant 0 : index
    %3 = vector.load %arg7[%c0_3, %c0_4] : memref<1x32xf32, #tpu.memory_space<vmem>>, vector<1x32xf32>
    %4 = vector.broadcast %3 : vector<1x32xf32> to vector<256x32xf32>
    %5 = arith.addf %2, %4 : vector<256x32xf32>
    %c0_5 = arith.constant 0 : index
    %c0_6 = arith.constant 0 : index
    %6 = vector.load %arg2[%c0_5, %c0_6] : memref<256x32xf32, #tpu.memory_space<vmem>>, vector<256x32xf32>
    %c0_7 = arith.constant 0 : index
    %c0_8 = arith.constant 0 : index
    %7 = vector.load %arg5[%c0_7, %c0_8] : memref<32x32xf32, #tpu.memory_space<vmem>>, vector<32x32xf32>
    %cst_9 = arith.constant dense<0.000000e+00> : vector<256x32xf32>
    %8 = tpu.matmul %6, %7, %cst_9 {dimension_numbers = #tpu.dot_dimension_numbers<[1], [0], [0], [1], [0, 0, 1, 1], [], []>, precision = #tpu.contract_precision<fp32>} : vector<256x32xf32>, vector<32x32xf32>, vector<256x32xf32> -> vector<256x32xf32>
    %c0_10 = arith.constant 0 : index
    %c0_11 = arith.constant 0 : index
    %9 = vector.load %arg8[%c0_10, %c0_11] : memref<1x32xf32, #tpu.memory_space<vmem>>, vector<1x32xf32>
    %10 = vector.broadcast %9 : vector<1x32xf32> to vector<256x32xf32>
    %11 = arith.addf %8, %10 : vector<256x32xf32>
    %c0_12 = arith.constant 0 : index
    %c0_13 = arith.constant 0 : index
    %12 = vector.load %arg3[%c0_12, %c0_13] : memref<256x32xf32, #tpu.memory_space<vmem>>, vector<256x32xf32>
    %c0_14 = arith.constant 0 : index
    %c0_15 = arith.constant 0 : index
    %13 = vector.load %arg6[%c0_14, %c0_15] : memref<32x32xf32, #tpu.memory_space<vmem>>, vector<32x32xf32>
    %cst_16 = arith.constant dense<0.000000e+00> : vector<256x32xf32>
    %14 = tpu.matmul %12, %13, %cst_16 {dimension_numbers = #tpu.dot_dimension_numbers<[1], [0], [0], [1], [0, 0, 1, 1], [], []>, precision = #tpu.contract_precision<fp32>} : vector<256x32xf32>, vector<32x32xf32>, vector<256x32xf32> -> vector<256x32xf32>
    %c0_17 = arith.constant 0 : index
    %c0_18 = arith.constant 0 : index
    %15 = vector.load %arg9[%c0_17, %c0_18] : memref<1x32xf32, #tpu.memory_space<vmem>>, vector<1x32xf32>
    %16 = vector.broadcast %15 : vector<1x32xf32> to vector<256x32xf32>
    %17 = arith.addf %14, %16 : vector<256x32xf32>
    %cst_19 = arith.constant -1.000000e+00 : f32
    %cst_20 = arith.constant 1.000000e+00 : f32
    %18 = vector.broadcast %cst_19 : f32 to vector<256x32xf32>
    %19 = arith.maximumf %18, %5 : vector<256x32xf32>
    %20 = vector.broadcast %cst_20 : f32 to vector<256x32xf32>
    %21 = arith.minimumf %20, %19 : vector<256x32xf32>
    %cst_21 = arith.constant -1.000000e+00 : f32
    %cst_22 = arith.constant 1.000000e+00 : f32
    %22 = vector.broadcast %cst_21 : f32 to vector<256x32xf32>
    %23 = arith.maximumf %22, %11 : vector<256x32xf32>
    %24 = vector.broadcast %cst_22 : f32 to vector<256x32xf32>
    %25 = arith.minimumf %24, %23 : vector<256x32xf32>
    %26 = arith.negf %17 : vector<256x32xf32>
    %27 = math.exp %26 : vector<256x32xf32>
    %cst_23 = arith.constant 1.000000e+00 : f32
    %28 = vector.broadcast %cst_23 : f32 to vector<256x32xf32>
    %29 = arith.addf %28, %27 : vector<256x32xf32>
    %30 = arith.divf %28, %29 : vector<256x32xf32>
    %31 = arith.mulf %21, %25 : vector<256x32xf32>
    %32 = arith.mulf %31, %30 : vector<256x32xf32>
    %cst_24 = arith.constant dense<0.000000e+00> : vector<256xf32>
    %33 = vector.multi_reduction <add>, %32, %cst_24 [1] : vector<256x32xf32> to vector<256xf32>
    %34 = vector.shape_cast %33 : vector<256xf32> to vector<256x1xf32>
    %35 = arith.negf %34 : vector<256x1xf32>
    %36 = math.exp %35 : vector<256x1xf32>
    %cst_25 = arith.constant 1.000000e+00 : f32
    %37 = vector.broadcast %cst_25 : f32 to vector<256x1xf32>
    %38 = arith.addf %37, %36 : vector<256x1xf32>
    %39 = arith.divf %37, %38 : vector<256x1xf32>
    %c0_26 = arith.constant 0 : index
    %c0_27 = arith.constant 0 : index
    %40 = vector.load %arg10[%c0_26, %c0_27] : memref<256x1xf32, #tpu.memory_space<vmem>>, vector<256x1xf32>
    tpu.vector_store %arg10[%c0_26, %c0_27], %39 {strides = array<i32>} : memref<256x1xf32, #tpu.memory_space<vmem>>, vector<256x1xf32>,
    return
  }
  func.func @transform_0(%arg0: i32) -> (i32, i32) {
    %c0_i32 = arith.constant 0 : i32
    %c0_i32_0 = arith.constant 0 : i32
    return %arg0, %c0_i32 : i32, i32
  }
  func.func @transform_1(%arg0: i32) -> (i32, i32) {
    %c0_i32 = arith.constant 0 : i32
    %c0_i32_0 = arith.constant 0 : i32
    return %arg0, %c0_i32 : i32, i32
  }
  func.func @transform_2(%arg0: i32) -> (i32, i32) {
    %c0_i32 = arith.constant 0 : i32
    %c0_i32_0 = arith.constant 0 : i32
    return %arg0, %c0_i32 : i32, i32
  }
  func.func @transform_3(%arg0: i32) -> (i32, i32) {
    %c0_i32 = arith.constant 0 : i32
    %c0_i32_0 = arith.constant 0 : i32
    %c0_i32_1 = arith.constant 0 : i32
    return %c0_i32, %c0_i32_0 : i32, i32
  }
  func.func @transform_4(%arg0: i32) -> (i32, i32) {
    %c0_i32 = arith.constant 0 : i32
    %c0_i32_0 = arith.constant 0 : i32
    %c0_i32_1 = arith.constant 0 : i32
    return %c0_i32, %c0_i32_0 : i32, i32
  }
  func.func @transform_5(%arg0: i32) -> (i32, i32) {
    %c0_i32 = arith.constant 0 : i32
    %c0_i32_0 = arith.constant 0 : i32
    %c0_i32_1 = arith.constant 0 : i32
    return %c0_i32, %c0_i32_0 : i32, i32
  }
  func.func @transform_6(%arg0: i32) -> (i32, i32) {
    %c0_i32 = arith.constant 0 : i32
    %c0_i32_0 = arith.constant 0 : i32
    %c0_i32_1 = arith.constant 0 : i32
    return %c0_i32, %c0_i32_0 : i32, i32
  }
  func.func @transform_7(%arg0: i32) -> (i32, i32) {
    %c0_i32 = arith.constant 0 : i32
    %c0_i32_0 = arith.constant 0 : i32
    %c0_i32_1 = arith.constant 0 : i32
    return %c0_i32, %c0_i32_0 : i32, i32
  }
  func.func @transform_8(%arg0: i32) -> (i32, i32) {
    %c0_i32 = arith.constant 0 : i32
    %c0_i32_0 = arith.constant 0 : i32
    %c0_i32_1 = arith.constant 0 : i32
    return %c0_i32, %c0_i32_0 : i32, i32
  }
  func.func @transform_9(%arg0: i32) -> (i32, i32) {
    %c0_i32 = arith.constant 0 : i32
    %c0_i32_0 = arith.constant 0 : i32
    return %arg0, %c0_i32 : i32, i32
  }
}

</mosaic_0001>

<llo_original>
// kernel: tpu_custom_call.1
$region0: #{tpu_custom_call.1}
  #allocation0 [shape = 'u32[]', space=smem, size = 0x4, offset = 0x4, fixed_abs, tag = 'smem constant byte address 0x4 - core index']
  #allocation1 [shape = 'u32[144,128]{1,0:T(1,128)}', space=vmem, size = 0x12000, scoped, tag = 'internal scratch']
  %s0 = inlined_call_operand.vmem [shape: f32[256,32], index: 0, kind: input, shape index: {}]
  %s1 = inlined_call_operand.vmem [shape: f32[256,32], index: 1, kind: input, shape index: {}]
  %s2 = inlined_call_operand.vmem [shape: f32[256,32], index: 2, kind: input, shape index: {}]
  %s3 = inlined_call_operand.vmem [shape: f32[32,32], index: 3, kind: input, shape index: {}]
  %s4 = inlined_call_operand.vmem [shape: f32[32,32], index: 4, kind: input, shape index: {}]
  %s5 = inlined_call_operand.vmem [shape: f32[32,32], index: 5, kind: input, shape index: {}]
  %s6 = inlined_call_operand.vmem [shape: f32[1,32], index: 6, kind: input, shape index: {}]
  %s7 = inlined_call_operand.vmem [shape: f32[1,32], index: 7, kind: input, shape index: {}]
  %s8 = inlined_call_operand.vmem [shape: f32[1,32], index: 8, kind: input, shape index: {}]
  %s9 = inlined_call_operand.vmem [shape: f32[256,1], index: 9, kind: output, shape index: {}]
  %s10 = sld [smem:[#allocation0]]
  $region46: #{tpu_custom_call.1} parent=0
    _
  %s12 = ssub.s32 1, %s10
  %s13 = scalar_select 0, %s12, %s10
  // Predicated region
  $region2: #{tpu_custom_call.1} parent=0 // pred_check
    _
  $region3: #{tpu_custom_call.1} parent=0 // pred_check_branch
    %15 = sbr.rel (0) target = $region5
  $region4: #{tpu_custom_call.1} parent=0 // pred_region
    _
  $region5: #{tpu_custom_call.1} parent=0 // pred_fallthru
    _
  // Predicated region
  $region6: #{tpu_custom_call.1} parent=0 // pred_check
    _
  $region7: #{tpu_custom_call.1} parent=0 // pred_check_branch
    %17 = sbr.rel (0) target = $region9
  $region8: #{tpu_custom_call.1} parent=0 // pred_region
    _
  $region9: #{tpu_custom_call.1} parent=0 // pred_fallthru
    _
  // Predicated region
  $region10: #{tpu_custom_call.1} parent=0 // pred_check
    _
  $region11: #{tpu_custom_call.1} parent=0 // pred_check_branch
    %19 = sbr.rel (0) target = $region13
  $region12: #{tpu_custom_call.1} parent=0 // pred_region
    _
  $region13: #{tpu_custom_call.1} parent=0 // pred_fallthru
    _
  // Predicated region
  $region14: #{tpu_custom_call.1} parent=0 // pred_check
    _
  $region15: #{tpu_custom_call.1} parent=0 // pred_check_branch
    %21 = sbr.rel (0) target = $region17
  $region16: #{tpu_custom_call.1} parent=0 // pred_region
    _
  $region17: #{tpu_custom_call.1} parent=0 // pred_fallthru
    _
  // Predicated region
  $region18: #{tpu_custom_call.1} parent=0 // pred_check
    _
  $region19: #{tpu_custom_call.1} parent=0 // pred_check_branch
    %23 = sbr.rel (0) target = $region21
  $region20: #{tpu_custom_call.1} parent=0 // pred_region
    _
  $region21: #{tpu_custom_call.1} parent=0 // pred_fallthru
    _
  // Predicated region
  $region22: #{tpu_custom_call.1} parent=0 // pred_check
    _
  $region23: #{tpu_custom_call.1} parent=0 // pred_check_branch
    %25 = sbr.rel (0) target = $region25
  $region24: #{tpu_custom_call.1} parent=0 // pred_region
    _
  $region25: #{tpu_custom_call.1} parent=0 // pred_fallthru
    _
  // Predicated region
  $region26: #{tpu_custom_call.1} parent=0 // pred_check
    _
  $region27: #{tpu_custom_call.1} parent=0 // pred_check_branch
    %27 = sbr.rel (0) target = $region29
  $region28: #{tpu_custom_call.1} parent=0 // pred_region
    _
  $region29: #{tpu_custom_call.1} parent=0 // pred_fallthru
    _
  // Predicated region
  $region30: #{tpu_custom_call.1} parent=0 // pred_check
    _
  $region31: #{tpu_custom_call.1} parent=0 // pred_check_branch
    %29 = sbr.rel (0) target = $region33
  $region32: #{tpu_custom_call.1} parent=0 // pred_region
    _
  $region33: #{tpu_custom_call.1} parent=0 // pred_fallthru
    _
  // Predicated region
  $region34: #{tpu_custom_call.1} parent=0 // pred_check
    _
  $region35: #{tpu_custom_call.1} parent=0 // pred_check_branch
    %31 = sbr.rel (0) target = $region37
  $region36: #{tpu_custom_call.1} parent=0 // pred_region
    _
  $region37: #{tpu_custom_call.1} parent=0 // pred_fallthru
    _
  %v32 = vld [vmem:[%s0] sm:$0xff]
  %v33 = vld [vmem:[%s0 + $0x8] sm:$0xff]
  %v34 = vld [vmem:[%s0 + $0x10] sm:$0xff]
  %v35 = vld [vmem:[%s0 + $0x18] sm:$0xff]
  %v36 = vld [vmem:[%s0 + $0x20] sm:$0xff]
  %v37 = vld [vmem:[%s0 + $0x28] sm:$0xff]
  %v38 = vld [vmem:[%s0 + $0x30] sm:$0xff]
  %v39 = vld [vmem:[%s0 + $0x38] sm:$0xff]
  %v40 = vld [vmem:[%s0 + $0x40] sm:$0xff]
  %v41 = vld [vmem:[%s0 + $0x48] sm:$0xff]
  %v42 = vld [vmem:[%s0 + $0x50] sm:$0xff]
  %v43 = vld [vmem:[%s0 + $0x58] sm:$0xff]
  %v44 = vld [vmem:[%s0 + $0x60] sm:$0xff]
  %v45 = vld [vmem:[%s0 + $0x68] sm:$0xff]
  %v46 = vld [vmem:[%s0 + $0x70] sm:$0xff]
  %v47 = vld [vmem:[%s0 + $0x78] sm:$0xff]
  %v48 = vld [vmem:[%s0 + $0x80] sm:$0xff]
  %v49 = vld [vmem:[%s0 + $0x88] sm:$0xff]
  %v50 = vld [vmem:[%s0 + $0x90] sm:$0xff]
  %v51 = vld [vmem:[%s0 + $0x98] sm:$0xff]
  %v52 = vld [vmem:[%s0 + $0xa0] sm:$0xff]
  %v53 = vld [vmem:[%s0 + $0xa8] sm:$0xff]
  %v54 = vld [vmem:[%s0 + $0xb0] sm:$0xff]
  %v55 = vld [vmem:[%s0 + $0xb8] sm:$0xff]
  %v56 = vld [vmem:[%s0 + $0xc0] sm:$0xff]
  %v57 = vld [vmem:[%s0 + $0xc8] sm:$0xff]
  %v58 = vld [vmem:[%s0 + $0xd0] sm:$0xff]
  %v59 = vld [vmem:[%s0 + $0xd8] sm:$0xff]
  %v60 = vld [vmem:[%s0 + $0xe0] sm:$0xff]
  %v61 = vld [vmem:[%s0 + $0xe8] sm:$0xff]
  %v62 = vld [vmem:[%s0 + $0xf0] sm:$0xff]
  %v63 = vld [vmem:[%s0 + $0xf8] sm:$0xff]
  %v64 = vld [vmem:[%s3] sm:$0xff]
  %v65 = vld [vmem:[%s3 + $0x8] sm:$0xff]
  %v66 = vld [vmem:[%s3 + $0x10] sm:$0xff]
  %v67 = vld [vmem:[%s3 + $0x18] sm:$0xff]
  %v68 = vld [vmem:[%s6] sm:$0x1]
  %v70 = vlaneseq
  %v71 = vshrl.u32 %v70, 7
  %v72 = vsub.s32 0, %v71
  %v73 = vrot.slane %v68, %v72
  %vm75 = vcmask 261120
  %v77 = vsel %vm75, %v32, 0
  %v80 = vsel %vm75, %v33, 0
  %v83 = vsel %vm75, %v34, 0
  %v86 = vsel %vm75, %v35, 0
  %v89 = vsel %vm75, %v36, 0
  %v92 = vsel %vm75, %v37, 0
  %v95 = vsel %vm75, %v38, 0
  %v98 = vsel %vm75, %v39, 0
  %v101 = vsel %vm75, %v40, 0
  %v104 = vsel %vm75, %v41, 0
  %v107 = vsel %vm75, %v42, 0
  %v110 = vsel %vm75, %v43, 0
  %v113 = vsel %vm75, %v44, 0
  %v116 = vsel %vm75, %v45, 0
  %v119 = vsel %vm75, %v46, 0
  %v122 = vsel %vm75, %v47, 0
  %v125 = vsel %vm75, %v48, 0
  %v128 = vsel %vm75, %v49, 0
  %v131 = vsel %vm75, %v50, 0
  %v134 = vsel %vm75, %v51, 0
  %v137 = vsel %vm75, %v52, 0
  %v140 = vsel %vm75, %v53, 0
  %v143 = vsel %vm75, %v54, 0
  %v146 = vsel %vm75, %v55, 0
  %v149 = vsel %vm75, %v56, 0
  %v152 = vsel %vm75, %v57, 0
  %v155 = vsel %vm75, %v58, 0
  %v158 = vsel %vm75, %v59, 0
  %v161 = vsel %vm75, %v60, 0
  %v164 = vsel %vm75, %v61, 0
  %v167 = vsel %vm75, %v62, 0
  %v170 = vsel %vm75, %v63, 0
  %172 = vmatprep.subr.mxu0 0.0
  %v173 = vand.u32 %v64, 4294901760
  %174 = vmatpush1.msra.mxu0 %v173
  %175 = vmatprep.subr.mxu0 0.0
  %v176 = vand.u32 %v65, 4294901760
  %177 = vmatpush1.msra.mxu0 %v176
  %178 = vmatprep.subr.mxu0 0.0
  %v179 = vand.u32 %v66, 4294901760
  %180 = vmatpush1.msra.mxu0 %v179
  %181 = vmatprep.subr.mxu0 0.0
  %v182 = vand.u32 %v67, 4294901760
  %183 = vmatpush1.msra.mxu0 %v182
  %184 = vmatprep.subr.mxu0 0.0
  %185 = vmatpush1.msra.mxu0 0.0
  %186 = vmatprep.subr.mxu0 0.0
  %187 = vmatpush1.msra.mxu0 0.0
  %188 = vmatprep.subr.mxu0 0.0
  %189 = vmatpush1.msra.mxu0 0.0
  %190 = vmatprep.subr.mxu0 0.0
  %191 = vmatpush1.msra.mxu0 0.0
  %192 = vmatprep.subr.mxu0 0.0
  %193 = vmatpush1.msra.mxu0 0.0
  %194 = vmatprep.subr.mxu0 0.0
  %195 = vmatpush1.msra.mxu0 0.0
  %196 = vmatprep.subr.mxu0 0.0
  %197 = vmatpush1.msra.mxu0 0.0
  %198 = vmatprep.subr.mxu0 0.0
  %199 = vmatpush1.msra.mxu0 0.0
  %200 = vmatprep.subr.mxu0 0.0
  %201 = vmatpush1.msra.mxu0 0.0
  %202 = vmatprep.subr.mxu0 0.0
  %203 = vmatpush1.msra.mxu0 0.0
  %204 = vmatprep.subr.mxu0 0.0
  %205 = vmatpush1.msra.mxu0 0.0
  %206 = vmatprep.subr.mxu0 0.0
  %207 = vmatpush1.msra.mxu0 0.0
  %208 = vmatprep.subr.mxu0 0.0
  %209 = vmatpush1.msra.mxu0 0.0
  %210 = vmatprep.subr.mxu0 0.0
  %211 = vmatpush1.msra.mxu0 0.0
  %212 = vmatprep.subr.mxu0 0.0
  %213 = vmatpush1.msra.mxu0 0.0
  %214 = vmatprep.subr.mxu0 0.0
  %215 = vmatpush1.msra.mxu0 0.0
  %216 = vmatprep.subr.mxu0 0.0
  %217 = vmatpush1.msra.mxu0 0.0
  %218 = vmatprep.subr.mxu0 0.0
  %219 = vmatpush1.msra.mxu0 0.0
  %220 = vmatprep.subr.mxu0 0.0
  %221 = vmatpush1.msra.mxu0 0.0
  %222 = vmatprep.subr.mxu0 0.0
  %223 = vmatpush1.msra.mxu0 0.0
  %224 = vmatprep.subr.mxu0 0.0
  %225 = vmatpush1.msra.mxu0 0.0
  %226 = vmatprep.subr.mxu0 0.0
  %227 = vmatpush1.msra.mxu0 0.0
  %228 = vmatprep.subr.mxu0 0.0
  %229 = vmatpush1.msra.mxu0 0.0
  %230 = vmatprep.subr.mxu0 0.0
  %231 = vmatpush1.msra.mxu0 0.0
  %232 = vmatprep.subr.mxu0 0.0
  %233 = vmatpush1.msra.mxu0 0.0
  %234 = vmatprep.subr.mxu0 0.0
  %235 = vmatpush1.msra.mxu0 0.0
  %236 = vmatprep.subr.mxu0 0.0
  %237 = vmatpush1.msra.mxu0 0.0
  %238 = vmatprep.subr.mxu0 0.0
  %239 = vmatpush1.msra.mxu0 0.0
  %240 = vmatprep.mubr.f32.mxu0 0.0
  %v241 = vand.u32 %v77, 4294901760
  %v242 = vsub.f32 %v77, %v241
  %v243 = vand.u32 %v242, 4294901760
  %v244 = vsub.f32 %v242, %v243
  %v245 = vand.u32 %v244, 4294901760
  %246 = vmatmul.mubr.f32.gmra.mrb[0].mxu0 %v245
  %v247 = vpop.f32.mrb[0].mxu0
  %v248 = vadd.f32 %v73, %v247
  %v249 = vpop.f32.mrb[0].mxu0
  %250 = vmatprep.mubr.f32.mxu0 0.0
  %v251 = vand.u32 %v80, 4294901760
  %v252 = vsub.f32 %v80, %v251
  %v253 = vand.u32 %v252, 4294901760
  %v254 = vsub.f32 %v252, %v253
  %v255 = vand.u32 %v254, 4294901760
  %256 = vmatmul.mubr.f32.gmra.mrb[0].mxu0 %v255
  %v257 = vpop.f32.mrb[0].mxu0
  %v258 = vadd.f32 %v73, %v257
  %v259 = vpop.f32.mrb[0].mxu0
  %260 = vmatprep.mubr.f32.mxu0 0.0
  %v261 = vand.u32 %v83, 4294901760
  %v262 = vsub.f32 %v83, %v261
  %v263 = vand.u32 %v262, 4294901760
  %v264 = vsub.f32 %v262, %v263
  %v265 = vand.u32 %v264, 4294901760
  %266 = vmatmul.mubr.f32.gmra.mrb[0].mxu0 %v265
  %v267 = vpop.f32.mrb[0].mxu0
  %v268 = vadd.f32 %v73, %v267
  %v269 = vpop.f32.mrb[0].mxu0
  %270 = vmatprep.mubr.f32.mxu0 0.0
  %v271 = vand.u32 %v86, 4294901760
  %v272 = vsub.f32 %v86, %v271
  %v273 = vand.u32 %v272, 4294901760
  %v274 = vsub.f32 %v272, %v273
  %v275 = vand.u32 %v274, 4294901760
  %276 = vmatmul.mubr.f32.gmra.mrb[0].mxu0 %v275
  %v277 = vpop.f32.mrb[0].mxu0
  %v278 = vadd.f32 %v73, %v277
  %v279 = vpop.f32.mrb[0].mxu0
  %280 = vmatprep.mubr.f32.mxu0 0.0
  %v281 = vand.u32 %v89, 4294901760
  %v282 = vsub.f32 %v89, %v281
  %v283 = vand.u32 %v282, 4294901760
  %v284 = vsub.f32 %v282, %v283
  %v285 = vand.u32 %v284, 4294901760
  %286 = vmatmul.mubr.f32.gmra.mrb[0].mxu0 %v285
  %v287 = vpop.f32.mrb[0].mxu0
  %v288 = vadd.f32 %v73, %v287
  %v289 = vpop.f32.mrb[0].mxu0
  %290 = vmatprep.mubr.f32.mxu0 0.0
  %v291 = vand.u32 %v92, 4294901760
  %v292 = vsub.f32 %v92, %v291
  %v293 = vand.u32 %v292, 4294901760
  %v294 = vsub.f32 %v292, %v293
  %v295 = vand.u32 %v294, 4294901760
  %296 = vmatmul.mubr.f32.gmra.mrb[0].mxu0 %v295
  %v297 = vpop.f32.mrb[0].mxu0
  %v298 = vadd.f32 %v73, %v297
  %v299 = vpop.f32.mrb[0].mxu0
  %300 = vmatprep.mubr.f32.mxu0 0.0
  %v301 = vand.u32 %v95, 4294901760
  %v302 = vsub.f32 %v95, %v301
  %v303 = vand.u32 %v302, 4294901760
  %v304 = vsub.f32 %v302, %v303
  %v305 = vand.u32 %v304, 4294901760
  %306 = vmatmul.mubr.f32.gmra.mrb[0].mxu0 %v305
  %v307 = vpop.f32.mrb[0].mxu0
  %v308 = vadd.f32 %v73, %v307
  %v309 = vpop.f32.mrb[0].mxu0
  %310 = vmatprep.mubr.f32.mxu0 0.0
  %v311 = vand.u32 %v98, 4294901760
  %v312 = vsub.f32 %v98, %v311
  %v313 = vand.u32 %v312, 4294901760
  %v314 = vsub.f32 %v312, %v313
  %v315 = vand.u32 %v314, 4294901760
  %316 = vmatmul.mubr.f32.gmra.mrb[0].mxu0 %v315
  %v317 = vpop.f32.mrb[0].mxu0
  %v318 = vadd.f32 %v73, %v317
  %v319 = vpop.f32.mrb[0].mxu0
  %320 = vmatprep.mubr.f32.mxu0 0.0
  %v321 = vand.u32 %v101, 4294901760
  %v322 = vsub.f32 %v101, %v321
  %v323 = vand.u32 %v322, 4294901760
  %v324 = vsub.f32 %v322, %v323
  %v325 = vand.u32 %v324, 4294901760
  %326 = vmatmul.mubr.f32.gmra.mrb[0].mxu0 %v325
  %v327 = vpop.f32.mrb[0].mxu0
  %v328 = vadd.f32 %v73, %v327
  %v329 = vpop.f32.mrb[0].mxu0
  %330 = vmatprep.mubr.f32.mxu0 0.0
  %v331 = vand.u32 %v104, 4294901760
  %v332 = vsub.f32 %v104, %v331
  %v333 = vand.u32 %v332, 4294901760
  %v334 = vsub.f32 %v332, %v333
  %v335 = vand.u32 %v334, 4294901760
  %336 = vmatmul.mubr.f32.gmra.mrb[0].mxu0 %v335
  %v337 = vpop.f32.mrb[0].mxu0
  %v338 = vadd.f32 %v73, %v337
  %v339 = vpop.f32.mrb[0].mxu0
  %340 = vmatprep.mubr.f32.mxu0 0.0
  %v341 = vand.u32 %v107, 4294901760
  %v342 = vsub.f32 %v107, %v341
  %v343 = vand.u32 %v342, 4294901760
  %v344 = vsub.f32 %v342, %v343
  %v345 = vand.u32 %v344, 4294901760
  %346 = vmatmul.mubr.f32.gmra.mrb[0].mxu0 %v345
  %v347 = vpop.f32.mrb[0].mxu0
  %v348 = vadd.f32 %v73, %v347
  %v349 = vpop.f32.mrb[0].mxu0
  %350 = vmatprep.mubr.f32.mxu0 0.0
  %v351 = vand.u32 %v110, 4294901760
  %v352 = vsub.f32 %v110, %v351
  %v353 = vand.u32 %v352, 4294901760
  %v354 = vsub.f32 %v352, %v353
  %v355 = vand.u32 %v354, 4294901760
  %356 = vmatmul.mubr.f32.gmra.mrb[0].mxu0 %v355
  %v357 = vpop.f32.mrb[0].mxu0
  %v358 = vadd.f32 %v73, %v357
  %v359 = vpop.f32.mrb[0].mxu0
  %360 = vmatprep.mubr.f32.mxu0 0.0
  %v361 = vand.u32 %v113, 4294901760
  %v362 = vsub.f32 %v113, %v361
  %v363 = vand.u32 %v362, 4294901760
  %v364 = vsub.f32 %v362, %v363
  %v365 = vand.u32 %v364, 4294901760
  %366 = vmatmul.mubr.f32.gmra.mrb[0].mxu0 %v365
  %v367 = vpop.f32.mrb[0].mxu0
  %v368 = vadd.f32 %v73, %v367
  %v369 = vpop.f32.mrb[0].mxu0
  %370 = vmatprep.mubr.f32.mxu0 0.0
  %v371 = vand.u32 %v116, 4294901760
  %v372 = vsub.f32 %v116, %v371
  %v373 = vand.u32 %v372, 4294901760
  %v374 = vsub.f32 %v372, %v373
  %v375 = vand.u32 %v374, 4294901760
  %376 = vmatmul.mubr.f32.gmra.mrb[0].mxu0 %v375
  %v377 = vpop.f32.mrb[0].mxu0
  %v378 = vadd.f32 %v73, %v377
  %v379 = vpop.f32.mrb[0].mxu0
  %380 = vmatprep.mubr.f32.mxu0 0.0
  %v381 = vand.u32 %v119, 4294901760
  %v382 = vsub.f32 %v119, %v381
  %v383 = vand.u32 %v382, 4294901760
  %v384 = vsub.f32 %v382, %v383
  %v385 = vand.u32 %v384, 4294901760
  %386 = vmatmul.mubr.f32.gmra.mrb[0].mxu0 %v385
  %v387 = vpop.f32.mrb[0].mxu0
  %v388 = vadd.f32 %v73, %v387
  %v389 = vpop.f32.mrb[0].mxu0
  %390 = vmatprep.mubr.f32.mxu0 0.0
  %v391 = vand.u32 %v122, 4294901760
  %v392 = vsub.f32 %v122, %v391
  %v393 = vand.u32 %v392, 4294901760
  %v394 = vsub.f32 %v392, %v393
  %v395 = vand.u32 %v394, 4294901760
  %396 = vmatmul.mubr.f32.gmra.mrb[0].mxu0 %v395
  %v397 = vpop.f32.mrb[0].mxu0
  %v398 = vadd.f32 %v73, %v397
  %v399 = vpop.f32.mrb[0].mxu0
  %400 = vmatprep.mubr.f32.mxu0 0.0
  %v401 = vand.u32 %v125, 4294901760
  %v402 = vsub.f32 %v125, %v401
  %v403 = vand.u32 %v402, 4294901760
  %v404 = vsub.f32 %v402, %v403
  %v405 = vand.u32 %v404, 4294901760
  %406 = vmatmul.mubr.f32.gmra.mrb[0].mxu0 %v405
  %v407 = vpop.f32.mrb[0].mxu0
  %v408 = vadd.f32 %v73, %v407
  %v409 = vpop.f32.mrb[0].mxu0
  %410 = vmatprep.mubr.f32.mxu0 0.0
  %v411 = vand.u32 %v128, 4294901760
  %v412 = vsub.f32 %v128, %v411
  %v413 = vand.u32 %v412, 4294901760
  %v414 = vsub.f32 %v412, %v413
  %v415 = vand.u32 %v414, 4294901760
  %416 = vmatmul.mubr.f32.gmra.mrb[0].mxu0 %v415
  %v417 = vpop.f32.mrb[0].mxu0
  %v418 = vadd.f32 %v73, %v417
  %v419 = vpop.f32.mrb[0].mxu0
  %420 = vmatprep.mubr.f32.mxu0 0.0
  %v421 = vand.u32 %v131, 4294901760
  %v422 = vsub.f32 %v131, %v421
  %v423 = vand.u32 %v422, 4294901760
  %v424 = vsub.f32 %v422, %v423
  %v425 = vand.u32 %v424, 4294901760
  %426 = vmatmul.mubr.f32.gmra.mrb[0].mxu0 %v425
  %v427 = vpop.f32.mrb[0].mxu0
  %v428 = vadd.f32 %v73, %v427
  %v429 = vpop.f32.mrb[0].mxu0
  %430 = vmatprep.mubr.f32.mxu0 0.0
  %v431 = vand.u32 %v134, 4294901760
  %v432 = vsub.f32 %v134, %v431
  %v433 = vand.u32 %v432, 4294901760
  %v434 = vsub.f32 %v432, %v433
  %v435 = vand.u32 %v434, 4294901760
  %436 = vmatmul.mubr.f32.gmra.mrb[0].mxu0 %v435
  %v437 = vpop.f32.mrb[0].mxu0
  %v438 = vadd.f32 %v73, %v437
  %v439 = vpop.f32.mrb[0].mxu0
  %440 = vmatprep.mubr.f32.mxu0 0.0
  %v441 = vand.u32 %v137, 4294901760
  %v442 = vsub.f32 %v137, %v441
  %v443 = vand.u32 %v442, 4294901760
  %v444 = vsub.f32 %v442, %v443
  %v445 = vand.u32 %v444, 4294901760
  %446 = vmatmul.mubr.f32.gmra.mrb[0].mxu0 %v445
  %v447 = vpop.f32.mrb[0].mxu0
  %v448 = vadd.f32 %v73, %v447
  %v449 = vpop.f32.mrb[0].mxu0
  %450 = vmatprep.mubr.f32.mxu0 0.0
  %v451 = vand.u32 %v140, 4294901760
  %v452 = vsub.f32 %v140, %v451
  %v453 = vand.u32 %v452, 4294901760
  %v454 = vsub.f32 %v452, %v453
  %v455 = vand.u32 %v454, 4294901760
  %456 = vmatmul.mubr.f32.gmra.mrb[0].mxu0 %v455
  %v457 = vpop.f32.mrb[0].mxu0
  %v458 = vadd.f32 %v73, %v457
  %v459 = vpop.f32.mrb[0].mxu0
  %460 = vmatprep.mubr.f32.mxu0 0.0
  %v461 = vand.u32 %v143, 4294901760
  %v462 = vsub.f32 %v143, %v461
  %v463 = vand.u32 %v462, 4294901760
  %v464 = vsub.f32 %v462, %v463
  %v465 = vand.u32 %v464, 4294901760
  %466 = vmatmul.mubr.f32.gmra.mrb[0].mxu0 %v465
  %v467 = vpop.f32.mrb[0].mxu0
  %v468 = vadd.f32 %v73, %v467
  %v469 = vpop.f32.mrb[0].mxu0
  %470 = vmatprep.mubr.f32.mxu0 0.0
  %v471 = vand.u32 %v146, 4294901760
  %v472 = vsub.f32 %v146, %v471
  %v473 = vand.u32 %v472, 4294901760
  %v474 = vsub.f32 %v472, %v473
  %v475 = vand.u32 %v474, 4294901760
  %476 = vmatmul.mubr.f32.gmra.mrb[0].mxu0 %v475
  %v477 = vpop.f32.mrb[0].mxu0
  %v478 = vadd.f32 %v73, %v477
  %v479 = vpop.f32.mrb[0].mxu0
  %480 = vmatprep.mubr.f32.mxu0 0.0
  %v481 = vand.u32 %v149, 4294901760
  %v482 = vsub.f32 %v149, %v481
  %v483 = vand.u32 %v482, 4294901760
  %v484 = vsub.f32 %v482, %v483
  %v485 = vand.u32 %v484, 4294901760
  %486 = vmatmul.mubr.f32.gmra.mrb[0].mxu0 %v485
  %v487 = vpop.f32.mrb[0].mxu0
  %v488 = vadd.f32 %v73, %v487
  %v489 = vpop.f32.mrb[0].mxu0
  %490 = vmatprep.mubr.f32.mxu0 0.0
  %v491 = vand.u32 %v152, 4294901760
  %v492 = vsub.f32 %v152, %v491
  %v493 = vand.u32 %v492, 4294901760
  %v494 = vsub.f32 %v492, %v493
  %v495 = vand.u32 %v494, 4294901760
  %496 = vmatmul.mubr.f32.gmra.mrb[0].mxu0 %v495
  %v497 = vpop.f32.mrb[0].mxu0
  %v498 = vadd.f32 %v73, %v497
  %v499 = vpop.f32.mrb[0].mxu0
  %500 = vmatprep.mubr.f32.mxu0 0.0
  %v501 = vand.u32 %v155, 4294901760
  %v502 = vsub.f32 %v155, %v501
  %v503 = vand.u32 %v502, 4294901760
  %v504 = vsub.f32 %v502, %v503
  %v505 = vand.u32 %v504, 4294901760
  %506 = vmatmul.mubr.f32.gmra.mrb[0].mxu0 %v505
  %v507 = vpop.f32.mrb[0].mxu0
  %v508 = vadd.f32 %v73, %v507
  %v509 = vpop.f32.mrb[0].mxu0
  %510 = vmatprep.mubr.f32.mxu0 0.0
  %v511 = vand.u32 %v158, 4294901760
  %v512 = vsub.f32 %v158, %v511
  %v513 = vand.u32 %v512, 4294901760
  %v514 = vsub.f32 %v512, %v513
  %v515 = vand.u32 %v514, 4294901760
  %516 = vmatmul.mubr.f32.gmra.mrb[0].mxu0 %v515
  %v517 = vpop.f32.mrb[0].mxu0
  %v518 = vadd.f32 %v73, %v517
  %v519 = vpop.f32.mrb[0].mxu0
  %520 = vmatprep.mubr.f32.mxu0 0.0
  %v521 = vand.u32 %v161, 4294901760
  %v522 = vsub.f32 %v161, %v521
  %v523 = vand.u32 %v522, 4294901760
  %v524 = vsub.f32 %v522, %v523
  %v525 = vand.u32 %v524, 4294901760
  %526 = vmatmul.mubr.f32.gmra.mrb[0].mxu0 %v525
  %v527 = vpop.f32.mrb[0].mxu0
  %v528 = vadd.f32 %v73, %v527
  %v529 = vpop.f32.mrb[0].mxu0
  %530 = vmatprep.mubr.f32.mxu0 0.0
  %v531 = vand.u32 %v164, 4294901760
  %v532 = vsub.f32 %v164, %v531
  %v533 = vand.u32 %v532, 4294901760
  %v534 = vsub.f32 %v532, %v533
  %v535 = vand.u32 %v534, 4294901760
  %536 = vmatmul.mubr.f32.gmra.mrb[0].mxu0 %v535
  %v537 = vpop.f32.mrb[0].mxu0
  %v538 = vadd.f32 %v73, %v537
  %v539 = vpop.f32.mrb[0].mxu0
  %540 = vmatprep.mubr.f32.mxu0 0.0
  %v541 = vand.u32 %v167, 4294901760
  %v542 = vsub.f32 %v167, %v541
  %v543 = vand.u32 %v542, 4294901760
  %v544 = vsub.f32 %v542, %v543
  %v545 = vand.u32 %v544, 4294901760
  %546 = vmatmul.mubr.f32.gmra.mrb[0].mxu0 %v545
  %v547 = vpop.f32.mrb[0].mxu0
  %v548 = vadd.f32 %v73, %v547
  %v549 = vpop.f32.mrb[0].mxu0
  %550 = vmatprep.mubr.f32.mxu0 0.0
  %v551 = vand.u32 %v170, 4294901760
  %v552 = vsub.f32 %v170, %v551
  %v553 = vand.u32 %v552, 4294901760
  %v554 = vsub.f32 %v552, %v553
  %v555 = vand.u32 %v554, 4294901760
  %556 = vmatmul.mubr.f32.gmra.mrb[0].mxu0 %v555
  %v557 = vpop.f32.mrb[0].mxu0
  %v558 = vadd.f32 %v73, %v557
  %v559 = vpop.f32.mrb[0].mxu0
  %560 = vdwg.mxu0
  %561 = vmatprep.subr.mxu0 0.0
  %v562 = vand.u32 %v64, 4294901760
  %v563 = vsub.f32 %v64, %v562
  %v564 = vand.u32 %v563, 4294901760
  %v565 = vsub.f32 %v563, %v564
  %v566 = vand.u32 %v565, 4294901760
  %567 = vmatpush1.msra.mxu0 %v566
  %568 = vmatprep.subr.mxu0 0.0
  %v569 = vand.u32 %v65, 4294901760
  %v570 = vsub.f32 %v65, %v569
  %v571 = vand.u32 %v570, 4294901760
  %v572 = vsub.f32 %v570, %v571
  %v573 = vand.u32 %v572, 4294901760
  %574 = vmatpush1.msra.mxu0 %v573
  %575 = vmatprep.subr.mxu0 0.0
  %v576 = vand.u32 %v66, 4294901760
  %v577 = vsub.f32 %v66, %v576
  %v578 = vand.u32 %v577, 4294901760
  %v579 = vsub.f32 %v577, %v578
  %v580 = vand.u32 %v579, 4294901760
  %581 = vmatpush1.msra.mxu0 %v580
  %582 = vmatprep.subr.mxu0 0.0
  %v583 = vand.u32 %v67, 4294901760
  %v584 = vsub.f32 %v67, %v583
  %v585 = vand.u32 %v584, 4294901760
  %v586 = vsub.f32 %v584, %v585
  %v587 = vand.u32 %v586, 4294901760
  %588 = vmatpush1.msra.mxu0 %v587
  %589 = vmatprep.subr.mxu0 0.0
  %590 = vmatpush1.msra.mxu0 0.0
  %591 = vmatprep.subr.mxu0 0.0
  %592 = vmatpush1.msra.mxu0 0.0
  %593 = vmatprep.subr.mxu0 0.0
  %594 = vmatpush1.msra.mxu0 0.0
  %595 = vmatprep.subr.mxu0 0.0
  %596 = vmatpush1.msra.mxu0 0.0
  %597 = vmatprep.subr.mxu0 0.0
  %598 = vmatpush1.msra.mxu0 0.0
  %599 = vmatprep.subr.mxu0 0.0
  %600 = vmatpush1.msra.mxu0 0.0
  %601 = vmatprep.subr.mxu0 0.0
  %602 = vmatpush1.msra.mxu0 0.0
  %603 = vmatprep.subr.mxu0 0.0
  %604 = vmatpush1.msra.mxu0 0.0
  %605 = vmatprep.subr.mxu0 0.0
  %606 = vmatpush1.msra.mxu0 0.0
  %607 = vmatprep.subr.mxu0 0.0
  %608 = vmatpush1.msra.mxu0 0.0
  %609 = vmatprep.subr.mxu0 0.0
  %610 = vmatpush1.msra.mxu0 0.0
  %611 = vmatprep.subr.mxu0 0.0
  %612 = vmatpush1.msra.mxu0 0.0
  %613 = vmatprep.subr.mxu0 0.0
  %614 = vmatpush1.msra.mxu0 0.0
  %615 = vmatprep.subr.mxu0 0.0
  %616 = vmatpush1.msra.mxu0 0.0
  %617 = vmatprep.subr.mxu0 0.0
  %618 = vmatpush1.msra.mxu0 0.0
  %619 = vmatprep.subr.mxu0 0.0
  %620 = vmatpush1.msra.mxu0 0.0
  %621 = vmatprep.subr.mxu0 0.0
  %622 = vmatpush1.msra.mxu0 0.0
  %623 = vmatprep.subr.mxu0 0.0
  %624 = vmatpush1.msra.mxu0 0.0
  %625 = vmatprep.subr.mxu0 0.0
  %626 = vmatpush1.msra.mxu0 0.0
  %627 = vmatprep.subr.mxu0 0.0
  %628 = vmatpush1.msra.mxu0 0.0
  %629 = vmatprep.subr.mxu0 0.0
  %630 = vmatpush1.msra.mxu0 0.0
  %631 = vmatprep.subr.mxu0 0.0
  %632 = vmatpush1.msra.mxu0 0.0
  %633 = vmatprep.subr.mxu0 0.0
  %634 = vmatpush1.msra.mxu0 0.0
  %635 = vmatprep.subr.mxu0 0.0
  %636 = vmatpush1.msra.mxu0 0.0
  %637 = vmatprep.subr.mxu0 0.0
  %638 = vmatpush1.msra.mxu0 0.0
  %639 = vmatprep.subr.mxu0 0.0
  %640 = vmatpush1.msra.mxu0 0.0
  %641 = vmatprep.subr.mxu0 0.0
  %642 = vmatpush1.msra.mxu0 0.0
  %643 = vmatprep.subr.mxu0 0.0
  %644 = vmatpush1.msra.mxu0 0.0
  %645 = vmatprep.mubr.f32.mxu0 0.0
  %v646 = vand.u32 %v77, 4294901760
  %647 = vmatmul.mubr.f32.gmra.mrb[0].mxu0 %v646
  %v648 = vpop.f32.mrb[0].mxu0
  %v649 = vadd.f32 %v248, %v648
  %v650 = vpop.f32.mrb[0].mxu0
  %651 = vmatprep.mubr.f32.mxu0 0.0
  %v652 = vand.u32 %v80, 4294901760
  %653 = vmatmul.mubr.f32.gmra.mrb[0].mxu0 %v652
  %v654 = vpop.f32.mrb[0].mxu0
  %v655 = vadd.f32 %v258, %v654
  %v656 = vpop.f32.mrb[0].mxu0
  %657 = vmatprep.mubr.f32.mxu0 0.0
  %v658 = vand.u32 %v83, 4294901760
  %659 = vmatmul.mubr.f32.gmra.mrb[0].mxu0 %v658
  %v660 = vpop.f32.mrb[0].mxu0
  %v661 = vadd.f32 %v268, %v660
  %v662 = vpop.f32.mrb[0].mxu0
  %663 = vmatprep.mubr.f32.mxu0 0.0
  %v664 = vand.u32 %v86, 4294901760
  %665 = vmatmul.mubr.f32.gmra.mrb[0].mxu0 %v664
  %v666 = vpop.f32.mrb[0].mxu0
  %v667 = vadd.f32 %v278, %v666
  %v668 = vpop.f32.mrb[0].mxu0
  %669 = vmatprep.mubr.f32.mxu0 0.0
  %v670 = vand.u32 %v89, 4294901760
  %671 = vmatmul.mubr.f32.gmra.mrb[0].mxu0 %v670
  %v672 = vpop.f32.mrb[0].mxu0
  %v673 = vadd.f32 %v288, %v672
  %v674 = vpop.f32.mrb[0].mxu0
  %675 = vmatprep.mubr.f32.mxu0 0.0
  %v676 = vand.u32 %v92, 4294901760
  %677 = vmatmul.mubr.f32.gmra.mrb[0].mxu0 %v676
  %v678 = vpop.f32.mrb[0].mxu0
  %v679 = vadd.f32 %v298, %v678
  %v680 = vpop.f32.mrb[0].mxu0
  %681 = vmatprep.mubr.f32.mxu0 0.0
  %v682 = vand.u32 %v95, 4294901760
  %683 = vmatmul.mubr.f32.gmra.mrb[0].mxu0 %v682
  %v684 = vpop.f32.mrb[0].mxu0
  %v685 = vadd.f32 %v308, %v684
  %v686 = vpop.f32.mrb[0].mxu0
  %687 = vmatprep.mubr.f32.mxu0 0.0
  %v688 = vand.u32 %v98, 4294901760
  %689 = vmatmul.mubr.f32.gmra.mrb[0].mxu0 %v688
  %v690 = vpop.f32.mrb[0].mxu0
  %v691 = vadd.f32 %v318, %v690
  %v692 = vpop.f32.mrb[0].mxu0
  %693 = vmatprep.mubr.f32.mxu0 0.0
  %v694 = vand.u32 %v101, 4294901760
  %695 = vmatmul.mubr.f32.gmra.mrb[0].mxu0 %v694
  %v696 = vpop.f32.mrb[0].mxu0
  %v697 = vadd.f32 %v328, %v696
  %v698 = vpop.f32.mrb[0].mxu0
  %699 = vmatprep.mubr.f32.mxu0 0.0
  %v700 = vand.u32 %v104, 4294901760
  %701 = vmatmul.mubr.f32.gmra.mrb[0].mxu0 %v700
  %v702 = vpop.f32.mrb[0].mxu0
  %v703 = vadd.f32 %v338, %v702
  %v704 = vpop.f32.mrb[0].mxu0
  %705 = vmatprep.mubr.f32.mxu0 0.0
  %v706 = vand.u32 %v107, 4294901760
  %707 = vmatmul.mubr.f32.gmra.mrb[0].mxu0 %v706
  %v708 = vpop.f32.mrb[0].mxu0
  %v709 = vadd.f32 %v348, %v708
  %v710 = vpop.f32.mrb[0].mxu0
  %711 = vmatprep.mubr.f32.mxu0 0.0
  %v712 = vand.u32 %v110, 4294901760
  %713 = vmatmul.mubr.f32.gmra.mrb[0].mxu0 %v712
  %v714 = vpop.f32.mrb[0].mxu0
  %v715 = vadd.f32 %v358, %v714
  %v716 = vpop.f32.mrb[0].mxu0
  %717 = vmatprep.mubr.f32.mxu0 0.0
  %v718 = vand.u32 %v113, 4294901760
  %719 = vmatmul.mubr.f32.gmra.mrb[0].mxu0 %v718
  %v720 = vpop.f32.mrb[0].mxu0
  %v721 = vadd.f32 %v368, %v720
  %v722 = vpop.f32.mrb[0].mxu0
  %723 = vmatprep.mubr.f32.mxu0 0.0
  %v724 = vand.u32 %v116, 4294901760
  %725 = vmatmul.mubr.f32.gmra.mrb[0].mxu0 %v724
  %v726 = vpop.f32.mrb[0].mxu0
  %v727 = vadd.f32 %v378, %v726
  %v728 = vpop.f32.mrb[0].mxu0
  %729 = vmatprep.mubr.f32.mxu0 0.0
  %v730 = vand.u32 %v119, 4294901760
  %731 = vmatmul.mubr.f32.gmra.mrb[0].mxu0 %v730
  %v732 = vpop.f32.mrb[0].mxu0
  %v733 = vadd.f32 %v388, %v732
  %v734 = vpop.f32.mrb[0].mxu0
  %735 = vmatprep.mubr.f32.mxu0 0.0
  %v736 = vand.u32 %v122, 4294901760
  %737 = vmatmul.mubr.f32.gmra.mrb[0].mxu0 %v736
  %v738 = vpop.f32.mrb[0].mxu0
  %v739 = vadd.f32 %v398, %v738
  %v740 = vpop.f32.mrb[0].mxu0
  %741 = vmatprep.mubr.f32.mxu0 0.0
  %v742 = vand.u32 %v125, 4294901760
  %743 = vmatmul.mubr.f32.gmra.mrb[0].mxu0 %v742
  %v744 = vpop.f32.mrb[0].mxu0
  %v745 = vadd.f32 %v408, %v744
  %v746 = vpop.f32.mrb[0].mxu0
  %747 = vmatprep.mubr.f32.mxu0 0.0
  %v748 = vand.u32 %v128, 4294901760
  %749 = vmatmul.mubr.f32.gmra.mrb[0].mxu0 %v748
  %v750 = vpop.f32.mrb[0].mxu0
  %v751 = vadd.f32 %v418, %v750
  %v752 = vpop.f32.mrb[0].mxu0
  %753 = vmatprep.mubr.f32.mxu0 0.0
  %v754 = vand.u32 %v131, 4294901760
  %755 = vmatmul.mubr.f32.gmra.mrb[0].mxu0 %v754
  %v756 = vpop.f32.mrb[0].mxu0
  %v757 = vadd.f32 %v428, %v756
  %v758 = vpop.f32.mrb[0].mxu0
  %759 = vmatprep.mubr.f32.mxu0 0.0
  %v760 = vand.u32 %v134, 4294901760
  %761 = vmatmul.mubr.f32.gmra.mrb[0].mxu0 %v760
  %v762 = vpop.f32.mrb[0].mxu0
  %v763 = vadd.f32 %v438, %v762
  %v764 = vpop.f32.mrb[0].mxu0
  %765 = vmatprep.mubr.f32.mxu0 0.0
  %v766 = vand.u32 %v137, 4294901760
  %767 = vmatmul.mubr.f32.gmra.mrb[0].mxu0 %v766
  %v768 = vpop.f32.mrb[0].mxu0
  %v769 = vadd.f32 %v448, %v768
  %v770 = vpop.f32.mrb[0].mxu0
  %771 = vmatprep.mubr.f32.mxu0 0.0
  %v772 = vand.u32 %v140, 4294901760
  %773 = vmatmul.mubr.f32.gmra.mrb[0].mxu0 %v772
  %v774 = vpop.f32.mrb[0].mxu0
  %v775 = vadd.f32 %v458, %v774
  %v776 = vpop.f32.mrb[0].mxu0
  %777 = vmatprep.mubr.f32.mxu0 0.0
  %v778 = vand.u32 %v143, 4294901760
  %779 = vmatmul.mubr.f32.gmra.mrb[0].mxu0 %v778
  %v780 = vpop.f32.mrb[0].mxu0
  %v781 = vadd.f32 %v468, %v780
  %v782 = vpop.f32.mrb[0].mxu0
  %783 = vmatprep.mubr.f32.mxu0 0.0
  %v784 = vand.u32 %v146, 4294901760
  %785 = vmatmul.mubr.f32.gmra.mrb[0].mxu0 %v784
  %v786 = vpop.f32.mrb[0].mxu0
  %v787 = vadd.f32 %v478, %v786
  %v788 = vpop.f32.mrb[0].mxu0
  %789 = vmatprep.mubr.f32.mxu0 0.0
  %v790 = vand.u32 %v149, 4294901760
  %791 = vmatmul.mubr.f32.gmra.mrb[0].mxu0 %v790
  %v792 = vpop.f32.mrb[0].mxu0
  %v793 = vadd.f32 %v488, %v792
  %v794 = vpop.f32.mrb[0].mxu0
  %795 = vmatprep.mubr.f32.mxu0 0.0
  %v796 = vand.u32 %v152, 4294901760
  %797 = vmatmul.mubr.f32.gmra.mrb[0].mxu0 %v796
  %v798 = vpop.f32.mrb[0].mxu0
  %v799 = vadd.f32 %v498, %v798
  %v800 = vpop.f32.mrb[0].mxu0
  %801 = vmatprep.mubr.f32.mxu0 0.0
  %v802 = vand.u32 %v155, 4294901760
  %803 = vmatmul.mubr.f32.gmra.mrb[0].mxu0 %v802
  %v804 = vpop.f32.mrb[0].mxu0
  %v805 = vadd.f32 %v508, %v804
  %v806 = vpop.f32.mrb[0].mxu0
  %807 = vmatprep.mubr.f32.mxu0 0.0
  %v808 = vand.u32 %v158, 4294901760
  %809 = vmatmul.mubr.f32.gmra.mrb[0].mxu0 %v808
  %v810 = vpop.f32.mrb[0].mxu0
  %v811 = vadd.f32 %v518, %v810
  %v812 = vpop.f32.mrb[0].mxu0
  %813 = vmatprep.mubr.f32.mxu0 0.0
  %v814 = vand.u32 %v161, 4294901760
  %815 = vmatmul.mubr.f32.gmra.mrb[0].mxu0 %v814
  %v816 = vpop.f32.mrb[0].mxu0
  %v817 = vadd.f32 %v528, %v816
  %v818 = vpop.f32.mrb[0].mxu0
  %819 = vmatprep.mubr.f32.mxu0 0.0
  %v820 = vand.u32 %v164, 4294901760
  %821 = vmatmul.mubr.f32.gmra.mrb[0].mxu0 %v820
  %v822 = vpop.f32.mrb[0].mxu0
  %v823 = vadd.f32 %v538, %v822
  %v824 = vpop.f32.mrb[0].mxu0
  %825 = vmatprep.mubr.f32.mxu0 0.0
  %v826 = vand.u32 %v167, 4294901760
  %827 = vmatmul.mubr.f32.gmra.mrb[0].mxu0 %v826
  %v828 = vpop.f32.mrb[0].mxu0
  %v829 = vadd.f32 %v548, %v828
  %v830 = vpop.f32.mrb[0].mxu0
  %831 = vmatprep.mubr.f32.mxu0 0.0
  %v832 = vand.u32 %v170, 4294901760
  %833 = vmatmul.mubr.f32.gmra.mrb[0].mxu0 %v832
  %v834 = vpop.f32.mrb[0].mxu0
  %v835 = vadd.f32 %v558, %v834
  %v836 = vpop.f32.mrb[0].mxu0
  %837 = vdwg.mxu0
  %838 = vmatprep.subr.mxu0 0.0
  %v839 = vand.u32 %v64, 4294901760
  %v840 = vsub.f32 %v64, %v839
  %841 = vmatpush1.msra.mxu0 %v840
  %842 = vmatprep.subr.mxu0 0.0
  %v843 = vand.u32 %v65, 4294901760
  %v844 = vsub.f32 %v65, %v843
  %845 = vmatpush1.msra.mxu0 %v844
  %846 = vmatprep.subr.mxu0 0.0
  %v847 = vand.u32 %v66, 4294901760
  %v848 = vsub.f32 %v66, %v847
  %849 = vmatpush1.msra.mxu0 %v848
  %850 = vmatprep.subr.mxu0 0.0
  %v851 = vand.u32 %v67, 4294901760
  %v852 = vsub.f32 %v67, %v851
  %853 = vmatpush1.msra.mxu0 %v852
  %854 = vmatprep.subr.mxu0 0.0
  %855 = vmatpush1.msra.mxu0 0.0
  %856 = vmatprep.subr.mxu0 0.0
  %857 = vmatpush1.msra.mxu0 0.0
  %858 = vmatprep.subr.mxu0 0.0
  %859 = vmatpush1.msra.mxu0 0.0
  %860 = vmatprep.subr.mxu0 0.0
  %861 = vmatpush1.msra.mxu0 0.0
  %862 = vmatprep.subr.mxu0 0.0
  %863 = vmatpush1.msra.mxu0 0.0
  %864 = vmatprep.subr.mxu0 0.0
  %865 = vmatpush1.msra.mxu0 0.0
  %866 = vmatprep.subr.mxu0 0.0
  %867 = vmatpush1.msra.mxu0 0.0
  %868 = vmatprep.subr.mxu0 0.0
  %869 = vmatpush1.msra.mxu0 0.0
  %870 = vmatprep.subr.mxu0 0.0
  %871 = vmatpush1.msra.mxu0 0.0
  %872 = vmatprep.subr.mxu0 0.0
  %873 = vmatpush1.msra.mxu0 0.0
  %874 = vmatprep.subr.mxu0 0.0
  %875 = vmatpush1.msra.mxu0 0.0
  %876 = vmatprep.subr.mxu0 0.0
  %877 = vmatpush1.msra.mxu0 0.0
  %878 = vmatprep.subr.mxu0 0.0
  %879 = vmatpush1.msra.mxu0 0.0
  %880 = vmatprep.subr.mxu0 0.0
  %881 = vmatpush1.msra.mxu0 0.0
  %882 = vmatprep.subr.mxu0 0.0
  %883 = vmatpush1.msra.mxu0 0.0
  %884 = vmatprep.subr.mxu0 0.0
  %885 = vmatpush1.msra.mxu0 0.0
  %886 = vmatprep.subr.mxu0 0.0
  %887 = vmatpush1.msra.mxu0 0.0
  %888 = vmatprep.subr.mxu0 0.0
  %889 = vmatpush1.msra.mxu0 0.0
  %890 = vmatprep.subr.mxu0 0.0
  %891 = vmatpush1.msra.mxu0 0.0
  %892 = vmatprep.subr.mxu0 0.0
  %893 = vmatpush1.msra.mxu0 0.0
  %894 = vmatprep.subr.mxu0 0.0
  %895 = vmatpush1.msra.mxu0 0.0
  %896 = vmatprep.subr.mxu0 0.0
  %897 = vmatpush1.msra.mxu0 0.0
  %898 = vmatprep.subr.mxu0 0.0
  %899 = vmatpush1.msra.mxu0 0.0
  %900 = vmatprep.subr.mxu0 0.0
  %901 = vmatpush1.msra.mxu0 0.0
  %902 = vmatprep.subr.mxu0 0.0
  %903 = vmatpush1.msra.mxu0 0.0
  %904 = vmatprep.subr.mxu0 0.0
  %905 = vmatpush1.msra.mxu0 0.0
  %906 = vmatprep.subr.mxu0 0.0
  %907 = vmatpush1.msra.mxu0 0.0
  %908 = vmatprep.subr.mxu0 0.0
  %909 = vmatpush1.msra.mxu0 0.0
  %910 = vmatprep.mubr.f32.mxu0 0.0
  %v911 = vand.u32 %v77, 4294901760
  %v912 = vsub.f32 %v77, %v911
  %913 = vmatmul.mubr.f32.gmra.mrb[0].mxu0 %v912
  %v914 = vpop.f32.mrb[0].mxu0
  %v915 = vadd.f32 %v649, %v914
  %v916 = vpop.f32.mrb[0].mxu0
  %917 = vmatprep.mubr.f32.mxu0 0.0
  %v918 = vand.u32 %v80, 4294901760
  %v919 = vsub.f32 %v80, %v918
  %920 = vmatmul.mubr.f32.gmra.mrb[0].mxu0 %v919
  %v921 = vpop.f32.mrb[0].mxu0
  %v922 = vadd.f32 %v655, %v921
  %v923 = vpop.f32.mrb[0].mxu0
  %924 = vmatprep.mubr.f32.mxu0 0.0
  %v925 = vand.u32 %v83, 4294901760
  %v926 = vsub.f32 %v83, %v925
  %927 = vmatmul.mubr.f32.gmra.mrb[0].mxu0 %v926
  %v928 = vpop.f32.mrb[0].mxu0
  %v929 = vadd.f32 %v661, %v928
  %v930 = vpop.f32.mrb[0].mxu0
  %931 = vmatprep.mubr.f32.mxu0 0.0
  %v932 = vand.u32 %v86, 4294901760
  %v933 = vsub.f32 %v86, %v932
  %934 = vmatmul.mubr.f32.gmra.mrb[0].mxu0 %v933
  %v935 = vpop.f32.mrb[0].mxu0
  %v936 = vadd.f32 %v667, %v935
  %v937 = vpop.f32.mrb[0].mxu0
  %938 = vmatprep.mubr.f32.mxu0 0.0
  %v939 = vand.u32 %v89, 4294901760
  %v940 = vsub.f32 %v89, %v939
  %941 = vmatmul.mubr.f32.gmra.mrb[0].mxu0 %v940
  %v942 = vpop.f32.mrb[0].mxu0
  %v943 = vadd.f32 %v673, %v942
  %v944 = vpop.f32.mrb[0].mxu0
  %945 = vmatprep.mubr.f32.mxu0 0.0
  %v946 = vand.u32 %v92, 4294901760
  %v947 = vsub.f32 %v92, %v946
  %948 = vmatmul.mubr.f32.gmra.mrb[0].mxu0 %v947
  %v949 = vpop.f32.mrb[0].mxu0
  %v950 = vadd.f32 %v679, %v949
  %v951 = vpop.f32.mrb[0].mxu0
  %952 = vmatprep.mubr.f32.mxu0 0.0
  %v953 = vand.u32 %v95, 4294901760
  %v954 = vsub.f32 %v95, %v953
  %955 = vmatmul.mubr.f32.gmra.mrb[0].mxu0 %v954
  %v956 = vpop.f32.mrb[0].mxu0
  %v957 = vadd.f32 %v685, %v956
  %v958 = vpop.f32.mrb[0].mxu0
  %959 = vmatprep.mubr.f32.mxu0 0.0
  %v960 = vand.u32 %v98, 4294901760
  %v961 = vsub.f32 %v98, %v960
  %962 = vmatmul.mubr.f32.gmra.mrb[0].mxu0 %v961
  %v963 = vpop.f32.mrb[0].mxu0
  %v964 = vadd.f32 %v691, %v963
  %v965 = vpop.f32.mrb[0].mxu0
  %966 = vmatprep.mubr.f32.mxu0 0.0
  %v967 = vand.u32 %v101, 4294901760
  %v968 = vsub.f32 %v101, %v967
  %969 = vmatmul.mubr.f32.gmra.mrb[0].mxu0 %v968
  %v970 = vpop.f32.mrb[0].mxu0
  %v971 = vadd.f32 %v697, %v970
  %v972 = vpop.f32.mrb[0].mxu0
  %973 = vmatprep.mubr.f32.mxu0 0.0
  %v974 = vand.u32 %v104, 4294901760
  %v975 = vsub.f32 %v104, %v974
  %976 = vmatmul.mubr.f32.gmra.mrb[0].mxu0 %v975
  %v977 = vpop.f32.mrb[0].mxu0
  %v978 = vadd.f32 %v703, %v977
  %v979 = vpop.f32.mrb[0].mxu0
  %980 = vmatprep.mubr.f32.mxu0 0.0
  %v981 = vand.u32 %v107, 4294901760
  %v982 = vsub.f32 %v107, %v981
  %983 = vmatmul.mubr.f32.gmra.mrb[0].mxu0 %v982
  %v984 = vpop.f32.mrb[0].mxu0
  %v985 = vadd.f32 %v709, %v984
  %v986 = vpop.f32.mrb[0].mxu0
  %987 = vmatprep.mubr.f32.mxu0 0.0
  %v988 = vand.u32 %v110, 4294901760
  %v989 = vsub.f32 %v110, %v988
  %990 = vmatmul.mubr.f32.gmra.mrb[0].mxu0 %v989
  %v991 = vpop.f32.mrb[0].mxu0
  %v992 = vadd.f32 %v715, %v991
  %v993 = vpop.f32.mrb[0].mxu0
  %994 = vmatprep.mubr.f32.mxu0 0.0
  %v995 = vand.u32 %v113, 4294901760
  %v996 = vsub.f32 %v113, %v995
  %997 = vmatmul.mubr.f32.gmra.mrb[0].mxu0 %v996
  %v998 = vpop.f32.mrb[0].mxu0
  %v999 = vadd.f32 %v721, %v998
  %v1000 = vpop.f32.mrb[0].mxu0
  %1001 = vmatprep.mubr.f32.mxu0 0.0
  %v1002 = vand.u32 %v116, 4294901760
  %v1003 = vsub.f32 %v116, %v1002
  %1004 = vmatmul.mubr.f32.gmra.mrb[0].mxu0 %v1003
  %v1005 = vpop.f32.mrb[0].mxu0
  %v1006 = vadd.f32 %v727, %v1005
  %v1007 = vpop.f32.mrb[0].mxu0
  %1008 = vmatprep.mubr.f32.mxu0 0.0
  %v1009 = vand.u32 %v119, 4294901760
  %v1010 = vsub.f32 %v119, %v1009
  %1011 = vmatmul.mubr.f32.gmra.mrb[0].mxu0 %v1010
  %v1012 = vpop.f32.mrb[0].mxu0
  %v1013 = vadd.f32 %v733, %v1012
  %v1014 = vpop.f32.mrb[0].mxu0
  %1015 = vmatprep.mubr.f32.mxu0 0.0
  %v1016 = vand.u32 %v122, 4294901760
  %v1017 = vsub.f32 %v122, %v1016
  %1018 = vmatmul.mubr.f32.gmra.mrb[0].mxu0 %v1017
  %v1019 = vpop.f32.mrb[0].mxu0
  %v1020 = vadd.f32 %v739, %v1019
  %v1021 = vpop.f32.mrb[0].mxu0
  %1022 = vmatprep.mubr.f32.mxu0 0.0
  %v1023 = vand.u32 %v125, 4294901760
  %v1024 = vsub.f32 %v125, %v1023
  %1025 = vmatmul.mubr.f32.gmra.mrb[0].mxu0 %v1024
  %v1026 = vpop.f32.mrb[0].mxu0
  %v1027 = vadd.f32 %v745, %v1026
  %v1028 = vpop.f32.mrb[0].mxu0
  %1029 = vmatprep.mubr.f32.mxu0 0.0
  %v1030 = vand.u32 %v128, 4294901760
  %v1031 = vsub.f32 %v128, %v1030
  %1032 = vmatmul.mubr.f32.gmra.mrb[0].mxu0 %v1031
  %v1033 = vpop.f32.mrb[0].mxu0
  %v1034 = vadd.f32 %v751, %v1033
  %v1035 = vpop.f32.mrb[0].mxu0
  %1036 = vmatprep.mubr.f32.mxu0 0.0
  %v1037 = vand.u32 %v131, 4294901760
  %v1038 = vsub.f32 %v131, %v1037
  %1039 = vmatmul.mubr.f32.gmra.mrb[0].mxu0 %v1038
  %v1040 = vpop.f32.mrb[0].mxu0
  %v1041 = vadd.f32 %v757, %v1040
  %v1042 = vpop.f32.mrb[0].mxu0
  %1043 = vmatprep.mubr.f32.mxu0 0.0
  %v1044 = vand.u32 %v134, 4294901760
  %v1045 = vsub.f32 %v134, %v1044
  %1046 = vmatmul.mubr.f32.gmra.mrb[0].mxu0 %v1045
  %v1047 = vpop.f32.mrb[0].mxu0
  %v1048 = vadd.f32 %v763, %v1047
  %v1049 = vpop.f32.mrb[0].mxu0
  %1050 = vmatprep.mubr.f32.mxu0 0.0
  %v1051 = vand.u32 %v137, 4294901760
  %v1052 = vsub.f32 %v137, %v1051
  %1053 = vmatmul.mubr.f32.gmra.mrb[0].mxu0 %v1052
  %v1054 = vpop.f32.mrb[0].mxu0
  %v1055 = vadd.f32 %v769, %v1054
  %v1056 = vpop.f32.mrb[0].mxu0
  %1057 = vmatprep.mubr.f32.mxu0 0.0
  %v1058 = vand.u32 %v140, 4294901760
  %v1059 = vsub.f32 %v140, %v1058
  %1060 = vmatmul.mubr.f32.gmra.mrb[0].mxu0 %v1059
  %v1061 = vpop.f32.mrb[0].mxu0
  %v1062 = vadd.f32 %v775, %v1061
  %v1063 = vpop.f32.mrb[0].mxu0
  %1064 = vmatprep.mubr.f32.mxu0 0.0
  %v1065 = vand.u32 %v143, 4294901760
  %v1066 = vsub.f32 %v143, %v1065
  %1067 = vmatmul.mubr.f32.gmra.mrb[0].mxu0 %v1066
  %v1068 = vpop.f32.mrb[0].mxu0
  %v1069 = vadd.f32 %v781, %v1068
  %v1070 = vpop.f32.mrb[0].mxu0
  %1071 = vmatprep.mubr.f32.mxu0 0.0
  %v1072 = vand.u32 %v146, 4294901760
  %v1073 = vsub.f32 %v146, %v1072
  %1074 = vmatmul.mubr.f32.gmra.mrb[0].mxu0 %v1073
  %v1075 = vpop.f32.mrb[0].mxu0
  %v1076 = vadd.f32 %v787, %v1075
  %v1077 = vpop.f32.mrb[0].mxu0
  %1078 = vmatprep.mubr.f32.mxu0 0.0
  %v1079 = vand.u32 %v149, 4294901760
  %v1080 = vsub.f32 %v149, %v1079
  %1081 = vmatmul.mubr.f32.gmra.mrb[0].mxu0 %v1080
  %v1082 = vpop.f32.mrb[0].mxu0
  %v1083 = vadd.f32 %v793, %v1082
  %v1084 = vpop.f32.mrb[0].mxu0
  %1085 = vmatprep.mubr.f32.mxu0 0.0
  %v1086 = vand.u32 %v152, 4294901760
  %v1087 = vsub.f32 %v152, %v1086
  %1088 = vmatmul.mubr.f32.gmra.mrb[0].mxu0 %v1087
  %v1089 = vpop.f32.mrb[0].mxu0
  %v1090 = vadd.f32 %v799, %v1089
  %v1091 = vpop.f32.mrb[0].mxu0
  %1092 = vmatprep.mubr.f32.mxu0 0.0
  %v1093 = vand.u32 %v155, 4294901760
  %v1094 = vsub.f32 %v155, %v1093
  %1095 = vmatmul.mubr.f32.gmra.mrb[0].mxu0 %v1094
  %v1096 = vpop.f32.mrb[0].mxu0
  %v1097 = vadd.f32 %v805, %v1096
  %v1098 = vpop.f32.mrb[0].mxu0
  %1099 = vmatprep.mubr.f32.mxu0 0.0
  %v1100 = vand.u32 %v158, 4294901760
  %v1101 = vsub.f32 %v158, %v1100
  %1102 = vmatmul.mubr.f32.gmra.mrb[0].mxu0 %v1101
  %v1103 = vpop.f32.mrb[0].mxu0
  %v1104 = vadd.f32 %v811, %v1103
  %v1105 = vpop.f32.mrb[0].mxu0
  %1106 = vmatprep.mubr.f32.mxu0 0.0
  %v1107 = vand.u32 %v161, 4294901760
  %v1108 = vsub.f32 %v161, %v1107
  %1109 = vmatmul.mubr.f32.gmra.mrb[0].mxu0 %v1108
  %v1110 = vpop.f32.mrb[0].mxu0
  %v1111 = vadd.f32 %v817, %v1110
  %v1112 = vpop.f32.mrb[0].mxu0
  %1113 = vmatprep.mubr.f32.mxu0 0.0
  %v1114 = vand.u32 %v164, 4294901760
  %v1115 = vsub.f32 %v164, %v1114
  %1116 = vmatmul.mubr.f32.gmra.mrb[0].mxu0 %v1115
  %v1117 = vpop.f32.mrb[0].mxu0
  %v1118 = vadd.f32 %v823, %v1117
  %v1119 = vpop.f32.mrb[0].mxu0
  %1120 = vmatprep.mubr.f32.mxu0 0.0
  %v1121 = vand.u32 %v167, 4294901760
  %v1122 = vsub.f32 %v167, %v1121
  %1123 = vmatmul.mubr.f32.gmra.mrb[0].mxu0 %v1122
  %v1124 = vpop.f32.mrb[0].mxu0
  %v1125 = vadd.f32 %v829, %v1124
  %v1126 = vpop.f32.mrb[0].mxu0
  %1127 = vmatprep.mubr.f32.mxu0 0.0
  %v1128 = vand.u32 %v170, 4294901760
  %v1129 = vsub.f32 %v170, %v1128
  %1130 = vmatmul.mubr.f32.gmra.mrb[0].mxu0 %v1129
  %v1131 = vpop.f32.mrb[0].mxu0
  %v1132 = vadd.f32 %v835, %v1131
  %v1133 = vpop.f32.mrb[0].mxu0
  %1134 = vdwg.mxu0
  %1135 = vmatprep.subr.mxu0 0.0
  %v1136 = vand.u32 %v64, 4294901760
  %1137 = vmatpush1.msra.mxu0 %v1136
  %1138 = vmatprep.subr.mxu0 0.0
  %v1139 = vand.u32 %v65, 4294901760
  %1140 = vmatpush1.msra.mxu0 %v1139
  %1141 = vmatprep.subr.mxu0 0.0
  %v1142 = vand.u32 %v66, 4294901760
  %1143 = vmatpush1.msra.mxu0 %v1142
  %1144 = vmatprep.subr.mxu0 0.0
  %v1145 = vand.u32 %v67, 4294901760
  %1146 = vmatpush1.msra.mxu0 %v1145
  %1147 = vmatprep.subr.mxu0 0.0
  %1148 = vmatpush1.msra.mxu0 0.0
  %1149 = vmatprep.subr.mxu0 0.0
  %1150 = vmatpush1.msra.mxu0 0.0
  %1151 = vmatprep.subr.mxu0 0.0
  %1152 = vmatpush1.msra.mxu0 0.0
  %1153 = vmatprep.subr.mxu0 0.0
  %1154 = vmatpush1.msra.mxu0 0.0
  %1155 = vmatprep.subr.mxu0 0.0
  %1156 = vmatpush1.msra.mxu0 0.0
  %1157 = vmatprep.subr.mxu0 0.0
  %1158 = vmatpush1.msra.mxu0 0.0
  %1159 = vmatprep.subr.mxu0 0.0
  %1160 = vmatpush1.msra.mxu0 0.0
  %1161 = vmatprep.subr.mxu0 0.0
  %1162 = vmatpush1.msra.mxu0 0.0
  %1163 = vmatprep.subr.mxu0 0.0
  %1164 = vmatpush1.msra.mxu0 0.0
  %1165 = vmatprep.subr.mxu0 0.0
  %1166 = vmatpush1.msra.mxu0 0.0
  %1167 = vmatprep.subr.mxu0 0.0
  %1168 = vmatpush1.msra.mxu0 0.0
  %1169 = vmatprep.subr.mxu0 0.0
  %1170 = vmatpush1.msra.mxu0 0.0
  %1171 = vmatprep.subr.mxu0 0.0
  %1172 = vmatpush1.msra.mxu0 0.0
  %1173 = vmatprep.subr.mxu0 0.0
  %1174 = vmatpush1.msra.mxu0 0.0
  %1175 = vmatprep.subr.mxu0 0.0
  %1176 = vmatpush1.msra.mxu0 0.0
  %1177 = vmatprep.subr.mxu0 0.0
  %1178 = vmatpush1.msra.mxu0 0.0
  %1179 = vmatprep.subr.mxu0 0.0
  %1180 = vmatpush1.msra.mxu0 0.0
  %1181 = vmatprep.subr.mxu0 0.0
  %1182 = vmatpush1.msra.mxu0 0.0
  %1183 = vmatprep.subr.mxu0 0.0
  %1184 = vmatpush1.msra.mxu0 0.0
  %1185 = vmatprep.subr.mxu0 0.0
  %1186 = vmatpush1.msra.mxu0 0.0
  %1187 = vmatprep.subr.mxu0 0.0
  %1188 = vmatpush1.msra.mxu0 0.0
  %1189 = vmatprep.subr.mxu0 0.0
  %1190 = vmatpush1.msra.mxu0 0.0
  %1191 = vmatprep.subr.mxu0 0.0
  %1192 = vmatpush1.msra.mxu0 0.0
  %1193 = vmatprep.subr.mxu0 0.0
  %1194 = vmatpush1.msra.mxu0 0.0
  %1195 = vmatprep.subr.mxu0 0.0
  %1196 = vmatpush1.msra.mxu0 0.0
  %1197 = vmatprep.subr.mxu0 0.0
  %1198 = vmatpush1.msra.mxu0 0.0
  %1199 = vmatprep.subr.mxu0 0.0
  %1200 = vmatpush1.msra.mxu0 0.0
  %1201 = vmatprep.subr.mxu0 0.0
  %1202 = vmatpush1.msra.mxu0 0.0
  %1203 = vmatprep.mubr.f32.mxu0 0.0
  %v1204 = vand.u32 %v77, 4294901760
  %v1205 = vsub.f32 %v77, %v1204
  %v1206 = vand.u32 %v1205, 4294901760
  %1207 = vmatmul.mubr.f32.gmra.mrb[0].mxu0 %v1206
  %v1208 = vpop.f32.mrb[0].mxu0
  %v1209 = vadd.f32 %v915, %v1208
  %v1210 = vpop.f32.mrb[0].mxu0
  %1211 = vmatprep.mubr.f32.mxu0 0.0
  %v1212 = vand.u32 %v80, 4294901760
  %v1213 = vsub.f32 %v80, %v1212
  %v1214 = vand.u32 %v1213, 4294901760
  %1215 = vmatmul.mubr.f32.gmra.mrb[0].mxu0 %v1214
  %v1216 = vpop.f32.mrb[0].mxu0
  %v1217 = vadd.f32 %v922, %v1216
  %v1218 = vpop.f32.mrb[0].mxu0
  %1219 = vmatprep.mubr.f32.mxu0 0.0
  %v1220 = vand.u32 %v83, 4294901760
  %v1221 = vsub.f32 %v83, %v1220
  %v1222 = vand.u32 %v1221, 4294901760
  %1223 = vmatmul.mubr.f32.gmra.mrb[0].mxu0 %v1222
  %v1224 = vpop.f32.mrb[0].mxu0
  %v1225 = vadd.f32 %v929, %v1224
  %v1226 = vpop.f32.mrb[0].mxu0
  %1227 = vmatprep.mubr.f32.mxu0 0.0
  %v1228 = vand.u32 %v86, 4294901760
  %v1229 = vsub.f32 %v86, %v1228
  %v1230 = vand.u32 %v1229, 4294901760
  %1231 = vmatmul.mubr.f32.gmra.mrb[0].mxu0 %v1230
  %v1232 = vpop.f32.mrb[0].mxu0
  %v1233 = vadd.f32 %v936, %v1232
  %v1234 = vpop.f32.mrb[0].mxu0
  %1235 = vmatprep.mubr.f32.mxu0 0.0
  %v1236 = vand.u32 %v89, 4294901760
  %v1237 = vsub.f32 %v89, %v1236
  %v1238 = vand.u32 %v1237, 4294901760
  %1239 = vmatmul.mubr.f32.gmra.mrb[0].mxu0 %v1238
  %v1240 = vpop.f32.mrb[0].mxu0
  %v1241 = vadd.f32 %v943, %v1240
  %v1242 = vpop.f32.mrb[0].mxu0
  %1243 = vmatprep.mubr.f32.mxu0 0.0
  %v1244 = vand.u32 %v92, 4294901760
  %v1245 = vsub.f32 %v92, %v1244
  %v1246 = vand.u32 %v1245, 4294901760
  %1247 = vmatmul.mubr.f32.gmra.mrb[0].mxu0 %v1246
  %v1248 = vpop.f32.mrb[0].mxu0
  %v1249 = vadd.f32 %v950, %v1248
  %v1250 = vpop.f32.mrb[0].mxu0
  %1251 = vmatprep.mubr.f32.mxu0 0.0
  %v1252 = vand.u32 %v95, 4294901760
  %v1253 = vsub.f32 %v95, %v1252
  %v1254 = vand.u32 %v1253, 4294901760
  %1255 = vmatmul.mubr.f32.gmra.mrb[0].mxu0 %v1254
  %v1256 = vpop.f32.mrb[0].mxu0
  %v1257 = vadd.f32 %v957, %v1256
  %v1258 = vpop.f32.mrb[0].mxu0
  %1259 = vmatprep.mubr.f32.mxu0 0.0
  %v1260 = vand.u32 %v98, 4294901760
  %v1261 = vsub.f32 %v98, %v1260
  %v1262 = vand.u32 %v1261, 4294901760
  %1263 = vmatmul.mubr.f32.gmra.mrb[0].mxu0 %v1262
  %v1264 = vpop.f32.mrb[0].mxu0
  %v1265 = vadd.f32 %v964, %v1264
  %v1266 = vpop.f32.mrb[0].mxu0
  %1267 = vmatprep.mubr.f32.mxu0 0.0
  %v1268 = vand.u32 %v101, 4294901760
  %v1269 = vsub.f32 %v101, %v1268
  %v1270 = vand.u32 %v1269, 4294901760
  %1271 = vmatmul.mubr.f32.gmra.mrb[0].mxu0 %v1270
  %v1272 = vpop.f32.mrb[0].mxu0
  %v1273 = vadd.f32 %v971, %v1272
  %v1274 = vpop.f32.mrb[0].mxu0
  %1275 = vmatprep.mubr.f32.mxu0 0.0
  %v1276 = vand.u32 %v104, 4294901760
  %v1277 = vsub.f32 %v104, %v1276
  %v1278 = vand.u32 %v1277, 4294901760
  %1279 = vmatmul.mubr.f32.gmra.mrb[0].mxu0 %v1278
  %v1280 = vpop.f32.mrb[0].mxu0
  %v1281 = vadd.f32 %v978, %v1280
  %v1282 = vpop.f32.mrb[0].mxu0
  %1283 = vmatprep.mubr.f32.mxu0 0.0
  %v1284 = vand.u32 %v107, 4294901760
  %v1285 = vsub.f32 %v107, %v1284
  %v1286 = vand.u32 %v1285, 4294901760
  %1287 = vmatmul.mubr.f32.gmra.mrb[0].mxu0 %v1286
  %v1288 = vpop.f32.mrb[0].mxu0
  %v1289 = vadd.f32 %v985, %v1288
  %v1290 = vpop.f32.mrb[0].mxu0
  %1291 = vmatprep.mubr.f32.mxu0 0.0
  %v1292 = vand.u32 %v110, 4294901760
  %v1293 = vsub.f32 %v110, %v1292
  %v1294 = vand.u32 %v1293, 4294901760
  %1295 = vmatmul.mubr.f32.gmra.mrb[0].mxu0 %v1294
  %v1296 = vpop.f32.mrb[0].mxu0
  %v1297 = vadd.f32 %v992, %v1296
  %v1298 = vpop.f32.mrb[0].mxu0
  %1299 = vmatprep.mubr.f32.mxu0 0.0
  %v1300 = vand.u32 %v113, 4294901760
  %v1301 = vsub.f32 %v113, %v1300
  %v1302 = vand.u32 %v1301, 4294901760
  %1303 = vmatmul.mubr.f32.gmra.mrb[0].mxu0 %v1302
  %v1304 = vpop.f32.mrb[0].mxu0
  %v1305 = vadd.f32 %v999, %v1304
  %v1306 = vpop.f32.mrb[0].mxu0
  %1307 = vmatprep.mubr.f32.mxu0 0.0
  %v1308 = vand.u32 %v116, 4294901760
  %v1309 = vsub.f32 %v116, %v1308
  %v1310 = vand.u32 %v1309, 4294901760
  %1311 = vmatmul.mubr.f32.gmra.mrb[0].mxu0 %v1310
  %v1312 = vpop.f32.mrb[0].mxu0
  %v1313 = vadd.f32 %v1006, %v1312
  %v1314 = vpop.f32.mrb[0].mxu0
  %1315 = vmatprep.mubr.f32.mxu0 0.0
  %v1316 = vand.u32 %v119, 4294901760
  %v1317 = vsub.f32 %v119, %v1316
  %v1318 = vand.u32 %v1317, 4294901760
  %1319 = vmatmul.mubr.f32.gmra.mrb[0].mxu0 %v1318
  %v1320 = vpop.f32.mrb[0].mxu0
  %v1321 = vadd.f32 %v1013, %v1320
  %v1322 = vpop.f32.mrb[0].mxu0
  %1323 = vmatprep.mubr.f32.mxu0 0.0
  %v1324 = vand.u32 %v122, 4294901760
  %v1325 = vsub.f32 %v122, %v1324
  %v1326 = vand.u32 %v1325, 4294901760
  %1327 = vmatmul.mubr.f32.gmra.mrb[0].mxu0 %v1326
  %v1328 = vpop.f32.mrb[0].mxu0
  %v1329 = vadd.f32 %v1020, %v1328
  %v1330 = vpop.f32.mrb[0].mxu0
  %1331 = vmatprep.mubr.f32.mxu0 0.0
  %v1332 = vand.u32 %v125, 4294901760
  %v1333 = vsub.f32 %v125, %v1332
  %v1334 = vand.u32 %v1333, 4294901760
  %1335 = vmatmul.mubr.f32.gmra.mrb[0].mxu0 %v1334
  %v1336 = vpop.f32.mrb[0].mxu0
  %v1337 = vadd.f32 %v1027, %v1336
  %v1338 = vpop.f32.mrb[0].mxu0
  %1339 = vmatprep.mubr.f32.mxu0 0.0
  %v1340 = vand.u32 %v128, 4294901760
  %v1341 = vsub.f32 %v128, %v1340
  %v1342 = vand.u32 %v1341, 4294901760
  %1343 = vmatmul.mubr.f32.gmra.mrb[0].mxu0 %v1342
  %v1344 = vpop.f32.mrb[0].mxu0
  %v1345 = vadd.f32 %v1034, %v1344
  %v1346 = vpop.f32.mrb[0].mxu0
  %1347 = vmatprep.mubr.f32.mxu0 0.0
  %v1348 = vand.u32 %v131, 4294901760
  %v1349 = vsub.f32 %v131, %v1348
  %v1350 = vand.u32 %v1349, 4294901760
  %1351 = vmatmul.mubr.f32.gmra.mrb[0].mxu0 %v1350
  %v1352 = vpop.f32.mrb[0].mxu0
  %v1353 = vadd.f32 %v1041, %v1352
  %v1354 = vpop.f32.mrb[0].mxu0
  %1355 = vmatprep.mubr.f32.mxu0 0.0
  %v1356 = vand.u32 %v134, 4294901760
  %v1357 = vsub.f32 %v134, %v1356
  %v1358 = vand.u32 %v1357, 4294901760
  %1359 = vmatmul.mubr.f32.gmra.mrb[0].mxu0 %v1358
  %v1360 = vpop.f32.mrb[0].mxu0
  %v1361 = vadd.f32 %v1048, %v1360
  %v1362 = vpop.f32.mrb[0].mxu0
  %1363 = vmatprep.mubr.f32.mxu0 0.0
  %v1364 = vand.u32 %v137, 4294901760
  %v1365 = vsub.f32 %v137, %v1364
  %v1366 = vand.u32 %v1365, 4294901760
  %1367 = vmatmul.mubr.f32.gmra.mrb[0].mxu0 %v1366
  %v1368 = vpop.f32.mrb[0].mxu0
  %v1369 = vadd.f32 %v1055, %v1368
  %v1370 = vpop.f32.mrb[0].mxu0
  %1371 = vmatprep.mubr.f32.mxu0 0.0
  %v1372 = vand.u32 %v140, 4294901760
  %v1373 = vsub.f32 %v140, %v1372
  %v1374 = vand.u32 %v1373, 4294901760
  %1375 = vmatmul.mubr.f32.gmra.mrb[0].mxu0 %v1374
  %v1376 = vpop.f32.mrb[0].mxu0
  %v1377 = vadd.f32 %v1062, %v1376
  %v1378 = vpop.f32.mrb[0].mxu0
  %1379 = vmatprep.mubr.f32.mxu0 0.0
  %v1380 = vand.u32 %v143, 4294901760
  %v1381 = vsub.f32 %v143, %v1380
  %v1382 = vand.u32 %v1381, 4294901760
  %1383 = vmatmul.mubr.f32.gmra.mrb[0].mxu0 %v1382
  %v1384 = vpop.f32.mrb[0].mxu0
  %v1385 = vadd.f32 %v1069, %v1384
  %v1386 = vpop.f32.mrb[0].mxu0
  %1387 = vmatprep.mubr.f32.mxu0 0.0
  %v1388 = vand.u32 %v146, 4294901760
  %v1389 = vsub.f32 %v146, %v1388
  %v1390 = vand.u32 %v1389, 4294901760
  %1391 = vmatmul.mubr.f32.gmra.mrb[0].mxu0 %v1390
  %v1392 = vpop.f32.mrb[0].mxu0
  %v1393 = vadd.f32 %v1076, %v1392
  %v1394 = vpop.f32.mrb[0].mxu0
  %1395 = vmatprep.mubr.f32.mxu0 0.0
  %v1396 = vand.u32 %v149, 4294901760
  %v1397 = vsub.f32 %v149, %v1396
  %v1398 = vand.u32 %v1397, 4294901760
  %1399 = vmatmul.mubr.f32.gmra.mrb[0].mxu0 %v1398
  %v1400 = vpop.f32.mrb[0].mxu0
  %v1401 = vadd.f32 %v1083, %v1400
  %v1402 = vpop.f32.mrb[0].mxu0
  %1403 = vmatprep.mubr.f32.mxu0 0.0
  %v1404 = vand.u32 %v152, 4294901760
  %v1405 = vsub.f32 %v152, %v1404
  %v1406 = vand.u32 %v1405, 4294901760
  %1407 = vmatmul.mubr.f32.gmra.mrb[0].mxu0 %v1406
  %v1408 = vpop.f32.mrb[0].mxu0
  %v1409 = vadd.f32 %v1090, %v1408
  %v1410 = vpop.f32.mrb[0].mxu0
  %1411 = vmatprep.mubr.f32.mxu0 0.0
  %v1412 = vand.u32 %v155, 4294901760
  %v1413 = vsub.f32 %v155, %v1412
  %v1414 = vand.u32 %v1413, 4294901760
  %1415 = vmatmul.mubr.f32.gmra.mrb[0].mxu0 %v1414
  %v1416 = vpop.f32.mrb[0].mxu0
  %v1417 = vadd.f32 %v1097, %v1416
  %v1418 = vpop.f32.mrb[0].mxu0
  %1419 = vmatprep.mubr.f32.mxu0 0.0
  %v1420 = vand.u32 %v158, 4294901760
  %v1421 = vsub.f32 %v158, %v1420
  %v1422 = vand.u32 %v1421, 4294901760
  %1423 = vmatmul.mubr.f32.gmra.mrb[0].mxu0 %v1422
  %v1424 = vpop.f32.mrb[0].mxu0
  %v1425 = vadd.f32 %v1104, %v1424
  %v1426 = vpop.f32.mrb[0].mxu0
  %1427 = vmatprep.mubr.f32.mxu0 0.0
  %v1428 = vand.u32 %v161, 4294901760
  %v1429 = vsub.f32 %v161, %v1428
  %v1430 = vand.u32 %v1429, 4294901760
  %1431 = vmatmul.mubr.f32.gmra.mrb[0].mxu0 %v1430
  %v1432 = vpop.f32.mrb[0].mxu0
  %v1433 = vadd.f32 %v1111, %v1432
  %v1434 = vpop.f32.mrb[0].mxu0
  %1435 = vmatprep.mubr.f32.mxu0 0.0
  %v1436 = vand.u32 %v164, 4294901760
  %v1437 = vsub.f32 %v164, %v1436
  %v1438 = vand.u32 %v1437, 4294901760
  %1439 = vmatmul.mubr.f32.gmra.mrb[0].mxu0 %v1438
  %v1440 = vpop.f32.mrb[0].mxu0
  %v1441 = vadd.f32 %v1118, %v1440
  %v1442 = vpop.f32.mrb[0].mxu0
  %1443 = vmatprep.mubr.f32.mxu0 0.0
  %v1444 = vand.u32 %v167, 4294901760
  %v1445 = vsub.f32 %v167, %v1444
  %v1446 = vand.u32 %v1445, 4294901760
  %1447 = vmatmul.mubr.f32.gmra.mrb[0].mxu0 %v1446
  %v1448 = vpop.f32.mrb[0].mxu0
  %v1449 = vadd.f32 %v1125, %v1448
  %v1450 = vpop.f32.mrb[0].mxu0
  %1451 = vmatprep.mubr.f32.mxu0 0.0
  %v1452 = vand.u32 %v170, 4294901760
  %v1453 = vsub.f32 %v170, %v1452
  %v1454 = vand.u32 %v1453, 4294901760
  %1455 = vmatmul.mubr.f32.gmra.mrb[0].mxu0 %v1454
  %v1456 = vpop.f32.mrb[0].mxu0
  %v1457 = vadd.f32 %v1132, %v1456
  %v1458 = vpop.f32.mrb[0].mxu0
  %1459 = vdwg.mxu0
  %1460 = vmatprep.subr.mxu0 0.0
  %v1461 = vand.u32 %v64, 4294901760
  %v1462 = vsub.f32 %v64, %v1461
  %v1463 = vand.u32 %v1462, 4294901760
  %1464 = vmatpush1.msra.mxu0 %v1463
  %1465 = vmatprep.subr.mxu0 0.0
  %v1466 = vand.u32 %v65, 4294901760
  %v1467 = vsub.f32 %v65, %v1466
  %v1468 = vand.u32 %v1467, 4294901760
  %1469 = vmatpush1.msra.mxu0 %v1468
  %1470 = vmatprep.subr.mxu0 0.0
  %v1471 = vand.u32 %v66, 4294901760
  %v1472 = vsub.f32 %v66, %v1471
  %v1473 = vand.u32 %v1472, 4294901760
  %1474 = vmatpush1.msra.mxu0 %v1473
  %1475 = vmatprep.subr.mxu0 0.0
  %v1476 = vand.u32 %v67, 4294901760
  %v1477 = vsub.f32 %v67, %v1476
  %v1478 = vand.u32 %v1477, 4294901760
  %1479 = vmatpush1.msra.mxu0 %v1478
  %1480 = vmatprep.subr.mxu0 0.0
  %1481 = vmatpush1.msra.mxu0 0.0
  %1482 = vmatprep.subr.mxu0 0.0
  %1483 = vmatpush1.msra.mxu0 0.0
  %1484 = vmatprep.subr.mxu0 0.0
  %1485 = vmatpush1.msra.mxu0 0.0
  %1486 = vmatprep.subr.mxu0 0.0
  %1487 = vmatpush1.msra.mxu0 0.0
  %1488 = vmatprep.subr.mxu0 0.0
  %1489 = vmatpush1.msra.mxu0 0.0
  %1490 = vmatprep.subr.mxu0 0.0
  %1491 = vmatpush1.msra.mxu0 0.0
  %1492 = vmatprep.subr.mxu0 0.0
  %1493 = vmatpush1.msra.mxu0 0.0
  %1494 = vmatprep.subr.mxu0 0.0
  %1495 = vmatpush1.msra.mxu0 0.0
  %1496 = vmatprep.subr.mxu0 0.0
  %1497 = vmatpush1.msra.mxu0 0.0
  %1498 = vmatprep.subr.mxu0 0.0
  %1499 = vmatpush1.msra.mxu0 0.0
  %1500 = vmatprep.subr.mxu0 0.0
  %1501 = vmatpush1.msra.mxu0 0.0
  %1502 = vmatprep.subr.mxu0 0.0
  %1503 = vmatpush1.msra.mxu0 0.0
  %1504 = vmatprep.subr.mxu0 0.0
  %1505 = vmatpush1.msra.mxu0 0.0
  %1506 = vmatprep.subr.mxu0 0.0
  %1507 = vmatpush1.msra.mxu0 0.0
  %1508 = vmatprep.subr.mxu0 0.0
  %1509 = vmatpush1.msra.mxu0 0.0
  %1510 = vmatprep.subr.mxu0 0.0
  %1511 = vmatpush1.msra.mxu0 0.0
  %1512 = vmatprep.subr.mxu0 0.0
  %1513 = vmatpush1.msra.mxu0 0.0
  %1514 = vmatprep.subr.mxu0 0.0
  %1515 = vmatpush1.msra.mxu0 0.0
  %1516 = vmatprep.subr.mxu0 0.0
  %1517 = vmatpush1.msra.mxu0 0.0
  %1518 = vmatprep.subr.mxu0 0.0
  %1519 = vmatpush1.msra.mxu0 0.0
  %1520 = vmatprep.subr.mxu0 0.0
  %1521 = vmatpush1.msra.mxu0 0.0
  %1522 = vmatprep.subr.mxu0 0.0
  %1523 = vmatpush1.msra.mxu0 0.0
  %1524 = vmatprep.subr.mxu0 0.0
  %1525 = vmatpush1.msra.mxu0 0.0
  %1526 = vmatprep.subr.mxu0 0.0
  %1527 = vmatpush1.msra.mxu0 0.0
  %1528 = vmatprep.subr.mxu0 0.0
  %1529 = vmatpush1.msra.mxu0 0.0
  %1530 = vmatprep.subr.mxu0 0.0
  %1531 = vmatpush1.msra.mxu0 0.0
  %1532 = vmatprep.subr.mxu0 0.0
  %1533 = vmatpush1.msra.mxu0 0.0
  %1534 = vmatprep.subr.mxu0 0.0
  %1535 = vmatpush1.msra.mxu0 0.0
  %1536 = vmatprep.mubr.f32.mxu0 0.0
  %v1537 = vand.u32 %v77, 4294901760
  %1538 = vmatmul.mubr.f32.gmra.mrb[0].mxu0 %v1537
  %v1539 = vpop.f32.mrb[0].mxu0
  %v1540 = vadd.f32 %v1209, %v1539
  %v1541 = vpop.f32.mrb[0].mxu0
  %1542 = vmatprep.mubr.f32.mxu0 0.0
  %v1543 = vand.u32 %v80, 4294901760
  %1544 = vmatmul.mubr.f32.gmra.mrb[0].mxu0 %v1543
  %v1545 = vpop.f32.mrb[0].mxu0
  %v1546 = vadd.f32 %v1217, %v1545
  %v1547 = vpop.f32.mrb[0].mxu0
  %1548 = vmatprep.mubr.f32.mxu0 0.0
  %v1549 = vand.u32 %v83, 4294901760
  %1550 = vmatmul.mubr.f32.gmra.mrb[0].mxu0 %v1549
  %v1551 = vpop.f32.mrb[0].mxu0
  %v1552 = vadd.f32 %v1225, %v1551
  %v1553 = vpop.f32.mrb[0].mxu0
  %1554 = vmatprep.mubr.f32.mxu0 0.0
  %v1555 = vand.u32 %v86, 4294901760
  %1556 = vmatmul.mubr.f32.gmra.mrb[0].mxu0 %v1555
  %v1557 = vpop.f32.mrb[0].mxu0
  %v1558 = vadd.f32 %v1233, %v1557
  %v1559 = vpop.f32.mrb[0].mxu0
  %1560 = vmatprep.mubr.f32.mxu0 0.0
  %v1561 = vand.u32 %v89, 4294901760
  %1562 = vmatmul.mubr.f32.gmra.mrb[0].mxu0 %v1561
  %v1563 = vpop.f32.mrb[0].mxu0
  %v1564 = vadd.f32 %v1241, %v1563
  %v1565 = vpop.f32.mrb[0].mxu0
  %1566 = vmatprep.mubr.f32.mxu0 0.0
  %v1567 = vand.u32 %v92, 4294901760
  %1568 = vmatmul.mubr.f32.gmra.mrb[0].mxu0 %v1567
  %v1569 = vpop.f32.mrb[0].mxu0
  %v1570 = vadd.f32 %v1249, %v1569
  %v1571 = vpop.f32.mrb[0].mxu0
  %1572 = vmatprep.mubr.f32.mxu0 0.0
  %v1573 = vand.u32 %v95, 4294901760
  %1574 = vmatmul.mubr.f32.gmra.mrb[0].mxu0 %v1573
  %v1575 = vpop.f32.mrb[0].mxu0
  %v1576 = vadd.f32 %v1257, %v1575
  %v1577 = vpop.f32.mrb[0].mxu0
  %1578 = vmatprep.mubr.f32.mxu0 0.0
  %v1579 = vand.u32 %v98, 4294901760
  %1580 = vmatmul.mubr.f32.gmra.mrb[0].mxu0 %v1579
  %v1581 = vpop.f32.mrb[0].mxu0
  %v1582 = vadd.f32 %v1265, %v1581
  %v1583 = vpop.f32.mrb[0].mxu0
  %1584 = vmatprep.mubr.f32.mxu0 0.0
  %v1585 = vand.u32 %v101, 4294901760
  %1586 = vmatmul.mubr.f32.gmra.mrb[0].mxu0 %v1585
  %v1587 = vpop.f32.mrb[0].mxu0
  %v1588 = vadd.f32 %v1273, %v1587
  %v1589 = vpop.f32.mrb[0].mxu0
  %1590 = vmatprep.mubr.f32.mxu0 0.0
  %v1591 = vand.u32 %v104, 4294901760
  %1592 = vmatmul.mubr.f32.gmra.mrb[0].mxu0 %v1591
  %v1593 = vpop.f32.mrb[0].mxu0
  %v1594 = vadd.f32 %v1281, %v1593
  %v1595 = vpop.f32.mrb[0].mxu0
  %1596 = vmatprep.mubr.f32.mxu0 0.0
  %v1597 = vand.u32 %v107, 4294901760
  %1598 = vmatmul.mubr.f32.gmra.mrb[0].mxu0 %v1597
  %v1599 = vpop.f32.mrb[0].mxu0
  %v1600 = vadd.f32 %v1289, %v1599
  %v1601 = vpop.f32.mrb[0].mxu0
  %1602 = vmatprep.mubr.f32.mxu0 0.0
  %v1603 = vand.u32 %v110, 4294901760
  %1604 = vmatmul.mubr.f32.gmra.mrb[0].mxu0 %v1603
  %v1605 = vpop.f32.mrb[0].mxu0
  %v1606 = vadd.f32 %v1297, %v1605
  %v1607 = vpop.f32.mrb[0].mxu0
  %1608 = vmatprep.mubr.f32.mxu0 0.0
  %v1609 = vand.u32 %v113, 4294901760
  %1610 = vmatmul.mubr.f32.gmra.mrb[0].mxu0 %v1609
  %v1611 = vpop.f32.mrb[0].mxu0
  %v1612 = vadd.f32 %v1305, %v1611
  %v1613 = vpop.f32.mrb[0].mxu0
  %1614 = vmatprep.mubr.f32.mxu0 0.0
  %v1615 = vand.u32 %v116, 4294901760
  %1616 = vmatmul.mubr.f32.gmra.mrb[0].mxu0 %v1615
  %v1617 = vpop.f32.mrb[0].mxu0
  %v1618 = vadd.f32 %v1313, %v1617
  %v1619 = vpop.f32.mrb[0].mxu0
  %1620 = vmatprep.mubr.f32.mxu0 0.0
  %v1621 = vand.u32 %v119, 4294901760
  %1622 = vmatmul.mubr.f32.gmra.mrb[0].mxu0 %v1621
  %v1623 = vpop.f32.mrb[0].mxu0
  %v1624 = vadd.f32 %v1321, %v1623
  %v1625 = vpop.f32.mrb[0].mxu0
  %1626 = vmatprep.mubr.f32.mxu0 0.0
  %v1627 = vand.u32 %v122, 4294901760
  %1628 = vmatmul.mubr.f32.gmra.mrb[0].mxu0 %v1627
  %v1629 = vpop.f32.mrb[0].mxu0
  %v1630 = vadd.f32 %v1329, %v1629
  %v1631 = vpop.f32.mrb[0].mxu0
  %1632 = vmatprep.mubr.f32.mxu0 0.0
  %v1633 = vand.u32 %v125, 4294901760
  %1634 = vmatmul.mubr.f32.gmra.mrb[0].mxu0 %v1633
  %v1635 = vpop.f32.mrb[0].mxu0
  %v1636 = vadd.f32 %v1337, %v1635
  %v1637 = vpop.f32.mrb[0].mxu0
  %1638 = vmatprep.mubr.f32.mxu0 0.0
  %v1639 = vand.u32 %v128, 4294901760
  %1640 = vmatmul.mubr.f32.gmra.mrb[0].mxu0 %v1639
  %v1641 = vpop.f32.mrb[0].mxu0
  %v1642 = vadd.f32 %v1345, %v1641
  %v1643 = vpop.f32.mrb[0].mxu0
  %1644 = vmatprep.mubr.f32.mxu0 0.0
  %v1645 = vand.u32 %v131, 4294901760
  %1646 = vmatmul.mubr.f32.gmra.mrb[0].mxu0 %v1645
  %v1647 = vpop.f32.mrb[0].mxu0
  %v1648 = vadd.f32 %v1353, %v1647
  %v1649 = vpop.f32.mrb[0].mxu0
  %1650 = vmatprep.mubr.f32.mxu0 0.0
  %v1651 = vand.u32 %v134, 4294901760
  %1652 = vmatmul.mubr.f32.gmra.mrb[0].mxu0 %v1651
  %v1653 = vpop.f32.mrb[0].mxu0
  %v1654 = vadd.f32 %v1361, %v1653
  %v1655 = vpop.f32.mrb[0].mxu0
  %1656 = vmatprep.mubr.f32.mxu0 0.0
  %v1657 = vand.u32 %v137, 4294901760
  %1658 = vmatmul.mubr.f32.gmra.mrb[0].mxu0 %v1657
  %v1659 = vpop.f32.mrb[0].mxu0
  %v1660 = vadd.f32 %v1369, %v1659
  %v1661 = vpop.f32.mrb[0].mxu0
  %1662 = vmatprep.mubr.f32.mxu0 0.0
  %v1663 = vand.u32 %v140, 4294901760
  %1664 = vmatmul.mubr.f32.gmra.mrb[0].mxu0 %v1663
  %v1665 = vpop.f32.mrb[0].mxu0
  %v1666 = vadd.f32 %v1377, %v1665
  %v1667 = vpop.f32.mrb[0].mxu0
  %1668 = vmatprep.mubr.f32.mxu0 0.0
  %v1669 = vand.u32 %v143, 4294901760
  %1670 = vmatmul.mubr.f32.gmra.mrb[0].mxu0 %v1669
  %v1671 = vpop.f32.mrb[0].mxu0
  %v1672 = vadd.f32 %v1385, %v1671
  %v1673 = vpop.f32.mrb[0].mxu0
  %1674 = vmatprep.mubr.f32.mxu0 0.0
  %v1675 = vand.u32 %v146, 4294901760
  %1676 = vmatmul.mubr.f32.gmra.mrb[0].mxu0 %v1675
  %v1677 = vpop.f32.mrb[0].mxu0
  %v1678 = vadd.f32 %v1393, %v1677
  %v1679 = vpop.f32.mrb[0].mxu0
  %1680 = vmatprep.mubr.f32.mxu0 0.0
  %v1681 = vand.u32 %v149, 4294901760
  %1682 = vmatmul.mubr.f32.gmra.mrb[0].mxu0 %v1681
  %v1683 = vpop.f32.mrb[0].mxu0
  %v1684 = vadd.f32 %v1401, %v1683
  %v1685 = vpop.f32.mrb[0].mxu0
  %1686 = vmatprep.mubr.f32.mxu0 0.0
  %v1687 = vand.u32 %v152, 4294901760
  %1688 = vmatmul.mubr.f32.gmra.mrb[0].mxu0 %v1687
  %v1689 = vpop.f32.mrb[0].mxu0
  %v1690 = vadd.f32 %v1409, %v1689
  %v1691 = vpop.f32.mrb[0].mxu0
  %1692 = vmatprep.mubr.f32.mxu0 0.0
  %v1693 = vand.u32 %v155, 4294901760
  %1694 = vmatmul.mubr.f32.gmra.mrb[0].mxu0 %v1693
  %v1695 = vpop.f32.mrb[0].mxu0
  %v1696 = vadd.f32 %v1417, %v1695
  %v1697 = vpop.f32.mrb[0].mxu0
  %1698 = vmatprep.mubr.f32.mxu0 0.0
  %v1699 = vand.u32 %v158, 4294901760
  %1700 = vmatmul.mubr.f32.gmra.mrb[0].mxu0 %v1699
  %v1701 = vpop.f32.mrb[0].mxu0
  %v1702 = vadd.f32 %v1425, %v1701
  %v1703 = vpop.f32.mrb[0].mxu0
  %1704 = vmatprep.mubr.f32.mxu0 0.0
  %v1705 = vand.u32 %v161, 4294901760
  %1706 = vmatmul.mubr.f32.gmra.mrb[0].mxu0 %v1705
  %v1707 = vpop.f32.mrb[0].mxu0
  %v1708 = vadd.f32 %v1433, %v1707
  %v1709 = vpop.f32.mrb[0].mxu0
  %1710 = vmatprep.mubr.f32.mxu0 0.0
  %v1711 = vand.u32 %v164, 4294901760
  %1712 = vmatmul.mubr.f32.gmra.mrb[0].mxu0 %v1711
  %v1713 = vpop.f32.mrb[0].mxu0
  %v1714 = vadd.f32 %v1441, %v1713
  %v1715 = vpop.f32.mrb[0].mxu0
  %1716 = vmatprep.mubr.f32.mxu0 0.0
  %v1717 = vand.u32 %v167, 4294901760
  %1718 = vmatmul.mubr.f32.gmra.mrb[0].mxu0 %v1717
  %v1719 = vpop.f32.mrb[0].mxu0
  %v1720 = vadd.f32 %v1449, %v1719
  %v1721 = vpop.f32.mrb[0].mxu0
  %1722 = vmatprep.mubr.f32.mxu0 0.0
  %v1723 = vand.u32 %v170, 4294901760
  %1724 = vmatmul.mubr.f32.gmra.mrb[0].mxu0 %v1723
  %v1725 = vpop.f32.mrb[0].mxu0
  %v1726 = vadd.f32 %v1457, %v1725
  %v1727 = vpop.f32.mrb[0].mxu0
  %1728 = vdwg.mxu0
  %1729 = vmatprep.subr.mxu0 0.0
  %v1730 = vand.u32 %v64, 4294901760
  %1731 = vmatpush1.msra.mxu0 %v1730
  %1732 = vmatprep.subr.mxu0 0.0
  %v1733 = vand.u32 %v65, 4294901760
  %1734 = vmatpush1.msra.mxu0 %v1733
  %1735 = vmatprep.subr.mxu0 0.0
  %v1736 = vand.u32 %v66, 4294901760
  %1737 = vmatpush1.msra.mxu0 %v1736
  %1738 = vmatprep.subr.mxu0 0.0
  %v1739 = vand.u32 %v67, 4294901760
  %1740 = vmatpush1.msra.mxu0 %v1739
  %1741 = vmatprep.subr.mxu0 0.0
  %1742 = vmatpush1.msra.mxu0 0.0
  %1743 = vmatprep.subr.mxu0 0.0
  %1744 = vmatpush1.msra.mxu0 0.0
  %1745 = vmatprep.subr.mxu0 0.0
  %1746 = vmatpush1.msra.mxu0 0.0
  %1747 = vmatprep.subr.mxu0 0.0
  %1748 = vmatpush1.msra.mxu0 0.0
  %1749 = vmatprep.subr.mxu0 0.0
  %1750 = vmatpush1.msra.mxu0 0.0
  %1751 = vmatprep.subr.mxu0 0.0
  %1752 = vmatpush1.msra.mxu0 0.0
  %1753 = vmatprep.subr.mxu0 0.0
  %1754 = vmatpush1.msra.mxu0 0.0
  %1755 = vmatprep.subr.mxu0 0.0
  %1756 = vmatpush1.msra.mxu0 0.0
  %1757 = vmatprep.subr.mxu0 0.0
  %1758 = vmatpush1.msra.mxu0 0.0
  %1759 = vmatprep.subr.mxu0 0.0
  %1760 = vmatpush1.msra.mxu0 0.0
  %1761 = vmatprep.subr.mxu0 0.0
  %1762 = vmatpush1.msra.mxu0 0.0
  %1763 = vmatprep.subr.mxu0 0.0
  %1764 = vmatpush1.msra.mxu0 0.0
  %1765 = vmatprep.subr.mxu0 0.0
  %1766 = vmatpush1.msra.mxu0 0.0
  %1767 = vmatprep.subr.mxu0 0.0
  %1768 = vmatpush1.msra.mxu0 0.0
  %1769 = vmatprep.subr.mxu0 0.0
  %1770 = vmatpush1.msra.mxu0 0.0
  %1771 = vmatprep.subr.mxu0 0.0
  %1772 = vmatpush1.msra.mxu0 0.0
  %1773 = vmatprep.subr.mxu0 0.0
  %1774 = vmatpush1.msra.mxu0 0.0
  %1775 = vmatprep.subr.mxu0 0.0
  %1776 = vmatpush1.msra.mxu0 0.0
  %1777 = vmatprep.subr.mxu0 0.0
  %1778 = vmatpush1.msra.mxu0 0.0
  %1779 = vmatprep.subr.mxu0 0.0
  %1780 = vmatpush1.msra.mxu0 0.0
  %1781 = vmatprep.subr.mxu0 0.0
  %1782 = vmatpush1.msra.mxu0 0.0
  %1783 = vmatprep.subr.mxu0 0.0
  %1784 = vmatpush1.msra.mxu0 0.0
  %1785 = vmatprep.subr.mxu0 0.0
  %1786 = vmatpush1.msra.mxu0 0.0
  %1787 = vmatprep.subr.mxu0 0.0
  %1788 = vmatpush1.msra.mxu0 0.0
  %1789 = vmatprep.subr.mxu0 0.0
  %1790 = vmatpush1.msra.mxu0 0.0
  %1791 = vmatprep.subr.mxu0 0.0
  %1792 = vmatpush1.msra.mxu0 0.0
  %1793 = vmatprep.subr.mxu0 0.0
  %1794 = vmatpush1.msra.mxu0 0.0
  %1795 = vmatprep.subr.mxu0 0.0
  %1796 = vmatpush1.msra.mxu0 0.0
  %1797 = vmatprep.mubr.f32.mxu0 0.0
  %v1798 = vand.u32 %v77, 4294901760
  %1799 = vmatmul.mubr.f32.gmra.mrb[0].mxu0 %v1798
  %v1800 = vpop.f32.mrb[0].mxu0
  %v1801 = vadd.f32 %v1540, %v1800
  %v1802 = vpop.f32.mrb[0].mxu0
  %1803 = vmatprep.mubr.f32.mxu0 0.0
  %v1804 = vand.u32 %v80, 4294901760
  %1805 = vmatmul.mubr.f32.gmra.mrb[0].mxu0 %v1804
  %v1806 = vpop.f32.mrb[0].mxu0
  %v1807 = vadd.f32 %v1546, %v1806
  %v1808 = vpop.f32.mrb[0].mxu0
  %1809 = vmatprep.mubr.f32.mxu0 0.0
  %v1810 = vand.u32 %v83, 4294901760
  %1811 = vmatmul.mubr.f32.gmra.mrb[0].mxu0 %v1810
  %v1812 = vpop.f32.mrb[0].mxu0
  %v1813 = vadd.f32 %v1552, %v1812
  %v1814 = vpop.f32.mrb[0].mxu0
  %1815 = vmatprep.mubr.f32.mxu0 0.0
  %v1816 = vand.u32 %v86, 4294901760
  %1817 = vmatmul.mubr.f32.gmra.mrb[0].mxu0 %v1816
  %v1818 = vpop.f32.mrb[0].mxu0
  %v1819 = vadd.f32 %v1558, %v1818
  %v1820 = vpop.f32.mrb[0].mxu0
  %1821 = vmatprep.mubr.f32.mxu0 0.0
  %v1822 = vand.u32 %v89, 4294901760
  %1823 = vmatmul.mubr.f32.gmra.mrb[0].mxu0 %v1822
  %v1824 = vpop.f32.mrb[0].mxu0
  %v1825 = vadd.f32 %v1564, %v1824
  %v1826 = vpop.f32.mrb[0].mxu0
  %1827 = vmatprep.mubr.f32.mxu0 0.0
  %v1828 = vand.u32 %v92, 4294901760
  %1829 = vmatmul.mubr.f32.gmra.mrb[0].mxu0 %v1828
  %v1830 = vpop.f32.mrb[0].mxu0
  %v1831 = vadd.f32 %v1570, %v1830
  %v1832 = vpop.f32.mrb[0].mxu0
  %1833 = vmatprep.mubr.f32.mxu0 0.0
  %v1834 = vand.u32 %v95, 4294901760
  %1835 = vmatmul.mubr.f32.gmra.mrb[0].mxu0 %v1834
  %v1836 = vpop.f32.mrb[0].mxu0
  %v1837 = vadd.f32 %v1576, %v1836
  %v1838 = vpop.f32.mrb[0].mxu0
  %1839 = vmatprep.mubr.f32.mxu0 0.0
  %v1840 = vand.u32 %v98, 4294901760
  %1841 = vmatmul.mubr.f32.gmra.mrb[0].mxu0 %v1840
  %v1842 = vpop.f32.mrb[0].mxu0
  %v1843 = vadd.f32 %v1582, %v1842
  %v1844 = vpop.f32.mrb[0].mxu0
  %1845 = vmatprep.mubr.f32.mxu0 0.0
  %v1846 = vand.u32 %v101, 4294901760
  %1847 = vmatmul.mubr.f32.gmra.mrb[0].mxu0 %v1846
  %v1848 = vpop.f32.mrb[0].mxu0
  %v1849 = vadd.f32 %v1588, %v1848
  %v1850 = vpop.f32.mrb[0].mxu0
  %1851 = vmatprep.mubr.f32.mxu0 0.0
  %v1852 = vand.u32 %v104, 4294901760
  %1853 = vmatmul.mubr.f32.gmra.mrb[0].mxu0 %v1852
  %v1854 = vpop.f32.mrb[0].mxu0
  %v1855 = vadd.f32 %v1594, %v1854
  %v1856 = vpop.f32.mrb[0].mxu0
  %1857 = vmatprep.mubr.f32.mxu0 0.0
  %v1858 = vand.u32 %v107, 4294901760
  %1859 = vmatmul.mubr.f32.gmra.mrb[0].mxu0 %v1858
  %v1860 = vpop.f32.mrb[0].mxu0
  %v1861 = vadd.f32 %v1600, %v1860
  %v1862 = vpop.f32.mrb[0].mxu0
  %1863 = vmatprep.mubr.f32.mxu0 0.0
  %v1864 = vand.u32 %v110, 4294901760
  %1865 = vmatmul.mubr.f32.gmra.mrb[0].mxu0 %v1864
  %v1866 = vpop.f32.mrb[0].mxu0
  %v1867 = vadd.f32 %v1606, %v1866
  %v1868 = vpop.f32.mrb[0].mxu0
  %1869 = vmatprep.mubr.f32.mxu0 0.0
  %v1870 = vand.u32 %v113, 4294901760
  %1871 = vmatmul.mubr.f32.gmra.mrb[0].mxu0 %v1870
  %v1872 = vpop.f32.mrb[0].mxu0
  %v1873 = vadd.f32 %v1612, %v1872
  %v1874 = vpop.f32.mrb[0].mxu0
  %1875 = vmatprep.mubr.f32.mxu0 0.0
  %v1876 = vand.u32 %v116, 4294901760
  %1877 = vmatmul.mubr.f32.gmra.mrb[0].mxu0 %v1876
  %v1878 = vpop.f32.mrb[0].mxu0
  %v1879 = vadd.f32 %v1618, %v1878
  %v1880 = vpop.f32.mrb[0].mxu0
  %1881 = vmatprep.mubr.f32.mxu0 0.0
  %v1882 = vand.u32 %v119, 4294901760
  %1883 = vmatmul.mubr.f32.gmra.mrb[0].mxu0 %v1882
  %v1884 = vpop.f32.mrb[0].mxu0
  %v1885 = vadd.f32 %v1624, %v1884
  %v1886 = vpop.f32.mrb[0].mxu0
  %1887 = vmatprep.mubr.f32.mxu0 0.0
  %v1888 = vand.u32 %v122, 4294901760
  %1889 = vmatmul.mubr.f32.gmra.mrb[0].mxu0 %v1888
  %v1890 = vpop.f32.mrb[0].mxu0
  %v1891 = vadd.f32 %v1630, %v1890
  %v1892 = vpop.f32.mrb[0].mxu0
  %1893 = vmatprep.mubr.f32.mxu0 0.0
  %v1894 = vand.u32 %v125, 4294901760
  %1895 = vmatmul.mubr.f32.gmra.mrb[0].mxu0 %v1894
  %v1896 = vpop.f32.mrb[0].mxu0
  %v1897 = vadd.f32 %v1636, %v1896
  %v1898 = vpop.f32.mrb[0].mxu0
  %1899 = vmatprep.mubr.f32.mxu0 0.0
  %v1900 = vand.u32 %v128, 4294901760
  %1901 = vmatmul.mubr.f32.gmra.mrb[0].mxu0 %v1900
  %v1902 = vpop.f32.mrb[0].mxu0
  %v1903 = vadd.f32 %v1642, %v1902
  %v1904 = vpop.f32.mrb[0].mxu0
  %1905 = vmatprep.mubr.f32.mxu0 0.0
  %v1906 = vand.u32 %v131, 4294901760
  %1907 = vmatmul.mubr.f32.gmra.mrb[0].mxu0 %v1906
  %v1908 = vpop.f32.mrb[0].mxu0
  %v1909 = vadd.f32 %v1648, %v1908
  %v1910 = vpop.f32.mrb[0].mxu0
  %1911 = vmatprep.mubr.f32.mxu0 0.0
  %v1912 = vand.u32 %v134, 4294901760
  %1913 = vmatmul.mubr.f32.gmra.mrb[0].mxu0 %v1912
  %v1914 = vpop.f32.mrb[0].mxu0
  %v1915 = vadd.f32 %v1654, %v1914
  %v1916 = vpop.f32.mrb[0].mxu0
  %1917 = vmatprep.mubr.f32.mxu0 0.0
  %v1918 = vand.u32 %v137, 4294901760
  %1919 = vmatmul.mubr.f32.gmra.mrb[0].mxu0 %v1918
  %v1920 = vpop.f32.mrb[0].mxu0
  %v1921 = vadd.f32 %v1660, %v1920
  %v1922 = vpop.f32.mrb[0].mxu0
  %1923 = vmatprep.mubr.f32.mxu0 0.0
  %v1924 = vand.u32 %v140, 4294901760
  %1925 = vmatmul.mubr.f32.gmra.mrb[0].mxu0 %v1924
  %v1926 = vpop.f32.mrb[0].mxu0
  %v1927 = vadd.f32 %v1666, %v1926
  %v1928 = vpop.f32.mrb[0].mxu0
  %1929 = vmatprep.mubr.f32.mxu0 0.0
  %v1930 = vand.u32 %v143, 4294901760
  %1931 = vmatmul.mubr.f32.gmra.mrb[0].mxu0 %v1930
  %v1932 = vpop.f32.mrb[0].mxu0
  %v1933 = vadd.f32 %v1672, %v1932
  %v1934 = vpop.f32.mrb[0].mxu0
  %1935 = vmatprep.mubr.f32.mxu0 0.0
  %v1936 = vand.u32 %v146, 4294901760
  %1937 = vmatmul.mubr.f32.gmra.mrb[0].mxu0 %v1936
  %v1938 = vpop.f32.mrb[0].mxu0
  %v1939 = vadd.f32 %v1678, %v1938
  %v1940 = vpop.f32.mrb[0].mxu0
  %1941 = vmatprep.mubr.f32.mxu0 0.0
  %v1942 = vand.u32 %v149, 4294901760
  %1943 = vmatmul.mubr.f32.gmra.mrb[0].mxu0 %v1942
  %v1944 = vpop.f32.mrb[0].mxu0
  %v1945 = vadd.f32 %v1684, %v1944
  %v1946 = vpop.f32.mrb[0].mxu0
  %1947 = vmatprep.mubr.f32.mxu0 0.0
  %v1948 = vand.u32 %v152, 4294901760
  %1949 = vmatmul.mubr.f32.gmra.mrb[0].mxu0 %v1948
  %v1950 = vpop.f32.mrb[0].mxu0
  %v1951 = vadd.f32 %v1690, %v1950
  %v1952 = vpop.f32.mrb[0].mxu0
  %1953 = vmatprep.mubr.f32.mxu0 0.0
  %v1954 = vand.u32 %v155, 4294901760
  %1955 = vmatmul.mubr.f32.gmra.mrb[0].mxu0 %v1954
  %v1956 = vpop.f32.mrb[0].mxu0
  %v1957 = vadd.f32 %v1696, %v1956
  %v1958 = vpop.f32.mrb[0].mxu0
  %1959 = vmatprep.mubr.f32.mxu0 0.0
  %v1960 = vand.u32 %v158, 4294901760
  %1961 = vmatmul.mubr.f32.gmra.mrb[0].mxu0 %v1960
  %v1962 = vpop.f32.mrb[0].mxu0
  %v1963 = vadd.f32 %v1702, %v1962
  %v1964 = vpop.f32.mrb[0].mxu0
  %1965 = vmatprep.mubr.f32.mxu0 0.0
  %v1966 = vand.u32 %v161, 4294901760
  %1967 = vmatmul.mubr.f32.gmra.mrb[0].mxu0 %v1966
  %v1968 = vpop.f32.mrb[0].mxu0
  %v1969 = vadd.f32 %v1708, %v1968
  %v1970 = vpop.f32.mrb[0].mxu0
  %1971 = vmatprep.mubr.f32.mxu0 0.0
  %v1972 = vand.u32 %v164, 4294901760
  %1973 = vmatmul.mubr.f32.gmra.mrb[0].mxu0 %v1972
  %v1974 = vpop.f32.mrb[0].mxu0
  %v1975 = vadd.f32 %v1714, %v1974
  %v1976 = vpop.f32.mrb[0].mxu0
  %1977 = vmatprep.mubr.f32.mxu0 0.0
  %v1978 = vand.u32 %v167, 4294901760
  %1979 = vmatmul.mubr.f32.gmra.mrb[0].mxu0 %v1978
  %v1980 = vpop.f32.mrb[0].mxu0
  %v1981 = vadd.f32 %v1720, %v1980
  %v1982 = vpop.f32.mrb[0].mxu0
  %1983 = vmatprep.mubr.f32.mxu0 0.0
  %v1984 = vand.u32 %v170, 4294901760
  %1985 = vmatmul.mubr.f32.gmra.mrb[0].mxu0 %v1984
  %v1986 = vpop.f32.mrb[0].mxu0
  %v1987 = vadd.f32 %v1726, %v1986
  %v1988 = vpop.f32.mrb[0].mxu0
  %1989 = vdwg.mxu0
  %v1990 = vld [vmem:[%s1] sm:$0xff]
  %v1991 = vld [vmem:[%s1 + $0x8] sm:$0xff]
  %v1992 = vld [vmem:[%s1 + $0x10] sm:$0xff]
  %v1993 = vld [vmem:[%s1 + $0x18] sm:$0xff]
  %v1994 = vld [vmem:[%s1 + $0x20] sm:$0xff]
  %v1995 = vld [vmem:[%s1 + $0x28] sm:$0xff]
  %v1996 = vld [vmem:[%s1 + $0x30] sm:$0xff]
  %v1997 = vld [vmem:[%s1 + $0x38] sm:$0xff]
  %v1998 = vld [vmem:[%s1 + $0x40] sm:$0xff]
  %v1999 = vld [vmem:[%s1 + $0x48] sm:$0xff]
  %v2000 = vld [vmem:[%s1 + $0x50] sm:$0xff]
  %v2001 = vld [vmem:[%s1 + $0x58] sm:$0xff]
  %v2002 = vld [vmem:[%s1 + $0x60] sm:$0xff]
  %v2003 = vld [vmem:[%s1 + $0x68] sm:$0xff]
  %v2004 = vld [vmem:[%s1 + $0x70] sm:$0xff]
  %v2005 = vld [vmem:[%s1 + $0x78] sm:$0xff]
  %v2006 = vld [vmem:[%s1 + $0x80] sm:$0xff]
  %v2007 = vld [vmem:[%s1 + $0x88] sm:$0xff]
  %v2008 = vld [vmem:[%s1 + $0x90] sm:$0xff]
  %v2009 = vld [vmem:[%s1 + $0x98] sm:$0xff]
  %v2010 = vld [vmem:[%s1 + $0xa0] sm:$0xff]
  %v2011 = vld [vmem:[%s1 + $0xa8] sm:$0xff]
  %v2012 = vld [vmem:[%s1 + $0xb0] sm:$0xff]
  %v2013 = vld [vmem:[%s1 + $0xb8] sm:$0xff]
  %v2014 = vld [vmem:[%s1 + $0xc0] sm:$0xff]
  %v2015 = vld [vmem:[%s1 + $0xc8] sm:$0xff]
  %v2016 = vld [vmem:[%s1 + $0xd0] sm:$0xff]
  %v2017 = vld [vmem:[%s1 + $0xd8] sm:$0xff]
  %v2018 = vld [vmem:[%s1 + $0xe0] sm:$0xff]
  %v2019 = vld [vmem:[%s1 + $0xe8] sm:$0xff]
  %v2020 = vld [vmem:[%s1 + $0xf0] sm:$0xff]
  %v2021 = vld [vmem:[%s1 + $0xf8] sm:$0xff]
  %v2022 = vld [vmem:[%s4] sm:$0xff]
  %v2023 = vld [vmem:[%s4 + $0x8] sm:$0xff]
  %v2024 = vld [vmem:[%s4 + $0x10] sm:$0xff]
  %v2025 = vld [vmem:[%s4 + $0x18] sm:$0xff]
  %v2026 = vld [vmem:[%s7] sm:$0x1]
  %v2028 = vlaneseq
  %v2029 = vshrl.u32 %v2028, 7
  %v2030 = vsub.s32 0, %v2029
  %v2031 = vrot.slane %v2026, %v2030
  %v2034 = vsel %vm75, %v1990, 0
  %v2037 = vsel %vm75, %v1991, 0
  %v2040 = vsel %vm75, %v1992, 0
  %v2043 = vsel %vm75, %v1993, 0
  %v2046 = vsel %vm75, %v1994, 0
  %v2049 = vsel %vm75, %v1995, 0
  %v2052 = vsel %vm75, %v1996, 0
  %v2055 = vsel %vm75, %v1997, 0
  %v2058 = vsel %vm75, %v1998, 0
  %v2061 = vsel %vm75, %v1999, 0
  %v2064 = vsel %vm75, %v2000, 0
  %v2067 = vsel %vm75, %v2001, 0
  %v2070 = vsel %vm75, %v2002, 0
  %v2073 = vsel %vm75, %v2003, 0
  %v2076 = vsel %vm75, %v2004, 0
  %v2079 = vsel %vm75, %v2005, 0
  %v2082 = vsel %vm75, %v2006, 0
  %v2085 = vsel %vm75, %v2007, 0
  %v2088 = vsel %vm75, %v2008, 0
  %v2091 = vsel %vm75, %v2009, 0
  %v2094 = vsel %vm75, %v2010, 0
  %v2097 = vsel %vm75, %v2011, 0
  %v2100 = vsel %vm75, %v2012, 0
  %v2103 = vsel %vm75, %v2013, 0
  %v2106 = vsel %vm75, %v2014, 0
  %v2109 = vsel %vm75, %v2015, 0
  %v2112 = vsel %vm75, %v2016, 0
  %v2115 = vsel %vm75, %v2017, 0
  %v2118 = vsel %vm75, %v2018, 0
  %v2121 = vsel %vm75, %v2019, 0
  %v2124 = vsel %vm75, %v2020, 0
  %v2127 = vsel %vm75, %v2021, 0
  %2129 = vmatprep.subr.mxu0 0.0
  %v2130 = vand.u32 %v2022, 4294901760
  %2131 = vmatpush1.msra.mxu0 %v2130
  %2132 = vmatprep.subr.mxu0 0.0
  %v2133 = vand.u32 %v2023, 4294901760
  %2134 = vmatpush1.msra.mxu0 %v2133
  %2135 = vmatprep.subr.mxu0 0.0
  %v2136 = vand.u32 %v2024, 4294901760
  %2137 = vmatpush1.msra.mxu0 %v2136
  %2138 = vmatprep.subr.mxu0 0.0
  %v2139 = vand.u32 %v2025, 4294901760
  %2140 = vmatpush1.msra.mxu0 %v2139
  %2141 = vmatprep.subr.mxu0 0.0
  %2142 = vmatpush1.msra.mxu0 0.0
  %2143 = vmatprep.subr.mxu0 0.0
  %2144 = vmatpush1.msra.mxu0 0.0
  %2145 = vmatprep.subr.mxu0 0.0
  %2146 = vmatpush1.msra.mxu0 0.0
  %2147 = vmatprep.subr.mxu0 0.0
  %2148 = vmatpush1.msra.mxu0 0.0
  %2149 = vmatprep.subr.mxu0 0.0
  %2150 = vmatpush1.msra.mxu0 0.0
  %2151 = vmatprep.subr.mxu0 0.0
  %2152 = vmatpush1.msra.mxu0 0.0
  %2153 = vmatprep.subr.mxu0 0.0
  %2154 = vmatpush1.msra.mxu0 0.0
  %2155 = vmatprep.subr.mxu0 0.0
  %2156 = vmatpush1.msra.mxu0 0.0
  %2157 = vmatprep.subr.mxu0 0.0
  %2158 = vmatpush1.msra.mxu0 0.0
  %2159 = vmatprep.subr.mxu0 0.0
  %2160 = vmatpush1.msra.mxu0 0.0
  %2161 = vmatprep.subr.mxu0 0.0
  %2162 = vmatpush1.msra.mxu0 0.0
  %2163 = vmatprep.subr.mxu0 0.0
  %2164 = vmatpush1.msra.mxu0 0.0
  %2165 = vmatprep.subr.mxu0 0.0
  %2166 = vmatpush1.msra.mxu0 0.0
  %2167 = vmatprep.subr.mxu0 0.0
  %2168 = vmatpush1.msra.mxu0 0.0
  %2169 = vmatprep.subr.mxu0 0.0
  %2170 = vmatpush1.msra.mxu0 0.0
  %2171 = vmatprep.subr.mxu0 0.0
  %2172 = vmatpush1.msra.mxu0 0.0
  %2173 = vmatprep.subr.mxu0 0.0
  %2174 = vmatpush1.msra.mxu0 0.0
  %2175 = vmatprep.subr.mxu0 0.0
  %2176 = vmatpush1.msra.mxu0 0.0
  %2177 = vmatprep.subr.mxu0 0.0
  %2178 = vmatpush1.msra.mxu0 0.0
  %2179 = vmatprep.subr.mxu0 0.0
  %2180 = vmatpush1.msra.mxu0 0.0
  %2181 = vmatprep.subr.mxu0 0.0
  %2182 = vmatpush1.msra.mxu0 0.0
  %2183 = vmatprep.subr.mxu0 0.0
  %2184 = vmatpush1.msra.mxu0 0.0
  %2185 = vmatprep.subr.mxu0 0.0
  %2186 = vmatpush1.msra.mxu0 0.0
  %2187 = vmatprep.subr.mxu0 0.0
  %2188 = vmatpush1.msra.mxu0 0.0
  %2189 = vmatprep.subr.mxu0 0.0
  %2190 = vmatpush1.msra.mxu0 0.0
  %2191 = vmatprep.subr.mxu0 0.0
  %2192 = vmatpush1.msra.mxu0 0.0
  %2193 = vmatprep.subr.mxu0 0.0
  %2194 = vmatpush1.msra.mxu0 0.0
  %2195 = vmatprep.subr.mxu0 0.0
  %2196 = vmatpush1.msra.mxu0 0.0
  %2197 = vmatprep.mubr.f32.mxu0 0.0
  %v2198 = vand.u32 %v2034, 4294901760
  %v2199 = vsub.f32 %v2034, %v2198
  %v2200 = vand.u32 %v2199, 4294901760
  %v2201 = vsub.f32 %v2199, %v2200
  %v2202 = vand.u32 %v2201, 4294901760
  %2203 = vmatmul.mubr.f32.gmra.mrb[0].mxu0 %v2202
  %v2204 = vpop.f32.mrb[0].mxu0
  %v2205 = vadd.f32 %v2031, %v2204
  %v2206 = vpop.f32.mrb[0].mxu0
  %2207 = vmatprep.mubr.f32.mxu0 0.0
  %v2208 = vand.u32 %v2037, 4294901760
  %v2209 = vsub.f32 %v2037, %v2208
  %v2210 = vand.u32 %v2209, 4294901760
  %v2211 = vsub.f32 %v2209, %v2210
  %v2212 = vand.u32 %v2211, 4294901760
  %2213 = vmatmul.mubr.f32.gmra.mrb[0].mxu0 %v2212
  %v2214 = vpop.f32.mrb[0].mxu0
  %v2215 = vadd.f32 %v2031, %v2214
  %v2216 = vpop.f32.mrb[0].mxu0
  %2217 = vmatprep.mubr.f32.mxu0 0.0
  %v2218 = vand.u32 %v2040, 4294901760
  %v2219 = vsub.f32 %v2040, %v2218
  %v2220 = vand.u32 %v2219, 4294901760
  %v2221 = vsub.f32 %v2219, %v2220
  %v2222 = vand.u32 %v2221, 4294901760
  %2223 = vmatmul.mubr.f32.gmra.mrb[0].mxu0 %v2222
  %v2224 = vpop.f32.mrb[0].mxu0
  %v2225 = vadd.f32 %v2031, %v2224
  %v2226 = vpop.f32.mrb[0].mxu0
  %2227 = vmatprep.mubr.f32.mxu0 0.0
  %v2228 = vand.u32 %v2043, 4294901760
  %v2229 = vsub.f32 %v2043, %v2228
  %v2230 = vand.u32 %v2229, 4294901760
  %v2231 = vsub.f32 %v2229, %v2230
  %v2232 = vand.u32 %v2231, 4294901760
  %2233 = vmatmul.mubr.f32.gmra.mrb[0].mxu0 %v2232
  %v2234 = vpop.f32.mrb[0].mxu0
  %v2235 = vadd.f32 %v2031, %v2234
  %v2236 = vpop.f32.mrb[0].mxu0
  %2237 = vmatprep.mubr.f32.mxu0 0.0
  %v2238 = vand.u32 %v2046, 4294901760
  %v2239 = vsub.f32 %v2046, %v2238
  %v2240 = vand.u32 %v2239, 4294901760
  %v2241 = vsub.f32 %v2239, %v2240
  %v2242 = vand.u32 %v2241, 4294901760
  %2243 = vmatmul.mubr.f32.gmra.mrb[0].mxu0 %v2242
  %v2244 = vpop.f32.mrb[0].mxu0
  %v2245 = vadd.f32 %v2031, %v2244
  %v2246 = vpop.f32.mrb[0].mxu0
  %2247 = vmatprep.mubr.f32.mxu0 0.0
  %v2248 = vand.u32 %v2049, 4294901760
  %v2249 = vsub.f32 %v2049, %v2248
  %v2250 = vand.u32 %v2249, 4294901760
  %v2251 = vsub.f32 %v2249, %v2250
  %v2252 = vand.u32 %v2251, 4294901760
  %2253 = vmatmul.mubr.f32.gmra.mrb[0].mxu0 %v2252
  %v2254 = vpop.f32.mrb[0].mxu0
  %v2255 = vadd.f32 %v2031, %v2254
  %v2256 = vpop.f32.mrb[0].mxu0
  %2257 = vmatprep.mubr.f32.mxu0 0.0
  %v2258 = vand.u32 %v2052, 4294901760
  %v2259 = vsub.f32 %v2052, %v2258
  %v2260 = vand.u32 %v2259, 4294901760
  %v2261 = vsub.f32 %v2259, %v2260
  %v2262 = vand.u32 %v2261, 4294901760
  %2263 = vmatmul.mubr.f32.gmra.mrb[0].mxu0 %v2262
  %v2264 = vpop.f32.mrb[0].mxu0
  %v2265 = vadd.f32 %v2031, %v2264
  %v2266 = vpop.f32.mrb[0].mxu0
  %2267 = vmatprep.mubr.f32.mxu0 0.0
  %v2268 = vand.u32 %v2055, 4294901760
  %v2269 = vsub.f32 %v2055, %v2268
  %v2270 = vand.u32 %v2269, 4294901760
  %v2271 = vsub.f32 %v2269, %v2270
  %v2272 = vand.u32 %v2271, 4294901760
  %2273 = vmatmul.mubr.f32.gmra.mrb[0].mxu0 %v2272
  %v2274 = vpop.f32.mrb[0].mxu0
  %v2275 = vadd.f32 %v2031, %v2274
  %v2276 = vpop.f32.mrb[0].mxu0
  %2277 = vmatprep.mubr.f32.mxu0 0.0
  %v2278 = vand.u32 %v2058, 4294901760
  %v2279 = vsub.f32 %v2058, %v2278
  %v2280 = vand.u32 %v2279, 4294901760
  %v2281 = vsub.f32 %v2279, %v2280
  %v2282 = vand.u32 %v2281, 4294901760
  %2283 = vmatmul.mubr.f32.gmra.mrb[0].mxu0 %v2282
  %v2284 = vpop.f32.mrb[0].mxu0
  %v2285 = vadd.f32 %v2031, %v2284
  %v2286 = vpop.f32.mrb[0].mxu0
  %2287 = vmatprep.mubr.f32.mxu0 0.0
  %v2288 = vand.u32 %v2061, 4294901760
  %v2289 = vsub.f32 %v2061, %v2288
  %v2290 = vand.u32 %v2289, 4294901760
  %v2291 = vsub.f32 %v2289, %v2290
  %v2292 = vand.u32 %v2291, 4294901760
  %2293 = vmatmul.mubr.f32.gmra.mrb[0].mxu0 %v2292
  %v2294 = vpop.f32.mrb[0].mxu0
  %v2295 = vadd.f32 %v2031, %v2294
  %v2296 = vpop.f32.mrb[0].mxu0
  %2297 = vmatprep.mubr.f32.mxu0 0.0
  %v2298 = vand.u32 %v2064, 4294901760
  %v2299 = vsub.f32 %v2064, %v2298
  %v2300 = vand.u32 %v2299, 4294901760
  %v2301 = vsub.f32 %v2299, %v2300
  %v2302 = vand.u32 %v2301, 4294901760
  %2303 = vmatmul.mubr.f32.gmra.mrb[0].mxu0 %v2302
  %v2304 = vpop.f32.mrb[0].mxu0
  %v2305 = vadd.f32 %v2031, %v2304
  %v2306 = vpop.f32.mrb[0].mxu0
  %2307 = vmatprep.mubr.f32.mxu0 0.0
  %v2308 = vand.u32 %v2067, 4294901760
  %v2309 = vsub.f32 %v2067, %v2308
  %v2310 = vand.u32 %v2309, 4294901760
  %v2311 = vsub.f32 %v2309, %v2310
  %v2312 = vand.u32 %v2311, 4294901760
  %2313 = vmatmul.mubr.f32.gmra.mrb[0].mxu0 %v2312
  %v2314 = vpop.f32.mrb[0].mxu0
  %v2315 = vadd.f32 %v2031, %v2314
  %v2316 = vpop.f32.mrb[0].mxu0
  %2317 = vmatprep.mubr.f32.mxu0 0.0
  %v2318 = vand.u32 %v2070, 4294901760
  %v2319 = vsub.f32 %v2070, %v2318
  %v2320 = vand.u32 %v2319, 4294901760
  %v2321 = vsub.f32 %v2319, %v2320
  %v2322 = vand.u32 %v2321, 4294901760
  %2323 = vmatmul.mubr.f32.gmra.mrb[0].mxu0 %v2322
  %v2324 = vpop.f32.mrb[0].mxu0
  %v2325 = vadd.f32 %v2031, %v2324
  %v2326 = vpop.f32.mrb[0].mxu0
  %2327 = vmatprep.mubr.f32.mxu0 0.0
  %v2328 = vand.u32 %v2073, 4294901760
  %v2329 = vsub.f32 %v2073, %v2328
  %v2330 = vand.u32 %v2329, 4294901760
  %v2331 = vsub.f32 %v2329, %v2330
  %v2332 = vand.u32 %v2331, 4294901760
  %2333 = vmatmul.mubr.f32.gmra.mrb[0].mxu0 %v2332
  %v2334 = vpop.f32.mrb[0].mxu0
  %v2335 = vadd.f32 %v2031, %v2334
  %v2336 = vpop.f32.mrb[0].mxu0
  %2337 = vmatprep.mubr.f32.mxu0 0.0
  %v2338 = vand.u32 %v2076, 4294901760
  %v2339 = vsub.f32 %v2076, %v2338
  %v2340 = vand.u32 %v2339, 4294901760
  %v2341 = vsub.f32 %v2339, %v2340
  %v2342 = vand.u32 %v2341, 4294901760
  %2343 = vmatmul.mubr.f32.gmra.mrb[0].mxu0 %v2342
  %v2344 = vpop.f32.mrb[0].mxu0
  %v2345 = vadd.f32 %v2031, %v2344
  %v2346 = vpop.f32.mrb[0].mxu0
  %2347 = vmatprep.mubr.f32.mxu0 0.0
  %v2348 = vand.u32 %v2079, 4294901760
  %v2349 = vsub.f32 %v2079, %v2348
  %v2350 = vand.u32 %v2349, 4294901760
  %v2351 = vsub.f32 %v2349, %v2350
  %v2352 = vand.u32 %v2351, 4294901760
  %2353 = vmatmul.mubr.f32.gmra.mrb[0].mxu0 %v2352
  %v2354 = vpop.f32.mrb[0].mxu0
  %v2355 = vadd.f32 %v2031, %v2354
  %v2356 = vpop.f32.mrb[0].mxu0
  %2357 = vmatprep.mubr.f32.mxu0 0.0
  %v2358 = vand.u32 %v2082, 4294901760
  %v2359 = vsub.f32 %v2082, %v2358
  %v2360 = vand.u32 %v2359, 4294901760
  %v2361 = vsub.f32 %v2359, %v2360
  %v2362 = vand.u32 %v2361, 4294901760
  %2363 = vmatmul.mubr.f32.gmra.mrb[0].mxu0 %v2362
  %v2364 = vpop.f32.mrb[0].mxu0
  %v2365 = vadd.f32 %v2031, %v2364
  %v2366 = vpop.f32.mrb[0].mxu0
  %2367 = vmatprep.mubr.f32.mxu0 0.0
  %v2368 = vand.u32 %v2085, 4294901760
  %v2369 = vsub.f32 %v2085, %v2368
  %v2370 = vand.u32 %v2369, 4294901760
  %v2371 = vsub.f32 %v2369, %v2370
  %v2372 = vand.u32 %v2371, 4294901760
  %2373 = vmatmul.mubr.f32.gmra.mrb[0].mxu0 %v2372
  %v2374 = vpop.f32.mrb[0].mxu0
  %v2375 = vadd.f32 %v2031, %v2374
  %v2376 = vpop.f32.mrb[0].mxu0
  %2377 = vmatprep.mubr.f32.mxu0 0.0
  %v2378 = vand.u32 %v2088, 4294901760
  %v2379 = vsub.f32 %v2088, %v2378
  %v2380 = vand.u32 %v2379, 4294901760
  %v2381 = vsub.f32 %v2379, %v2380
  %v2382 = vand.u32 %v2381, 4294901760
  %2383 = vmatmul.mubr.f32.gmra.mrb[0].mxu0 %v2382
  %v2384 = vpop.f32.mrb[0].mxu0
  %v2385 = vadd.f32 %v2031, %v2384
  %v2386 = vpop.f32.mrb[0].mxu0
  %2387 = vmatprep.mubr.f32.mxu0 0.0
  %v2388 = vand.u32 %v2091, 4294901760
  %v2389 = vsub.f32 %v2091, %v2388
  %v2390 = vand.u32 %v2389, 4294901760
  %v2391 = vsub.f32 %v2389, %v2390
  %v2392 = vand.u32 %v2391, 4294901760
  %2393 = vmatmul.mubr.f32.gmra.mrb[0].mxu0 %v2392
  %v2394 = vpop.f32.mrb[0].mxu0
  %v2395 = vadd.f32 %v2031, %v2394
  %v2396 = vpop.f32.mrb[0].mxu0
  %2397 = vmatprep.mubr.f32.mxu0 0.0
  %v2398 = vand.u32 %v2094, 4294901760
  %v2399 = vsub.f32 %v2094, %v2398
  %v2400 = vand.u32 %v2399, 4294901760
  %v2401 = vsub.f32 %v2399, %v2400
  %v2402 = vand.u32 %v2401, 4294901760
  %2403 = vmatmul.mubr.f32.gmra.mrb[0].mxu0 %v2402
  %v2404 = vpop.f32.mrb[0].mxu0
  %v2405 = vadd.f32 %v2031, %v2404
  %v2406 = vpop.f32.mrb[0].mxu0
  %2407 = vmatprep.mubr.f32.mxu0 0.0
  %v2408 = vand.u32 %v2097, 4294901760
  %v2409 = vsub.f32 %v2097, %v2408
  %v2410 = vand.u32 %v2409, 4294901760
  %v2411 = vsub.f32 %v2409, %v2410
  %v2412 = vand.u32 %v2411, 4294901760
  %2413 = vmatmul.mubr.f32.gmra.mrb[0].mxu0 %v2412
  %v2414 = vpop.f32.mrb[0].mxu0
  %v2415 = vadd.f32 %v2031, %v2414
  %v2416 = vpop.f32.mrb[0].mxu0
  %2417 = vmatprep.mubr.f32.mxu0 0.0
  %v2418 = vand.u32 %v2100, 4294901760
  %v2419 = vsub.f32 %v2100, %v2418
  %v2420 = vand.u32 %v2419, 4294901760
  %v2421 = vsub.f32 %v2419, %v2420
  %v2422 = vand.u32 %v2421, 4294901760
  %2423 = vmatmul.mubr.f32.gmra.mrb[0].mxu0 %v2422
  %v2424 = vpop.f32.mrb[0].mxu0
  %v2425 = vadd.f32 %v2031, %v2424
  %v2426 = vpop.f32.mrb[0].mxu0
  %2427 = vmatprep.mubr.f32.mxu0 0.0
  %v2428 = vand.u32 %v2103, 4294901760
  %v2429 = vsub.f32 %v2103, %v2428
  %v2430 = vand.u32 %v2429, 4294901760
  %v2431 = vsub.f32 %v2429, %v2430
  %v2432 = vand.u32 %v2431, 4294901760
  %2433 = vmatmul.mubr.f32.gmra.mrb[0].mxu0 %v2432
  %v2434 = vpop.f32.mrb[0].mxu0
  %v2435 = vadd.f32 %v2031, %v2434
  %v2436 = vpop.f32.mrb[0].mxu0
  %2437 = vmatprep.mubr.f32.mxu0 0.0
  %v2438 = vand.u32 %v2106, 4294901760
  %v2439 = vsub.f32 %v2106, %v2438
  %v2440 = vand.u32 %v2439, 4294901760
  %v2441 = vsub.f32 %v2439, %v2440
  %v2442 = vand.u32 %v2441, 4294901760
  %2443 = vmatmul.mubr.f32.gmra.mrb[0].mxu0 %v2442
  %v2444 = vpop.f32.mrb[0].mxu0
  %v2445 = vadd.f32 %v2031, %v2444
  %v2446 = vpop.f32.mrb[0].mxu0
  %2447 = vmatprep.mubr.f32.mxu0 0.0
  %v2448 = vand.u32 %v2109, 4294901760
  %v2449 = vsub.f32 %v2109, %v2448
  %v2450 = vand.u32 %v2449, 4294901760
  %v2451 = vsub.f32 %v2449, %v2450
  %v2452 = vand.u32 %v2451, 4294901760
  %2453 = vmatmul.mubr.f32.gmra.mrb[0].mxu0 %v2452
  %v2454 = vpop.f32.mrb[0].mxu0
  %v2455 = vadd.f32 %v2031, %v2454
  %v2456 = vpop.f32.mrb[0].mxu0
  %2457 = vmatprep.mubr.f32.mxu0 0.0
  %v2458 = vand.u32 %v2112, 4294901760
  %v2459 = vsub.f32 %v2112, %v2458
  %v2460 = vand.u32 %v2459, 4294901760
  %v2461 = vsub.f32 %v2459, %v2460
  %v2462 = vand.u32 %v2461, 4294901760
  %2463 = vmatmul.mubr.f32.gmra.mrb[0].mxu0 %v2462
  %v2464 = vpop.f32.mrb[0].mxu0
  %v2465 = vadd.f32 %v2031, %v2464
  %v2466 = vpop.f32.mrb[0].mxu0
  %2467 = vmatprep.mubr.f32.mxu0 0.0
  %v2468 = vand.u32 %v2115, 4294901760
  %v2469 = vsub.f32 %v2115, %v2468
  %v2470 = vand.u32 %v2469, 4294901760
  %v2471 = vsub.f32 %v2469, %v2470
  %v2472 = vand.u32 %v2471, 4294901760
  %2473 = vmatmul.mubr.f32.gmra.mrb[0].mxu0 %v2472
  %v2474 = vpop.f32.mrb[0].mxu0
  %v2475 = vadd.f32 %v2031, %v2474
  %v2476 = vpop.f32.mrb[0].mxu0
  %2477 = vmatprep.mubr.f32.mxu0 0.0
  %v2478 = vand.u32 %v2118, 4294901760
  %v2479 = vsub.f32 %v2118, %v2478
  %v2480 = vand.u32 %v2479, 4294901760
  %v2481 = vsub.f32 %v2479, %v2480
  %v2482 = vand.u32 %v2481, 4294901760
  %2483 = vmatmul.mubr.f32.gmra.mrb[0].mxu0 %v2482
  %v2484 = vpop.f32.mrb[0].mxu0
  %v2485 = vadd.f32 %v2031, %v2484
  %v2486 = vpop.f32.mrb[0].mxu0
  %2487 = vmatprep.mubr.f32.mxu0 0.0
  %v2488 = vand.u32 %v2121, 4294901760
  %v2489 = vsub.f32 %v2121, %v2488
  %v2490 = vand.u32 %v2489, 4294901760
  %v2491 = vsub.f32 %v2489, %v2490
  %v2492 = vand.u32 %v2491, 4294901760
  %2493 = vmatmul.mubr.f32.gmra.mrb[0].mxu0 %v2492
  %v2494 = vpop.f32.mrb[0].mxu0
  %v2495 = vadd.f32 %v2031, %v2494
  %v2496 = vpop.f32.mrb[0].mxu0
  %2497 = vmatprep.mubr.f32.mxu0 0.0
  %v2498 = vand.u32 %v2124, 4294901760
  %v2499 = vsub.f32 %v2124, %v2498
  %v2500 = vand.u32 %v2499, 4294901760
  %v2501 = vsub.f32 %v2499, %v2500
  %v2502 = vand.u32 %v2501, 4294901760
  %2503 = vmatmul.mubr.f32.gmra.mrb[0].mxu0 %v2502
  %v2504 = vpop.f32.mrb[0].mxu0
  %v2505 = vadd.f32 %v2031, %v2504
  %v2506 = vpop.f32.mrb[0].mxu0
  %2507 = vmatprep.mubr.f32.mxu0 0.0
  %v2508 = vand.u32 %v2127, 4294901760
  %v2509 = vsub.f32 %v2127, %v2508
  %v2510 = vand.u32 %v2509, 4294901760
  %v2511 = vsub.f32 %v2509, %v2510
  %v2512 = vand.u32 %v2511, 4294901760
  %2513 = vmatmul.mubr.f32.gmra.mrb[0].mxu0 %v2512
  %v2514 = vpop.f32.mrb[0].mxu0
  %v2515 = vadd.f32 %v2031, %v2514
  %v2516 = vpop.f32.mrb[0].mxu0
  %2517 = vdwg.mxu0
  %2518 = vmatprep.subr.mxu0 0.0
  %v2519 = vand.u32 %v2022, 4294901760
  %v2520 = vsub.f32 %v2022, %v2519
  %v2521 = vand.u32 %v2520, 4294901760
  %v2522 = vsub.f32 %v2520, %v2521
  %v2523 = vand.u32 %v2522, 4294901760
  %2524 = vmatpush1.msra.mxu0 %v2523
  %2525 = vmatprep.subr.mxu0 0.0
  %v2526 = vand.u32 %v2023, 4294901760
  %v2527 = vsub.f32 %v2023, %v2526
  %v2528 = vand.u32 %v2527, 4294901760
  %v2529 = vsub.f32 %v2527, %v2528
  %v2530 = vand.u32 %v2529, 4294901760
  %2531 = vmatpush1.msra.mxu0 %v2530
  %2532 = vmatprep.subr.mxu0 0.0
  %v2533 = vand.u32 %v2024, 4294901760
  %v2534 = vsub.f32 %v2024, %v2533
  %v2535 = vand.u32 %v2534, 4294901760
  %v2536 = vsub.f32 %v2534, %v2535
  %v2537 = vand.u32 %v2536, 4294901760
  %2538 = vmatpush1.msra.mxu0 %v2537
  %2539 = vmatprep.subr.mxu0 0.0
  %v2540 = vand.u32 %v2025, 4294901760
  %v2541 = vsub.f32 %v2025, %v2540
  %v2542 = vand.u32 %v2541, 4294901760
  %v2543 = vsub.f32 %v2541, %v2542
  %v2544 = vand.u32 %v2543, 4294901760
  %2545 = vmatpush1.msra.mxu0 %v2544
  %2546 = vmatprep.subr.mxu0 0.0
  %2547 = vmatpush1.msra.mxu0 0.0
  %2548 = vmatprep.subr.mxu0 0.0
  %2549 = vmatpush1.msra.mxu0 0.0
  %2550 = vmatprep.subr.mxu0 0.0
  %2551 = vmatpush1.msra.mxu0 0.0
  %2552 = vmatprep.subr.mxu0 0.0
  %2553 = vmatpush1.msra.mxu0 0.0
  %2554 = vmatprep.subr.mxu0 0.0
  %2555 = vmatpush1.msra.mxu0 0.0
  %2556 = vmatprep.subr.mxu0 0.0
  %2557 = vmatpush1.msra.mxu0 0.0
  %2558 = vmatprep.subr.mxu0 0.0
  %2559 = vmatpush1.msra.mxu0 0.0
  %2560 = vmatprep.subr.mxu0 0.0
  %2561 = vmatpush1.msra.mxu0 0.0
  %2562 = vmatprep.subr.mxu0 0.0
  %2563 = vmatpush1.msra.mxu0 0.0
  %2564 = vmatprep.subr.mxu0 0.0
  %2565 = vmatpush1.msra.mxu0 0.0
  %2566 = vmatprep.subr.mxu0 0.0
  %2567 = vmatpush1.msra.mxu0 0.0
  %2568 = vmatprep.subr.mxu0 0.0
  %2569 = vmatpush1.msra.mxu0 0.0
  %2570 = vmatprep.subr.mxu0 0.0
  %2571 = vmatpush1.msra.mxu0 0.0
  %2572 = vmatprep.subr.mxu0 0.0
  %2573 = vmatpush1.msra.mxu0 0.0
  %2574 = vmatprep.subr.mxu0 0.0
  %2575 = vmatpush1.msra.mxu0 0.0
  %2576 = vmatprep.subr.mxu0 0.0
  %2577 = vmatpush1.msra.mxu0 0.0
  %2578 = vmatprep.subr.mxu0 0.0
  %2579 = vmatpush1.msra.mxu0 0.0
  %2580 = vmatprep.subr.mxu0 0.0
  %2581 = vmatpush1.msra.mxu0 0.0
  %2582 = vmatprep.subr.mxu0 0.0
  %2583 = vmatpush1.msra.mxu0 0.0
  %2584 = vmatprep.subr.mxu0 0.0
  %2585 = vmatpush1.msra.mxu0 0.0
  %2586 = vmatprep.subr.mxu0 0.0
  %2587 = vmatpush1.msra.mxu0 0.0
  %2588 = vmatprep.subr.mxu0 0.0
  %2589 = vmatpush1.msra.mxu0 0.0
  %2590 = vmatprep.subr.mxu0 0.0
  %2591 = vmatpush1.msra.mxu0 0.0
  %2592 = vmatprep.subr.mxu0 0.0
  %2593 = vmatpush1.msra.mxu0 0.0
  %2594 = vmatprep.subr.mxu0 0.0
  %2595 = vmatpush1.msra.mxu0 0.0
  %2596 = vmatprep.subr.mxu0 0.0
  %2597 = vmatpush1.msra.mxu0 0.0
  %2598 = vmatprep.subr.mxu0 0.0
  %2599 = vmatpush1.msra.mxu0 0.0
  %2600 = vmatprep.subr.mxu0 0.0
  %2601 = vmatpush1.msra.mxu0 0.0
  %2602 = vmatprep.mubr.f32.mxu0 0.0
  %v2603 = vand.u32 %v2034, 4294901760
  %2604 = vmatmul.mubr.f32.gmra.mrb[0].mxu0 %v2603
  %v2605 = vpop.f32.mrb[0].mxu0
  %v2606 = vadd.f32 %v2205, %v2605
  %v2607 = vpop.f32.mrb[0].mxu0
  %2608 = vmatprep.mubr.f32.mxu0 0.0
  %v2609 = vand.u32 %v2037, 4294901760
  %2610 = vmatmul.mubr.f32.gmra.mrb[0].mxu0 %v2609
  %v2611 = vpop.f32.mrb[0].mxu0
  %v2612 = vadd.f32 %v2215, %v2611
  %v2613 = vpop.f32.mrb[0].mxu0
  %2614 = vmatprep.mubr.f32.mxu0 0.0
  %v2615 = vand.u32 %v2040, 4294901760
  %2616 = vmatmul.mubr.f32.gmra.mrb[0].mxu0 %v2615
  %v2617 = vpop.f32.mrb[0].mxu0
  %v2618 = vadd.f32 %v2225, %v2617
  %v2619 = vpop.f32.mrb[0].mxu0
  %2620 = vmatprep.mubr.f32.mxu0 0.0
  %v2621 = vand.u32 %v2043, 4294901760
  %2622 = vmatmul.mubr.f32.gmra.mrb[0].mxu0 %v2621
  %v2623 = vpop.f32.mrb[0].mxu0
  %v2624 = vadd.f32 %v2235, %v2623
  %v2625 = vpop.f32.mrb[0].mxu0
  %2626 = vmatprep.mubr.f32.mxu0 0.0
  %v2627 = vand.u32 %v2046, 4294901760
  %2628 = vmatmul.mubr.f32.gmra.mrb[0].mxu0 %v2627
  %v2629 = vpop.f32.mrb[0].mxu0
  %v2630 = vadd.f32 %v2245, %v2629
  %v2631 = vpop.f32.mrb[0].mxu0
  %2632 = vmatprep.mubr.f32.mxu0 0.0
  %v2633 = vand.u32 %v2049, 4294901760
  %2634 = vmatmul.mubr.f32.gmra.mrb[0].mxu0 %v2633
  %v2635 = vpop.f32.mrb[0].mxu0
  %v2636 = vadd.f32 %v2255, %v2635
  %v2637 = vpop.f32.mrb[0].mxu0
  %2638 = vmatprep.mubr.f32.mxu0 0.0
  %v2639 = vand.u32 %v2052, 4294901760
  %2640 = vmatmul.mubr.f32.gmra.mrb[0].mxu0 %v2639
  %v2641 = vpop.f32.mrb[0].mxu0
  %v2642 = vadd.f32 %v2265, %v2641
  %v2643 = vpop.f32.mrb[0].mxu0
  %2644 = vmatprep.mubr.f32.mxu0 0.0
  %v2645 = vand.u32 %v2055, 4294901760
  %2646 = vmatmul.mubr.f32.gmra.mrb[0].mxu0 %v2645
  %v2647 = vpop.f32.mrb[0].mxu0
  %v2648 = vadd.f32 %v2275, %v2647
  %v2649 = vpop.f32.mrb[0].mxu0
  %2650 = vmatprep.mubr.f32.mxu0 0.0
  %v2651 = vand.u32 %v2058, 4294901760
  %2652 = vmatmul.mubr.f32.gmra.mrb[0].mxu0 %v2651
  %v2653 = vpop.f32.mrb[0].mxu0
  %v2654 = vadd.f32 %v2285, %v2653
  %v2655 = vpop.f32.mrb[0].mxu0
  %2656 = vmatprep.mubr.f32.mxu0 0.0
  %v2657 = vand.u32 %v2061, 4294901760
  %2658 = vmatmul.mubr.f32.gmra.mrb[0].mxu0 %v2657
  %v2659 = vpop.f32.mrb[0].mxu0
  %v2660 = vadd.f32 %v2295, %v2659
  %v2661 = vpop.f32.mrb[0].mxu0
  %2662 = vmatprep.mubr.f32.mxu0 0.0
  %v2663 = vand.u32 %v2064, 4294901760
  %2664 = vmatmul.mubr.f32.gmra.mrb[0].mxu0 %v2663
  %v2665 = vpop.f32.mrb[0].mxu0
  %v2666 = vadd.f32 %v2305, %v2665
  %v2667 = vpop.f32.mrb[0].mxu0
  %2668 = vmatprep.mubr.f32.mxu0 0.0
  %v2669 = vand.u32 %v2067, 4294901760
  %2670 = vmatmul.mubr.f32.gmra.mrb[0].mxu0 %v2669
  %v2671 = vpop.f32.mrb[0].mxu0
  %v2672 = vadd.f32 %v2315, %v2671
  %v2673 = vpop.f32.mrb[0].mxu0
  %2674 = vmatprep.mubr.f32.mxu0 0.0
  %v2675 = vand.u32 %v2070, 4294901760
  %2676 = vmatmul.mubr.f32.gmra.mrb[0].mxu0 %v2675
  %v2677 = vpop.f32.mrb[0].mxu0
  %v2678 = vadd.f32 %v2325, %v2677
  %v2679 = vpop.f32.mrb[0].mxu0
  %2680 = vmatprep.mubr.f32.mxu0 0.0
  %v2681 = vand.u32 %v2073, 4294901760
  %2682 = vmatmul.mubr.f32.gmra.mrb[0].mxu0 %v2681
  %v2683 = vpop.f32.mrb[0].mxu0
  %v2684 = vadd.f32 %v2335, %v2683
  %v2685 = vpop.f32.mrb[0].mxu0
  %2686 = vmatprep.mubr.f32.mxu0 0.0
  %v2687 = vand.u32 %v2076, 4294901760
  %2688 = vmatmul.mubr.f32.gmra.mrb[0].mxu0 %v2687
  %v2689 = vpop.f32.mrb[0].mxu0
  %v2690 = vadd.f32 %v2345, %v2689
  %v2691 = vpop.f32.mrb[0].mxu0
  %2692 = vmatprep.mubr.f32.mxu0 0.0
  %v2693 = vand.u32 %v2079, 4294901760
  %2694 = vmatmul.mubr.f32.gmra.mrb[0].mxu0 %v2693
  %v2695 = vpop.f32.mrb[0].mxu0
  %v2696 = vadd.f32 %v2355, %v2695
  %v2697 = vpop.f32.mrb[0].mxu0
  %2698 = vmatprep.mubr.f32.mxu0 0.0
  %v2699 = vand.u32 %v2082, 4294901760
  %2700 = vmatmul.mubr.f32.gmra.mrb[0].mxu0 %v2699
  %v2701 = vpop.f32.mrb[0].mxu0
  %v2702 = vadd.f32 %v2365, %v2701
  %v2703 = vpop.f32.mrb[0].mxu0
  %2704 = vmatprep.mubr.f32.mxu0 0.0
  %v2705 = vand.u32 %v2085, 4294901760
  %2706 = vmatmul.mubr.f32.gmra.mrb[0].mxu0 %v2705
  %v2707 = vpop.f32.mrb[0].mxu0
  %v2708 = vadd.f32 %v2375, %v2707
  %v2709 = vpop.f32.mrb[0].mxu0
  %2710 = vmatprep.mubr.f32.mxu0 0.0
  %v2711 = vand.u32 %v2088, 4294901760
  %2712 = vmatmul.mubr.f32.gmra.mrb[0].mxu0 %v2711
  %v2713 = vpop.f32.mrb[0].mxu0
  %v2714 = vadd.f32 %v2385, %v2713
  %v2715 = vpop.f32.mrb[0].mxu0
  %2716 = vmatprep.mubr.f32.mxu0 0.0
  %v2717 = vand.u32 %v2091, 4294901760
  %2718 = vmatmul.mubr.f32.gmra.mrb[0].mxu0 %v2717
  %v2719 = vpop.f32.mrb[0].mxu0
  %v2720 = vadd.f32 %v2395, %v2719
  %v2721 = vpop.f32.mrb[0].mxu0
  %2722 = vmatprep.mubr.f32.mxu0 0.0
  %v2723 = vand.u32 %v2094, 4294901760
  %2724 = vmatmul.mubr.f32.gmra.mrb[0].mxu0 %v2723
  %v2725 = vpop.f32.mrb[0].mxu0
  %v2726 = vadd.f32 %v2405, %v2725
  %v2727 = vpop.f32.mrb[0].mxu0
  %2728 = vmatprep.mubr.f32.mxu0 0.0
  %v2729 = vand.u32 %v2097, 4294901760
  %2730 = vmatmul.mubr.f32.gmra.mrb[0].mxu0 %v2729
  %v2731 = vpop.f32.mrb[0].mxu0
  %v2732 = vadd.f32 %v2415, %v2731
  %v2733 = vpop.f32.mrb[0].mxu0
  %2734 = vmatprep.mubr.f32.mxu0 0.0
  %v2735 = vand.u32 %v2100, 4294901760
  %2736 = vmatmul.mubr.f32.gmra.mrb[0].mxu0 %v2735
  %v2737 = vpop.f32.mrb[0].mxu0
  %v2738 = vadd.f32 %v2425, %v2737
  %v2739 = vpop.f32.mrb[0].mxu0
  %2740 = vmatprep.mubr.f32.mxu0 0.0
  %v2741 = vand.u32 %v2103, 4294901760
  %2742 = vmatmul.mubr.f32.gmra.mrb[0].mxu0 %v2741
  %v2743 = vpop.f32.mrb[0].mxu0
  %v2744 = vadd.f32 %v2435, %v2743
  %v2745 = vpop.f32.mrb[0].mxu0
  %2746 = vmatprep.mubr.f32.mxu0 0.0
  %v2747 = vand.u32 %v2106, 4294901760
  %2748 = vmatmul.mubr.f32.gmra.mrb[0].mxu0 %v2747
  %v2749 = vpop.f32.mrb[0].mxu0
  %v2750 = vadd.f32 %v2445, %v2749
  %v2751 = vpop.f32.mrb[0].mxu0
  %2752 = vmatprep.mubr.f32.mxu0 0.0
  %v2753 = vand.u32 %v2109, 4294901760
  %2754 = vmatmul.mubr.f32.gmra.mrb[0].mxu0 %v2753
  %v2755 = vpop.f32.mrb[0].mxu0
  %v2756 = vadd.f32 %v2455, %v2755
  %v2757 = vpop.f32.mrb[0].mxu0
  %2758 = vmatprep.mubr.f32.mxu0 0.0
  %v2759 = vand.u32 %v2112, 4294901760
  %2760 = vmatmul.mubr.f32.gmra.mrb[0].mxu0 %v2759
  %v2761 = vpop.f32.mrb[0].mxu0
  %v2762 = vadd.f32 %v2465, %v2761
  %v2763 = vpop.f32.mrb[0].mxu0
  %2764 = vmatprep.mubr.f32.mxu0 0.0
  %v2765 = vand.u32 %v2115, 4294901760
  %2766 = vmatmul.mubr.f32.gmra.mrb[0].mxu0 %v2765
  %v2767 = vpop.f32.mrb[0].mxu0
  %v2768 = vadd.f32 %v2475, %v2767
  %v2769 = vpop.f32.mrb[0].mxu0
  %2770 = vmatprep.mubr.f32.mxu0 0.0
  %v2771 = vand.u32 %v2118, 4294901760
  %2772 = vmatmul.mubr.f32.gmra.mrb[0].mxu0 %v2771
  %v2773 = vpop.f32.mrb[0].mxu0
  %v2774 = vadd.f32 %v2485, %v2773
  %v2775 = vpop.f32.mrb[0].mxu0
  %2776 = vmatprep.mubr.f32.mxu0 0.0
  %v2777 = vand.u32 %v2121, 4294901760
  %2778 = vmatmul.mubr.f32.gmra.mrb[0].mxu0 %v2777
  %v2779 = vpop.f32.mrb[0].mxu0
  %v2780 = vadd.f32 %v2495, %v2779
  %v2781 = vpop.f32.mrb[0].mxu0
  %2782 = vmatprep.mubr.f32.mxu0 0.0
  %v2783 = vand.u32 %v2124, 4294901760
  %2784 = vmatmul.mubr.f32.gmra.mrb[0].mxu0 %v2783
  %v2785 = vpop.f32.mrb[0].mxu0
  %v2786 = vadd.f32 %v2505, %v2785
  %v2787 = vpop.f32.mrb[0].mxu0
  %2788 = vmatprep.mubr.f32.mxu0 0.0
  %v2789 = vand.u32 %v2127, 4294901760
  %2790 = vmatmul.mubr.f32.gmra.mrb[0].mxu0 %v2789
  %v2791 = vpop.f32.mrb[0].mxu0
  %v2792 = vadd.f32 %v2515, %v2791
  %v2793 = vpop.f32.mrb[0].mxu0
  %2794 = vdwg.mxu0
  %2795 = vmatprep.subr.mxu0 0.0
  %v2796 = vand.u32 %v2022, 4294901760
  %v2797 = vsub.f32 %v2022, %v2796
  %2798 = vmatpush1.msra.mxu0 %v2797
  %2799 = vmatprep.subr.mxu0 0.0
  %v2800 = vand.u32 %v2023, 4294901760
  %v2801 = vsub.f32 %v2023, %v2800
  %2802 = vmatpush1.msra.mxu0 %v2801
  %2803 = vmatprep.subr.mxu0 0.0
  %v2804 = vand.u32 %v2024, 4294901760
  %v2805 = vsub.f32 %v2024, %v2804
  %2806 = vmatpush1.msra.mxu0 %v2805
  %2807 = vmatprep.subr.mxu0 0.0
  %v2808 = vand.u32 %v2025, 4294901760
  %v2809 = vsub.f32 %v2025, %v2808
  %2810 = vmatpush1.msra.mxu0 %v2809
  %2811 = vmatprep.subr.mxu0 0.0
  %2812 = vmatpush1.msra.mxu0 0.0
  %2813 = vmatprep.subr.mxu0 0.0
  %2814 = vmatpush1.msra.mxu0 0.0
  %2815 = vmatprep.subr.mxu0 0.0
  %2816 = vmatpush1.msra.mxu0 0.0
  %2817 = vmatprep.subr.mxu0 0.0
  %2818 = vmatpush1.msra.mxu0 0.0
  %2819 = vmatprep.subr.mxu0 0.0
  %2820 = vmatpush1.msra.mxu0 0.0
  %2821 = vmatprep.subr.mxu0 0.0
  %2822 = vmatpush1.msra.mxu0 0.0
  %2823 = vmatprep.subr.mxu0 0.0
  %2824 = vmatpush1.msra.mxu0 0.0
  %2825 = vmatprep.subr.mxu0 0.0
  %2826 = vmatpush1.msra.mxu0 0.0
  %2827 = vmatprep.subr.mxu0 0.0
  %2828 = vmatpush1.msra.mxu0 0.0
  %2829 = vmatprep.subr.mxu0 0.0
  %2830 = vmatpush1.msra.mxu0 0.0
  %2831 = vmatprep.subr.mxu0 0.0
  %2832 = vmatpush1.msra.mxu0 0.0
  %2833 = vmatprep.subr.mxu0 0.0
  %2834 = vmatpush1.msra.mxu0 0.0
  %2835 = vmatprep.subr.mxu0 0.0
  %2836 = vmatpush1.msra.mxu0 0.0
  %2837 = vmatprep.subr.mxu0 0.0
  %2838 = vmatpush1.msra.mxu0 0.0
  %2839 = vmatprep.subr.mxu0 0.0
  %2840 = vmatpush1.msra.mxu0 0.0
  %2841 = vmatprep.subr.mxu0 0.0
  %2842 = vmatpush1.msra.mxu0 0.0
  %2843 = vmatprep.subr.mxu0 0.0
  %2844 = vmatpush1.msra.mxu0 0.0
  %2845 = vmatprep.subr.mxu0 0.0
  %2846 = vmatpush1.msra.mxu0 0.0
  %2847 = vmatprep.subr.mxu0 0.0
  %2848 = vmatpush1.msra.mxu0 0.0
  %2849 = vmatprep.subr.mxu0 0.0
  %2850 = vmatpush1.msra.mxu0 0.0
  %2851 = vmatprep.subr.mxu0 0.0
  %2852 = vmatpush1.msra.mxu0 0.0
  %2853 = vmatprep.subr.mxu0 0.0
  %2854 = vmatpush1.msra.mxu0 0.0
  %2855 = vmatprep.subr.mxu0 0.0
  %2856 = vmatpush1.msra.mxu0 0.0
  %2857 = vmatprep.subr.mxu0 0.0
  %2858 = vmatpush1.msra.mxu0 0.0
  %2859 = vmatprep.subr.mxu0 0.0
  %2860 = vmatpush1.msra.mxu0 0.0
  %2861 = vmatprep.subr.mxu0 0.0
  %2862 = vmatpush1.msra.mxu0 0.0
  %2863 = vmatprep.subr.mxu0 0.0
  %2864 = vmatpush1.msra.mxu0 0.0
  %2865 = vmatprep.subr.mxu0 0.0
  %2866 = vmatpush1.msra.mxu0 0.0
  %2867 = vmatprep.mubr.f32.mxu0 0.0
  %v2868 = vand.u32 %v2034, 4294901760
  %v2869 = vsub.f32 %v2034, %v2868
  %2870 = vmatmul.mubr.f32.gmra.mrb[0].mxu0 %v2869
  %v2871 = vpop.f32.mrb[0].mxu0
  %v2872 = vadd.f32 %v2606, %v2871
  %v2873 = vpop.f32.mrb[0].mxu0
  %2874 = vmatprep.mubr.f32.mxu0 0.0
  %v2875 = vand.u32 %v2037, 4294901760
  %v2876 = vsub.f32 %v2037, %v2875
  %2877 = vmatmul.mubr.f32.gmra.mrb[0].mxu0 %v2876
  %v2878 = vpop.f32.mrb[0].mxu0
  %v2879 = vadd.f32 %v2612, %v2878
  %v2880 = vpop.f32.mrb[0].mxu0
  %2881 = vmatprep.mubr.f32.mxu0 0.0
  %v2882 = vand.u32 %v2040, 4294901760
  %v2883 = vsub.f32 %v2040, %v2882
  %2884 = vmatmul.mubr.f32.gmra.mrb[0].mxu0 %v2883
  %v2885 = vpop.f32.mrb[0].mxu0
  %v2886 = vadd.f32 %v2618, %v2885
  %v2887 = vpop.f32.mrb[0].mxu0
  %2888 = vmatprep.mubr.f32.mxu0 0.0
  %v2889 = vand.u32 %v2043, 4294901760
  %v2890 = vsub.f32 %v2043, %v2889
  %2891 = vmatmul.mubr.f32.gmra.mrb[0].mxu0 %v2890
  %v2892 = vpop.f32.mrb[0].mxu0
  %v2893 = vadd.f32 %v2624, %v2892
  %v2894 = vpop.f32.mrb[0].mxu0
  %2895 = vmatprep.mubr.f32.mxu0 0.0
  %v2896 = vand.u32 %v2046, 4294901760
  %v2897 = vsub.f32 %v2046, %v2896
  %2898 = vmatmul.mubr.f32.gmra.mrb[0].mxu0 %v2897
  %v2899 = vpop.f32.mrb[0].mxu0
  %v2900 = vadd.f32 %v2630, %v2899
  %v2901 = vpop.f32.mrb[0].mxu0
  %2902 = vmatprep.mubr.f32.mxu0 0.0
  %v2903 = vand.u32 %v2049, 4294901760
  %v2904 = vsub.f32 %v2049, %v2903
  %2905 = vmatmul.mubr.f32.gmra.mrb[0].mxu0 %v2904
  %v2906 = vpop.f32.mrb[0].mxu0
  %v2907 = vadd.f32 %v2636, %v2906
  %v2908 = vpop.f32.mrb[0].mxu0
  %2909 = vmatprep.mubr.f32.mxu0 0.0
  %v2910 = vand.u32 %v2052, 4294901760
  %v2911 = vsub.f32 %v2052, %v2910
  %2912 = vmatmul.mubr.f32.gmra.mrb[0].mxu0 %v2911
  %v2913 = vpop.f32.mrb[0].mxu0
  %v2914 = vadd.f32 %v2642, %v2913
  %v2915 = vpop.f32.mrb[0].mxu0
  %2916 = vmatprep.mubr.f32.mxu0 0.0
  %v2917 = vand.u32 %v2055, 4294901760
  %v2918 = vsub.f32 %v2055, %v2917
  %2919 = vmatmul.mubr.f32.gmra.mrb[0].mxu0 %v2918
  %v2920 = vpop.f32.mrb[0].mxu0
  %v2921 = vadd.f32 %v2648, %v2920
  %v2922 = vpop.f32.mrb[0].mxu0
  %2923 = vmatprep.mubr.f32.mxu0 0.0
  %v2924 = vand.u32 %v2058, 4294901760
  %v2925 = vsub.f32 %v2058, %v2924
  %2926 = vmatmul.mubr.f32.gmra.mrb[0].mxu0 %v2925
  %v2927 = vpop.f32.mrb[0].mxu0
  %v2928 = vadd.f32 %v2654, %v2927
  %v2929 = vpop.f32.mrb[0].mxu0
  %2930 = vmatprep.mubr.f32.mxu0 0.0
  %v2931 = vand.u32 %v2061, 4294901760
  %v2932 = vsub.f32 %v2061, %v2931
  %2933 = vmatmul.mubr.f32.gmra.mrb[0].mxu0 %v2932
  %v2934 = vpop.f32.mrb[0].mxu0
  %v2935 = vadd.f32 %v2660, %v2934
  %v2936 = vpop.f32.mrb[0].mxu0
  %2937 = vmatprep.mubr.f32.mxu0 0.0
  %v2938 = vand.u32 %v2064, 4294901760
  %v2939 = vsub.f32 %v2064, %v2938
  %2940 = vmatmul.mubr.f32.gmra.mrb[0].mxu0 %v2939
  %v2941 = vpop.f32.mrb[0].mxu0
  %v2942 = vadd.f32 %v2666, %v2941
  %v2943 = vpop.f32.mrb[0].mxu0
  %2944 = vmatprep.mubr.f32.mxu0 0.0
  %v2945 = vand.u32 %v2067, 4294901760
  %v2946 = vsub.f32 %v2067, %v2945
  %2947 = vmatmul.mubr.f32.gmra.mrb[0].mxu0 %v2946
  %v2948 = vpop.f32.mrb[0].mxu0
  %v2949 = vadd.f32 %v2672, %v2948
  %v2950 = vpop.f32.mrb[0].mxu0
  %2951 = vmatprep.mubr.f32.mxu0 0.0
  %v2952 = vand.u32 %v2070, 4294901760
  %v2953 = vsub.f32 %v2070, %v2952
  %2954 = vmatmul.mubr.f32.gmra.mrb[0].mxu0 %v2953
  %v2955 = vpop.f32.mrb[0].mxu0
  %v2956 = vadd.f32 %v2678, %v2955
  %v2957 = vpop.f32.mrb[0].mxu0
  %2958 = vmatprep.mubr.f32.mxu0 0.0
  %v2959 = vand.u32 %v2073, 4294901760
  %v2960 = vsub.f32 %v2073, %v2959
  %2961 = vmatmul.mubr.f32.gmra.mrb[0].mxu0 %v2960
  %v2962 = vpop.f32.mrb[0].mxu0
  %v2963 = vadd.f32 %v2684, %v2962
  %v2964 = vpop.f32.mrb[0].mxu0
  %2965 = vmatprep.mubr.f32.mxu0 0.0
  %v2966 = vand.u32 %v2076, 4294901760
  %v2967 = vsub.f32 %v2076, %v2966
  %2968 = vmatmul.mubr.f32.gmra.mrb[0].mxu0 %v2967
  %v2969 = vpop.f32.mrb[0].mxu0
  %v2970 = vadd.f32 %v2690, %v2969
  %v2971 = vpop.f32.mrb[0].mxu0
  %2972 = vmatprep.mubr.f32.mxu0 0.0
  %v2973 = vand.u32 %v2079, 4294901760
  %v2974 = vsub.f32 %v2079, %v2973
  %2975 = vmatmul.mubr.f32.gmra.mrb[0].mxu0 %v2974
  %v2976 = vpop.f32.mrb[0].mxu0
  %v2977 = vadd.f32 %v2696, %v2976
  %v2978 = vpop.f32.mrb[0].mxu0
  %2979 = vmatprep.mubr.f32.mxu0 0.0
  %v2980 = vand.u32 %v2082, 4294901760
  %v2981 = vsub.f32 %v2082, %v2980
  %2982 = vmatmul.mubr.f32.gmra.mrb[0].mxu0 %v2981
  %v2983 = vpop.f32.mrb[0].mxu0
  %v2984 = vadd.f32 %v2702, %v2983
  %v2985 = vpop.f32.mrb[0].mxu0
  %2986 = vmatprep.mubr.f32.mxu0 0.0
  %v2987 = vand.u32 %v2085, 4294901760
  %v2988 = vsub.f32 %v2085, %v2987
  %2989 = vmatmul.mubr.f32.gmra.mrb[0].mxu0 %v2988
  %v2990 = vpop.f32.mrb[0].mxu0
  %v2991 = vadd.f32 %v2708, %v2990
  %v2992 = vpop.f32.mrb[0].mxu0
  %2993 = vmatprep.mubr.f32.mxu0 0.0
  %v2994 = vand.u32 %v2088, 4294901760
  %v2995 = vsub.f32 %v2088, %v2994
  %2996 = vmatmul.mubr.f32.gmra.mrb[0].mxu0 %v2995
  %v2997 = vpop.f32.mrb[0].mxu0
  %v2998 = vadd.f32 %v2714, %v2997
  %v2999 = vpop.f32.mrb[0].mxu0
  %3000 = vmatprep.mubr.f32.mxu0 0.0
  %v3001 = vand.u32 %v2091, 4294901760
  %v3002 = vsub.f32 %v2091, %v3001
  %3003 = vmatmul.mubr.f32.gmra.mrb[0].mxu0 %v3002
  %v3004 = vpop.f32.mrb[0].mxu0
  %v3005 = vadd.f32 %v2720, %v3004
  %v3006 = vpop.f32.mrb[0].mxu0
  %3007 = vmatprep.mubr.f32.mxu0 0.0
  %v3008 = vand.u32 %v2094, 4294901760
  %v3009 = vsub.f32 %v2094, %v3008
  %3010 = vmatmul.mubr.f32.gmra.mrb[0].mxu0 %v3009
  %v3011 = vpop.f32.mrb[0].mxu0
  %v3012 = vadd.f32 %v2726, %v3011
  %v3013 = vpop.f32.mrb[0].mxu0
  %3014 = vmatprep.mubr.f32.mxu0 0.0
  %v3015 = vand.u32 %v2097, 4294901760
  %v3016 = vsub.f32 %v2097, %v3015
  %3017 = vmatmul.mubr.f32.gmra.mrb[0].mxu0 %v3016
  %v3018 = vpop.f32.mrb[0].mxu0
  %v3019 = vadd.f32 %v2732, %v3018
  %v3020 = vpop.f32.mrb[0].mxu0
  %3021 = vmatprep.mubr.f32.mxu0 0.0
  %v3022 = vand.u32 %v2100, 4294901760
  %v3023 = vsub.f32 %v2100, %v3022
  %3024 = vmatmul.mubr.f32.gmra.mrb[0].mxu0 %v3023
  %v3025 = vpop.f32.mrb[0].mxu0
  %v3026 = vadd.f32 %v2738, %v3025
  %v3027 = vpop.f32.mrb[0].mxu0
  %3028 = vmatprep.mubr.f32.mxu0 0.0
  %v3029 = vand.u32 %v2103, 4294901760
  %v3030 = vsub.f32 %v2103, %v3029
  %3031 = vmatmul.mubr.f32.gmra.mrb[0].mxu0 %v3030
  %v3032 = vpop.f32.mrb[0].mxu0
  %v3033 = vadd.f32 %v2744, %v3032
  %v3034 = vpop.f32.mrb[0].mxu0
  %3035 = vmatprep.mubr.f32.mxu0 0.0
  %v3036 = vand.u32 %v2106, 4294901760
  %v3037 = vsub.f32 %v2106, %v3036
  %3038 = vmatmul.mubr.f32.gmra.mrb[0].mxu0 %v3037
  %v3039 = vpop.f32.mrb[0].mxu0
  %v3040 = vadd.f32 %v2750, %v3039
  %v3041 = vpop.f32.mrb[0].mxu0
  %3042 = vmatprep.mubr.f32.mxu0 0.0
  %v3043 = vand.u32 %v2109, 4294901760
  %v3044 = vsub.f32 %v2109, %v3043
  %3045 = vmatmul.mubr.f32.gmra.mrb[0].mxu0 %v3044
  %v3046 = vpop.f32.mrb[0].mxu0
  %v3047 = vadd.f32 %v2756, %v3046
  %v3048 = vpop.f32.mrb[0].mxu0
  %3049 = vmatprep.mubr.f32.mxu0 0.0
  %v3050 = vand.u32 %v2112, 4294901760
  %v3051 = vsub.f32 %v2112, %v3050
  %3052 = vmatmul.mubr.f32.gmra.mrb[0].mxu0 %v3051
  %v3053 = vpop.f32.mrb[0].mxu0
  %v3054 = vadd.f32 %v2762, %v3053
  %v3055 = vpop.f32.mrb[0].mxu0
  %3056 = vmatprep.mubr.f32.mxu0 0.0
  %v3057 = vand.u32 %v2115, 4294901760
  %v3058 = vsub.f32 %v2115, %v3057
  %3059 = vmatmul.mubr.f32.gmra.mrb[0].mxu0 %v3058
  %v3060 = vpop.f32.mrb[0].mxu0
  %v3061 = vadd.f32 %v2768, %v3060
  %v3062 = vpop.f32.mrb[0].mxu0
  %3063 = vmatprep.mubr.f32.mxu0 0.0
  %v3064 = vand.u32 %v2118, 4294901760
  %v3065 = vsub.f32 %v2118, %v3064
  %3066 = vmatmul.mubr.f32.gmra.mrb[0].mxu0 %v3065
  %v3067 = vpop.f32.mrb[0].mxu0
  %v3068 = vadd.f32 %v2774, %v3067
  %v3069 = vpop.f32.mrb[0].mxu0
  %3070 = vmatprep.mubr.f32.mxu0 0.0
  %v3071 = vand.u32 %v2121, 4294901760
  %v3072 = vsub.f32 %v2121, %v3071
  %3073 = vmatmul.mubr.f32.gmra.mrb[0].mxu0 %v3072
  %v3074 = vpop.f32.mrb[0].mxu0
  %v3075 = vadd.f32 %v2780, %v3074
  %v3076 = vpop.f32.mrb[0].mxu0
  %3077 = vmatprep.mubr.f32.mxu0 0.0
  %v3078 = vand.u32 %v2124, 4294901760
  %v3079 = vsub.f32 %v2124, %v3078
  %3080 = vmatmul.mubr.f32.gmra.mrb[0].mxu0 %v3079
  %v3081 = vpop.f32.mrb[0].mxu0
  %v3082 = vadd.f32 %v2786, %v3081
  %v3083 = vpop.f32.mrb[0].mxu0
  %3084 = vmatprep.mubr.f32.mxu0 0.0
  %v3085 = vand.u32 %v2127, 4294901760
  %v3086 = vsub.f32 %v2127, %v3085
  %3087 = vmatmul.mubr.f32.gmra.mrb[0].mxu0 %v3086
  %v3088 = vpop.f32.mrb[0].mxu0
  %v3089 = vadd.f32 %v2792, %v3088
  %v3090 = vpop.f32.mrb[0].mxu0
  %3091 = vdwg.mxu0
  %3092 = vmatprep.subr.mxu0 0.0
  %v3093 = vand.u32 %v2022, 4294901760
  %3094 = vmatpush1.msra.mxu0 %v3093
  %3095 = vmatprep.subr.mxu0 0.0
  %v3096 = vand.u32 %v2023, 4294901760
  %3097 = vmatpush1.msra.mxu0 %v3096
  %3098 = vmatprep.subr.mxu0 0.0
  %v3099 = vand.u32 %v2024, 4294901760
  %3100 = vmatpush1.msra.mxu0 %v3099
  %3101 = vmatprep.subr.mxu0 0.0
  %v3102 = vand.u32 %v2025, 4294901760
  %3103 = vmatpush1.msra.mxu0 %v3102
  %3104 = vmatprep.subr.mxu0 0.0
  %3105 = vmatpush1.msra.mxu0 0.0
  %3106 = vmatprep.subr.mxu0 0.0
  %3107 = vmatpush1.msra.mxu0 0.0
  %3108 = vmatprep.subr.mxu0 0.0
  %3109 = vmatpush1.msra.mxu0 0.0
  %3110 = vmatprep.subr.mxu0 0.0
  %3111 = vmatpush1.msra.mxu0 0.0
  %3112 = vmatprep.subr.mxu0 0.0
  %3113 = vmatpush1.msra.mxu0 0.0
  %3114 = vmatprep.subr.mxu0 0.0
  %3115 = vmatpush1.msra.mxu0 0.0
  %3116 = vmatprep.subr.mxu0 0.0
  %3117 = vmatpush1.msra.mxu0 0.0
  %3118 = vmatprep.subr.mxu0 0.0
  %3119 = vmatpush1.msra.mxu0 0.0
  %3120 = vmatprep.subr.mxu0 0.0
  %3121 = vmatpush1.msra.mxu0 0.0
  %3122 = vmatprep.subr.mxu0 0.0
  %3123 = vmatpush1.msra.mxu0 0.0
  %3124 = vmatprep.subr.mxu0 0.0
  %3125 = vmatpush1.msra.mxu0 0.0
  %3126 = vmatprep.subr.mxu0 0.0
  %3127 = vmatpush1.msra.mxu0 0.0
  %3128 = vmatprep.subr.mxu0 0.0
  %3129 = vmatpush1.msra.mxu0 0.0
  %3130 = vmatprep.subr.mxu0 0.0
  %3131 = vmatpush1.msra.mxu0 0.0
  %3132 = vmatprep.subr.mxu0 0.0
  %3133 = vmatpush1.msra.mxu0 0.0
  %3134 = vmatprep.subr.mxu0 0.0
  %3135 = vmatpush1.msra.mxu0 0.0
  %3136 = vmatprep.subr.mxu0 0.0
  %3137 = vmatpush1.msra.mxu0 0.0
  %3138 = vmatprep.subr.mxu0 0.0
  %3139 = vmatpush1.msra.mxu0 0.0
  %3140 = vmatprep.subr.mxu0 0.0
  %3141 = vmatpush1.msra.mxu0 0.0
  %3142 = vmatprep.subr.mxu0 0.0
  %3143 = vmatpush1.msra.mxu0 0.0
  %3144 = vmatprep.subr.mxu0 0.0
  %3145 = vmatpush1.msra.mxu0 0.0
  %3146 = vmatprep.subr.mxu0 0.0
  %3147 = vmatpush1.msra.mxu0 0.0
  %3148 = vmatprep.subr.mxu0 0.0
  %3149 = vmatpush1.msra.mxu0 0.0
  %3150 = vmatprep.subr.mxu0 0.0
  %3151 = vmatpush1.msra.mxu0 0.0
  %3152 = vmatprep.subr.mxu0 0.0
  %3153 = vmatpush1.msra.mxu0 0.0
  %3154 = vmatprep.subr.mxu0 0.0
  %3155 = vmatpush1.msra.mxu0 0.0
  %3156 = vmatprep.subr.mxu0 0.0
  %3157 = vmatpush1.msra.mxu0 0.0
  %3158 = vmatprep.subr.mxu0 0.0
  %3159 = vmatpush1.msra.mxu0 0.0
  %3160 = vmatprep.mubr.f32.mxu0 0.0
  %v3161 = vand.u32 %v2034, 4294901760
  %v3162 = vsub.f32 %v2034, %v3161
  %v3163 = vand.u32 %v3162, 4294901760
  %3164 = vmatmul.mubr.f32.gmra.mrb[0].mxu0 %v3163
  %v3165 = vpop.f32.mrb[0].mxu0
  %v3166 = vadd.f32 %v2872, %v3165
  %v3167 = vpop.f32.mrb[0].mxu0
  %3168 = vmatprep.mubr.f32.mxu0 0.0
  %v3169 = vand.u32 %v2037, 4294901760
  %v3170 = vsub.f32 %v2037, %v3169
  %v3171 = vand.u32 %v3170, 4294901760
  %3172 = vmatmul.mubr.f32.gmra.mrb[0].mxu0 %v3171
  %v3173 = vpop.f32.mrb[0].mxu0
  %v3174 = vadd.f32 %v2879, %v3173
  %v3175 = vpop.f32.mrb[0].mxu0
  %3176 = vmatprep.mubr.f32.mxu0 0.0
  %v3177 = vand.u32 %v2040, 4294901760
  %v3178 = vsub.f32 %v2040, %v3177
  %v3179 = vand.u32 %v3178, 4294901760
  %3180 = vmatmul.mubr.f32.gmra.mrb[0].mxu0 %v3179
  %v3181 = vpop.f32.mrb[0].mxu0
  %v3182 = vadd.f32 %v2886, %v3181
  %v3183 = vpop.f32.mrb[0].mxu0
  %3184 = vmatprep.mubr.f32.mxu0 0.0
  %v3185 = vand.u32 %v2043, 4294901760
  %v3186 = vsub.f32 %v2043, %v3185
  %v3187 = vand.u32 %v3186, 4294901760
  %3188 = vmatmul.mubr.f32.gmra.mrb[0].mxu0 %v3187
  %v3189 = vpop.f32.mrb[0].mxu0
  %v3190 = vadd.f32 %v2893, %v3189
  %v3191 = vpop.f32.mrb[0].mxu0
  %3192 = vmatprep.mubr.f32.mxu0 0.0
  %v3193 = vand.u32 %v2046, 4294901760
  %v3194 = vsub.f32 %v2046, %v3193
  %v3195 = vand.u32 %v3194, 4294901760
  %3196 = vmatmul.mubr.f32.gmra.mrb[0].mxu0 %v3195
  %v3197 = vpop.f32.mrb[0].mxu0
  %v3198 = vadd.f32 %v2900, %v3197
  %v3199 = vpop.f32.mrb[0].mxu0
  %3200 = vmatprep.mubr.f32.mxu0 0.0
  %v3201 = vand.u32 %v2049, 4294901760
  %v3202 = vsub.f32 %v2049, %v3201
  %v3203 = vand.u32 %v3202, 4294901760
  %3204 = vmatmul.mubr.f32.gmra.mrb[0].mxu0 %v3203
  %v3205 = vpop.f32.mrb[0].mxu0
  %v3206 = vadd.f32 %v2907, %v3205
  %v3207 = vpop.f32.mrb[0].mxu0
  %3208 = vmatprep.mubr.f32.mxu0 0.0
  %v3209 = vand.u32 %v2052, 4294901760
  %v3210 = vsub.f32 %v2052, %v3209
  %v3211 = vand.u32 %v3210, 4294901760
  %3212 = vmatmul.mubr.f32.gmra.mrb[0].mxu0 %v3211
  %v3213 = vpop.f32.mrb[0].mxu0
  %v3214 = vadd.f32 %v2914, %v3213
  %v3215 = vpop.f32.mrb[0].mxu0
  %3216 = vmatprep.mubr.f32.mxu0 0.0
  %v3217 = vand.u32 %v2055, 4294901760
  %v3218 = vsub.f32 %v2055, %v3217
  %v3219 = vand.u32 %v3218, 4294901760
  %3220 = vmatmul.mubr.f32.gmra.mrb[0].mxu0 %v3219
  %v3221 = vpop.f32.mrb[0].mxu0
  %v3222 = vadd.f32 %v2921, %v3221
  %v3223 = vpop.f32.mrb[0].mxu0
  %3224 = vmatprep.mubr.f32.mxu0 0.0
  %v3225 = vand.u32 %v2058, 4294901760
  %v3226 = vsub.f32 %v2058, %v3225
  %v3227 = vand.u32 %v3226, 4294901760
  %3228 = vmatmul.mubr.f32.gmra.mrb[0].mxu0 %v3227
  %v3229 = vpop.f32.mrb[0].mxu0
  %v3230 = vadd.f32 %v2928, %v3229
  %v3231 = vpop.f32.mrb[0].mxu0
  %3232 = vmatprep.mubr.f32.mxu0 0.0
  %v3233 = vand.u32 %v2061, 4294901760
  %v3234 = vsub.f32 %v2061, %v3233
  %v3235 = vand.u32 %v3234, 4294901760
  %3236 = vmatmul.mubr.f32.gmra.mrb[0].mxu0 %v3235
  %v3237 = vpop.f32.mrb[0].mxu0
  %v3238 = vadd.f32 %v2935, %v3237
  %v3239 = vpop.f32.mrb[0].mxu0
  %3240 = vmatprep.mubr.f32.mxu0 0.0
  %v3241 = vand.u32 %v2064, 4294901760
  %v3242 = vsub.f32 %v2064, %v3241
  %v3243 = vand.u32 %v3242, 4294901760
  %3244 = vmatmul.mubr.f32.gmra.mrb[0].mxu0 %v3243
  %v3245 = vpop.f32.mrb[0].mxu0
  %v3246 = vadd.f32 %v2942, %v3245
  %v3247 = vpop.f32.mrb[0].mxu0
  %3248 = vmatprep.mubr.f32.mxu0 0.0
  %v3249 = vand.u32 %v2067, 4294901760
  %v3250 = vsub.f32 %v2067, %v3249
  %v3251 = vand.u32 %v3250, 4294901760
  %3252 = vmatmul.mubr.f32.gmra.mrb[0].mxu0 %v3251
  %v3253 = vpop.f32.mrb[0].mxu0
  %v3254 = vadd.f32 %v2949, %v3253
  %v3255 = vpop.f32.mrb[0].mxu0
  %3256 = vmatprep.mubr.f32.mxu0 0.0
  %v3257 = vand.u32 %v2070, 4294901760
  %v3258 = vsub.f32 %v2070, %v3257
  %v3259 = vand.u32 %v3258, 4294901760
  %3260 = vmatmul.mubr.f32.gmra.mrb[0].mxu0 %v3259
  %v3261 = vpop.f32.mrb[0].mxu0
  %v3262 = vadd.f32 %v2956, %v3261
  %v3263 = vpop.f32.mrb[0].mxu0
  %3264 = vmatprep.mubr.f32.mxu0 0.0
  %v3265 = vand.u32 %v2073, 4294901760
  %v3266 = vsub.f32 %v2073, %v3265
  %v3267 = vand.u32 %v3266, 4294901760
  %3268 = vmatmul.mubr.f32.gmra.mrb[0].mxu0 %v3267
  %v3269 = vpop.f32.mrb[0].mxu0
  %v3270 = vadd.f32 %v2963, %v3269
  %v3271 = vpop.f32.mrb[0].mxu0
  %3272 = vmatprep.mubr.f32.mxu0 0.0
  %v3273 = vand.u32 %v2076, 4294901760
  %v3274 = vsub.f32 %v2076, %v3273
  %v3275 = vand.u32 %v3274, 4294901760
  %3276 = vmatmul.mubr.f32.gmra.mrb[0].mxu0 %v3275
  %v3277 = vpop.f32.mrb[0].mxu0
  %v3278 = vadd.f32 %v2970, %v3277
  %v3279 = vpop.f32.mrb[0].mxu0
  %3280 = vmatprep.mubr.f32.mxu0 0.0
  %v3281 = vand.u32 %v2079, 4294901760
  %v3282 = vsub.f32 %v2079, %v3281
  %v3283 = vand.u32 %v3282, 4294901760
  %3284 = vmatmul.mubr.f32.gmra.mrb[0].mxu0 %v3283
  %v3285 = vpop.f32.mrb[0].mxu0
  %v3286 = vadd.f32 %v2977, %v3285
  %v3287 = vpop.f32.mrb[0].mxu0
  %3288 = vmatprep.mubr.f32.mxu0 0.0
  %v3289 = vand.u32 %v2082, 4294901760
  %v3290 = vsub.f32 %v2082, %v3289
  %v3291 = vand.u32 %v3290, 4294901760
  %3292 = vmatmul.mubr.f32.gmra.mrb[0].mxu0 %v3291
  %v3293 = vpop.f32.mrb[0].mxu0
  %v3294 = vadd.f32 %v2984, %v3293
  %v3295 = vpop.f32.mrb[0].mxu0
  %3296 = vmatprep.mubr.f32.mxu0 0.0
  %v3297 = vand.u32 %v2085, 4294901760
  %v3298 = vsub.f32 %v2085, %v3297
  %v3299 = vand.u32 %v3298, 4294901760
  %3300 = vmatmul.mubr.f32.gmra.mrb[0].mxu0 %v3299
  %v3301 = vpop.f32.mrb[0].mxu0
  %v3302 = vadd.f32 %v2991, %v3301
  %v3303 = vpop.f32.mrb[0].mxu0
  %3304 = vmatprep.mubr.f32.mxu0 0.0
  %v3305 = vand.u32 %v2088, 4294901760
  %v3306 = vsub.f32 %v2088, %v3305
  %v3307 = vand.u32 %v3306, 4294901760
  %3308 = vmatmul.mubr.f32.gmra.mrb[0].mxu0 %v3307
  %v3309 = vpop.f32.mrb[0].mxu0
  %v3310 = vadd.f32 %v2998, %v3309
  %v3311 = vpop.f32.mrb[0].mxu0
  %3312 = vmatprep.mubr.f32.mxu0 0.0
  %v3313 = vand.u32 %v2091, 4294901760
  %v3314 = vsub.f32 %v2091, %v3313
  %v3315 = vand.u32 %v3314, 4294901760
  %3316 = vmatmul.mubr.f32.gmra.mrb[0].mxu0 %v3315
  %v3317 = vpop.f32.mrb[0].mxu0
  %v3318 = vadd.f32 %v3005, %v3317
  %v3319 = vpop.f32.mrb[0].mxu0
  %3320 = vmatprep.mubr.f32.mxu0 0.0
  %v3321 = vand.u32 %v2094, 4294901760
  %v3322 = vsub.f32 %v2094, %v3321
  %v3323 = vand.u32 %v3322, 4294901760
  %3324 = vmatmul.mubr.f32.gmra.mrb[0].mxu0 %v3323
  %v3325 = vpop.f32.mrb[0].mxu0
  %v3326 = vadd.f32 %v3012, %v3325
  %v3327 = vpop.f32.mrb[0].mxu0
  %3328 = vmatprep.mubr.f32.mxu0 0.0
  %v3329 = vand.u32 %v2097, 4294901760
  %v3330 = vsub.f32 %v2097, %v3329
  %v3331 = vand.u32 %v3330, 4294901760
  %3332 = vmatmul.mubr.f32.gmra.mrb[0].mxu0 %v3331
  %v3333 = vpop.f32.mrb[0].mxu0
  %v3334 = vadd.f32 %v3019, %v3333
  %v3335 = vpop.f32.mrb[0].mxu0
  %3336 = vmatprep.mubr.f32.mxu0 0.0
  %v3337 = vand.u32 %v2100, 4294901760
  %v3338 = vsub.f32 %v2100, %v3337
  %v3339 = vand.u32 %v3338, 4294901760
  %3340 = vmatmul.mubr.f32.gmra.mrb[0].mxu0 %v3339
  %v3341 = vpop.f32.mrb[0].mxu0
  %v3342 = vadd.f32 %v3026, %v3341
  %v3343 = vpop.f32.mrb[0].mxu0
  %3344 = vmatprep.mubr.f32.mxu0 0.0
  %v3345 = vand.u32 %v2103, 4294901760
  %v3346 = vsub.f32 %v2103, %v3345
  %v3347 = vand.u32 %v3346, 4294901760
  %3348 = vmatmul.mubr.f32.gmra.mrb[0].mxu0 %v3347
  %v3349 = vpop.f32.mrb[0].mxu0
  %v3350 = vadd.f32 %v3033, %v3349
  %v3351 = vpop.f32.mrb[0].mxu0
  %3352 = vmatprep.mubr.f32.mxu0 0.0
  %v3353 = vand.u32 %v2106, 4294901760
  %v3354 = vsub.f32 %v2106, %v3353
  %v3355 = vand.u32 %v3354, 4294901760
  %3356 = vmatmul.mubr.f32.gmra.mrb[0].mxu0 %v3355
  %v3357 = vpop.f32.mrb[0].mxu0
  %v3358 = vadd.f32 %v3040, %v3357
  %v3359 = vpop.f32.mrb[0].mxu0
  %3360 = vmatprep.mubr.f32.mxu0 0.0
  %v3361 = vand.u32 %v2109, 4294901760
  %v3362 = vsub.f32 %v2109, %v3361
  %v3363 = vand.u32 %v3362, 4294901760
  %3364 = vmatmul.mubr.f32.gmra.mrb[0].mxu0 %v3363
  %v3365 = vpop.f32.mrb[0].mxu0
  %v3366 = vadd.f32 %v3047, %v3365
  %v3367 = vpop.f32.mrb[0].mxu0
  %3368 = vmatprep.mubr.f32.mxu0 0.0
  %v3369 = vand.u32 %v2112, 4294901760
  %v3370 = vsub.f32 %v2112, %v3369
  %v3371 = vand.u32 %v3370, 4294901760
  %3372 = vmatmul.mubr.f32.gmra.mrb[0].mxu0 %v3371
  %v3373 = vpop.f32.mrb[0].mxu0
  %v3374 = vadd.f32 %v3054, %v3373
  %v3375 = vpop.f32.mrb[0].mxu0
  %3376 = vmatprep.mubr.f32.mxu0 0.0
  %v3377 = vand.u32 %v2115, 4294901760
  %v3378 = vsub.f32 %v2115, %v3377
  %v3379 = vand.u32 %v3378, 4294901760
  %3380 = vmatmul.mubr.f32.gmra.mrb[0].mxu0 %v3379
  %v3381 = vpop.f32.mrb[0].mxu0
  %v3382 = vadd.f32 %v3061, %v3381
  %v3383 = vpop.f32.mrb[0].mxu0
  %3384 = vmatprep.mubr.f32.mxu0 0.0
  %v3385 = vand.u32 %v2118, 4294901760
  %v3386 = vsub.f32 %v2118, %v3385
  %v3387 = vand.u32 %v3386, 4294901760
  %3388 = vmatmul.mubr.f32.gmra.mrb[0].mxu0 %v3387
  %v3389 = vpop.f32.mrb[0].mxu0
  %v3390 = vadd.f32 %v3068, %v3389
  %v3391 = vpop.f32.mrb[0].mxu0
  %3392 = vmatprep.mubr.f32.mxu0 0.0
  %v3393 = vand.u32 %v2121, 4294901760
  %v3394 = vsub.f32 %v2121, %v3393
  %v3395 = vand.u32 %v3394, 4294901760
  %3396 = vmatmul.mubr.f32.gmra.mrb[0].mxu0 %v3395
  %v3397 = vpop.f32.mrb[0].mxu0
  %v3398 = vadd.f32 %v3075, %v3397
  %v3399 = vpop.f32.mrb[0].mxu0
  %3400 = vmatprep.mubr.f32.mxu0 0.0
  %v3401 = vand.u32 %v2124, 4294901760
  %v3402 = vsub.f32 %v2124, %v3401
  %v3403 = vand.u32 %v3402, 4294901760
  %3404 = vmatmul.mubr.f32.gmra.mrb[0].mxu0 %v3403
  %v3405 = vpop.f32.mrb[0].mxu0
  %v3406 = vadd.f32 %v3082, %v3405
  %v3407 = vpop.f32.mrb[0].mxu0
  %3408 = vmatprep.mubr.f32.mxu0 0.0
  %v3409 = vand.u32 %v2127, 4294901760
  %v3410 = vsub.f32 %v2127, %v3409
  %v3411 = vand.u32 %v3410, 4294901760
  %3412 = vmatmul.mubr.f32.gmra.mrb[0].mxu0 %v3411
  %v3413 = vpop.f32.mrb[0].mxu0
  %v3414 = vadd.f32 %v3089, %v3413
  %v3415 = vpop.f32.mrb[0].mxu0
  %3416 = vdwg.mxu0
  %3417 = vmatprep.subr.mxu0 0.0
  %v3418 = vand.u32 %v2022, 4294901760
  %v3419 = vsub.f32 %v2022, %v3418
  %v3420 = vand.u32 %v3419, 4294901760
  %3421 = vmatpush1.msra.mxu0 %v3420
  %3422 = vmatprep.subr.mxu0 0.0
  %v3423 = vand.u32 %v2023, 4294901760
  %v3424 = vsub.f32 %v2023, %v3423
  %v3425 = vand.u32 %v3424, 4294901760
  %3426 = vmatpush1.msra.mxu0 %v3425
  %3427 = vmatprep.subr.mxu0 0.0
  %v3428 = vand.u32 %v2024, 4294901760
  %v3429 = vsub.f32 %v2024, %v3428
  %v3430 = vand.u32 %v3429, 4294901760
  %3431 = vmatpush1.msra.mxu0 %v3430
  %3432 = vmatprep.subr.mxu0 0.0
  %v3433 = vand.u32 %v2025, 4294901760
  %v3434 = vsub.f32 %v2025, %v3433
  %v3435 = vand.u32 %v3434, 4294901760
  %3436 = vmatpush1.msra.mxu0 %v3435
  %3437 = vmatprep.subr.mxu0 0.0
  %3438 = vmatpush1.msra.mxu0 0.0
  %3439 = vmatprep.subr.mxu0 0.0
  %3440 = vmatpush1.msra.mxu0 0.0
  %3441 = vmatprep.subr.mxu0 0.0
  %3442 = vmatpush1.msra.mxu0 0.0
  %3443 = vmatprep.subr.mxu0 0.0
  %3444 = vmatpush1.msra.mxu0 0.0
  %3445 = vmatprep.subr.mxu0 0.0
  %3446 = vmatpush1.msra.mxu0 0.0
  %3447 = vmatprep.subr.mxu0 0.0
  %3448 = vmatpush1.msra.mxu0 0.0
  %3449 = vmatprep.subr.mxu0 0.0
  %3450 = vmatpush1.msra.mxu0 0.0
  %3451 = vmatprep.subr.mxu0 0.0
  %3452 = vmatpush1.msra.mxu0 0.0
  %3453 = vmatprep.subr.mxu0 0.0
  %3454 = vmatpush1.msra.mxu0 0.0
  %3455 = vmatprep.subr.mxu0 0.0
  %3456 = vmatpush1.msra.mxu0 0.0
  %3457 = vmatprep.subr.mxu0 0.0
  %3458 = vmatpush1.msra.mxu0 0.0
  %3459 = vmatprep.subr.mxu0 0.0
  %3460 = vmatpush1.msra.mxu0 0.0
  %3461 = vmatprep.subr.mxu0 0.0
  %3462 = vmatpush1.msra.mxu0 0.0
  %3463 = vmatprep.subr.mxu0 0.0
  %3464 = vmatpush1.msra.mxu0 0.0
  %3465 = vmatprep.subr.mxu0 0.0
  %3466 = vmatpush1.msra.mxu0 0.0
  %3467 = vmatprep.subr.mxu0 0.0
  %3468 = vmatpush1.msra.mxu0 0.0
  %3469 = vmatprep.subr.mxu0 0.0
  %3470 = vmatpush1.msra.mxu0 0.0
  %3471 = vmatprep.subr.mxu0 0.0
  %3472 = vmatpush1.msra.mxu0 0.0
  %3473 = vmatprep.subr.mxu0 0.0
  %3474 = vmatpush1.msra.mxu0 0.0
  %3475 = vmatprep.subr.mxu0 0.0
  %3476 = vmatpush1.msra.mxu0 0.0
  %3477 = vmatprep.subr.mxu0 0.0
  %3478 = vmatpush1.msra.mxu0 0.0
  %3479 = vmatprep.subr.mxu0 0.0
  %3480 = vmatpush1.msra.mxu0 0.0
  %3481 = vmatprep.subr.mxu0 0.0
  %3482 = vmatpush1.msra.mxu0 0.0
  %3483 = vmatprep.subr.mxu0 0.0
  %3484 = vmatpush1.msra.mxu0 0.0
  %3485 = vmatprep.subr.mxu0 0.0
  %3486 = vmatpush1.msra.mxu0 0.0
  %3487 = vmatprep.subr.mxu0 0.0
  %3488 = vmatpush1.msra.mxu0 0.0
  %3489 = vmatprep.subr.mxu0 0.0
  %3490 = vmatpush1.msra.mxu0 0.0
  %3491 = vmatprep.subr.mxu0 0.0
  %3492 = vmatpush1.msra.mxu0 0.0
  %3493 = vmatprep.mubr.f32.mxu0 0.0
  %v3494 = vand.u32 %v2034, 4294901760
  %3495 = vmatmul.mubr.f32.gmra.mrb[0].mxu0 %v3494
  %v3496 = vpop.f32.mrb[0].mxu0
  %v3497 = vadd.f32 %v3166, %v3496
  %v3498 = vpop.f32.mrb[0].mxu0
  %3499 = vmatprep.mubr.f32.mxu0 0.0
  %v3500 = vand.u32 %v2037, 4294901760
  %3501 = vmatmul.mubr.f32.gmra.mrb[0].mxu0 %v3500
  %v3502 = vpop.f32.mrb[0].mxu0
  %v3503 = vadd.f32 %v3174, %v3502
  %v3504 = vpop.f32.mrb[0].mxu0
  %3505 = vmatprep.mubr.f32.mxu0 0.0
  %v3506 = vand.u32 %v2040, 4294901760
  %3507 = vmatmul.mubr.f32.gmra.mrb[0].mxu0 %v3506
  %v3508 = vpop.f32.mrb[0].mxu0
  %v3509 = vadd.f32 %v3182, %v3508
  %v3510 = vpop.f32.mrb[0].mxu0
  %3511 = vmatprep.mubr.f32.mxu0 0.0
  %v3512 = vand.u32 %v2043, 4294901760
  %3513 = vmatmul.mubr.f32.gmra.mrb[0].mxu0 %v3512
  %v3514 = vpop.f32.mrb[0].mxu0
  %v3515 = vadd.f32 %v3190, %v3514
  %v3516 = vpop.f32.mrb[0].mxu0
  %3517 = vmatprep.mubr.f32.mxu0 0.0
  %v3518 = vand.u32 %v2046, 4294901760
  %3519 = vmatmul.mubr.f32.gmra.mrb[0].mxu0 %v3518
  %v3520 = vpop.f32.mrb[0].mxu0
  %v3521 = vadd.f32 %v3198, %v3520
  %v3522 = vpop.f32.mrb[0].mxu0
  %3523 = vmatprep.mubr.f32.mxu0 0.0
  %v3524 = vand.u32 %v2049, 4294901760
  %3525 = vmatmul.mubr.f32.gmra.mrb[0].mxu0 %v3524
  %v3526 = vpop.f32.mrb[0].mxu0
  %v3527 = vadd.f32 %v3206, %v3526
  %v3528 = vpop.f32.mrb[0].mxu0
  %3529 = vmatprep.mubr.f32.mxu0 0.0
  %v3530 = vand.u32 %v2052, 4294901760
  %3531 = vmatmul.mubr.f32.gmra.mrb[0].mxu0 %v3530
  %v3532 = vpop.f32.mrb[0].mxu0
  %v3533 = vadd.f32 %v3214, %v3532
  %v3534 = vpop.f32.mrb[0].mxu0
  %3535 = vmatprep.mubr.f32.mxu0 0.0
  %v3536 = vand.u32 %v2055, 4294901760
  %3537 = vmatmul.mubr.f32.gmra.mrb[0].mxu0 %v3536
  %v3538 = vpop.f32.mrb[0].mxu0
  %v3539 = vadd.f32 %v3222, %v3538
  %v3540 = vpop.f32.mrb[0].mxu0
  %3541 = vmatprep.mubr.f32.mxu0 0.0
  %v3542 = vand.u32 %v2058, 4294901760
  %3543 = vmatmul.mubr.f32.gmra.mrb[0].mxu0 %v3542
  %v3544 = vpop.f32.mrb[0].mxu0
  %v3545 = vadd.f32 %v3230, %v3544
  %v3546 = vpop.f32.mrb[0].mxu0
  %3547 = vmatprep.mubr.f32.mxu0 0.0
  %v3548 = vand.u32 %v2061, 4294901760
  %3549 = vmatmul.mubr.f32.gmra.mrb[0].mxu0 %v3548
  %v3550 = vpop.f32.mrb[0].mxu0
  %v3551 = vadd.f32 %v3238, %v3550
  %v3552 = vpop.f32.mrb[0].mxu0
  %3553 = vmatprep.mubr.f32.mxu0 0.0
  %v3554 = vand.u32 %v2064, 4294901760
  %3555 = vmatmul.mubr.f32.gmra.mrb[0].mxu0 %v3554
  %v3556 = vpop.f32.mrb[0].mxu0
  %v3557 = vadd.f32 %v3246, %v3556
  %v3558 = vpop.f32.mrb[0].mxu0
  %3559 = vmatprep.mubr.f32.mxu0 0.0
  %v3560 = vand.u32 %v2067, 4294901760
  %3561 = vmatmul.mubr.f32.gmra.mrb[0].mxu0 %v3560
  %v3562 = vpop.f32.mrb[0].mxu0
  %v3563 = vadd.f32 %v3254, %v3562
  %v3564 = vpop.f32.mrb[0].mxu0
  %3565 = vmatprep.mubr.f32.mxu0 0.0
  %v3566 = vand.u32 %v2070, 4294901760
  %3567 = vmatmul.mubr.f32.gmra.mrb[0].mxu0 %v3566
  %v3568 = vpop.f32.mrb[0].mxu0
  %v3569 = vadd.f32 %v3262, %v3568
  %v3570 = vpop.f32.mrb[0].mxu0
  %3571 = vmatprep.mubr.f32.mxu0 0.0
  %v3572 = vand.u32 %v2073, 4294901760
  %3573 = vmatmul.mubr.f32.gmra.mrb[0].mxu0 %v3572
  %v3574 = vpop.f32.mrb[0].mxu0
  %v3575 = vadd.f32 %v3270, %v3574
  %v3576 = vpop.f32.mrb[0].mxu0
  %3577 = vmatprep.mubr.f32.mxu0 0.0
  %v3578 = vand.u32 %v2076, 4294901760
  %3579 = vmatmul.mubr.f32.gmra.mrb[0].mxu0 %v3578
  %v3580 = vpop.f32.mrb[0].mxu0
  %v3581 = vadd.f32 %v3278, %v3580
  %v3582 = vpop.f32.mrb[0].mxu0
  %3583 = vmatprep.mubr.f32.mxu0 0.0
  %v3584 = vand.u32 %v2079, 4294901760
  %3585 = vmatmul.mubr.f32.gmra.mrb[0].mxu0 %v3584
  %v3586 = vpop.f32.mrb[0].mxu0
  %v3587 = vadd.f32 %v3286, %v3586
  %v3588 = vpop.f32.mrb[0].mxu0
  %3589 = vmatprep.mubr.f32.mxu0 0.0
  %v3590 = vand.u32 %v2082, 4294901760
  %3591 = vmatmul.mubr.f32.gmra.mrb[0].mxu0 %v3590
  %v3592 = vpop.f32.mrb[0].mxu0
  %v3593 = vadd.f32 %v3294, %v3592
  %v3594 = vpop.f32.mrb[0].mxu0
  %3595 = vmatprep.mubr.f32.mxu0 0.0
  %v3596 = vand.u32 %v2085, 4294901760
  %3597 = vmatmul.mubr.f32.gmra.mrb[0].mxu0 %v3596
  %v3598 = vpop.f32.mrb[0].mxu0
  %v3599 = vadd.f32 %v3302, %v3598
  %v3600 = vpop.f32.mrb[0].mxu0
  %3601 = vmatprep.mubr.f32.mxu0 0.0
  %v3602 = vand.u32 %v2088, 4294901760
  %3603 = vmatmul.mubr.f32.gmra.mrb[0].mxu0 %v3602
  %v3604 = vpop.f32.mrb[0].mxu0
  %v3605 = vadd.f32 %v3310, %v3604
  %v3606 = vpop.f32.mrb[0].mxu0
  %3607 = vmatprep.mubr.f32.mxu0 0.0
  %v3608 = vand.u32 %v2091, 4294901760
  %3609 = vmatmul.mubr.f32.gmra.mrb[0].mxu0 %v3608
  %v3610 = vpop.f32.mrb[0].mxu0
  %v3611 = vadd.f32 %v3318, %v3610
  %v3612 = vpop.f32.mrb[0].mxu0
  %3613 = vmatprep.mubr.f32.mxu0 0.0
  %v3614 = vand.u32 %v2094, 4294901760
  %3615 = vmatmul.mubr.f32.gmra.mrb[0].mxu0 %v3614
  %v3616 = vpop.f32.mrb[0].mxu0
  %v3617 = vadd.f32 %v3326, %v3616
  %v3618 = vpop.f32.mrb[0].mxu0
  %3619 = vmatprep.mubr.f32.mxu0 0.0
  %v3620 = vand.u32 %v2097, 4294901760
  %3621 = vmatmul.mubr.f32.gmra.mrb[0].mxu0 %v3620
  %v3622 = vpop.f32.mrb[0].mxu0
  %v3623 = vadd.f32 %v3334, %v3622
  %v3624 = vpop.f32.mrb[0].mxu0
  %3625 = vmatprep.mubr.f32.mxu0 0.0
  %v3626 = vand.u32 %v2100, 4294901760
  %3627 = vmatmul.mubr.f32.gmra.mrb[0].mxu0 %v3626
  %v3628 = vpop.f32.mrb[0].mxu0
  %v3629 = vadd.f32 %v3342, %v3628
  %v3630 = vpop.f32.mrb[0].mxu0
  %3631 = vmatprep.mubr.f32.mxu0 0.0
  %v3632 = vand.u32 %v2103, 4294901760
  %3633 = vmatmul.mubr.f32.gmra.mrb[0].mxu0 %v3632
  %v3634 = vpop.f32.mrb[0].mxu0
  %v3635 = vadd.f32 %v3350, %v3634
  %v3636 = vpop.f32.mrb[0].mxu0
  %3637 = vmatprep.mubr.f32.mxu0 0.0
  %v3638 = vand.u32 %v2106, 4294901760
  %3639 = vmatmul.mubr.f32.gmra.mrb[0].mxu0 %v3638
  %v3640 = vpop.f32.mrb[0].mxu0
  %v3641 = vadd.f32 %v3358, %v3640
  %v3642 = vpop.f32.mrb[0].mxu0
  %3643 = vmatprep.mubr.f32.mxu0 0.0
  %v3644 = vand.u32 %v2109, 4294901760
  %3645 = vmatmul.mubr.f32.gmra.mrb[0].mxu0 %v3644
  %v3646 = vpop.f32.mrb[0].mxu0
  %v3647 = vadd.f32 %v3366, %v3646
  %v3648 = vpop.f32.mrb[0].mxu0
  %3649 = vmatprep.mubr.f32.mxu0 0.0
  %v3650 = vand.u32 %v2112, 4294901760
  %3651 = vmatmul.mubr.f32.gmra.mrb[0].mxu0 %v3650
  %v3652 = vpop.f32.mrb[0].mxu0
  %v3653 = vadd.f32 %v3374, %v3652
  %v3654 = vpop.f32.mrb[0].mxu0
  %3655 = vmatprep.mubr.f32.mxu0 0.0
  %v3656 = vand.u32 %v2115, 4294901760
  %3657 = vmatmul.mubr.f32.gmra.mrb[0].mxu0 %v3656
  %v3658 = vpop.f32.mrb[0].mxu0
  %v3659 = vadd.f32 %v3382, %v3658
  %v3660 = vpop.f32.mrb[0].mxu0
  %3661 = vmatprep.mubr.f32.mxu0 0.0
  %v3662 = vand.u32 %v2118, 4294901760
  %3663 = vmatmul.mubr.f32.gmra.mrb[0].mxu0 %v3662
  %v3664 = vpop.f32.mrb[0].mxu0
  %v3665 = vadd.f32 %v3390, %v3664
  %v3666 = vpop.f32.mrb[0].mxu0
  %3667 = vmatprep.mubr.f32.mxu0 0.0
  %v3668 = vand.u32 %v2121, 4294901760
  %3669 = vmatmul.mubr.f32.gmra.mrb[0].mxu0 %v3668
  %v3670 = vpop.f32.mrb[0].mxu0
  %v3671 = vadd.f32 %v3398, %v3670
  %v3672 = vpop.f32.mrb[0].mxu0
  %3673 = vmatprep.mubr.f32.mxu0 0.0
  %v3674 = vand.u32 %v2124, 4294901760
  %3675 = vmatmul.mubr.f32.gmra.mrb[0].mxu0 %v3674
  %v3676 = vpop.f32.mrb[0].mxu0
  %v3677 = vadd.f32 %v3406, %v3676
  %v3678 = vpop.f32.mrb[0].mxu0
  %3679 = vmatprep.mubr.f32.mxu0 0.0
  %v3680 = vand.u32 %v2127, 4294901760
  %3681 = vmatmul.mubr.f32.gmra.mrb[0].mxu0 %v3680
  %v3682 = vpop.f32.mrb[0].mxu0
  %v3683 = vadd.f32 %v3414, %v3682
  %v3684 = vpop.f32.mrb[0].mxu0
  %3685 = vdwg.mxu0
  %3686 = vmatprep.subr.mxu0 0.0
  %v3687 = vand.u32 %v2022, 4294901760
  %3688 = vmatpush1.msra.mxu0 %v3687
  %3689 = vmatprep.subr.mxu0 0.0
  %v3690 = vand.u32 %v2023, 4294901760
  %3691 = vmatpush1.msra.mxu0 %v3690
  %3692 = vmatprep.subr.mxu0 0.0
  %v3693 = vand.u32 %v2024, 4294901760
  %3694 = vmatpush1.msra.mxu0 %v3693
  %3695 = vmatprep.subr.mxu0 0.0
  %v3696 = vand.u32 %v2025, 4294901760
  %3697 = vmatpush1.msra.mxu0 %v3696
  %3698 = vmatprep.subr.mxu0 0.0
  %3699 = vmatpush1.msra.mxu0 0.0
  %3700 = vmatprep.subr.mxu0 0.0
  %3701 = vmatpush1.msra.mxu0 0.0
  %3702 = vmatprep.subr.mxu0 0.0
  %3703 = vmatpush1.msra.mxu0 0.0
  %3704 = vmatprep.subr.mxu0 0.0
  %3705 = vmatpush1.msra.mxu0 0.0
  %3706 = vmatprep.subr.mxu0 0.0
  %3707 = vmatpush1.msra.mxu0 0.0
  %3708 = vmatprep.subr.mxu0 0.0
  %3709 = vmatpush1.msra.mxu0 0.0
  %3710 = vmatprep.subr.mxu0 0.0
  %3711 = vmatpush1.msra.mxu0 0.0
  %3712 = vmatprep.subr.mxu0 0.0
  %3713 = vmatpush1.msra.mxu0 0.0
  %3714 = vmatprep.subr.mxu0 0.0
  %3715 = vmatpush1.msra.mxu0 0.0
  %3716 = vmatprep.subr.mxu0 0.0
  %3717 = vmatpush1.msra.mxu0 0.0
  %3718 = vmatprep.subr.mxu0 0.0
  %3719 = vmatpush1.msra.mxu0 0.0
  %3720 = vmatprep.subr.mxu0 0.0
  %3721 = vmatpush1.msra.mxu0 0.0
  %3722 = vmatprep.subr.mxu0 0.0
  %3723 = vmatpush1.msra.mxu0 0.0
  %3724 = vmatprep.subr.mxu0 0.0
  %3725 = vmatpush1.msra.mxu0 0.0
  %3726 = vmatprep.subr.mxu0 0.0
  %3727 = vmatpush1.msra.mxu0 0.0
  %3728 = vmatprep.subr.mxu0 0.0
  %3729 = vmatpush1.msra.mxu0 0.0
  %3730 = vmatprep.subr.mxu0 0.0
  %3731 = vmatpush1.msra.mxu0 0.0
  %3732 = vmatprep.subr.mxu0 0.0
  %3733 = vmatpush1.msra.mxu0 0.0
  %3734 = vmatprep.subr.mxu0 0.0
  %3735 = vmatpush1.msra.mxu0 0.0
  %3736 = vmatprep.subr.mxu0 0.0
  %3737 = vmatpush1.msra.mxu0 0.0
  %3738 = vmatprep.subr.mxu0 0.0
  %3739 = vmatpush1.msra.mxu0 0.0
  %3740 = vmatprep.subr.mxu0 0.0
  %3741 = vmatpush1.msra.mxu0 0.0
  %3742 = vmatprep.subr.mxu0 0.0
  %3743 = vmatpush1.msra.mxu0 0.0
  %3744 = vmatprep.subr.mxu0 0.0
  %3745 = vmatpush1.msra.mxu0 0.0
  %3746 = vmatprep.subr.mxu0 0.0
  %3747 = vmatpush1.msra.mxu0 0.0
  %3748 = vmatprep.subr.mxu0 0.0
  %3749 = vmatpush1.msra.mxu0 0.0
  %3750 = vmatprep.subr.mxu0 0.0
  %3751 = vmatpush1.msra.mxu0 0.0
  %3752 = vmatprep.subr.mxu0 0.0
  %3753 = vmatpush1.msra.mxu0 0.0
  %3754 = vmatprep.mubr.f32.mxu0 0.0
  %v3755 = vand.u32 %v2034, 4294901760
  %3756 = vmatmul.mubr.f32.gmra.mrb[0].mxu0 %v3755
  %v3757 = vpop.f32.mrb[0].mxu0
  %v3758 = vadd.f32 %v3497, %v3757
  %v3759 = vpop.f32.mrb[0].mxu0
  %3760 = vmatprep.mubr.f32.mxu0 0.0
  %v3761 = vand.u32 %v2037, 4294901760
  %3762 = vmatmul.mubr.f32.gmra.mrb[0].mxu0 %v3761
  %v3763 = vpop.f32.mrb[0].mxu0
  %v3764 = vadd.f32 %v3503, %v3763
  %v3765 = vpop.f32.mrb[0].mxu0
  %3766 = vmatprep.mubr.f32.mxu0 0.0
  %v3767 = vand.u32 %v2040, 4294901760
  %3768 = vmatmul.mubr.f32.gmra.mrb[0].mxu0 %v3767
  %v3769 = vpop.f32.mrb[0].mxu0
  %v3770 = vadd.f32 %v3509, %v3769
  %v3771 = vpop.f32.mrb[0].mxu0
  %3772 = vmatprep.mubr.f32.mxu0 0.0
  %v3773 = vand.u32 %v2043, 4294901760
  %3774 = vmatmul.mubr.f32.gmra.mrb[0].mxu0 %v3773
  %v3775 = vpop.f32.mrb[0].mxu0
  %v3776 = vadd.f32 %v3515, %v3775
  %v3777 = vpop.f32.mrb[0].mxu0
  %3778 = vmatprep.mubr.f32.mxu0 0.0
  %v3779 = vand.u32 %v2046, 4294901760
  %3780 = vmatmul.mubr.f32.gmra.mrb[0].mxu0 %v3779
  %v3781 = vpop.f32.mrb[0].mxu0
  %v3782 = vadd.f32 %v3521, %v3781
  %v3783 = vpop.f32.mrb[0].mxu0
  %3784 = vmatprep.mubr.f32.mxu0 0.0
  %v3785 = vand.u32 %v2049, 4294901760
  %3786 = vmatmul.mubr.f32.gmra.mrb[0].mxu0 %v3785
  %v3787 = vpop.f32.mrb[0].mxu0
  %v3788 = vadd.f32 %v3527, %v3787
  %v3789 = vpop.f32.mrb[0].mxu0
  %3790 = vmatprep.mubr.f32.mxu0 0.0
  %v3791 = vand.u32 %v2052, 4294901760
  %3792 = vmatmul.mubr.f32.gmra.mrb[0].mxu0 %v3791
  %v3793 = vpop.f32.mrb[0].mxu0
  %v3794 = vadd.f32 %v3533, %v3793
  %v3795 = vpop.f32.mrb[0].mxu0
  %3796 = vmatprep.mubr.f32.mxu0 0.0
  %v3797 = vand.u32 %v2055, 4294901760
  %3798 = vmatmul.mubr.f32.gmra.mrb[0].mxu0 %v3797
  %v3799 = vpop.f32.mrb[0].mxu0
  %v3800 = vadd.f32 %v3539, %v3799
  %v3801 = vpop.f32.mrb[0].mxu0
  %3802 = vmatprep.mubr.f32.mxu0 0.0
  %v3803 = vand.u32 %v2058, 4294901760
  %3804 = vmatmul.mubr.f32.gmra.mrb[0].mxu0 %v3803
  %v3805 = vpop.f32.mrb[0].mxu0
  %v3806 = vadd.f32 %v3545, %v3805
  %v3807 = vpop.f32.mrb[0].mxu0
  %3808 = vmatprep.mubr.f32.mxu0 0.0
  %v3809 = vand.u32 %v2061, 4294901760
  %3810 = vmatmul.mubr.f32.gmra.mrb[0].mxu0 %v3809
  %v3811 = vpop.f32.mrb[0].mxu0
  %v3812 = vadd.f32 %v3551, %v3811
  %v3813 = vpop.f32.mrb[0].mxu0
  %3814 = vmatprep.mubr.f32.mxu0 0.0
  %v3815 = vand.u32 %v2064, 4294901760
  %3816 = vmatmul.mubr.f32.gmra.mrb[0].mxu0 %v3815
  %v3817 = vpop.f32.mrb[0].mxu0
  %v3818 = vadd.f32 %v3557, %v3817
  %v3819 = vpop.f32.mrb[0].mxu0
  %3820 = vmatprep.mubr.f32.mxu0 0.0
  %v3821 = vand.u32 %v2067, 4294901760
  %3822 = vmatmul.mubr.f32.gmra.mrb[0].mxu0 %v3821
  %v3823 = vpop.f32.mrb[0].mxu0
  %v3824 = vadd.f32 %v3563, %v3823
  %v3825 = vpop.f32.mrb[0].mxu0
  %3826 = vmatprep.mubr.f32.mxu0 0.0
  %v3827 = vand.u32 %v2070, 4294901760
  %3828 = vmatmul.mubr.f32.gmra.mrb[0].mxu0 %v3827
  %v3829 = vpop.f32.mrb[0].mxu0
  %v3830 = vadd.f32 %v3569, %v3829
  %v3831 = vpop.f32.mrb[0].mxu0
  %3832 = vmatprep.mubr.f32.mxu0 0.0
  %v3833 = vand.u32 %v2073, 4294901760
  %3834 = vmatmul.mubr.f32.gmra.mrb[0].mxu0 %v3833
  %v3835 = vpop.f32.mrb[0].mxu0
  %v3836 = vadd.f32 %v3575, %v3835
  %v3837 = vpop.f32.mrb[0].mxu0
  %3838 = vmatprep.mubr.f32.mxu0 0.0
  %v3839 = vand.u32 %v2076, 4294901760
  %3840 = vmatmul.mubr.f32.gmra.mrb[0].mxu0 %v3839
  %v3841 = vpop.f32.mrb[0].mxu0
  %v3842 = vadd.f32 %v3581, %v3841
  %v3843 = vpop.f32.mrb[0].mxu0
  %3844 = vmatprep.mubr.f32.mxu0 0.0
  %v3845 = vand.u32 %v2079, 4294901760
  %3846 = vmatmul.mubr.f32.gmra.mrb[0].mxu0 %v3845
  %v3847 = vpop.f32.mrb[0].mxu0
  %v3848 = vadd.f32 %v3587, %v3847
  %v3849 = vpop.f32.mrb[0].mxu0
  %3850 = vmatprep.mubr.f32.mxu0 0.0
  %v3851 = vand.u32 %v2082, 4294901760
  %3852 = vmatmul.mubr.f32.gmra.mrb[0].mxu0 %v3851
  %v3853 = vpop.f32.mrb[0].mxu0
  %v3854 = vadd.f32 %v3593, %v3853
  %v3855 = vpop.f32.mrb[0].mxu0
  %3856 = vmatprep.mubr.f32.mxu0 0.0
  %v3857 = vand.u32 %v2085, 4294901760
  %3858 = vmatmul.mubr.f32.gmra.mrb[0].mxu0 %v3857
  %v3859 = vpop.f32.mrb[0].mxu0
  %v3860 = vadd.f32 %v3599, %v3859
  %v3861 = vpop.f32.mrb[0].mxu0
  %3862 = vmatprep.mubr.f32.mxu0 0.0
  %v3863 = vand.u32 %v2088, 4294901760
  %3864 = vmatmul.mubr.f32.gmra.mrb[0].mxu0 %v3863
  %v3865 = vpop.f32.mrb[0].mxu0
  %v3866 = vadd.f32 %v3605, %v3865
  %v3867 = vpop.f32.mrb[0].mxu0
  %3868 = vmatprep.mubr.f32.mxu0 0.0
  %v3869 = vand.u32 %v2091, 4294901760
  %3870 = vmatmul.mubr.f32.gmra.mrb[0].mxu0 %v3869
  %v3871 = vpop.f32.mrb[0].mxu0
  %v3872 = vadd.f32 %v3611, %v3871
  %v3873 = vpop.f32.mrb[0].mxu0
  %3874 = vmatprep.mubr.f32.mxu0 0.0
  %v3875 = vand.u32 %v2094, 4294901760
  %3876 = vmatmul.mubr.f32.gmra.mrb[0].mxu0 %v3875
  %v3877 = vpop.f32.mrb[0].mxu0
  %v3878 = vadd.f32 %v3617, %v3877
  %v3879 = vpop.f32.mrb[0].mxu0
  %3880 = vmatprep.mubr.f32.mxu0 0.0
  %v3881 = vand.u32 %v2097, 4294901760
  %3882 = vmatmul.mubr.f32.gmra.mrb[0].mxu0 %v3881
  %v3883 = vpop.f32.mrb[0].mxu0
  %v3884 = vadd.f32 %v3623, %v3883
  %v3885 = vpop.f32.mrb[0].mxu0
  %3886 = vmatprep.mubr.f32.mxu0 0.0
  %v3887 = vand.u32 %v2100, 4294901760
  %3888 = vmatmul.mubr.f32.gmra.mrb[0].mxu0 %v3887
  %v3889 = vpop.f32.mrb[0].mxu0
  %v3890 = vadd.f32 %v3629, %v3889
  %v3891 = vpop.f32.mrb[0].mxu0
  %3892 = vmatprep.mubr.f32.mxu0 0.0
  %v3893 = vand.u32 %v2103, 4294901760
  %3894 = vmatmul.mubr.f32.gmra.mrb[0].mxu0 %v3893
  %v3895 = vpop.f32.mrb[0].mxu0
  %v3896 = vadd.f32 %v3635, %v3895
  %v3897 = vpop.f32.mrb[0].mxu0
  %3898 = vmatprep.mubr.f32.mxu0 0.0
  %v3899 = vand.u32 %v2106, 4294901760
  %3900 = vmatmul.mubr.f32.gmra.mrb[0].mxu0 %v3899
  %v3901 = vpop.f32.mrb[0].mxu0
  %v3902 = vadd.f32 %v3641, %v3901
  %v3903 = vpop.f32.mrb[0].mxu0
  %3904 = vmatprep.mubr.f32.mxu0 0.0
  %v3905 = vand.u32 %v2109, 4294901760
  %3906 = vmatmul.mubr.f32.gmra.mrb[0].mxu0 %v3905
  %v3907 = vpop.f32.mrb[0].mxu0
  %v3908 = vadd.f32 %v3647, %v3907
  %v3909 = vpop.f32.mrb[0].mxu0
  %3910 = vmatprep.mubr.f32.mxu0 0.0
  %v3911 = vand.u32 %v2112, 4294901760
  %3912 = vmatmul.mubr.f32.gmra.mrb[0].mxu0 %v3911
  %v3913 = vpop.f32.mrb[0].mxu0
  %v3914 = vadd.f32 %v3653, %v3913
  %v3915 = vpop.f32.mrb[0].mxu0
  %3916 = vmatprep.mubr.f32.mxu0 0.0
  %v3917 = vand.u32 %v2115, 4294901760
  %3918 = vmatmul.mubr.f32.gmra.mrb[0].mxu0 %v3917
  %v3919 = vpop.f32.mrb[0].mxu0
  %v3920 = vadd.f32 %v3659, %v3919
  %v3921 = vpop.f32.mrb[0].mxu0
  %3922 = vmatprep.mubr.f32.mxu0 0.0
  %v3923 = vand.u32 %v2118, 4294901760
  %3924 = vmatmul.mubr.f32.gmra.mrb[0].mxu0 %v3923
  %v3925 = vpop.f32.mrb[0].mxu0
  %v3926 = vadd.f32 %v3665, %v3925
  %v3927 = vpop.f32.mrb[0].mxu0
  %3928 = vmatprep.mubr.f32.mxu0 0.0
  %v3929 = vand.u32 %v2121, 4294901760
  %3930 = vmatmul.mubr.f32.gmra.mrb[0].mxu0 %v3929
  %v3931 = vpop.f32.mrb[0].mxu0
  %v3932 = vadd.f32 %v3671, %v3931
  %v3933 = vpop.f32.mrb[0].mxu0
  %3934 = vmatprep.mubr.f32.mxu0 0.0
  %v3935 = vand.u32 %v2124, 4294901760
  %3936 = vmatmul.mubr.f32.gmra.mrb[0].mxu0 %v3935
  %v3937 = vpop.f32.mrb[0].mxu0
  %v3938 = vadd.f32 %v3677, %v3937
  %v3939 = vpop.f32.mrb[0].mxu0
  %3940 = vmatprep.mubr.f32.mxu0 0.0
  %v3941 = vand.u32 %v2127, 4294901760
  %3942 = vmatmul.mubr.f32.gmra.mrb[0].mxu0 %v3941
  %v3943 = vpop.f32.mrb[0].mxu0
  %v3944 = vadd.f32 %v3683, %v3943
  %v3945 = vpop.f32.mrb[0].mxu0
  %3946 = vdwg.mxu0
  %v3947 = vld [vmem:[%s2] sm:$0xff]
  %v3948 = vld [vmem:[%s2 + $0x8] sm:$0xff]
  %v3949 = vld [vmem:[%s2 + $0x10] sm:$0xff]
  %v3950 = vld [vmem:[%s2 + $0x18] sm:$0xff]
  %v3951 = vld [vmem:[%s2 + $0x20] sm:$0xff]
  %v3952 = vld [vmem:[%s2 + $0x28] sm:$0xff]
  %v3953 = vld [vmem:[%s2 + $0x30] sm:$0xff]
  %v3954 = vld [vmem:[%s2 + $0x38] sm:$0xff]
  %v3955 = vld [vmem:[%s2 + $0x40] sm:$0xff]
  %v3956 = vld [vmem:[%s2 + $0x48] sm:$0xff]
  %v3957 = vld [vmem:[%s2 + $0x50] sm:$0xff]
  %v3958 = vld [vmem:[%s2 + $0x58] sm:$0xff]
  %v3959 = vld [vmem:[%s2 + $0x60] sm:$0xff]
  %v3960 = vld [vmem:[%s2 + $0x68] sm:$0xff]
  %v3961 = vld [vmem:[%s2 + $0x70] sm:$0xff]
  %v3962 = vld [vmem:[%s2 + $0x78] sm:$0xff]
  %v3963 = vld [vmem:[%s2 + $0x80] sm:$0xff]
  %v3964 = vld [vmem:[%s2 + $0x88] sm:$0xff]
  %v3965 = vld [vmem:[%s2 + $0x90] sm:$0xff]
  %v3966 = vld [vmem:[%s2 + $0x98] sm:$0xff]
  %v3967 = vld [vmem:[%s2 + $0xa0] sm:$0xff]
  %v3968 = vld [vmem:[%s2 + $0xa8] sm:$0xff]
  %v3969 = vld [vmem:[%s2 + $0xb0] sm:$0xff]
  %v3970 = vld [vmem:[%s2 + $0xb8] sm:$0xff]
  %v3971 = vld [vmem:[%s2 + $0xc0] sm:$0xff]
  %v3972 = vld [vmem:[%s2 + $0xc8] sm:$0xff]
  %v3973 = vld [vmem:[%s2 + $0xd0] sm:$0xff]
  %v3974 = vld [vmem:[%s2 + $0xd8] sm:$0xff]
  %v3975 = vld [vmem:[%s2 + $0xe0] sm:$0xff]
  %v3976 = vld [vmem:[%s2 + $0xe8] sm:$0xff]
  %v3977 = vld [vmem:[%s2 + $0xf0] sm:$0xff]
  %v3978 = vld [vmem:[%s2 + $0xf8] sm:$0xff]
  %v3979 = vld [vmem:[%s5] sm:$0xff]
  %v3980 = vld [vmem:[%s5 + $0x8] sm:$0xff]
  %v3981 = vld [vmem:[%s5 + $0x10] sm:$0xff]
  %v3982 = vld [vmem:[%s5 + $0x18] sm:$0xff]
  %v3983 = vld [vmem:[%s8] sm:$0x1]
  %v3985 = vlaneseq
  %v3986 = vshrl.u32 %v3985, 7
  %v3987 = vsub.s32 0, %v3986
  %v3988 = vrot.slane %v3983, %v3987
  %v3991 = vsel %vm75, %v3947, 0
  %v3994 = vsel %vm75, %v3948, 0
  %v3997 = vsel %vm75, %v3949, 0
  %v4000 = vsel %vm75, %v3950, 0
  %v4003 = vsel %vm75, %v3951, 0
  %v4006 = vsel %vm75, %v3952, 0
  %v4009 = vsel %vm75, %v3953, 0
  %v4012 = vsel %vm75, %v3954, 0
  %v4015 = vsel %vm75, %v3955, 0
  %v4018 = vsel %vm75, %v3956, 0
  %v4021 = vsel %vm75, %v3957, 0
  %v4024 = vsel %vm75, %v3958, 0
  %v4027 = vsel %vm75, %v3959, 0
  %v4030 = vsel %vm75, %v3960, 0
  %v4033 = vsel %vm75, %v3961, 0
  %v4036 = vsel %vm75, %v3962, 0
  %v4039 = vsel %vm75, %v3963, 0
  %v4042 = vsel %vm75, %v3964, 0
  %v4045 = vsel %vm75, %v3965, 0
  %v4048 = vsel %vm75, %v3966, 0
  %v4051 = vsel %vm75, %v3967, 0
  %v4054 = vsel %vm75, %v3968, 0
  %v4057 = vsel %vm75, %v3969, 0
  %v4060 = vsel %vm75, %v3970, 0
  %v4063 = vsel %vm75, %v3971, 0
  %v4066 = vsel %vm75, %v3972, 0
  %v4069 = vsel %vm75, %v3973, 0
  %v4072 = vsel %vm75, %v3974, 0
  %v4075 = vsel %vm75, %v3975, 0
  %v4078 = vsel %vm75, %v3976, 0
  %v4081 = vsel %vm75, %v3977, 0
  %v4084 = vsel %vm75, %v3978, 0
  %4086 = vmatprep.subr.mxu0 0.0
  %v4087 = vand.u32 %v3979, 4294901760
  %4088 = vmatpush1.msra.mxu0 %v4087
  %4089 = vmatprep.subr.mxu0 0.0
  %v4090 = vand.u32 %v3980, 4294901760
  %4091 = vmatpush1.msra.mxu0 %v4090
  %4092 = vmatprep.subr.mxu0 0.0
  %v4093 = vand.u32 %v3981, 4294901760
  %4094 = vmatpush1.msra.mxu0 %v4093
  %4095 = vmatprep.subr.mxu0 0.0
  %v4096 = vand.u32 %v3982, 4294901760
  %4097 = vmatpush1.msra.mxu0 %v4096
  %4098 = vmatprep.subr.mxu0 0.0
  %4099 = vmatpush1.msra.mxu0 0.0
  %4100 = vmatprep.subr.mxu0 0.0
  %4101 = vmatpush1.msra.mxu0 0.0
  %4102 = vmatprep.subr.mxu0 0.0
  %4103 = vmatpush1.msra.mxu0 0.0
  %4104 = vmatprep.subr.mxu0 0.0
  %4105 = vmatpush1.msra.mxu0 0.0
  %4106 = vmatprep.subr.mxu0 0.0
  %4107 = vmatpush1.msra.mxu0 0.0
  %4108 = vmatprep.subr.mxu0 0.0
  %4109 = vmatpush1.msra.mxu0 0.0
  %4110 = vmatprep.subr.mxu0 0.0
  %4111 = vmatpush1.msra.mxu0 0.0
  %4112 = vmatprep.subr.mxu0 0.0
  %4113 = vmatpush1.msra.mxu0 0.0
  %4114 = vmatprep.subr.mxu0 0.0
  %4115 = vmatpush1.msra.mxu0 0.0
  %4116 = vmatprep.subr.mxu0 0.0
  %4117 = vmatpush1.msra.mxu0 0.0
  %4118 = vmatprep.subr.mxu0 0.0
  %4119 = vmatpush1.msra.mxu0 0.0
  %4120 = vmatprep.subr.mxu0 0.0
  %4121 = vmatpush1.msra.mxu0 0.0
  %4122 = vmatprep.subr.mxu0 0.0
  %4123 = vmatpush1.msra.mxu0 0.0
  %4124 = vmatprep.subr.mxu0 0.0
  %4125 = vmatpush1.msra.mxu0 0.0
  %4126 = vmatprep.subr.mxu0 0.0
  %4127 = vmatpush1.msra.mxu0 0.0
  %4128 = vmatprep.subr.mxu0 0.0
  %4129 = vmatpush1.msra.mxu0 0.0
  %4130 = vmatprep.subr.mxu0 0.0
  %4131 = vmatpush1.msra.mxu0 0.0
  %4132 = vmatprep.subr.mxu0 0.0
  %4133 = vmatpush1.msra.mxu0 0.0
  %4134 = vmatprep.subr.mxu0 0.0
  %4135 = vmatpush1.msra.mxu0 0.0
  %4136 = vmatprep.subr.mxu0 0.0
  %4137 = vmatpush1.msra.mxu0 0.0
  %4138 = vmatprep.subr.mxu0 0.0
  %4139 = vmatpush1.msra.mxu0 0.0
  %4140 = vmatprep.subr.mxu0 0.0
  %4141 = vmatpush1.msra.mxu0 0.0
  %4142 = vmatprep.subr.mxu0 0.0
  %4143 = vmatpush1.msra.mxu0 0.0
  %4144 = vmatprep.subr.mxu0 0.0
  %4145 = vmatpush1.msra.mxu0 0.0
  %4146 = vmatprep.subr.mxu0 0.0
  %4147 = vmatpush1.msra.mxu0 0.0
  %4148 = vmatprep.subr.mxu0 0.0
  %4149 = vmatpush1.msra.mxu0 0.0
  %4150 = vmatprep.subr.mxu0 0.0
  %4151 = vmatpush1.msra.mxu0 0.0
  %4152 = vmatprep.subr.mxu0 0.0
  %4153 = vmatpush1.msra.mxu0 0.0
  %4154 = vmatprep.mubr.f32.mxu0 0.0
  %v4155 = vand.u32 %v3991, 4294901760
  %v4156 = vsub.f32 %v3991, %v4155
  %v4157 = vand.u32 %v4156, 4294901760
  %v4158 = vsub.f32 %v4156, %v4157
  %v4159 = vand.u32 %v4158, 4294901760
  %4160 = vmatmul.mubr.f32.gmra.mrb[0].mxu0 %v4159
  %v4161 = vpop.f32.mrb[0].mxu0
  %v4162 = vadd.f32 %v3988, %v4161
  %v4163 = vpop.f32.mrb[0].mxu0
  %4164 = vmatprep.mubr.f32.mxu0 0.0
  %v4165 = vand.u32 %v3994, 4294901760
  %v4166 = vsub.f32 %v3994, %v4165
  %v4167 = vand.u32 %v4166, 4294901760
  %v4168 = vsub.f32 %v4166, %v4167
  %v4169 = vand.u32 %v4168, 4294901760
  %4170 = vmatmul.mubr.f32.gmra.mrb[0].mxu0 %v4169
  %v4171 = vpop.f32.mrb[0].mxu0
  %v4172 = vadd.f32 %v3988, %v4171
  %v4173 = vpop.f32.mrb[0].mxu0
  %4174 = vmatprep.mubr.f32.mxu0 0.0
  %v4175 = vand.u32 %v3997, 4294901760
  %v4176 = vsub.f32 %v3997, %v4175
  %v4177 = vand.u32 %v4176, 4294901760
  %v4178 = vsub.f32 %v4176, %v4177
  %v4179 = vand.u32 %v4178, 4294901760
  %4180 = vmatmul.mubr.f32.gmra.mrb[0].mxu0 %v4179
  %v4181 = vpop.f32.mrb[0].mxu0
  %v4182 = vadd.f32 %v3988, %v4181
  %v4183 = vpop.f32.mrb[0].mxu0
  %4184 = vmatprep.mubr.f32.mxu0 0.0
  %v4185 = vand.u32 %v4000, 4294901760
  %v4186 = vsub.f32 %v4000, %v4185
  %v4187 = vand.u32 %v4186, 4294901760
  %v4188 = vsub.f32 %v4186, %v4187
  %v4189 = vand.u32 %v4188, 4294901760
  %4190 = vmatmul.mubr.f32.gmra.mrb[0].mxu0 %v4189
  %v4191 = vpop.f32.mrb[0].mxu0
  %v4192 = vadd.f32 %v3988, %v4191
  %v4193 = vpop.f32.mrb[0].mxu0
  %4194 = vmatprep.mubr.f32.mxu0 0.0
  %v4195 = vand.u32 %v4003, 4294901760
  %v4196 = vsub.f32 %v4003, %v4195
  %v4197 = vand.u32 %v4196, 4294901760
  %v4198 = vsub.f32 %v4196, %v4197
  %v4199 = vand.u32 %v4198, 4294901760
  %4200 = vmatmul.mubr.f32.gmra.mrb[0].mxu0 %v4199
  %v4201 = vpop.f32.mrb[0].mxu0
  %v4202 = vadd.f32 %v3988, %v4201
  %v4203 = vpop.f32.mrb[0].mxu0
  %4204 = vmatprep.mubr.f32.mxu0 0.0
  %v4205 = vand.u32 %v4006, 4294901760
  %v4206 = vsub.f32 %v4006, %v4205
  %v4207 = vand.u32 %v4206, 4294901760
  %v4208 = vsub.f32 %v4206, %v4207
  %v4209 = vand.u32 %v4208, 4294901760
  %4210 = vmatmul.mubr.f32.gmra.mrb[0].mxu0 %v4209
  %v4211 = vpop.f32.mrb[0].mxu0
  %v4212 = vadd.f32 %v3988, %v4211
  %v4213 = vpop.f32.mrb[0].mxu0
  %4214 = vmatprep.mubr.f32.mxu0 0.0
  %v4215 = vand.u32 %v4009, 4294901760
  %v4216 = vsub.f32 %v4009, %v4215
  %v4217 = vand.u32 %v4216, 4294901760
  %v4218 = vsub.f32 %v4216, %v4217
  %v4219 = vand.u32 %v4218, 4294901760
  %4220 = vmatmul.mubr.f32.gmra.mrb[0].mxu0 %v4219
  %v4221 = vpop.f32.mrb[0].mxu0
  %v4222 = vadd.f32 %v3988, %v4221
  %v4223 = vpop.f32.mrb[0].mxu0
  %4224 = vmatprep.mubr.f32.mxu0 0.0
  %v4225 = vand.u32 %v4012, 4294901760
  %v4226 = vsub.f32 %v4012, %v4225
  %v4227 = vand.u32 %v4226, 4294901760
  %v4228 = vsub.f32 %v4226, %v4227
  %v4229 = vand.u32 %v4228, 4294901760
  %4230 = vmatmul.mubr.f32.gmra.mrb[0].mxu0 %v4229
  %v4231 = vpop.f32.mrb[0].mxu0
  %v4232 = vadd.f32 %v3988, %v4231
  %v4233 = vpop.f32.mrb[0].mxu0
  %4234 = vmatprep.mubr.f32.mxu0 0.0
  %v4235 = vand.u32 %v4015, 4294901760
  %v4236 = vsub.f32 %v4015, %v4235
  %v4237 = vand.u32 %v4236, 4294901760
  %v4238 = vsub.f32 %v4236, %v4237
  %v4239 = vand.u32 %v4238, 4294901760
  %4240 = vmatmul.mubr.f32.gmra.mrb[0].mxu0 %v4239
  %v4241 = vpop.f32.mrb[0].mxu0
  %v4242 = vadd.f32 %v3988, %v4241
  %v4243 = vpop.f32.mrb[0].mxu0
  %4244 = vmatprep.mubr.f32.mxu0 0.0
  %v4245 = vand.u32 %v4018, 4294901760
  %v4246 = vsub.f32 %v4018, %v4245
  %v4247 = vand.u32 %v4246, 4294901760
  %v4248 = vsub.f32 %v4246, %v4247
  %v4249 = vand.u32 %v4248, 4294901760
  %4250 = vmatmul.mubr.f32.gmra.mrb[0].mxu0 %v4249
  %v4251 = vpop.f32.mrb[0].mxu0
  %v4252 = vadd.f32 %v3988, %v4251
  %v4253 = vpop.f32.mrb[0].mxu0
  %4254 = vmatprep.mubr.f32.mxu0 0.0
  %v4255 = vand.u32 %v4021, 4294901760
  %v4256 = vsub.f32 %v4021, %v4255
  %v4257 = vand.u32 %v4256, 4294901760
  %v4258 = vsub.f32 %v4256, %v4257
  %v4259 = vand.u32 %v4258, 4294901760
  %4260 = vmatmul.mubr.f32.gmra.mrb[0].mxu0 %v4259
  %v4261 = vpop.f32.mrb[0].mxu0
  %v4262 = vadd.f32 %v3988, %v4261
  %v4263 = vpop.f32.mrb[0].mxu0
  %4264 = vmatprep.mubr.f32.mxu0 0.0
  %v4265 = vand.u32 %v4024, 4294901760
  %v4266 = vsub.f32 %v4024, %v4265
  %v4267 = vand.u32 %v4266, 4294901760
  %v4268 = vsub.f32 %v4266, %v4267
  %v4269 = vand.u32 %v4268, 4294901760
  %4270 = vmatmul.mubr.f32.gmra.mrb[0].mxu0 %v4269
  %v4271 = vpop.f32.mrb[0].mxu0
  %v4272 = vadd.f32 %v3988, %v4271
  %v4273 = vpop.f32.mrb[0].mxu0
  %4274 = vmatprep.mubr.f32.mxu0 0.0
  %v4275 = vand.u32 %v4027, 4294901760
  %v4276 = vsub.f32 %v4027, %v4275
  %v4277 = vand.u32 %v4276, 4294901760
  %v4278 = vsub.f32 %v4276, %v4277
  %v4279 = vand.u32 %v4278, 4294901760
  %4280 = vmatmul.mubr.f32.gmra.mrb[0].mxu0 %v4279
  %v4281 = vpop.f32.mrb[0].mxu0
  %v4282 = vadd.f32 %v3988, %v4281
  %v4283 = vpop.f32.mrb[0].mxu0
  %4284 = vmatprep.mubr.f32.mxu0 0.0
  %v4285 = vand.u32 %v4030, 4294901760
  %v4286 = vsub.f32 %v4030, %v4285
  %v4287 = vand.u32 %v4286, 4294901760
  %v4288 = vsub.f32 %v4286, %v4287
  %v4289 = vand.u32 %v4288, 4294901760
  %4290 = vmatmul.mubr.f32.gmra.mrb[0].mxu0 %v4289
  %v4291 = vpop.f32.mrb[0].mxu0
  %v4292 = vadd.f32 %v3988, %v4291
  %v4293 = vpop.f32.mrb[0].mxu0
  %4294 = vmatprep.mubr.f32.mxu0 0.0
  %v4295 = vand.u32 %v4033, 4294901760
  %v4296 = vsub.f32 %v4033, %v4295
  %v4297 = vand.u32 %v4296, 4294901760
  %v4298 = vsub.f32 %v4296, %v4297
  %v4299 = vand.u32 %v4298, 4294901760
  %4300 = vmatmul.mubr.f32.gmra.mrb[0].mxu0 %v4299
  %v4301 = vpop.f32.mrb[0].mxu0
  %v4302 = vadd.f32 %v3988, %v4301
  %v4303 = vpop.f32.mrb[0].mxu0
  %4304 = vmatprep.mubr.f32.mxu0 0.0
  %v4305 = vand.u32 %v4036, 4294901760
  %v4306 = vsub.f32 %v4036, %v4305
  %v4307 = vand.u32 %v4306, 4294901760
  %v4308 = vsub.f32 %v4306, %v4307
  %v4309 = vand.u32 %v4308, 4294901760
  %4310 = vmatmul.mubr.f32.gmra.mrb[0].mxu0 %v4309
  %v4311 = vpop.f32.mrb[0].mxu0
  %v4312 = vadd.f32 %v3988, %v4311
  %v4313 = vpop.f32.mrb[0].mxu0
  %4314 = vmatprep.mubr.f32.mxu0 0.0
  %v4315 = vand.u32 %v4039, 4294901760
  %v4316 = vsub.f32 %v4039, %v4315
  %v4317 = vand.u32 %v4316, 4294901760
  %v4318 = vsub.f32 %v4316, %v4317
  %v4319 = vand.u32 %v4318, 4294901760
  %4320 = vmatmul.mubr.f32.gmra.mrb[0].mxu0 %v4319
  %v4321 = vpop.f32.mrb[0].mxu0
  %v4322 = vadd.f32 %v3988, %v4321
  %v4323 = vpop.f32.mrb[0].mxu0
  %4324 = vmatprep.mubr.f32.mxu0 0.0
  %v4325 = vand.u32 %v4042, 4294901760
  %v4326 = vsub.f32 %v4042, %v4325
  %v4327 = vand.u32 %v4326, 4294901760
  %v4328 = vsub.f32 %v4326, %v4327
  %v4329 = vand.u32 %v4328, 4294901760
  %4330 = vmatmul.mubr.f32.gmra.mrb[0].mxu0 %v4329
  %v4331 = vpop.f32.mrb[0].mxu0
  %v4332 = vadd.f32 %v3988, %v4331
  %v4333 = vpop.f32.mrb[0].mxu0
  %4334 = vmatprep.mubr.f32.mxu0 0.0
  %v4335 = vand.u32 %v4045, 4294901760
  %v4336 = vsub.f32 %v4045, %v4335
  %v4337 = vand.u32 %v4336, 4294901760
  %v4338 = vsub.f32 %v4336, %v4337
  %v4339 = vand.u32 %v4338, 4294901760
  %4340 = vmatmul.mubr.f32.gmra.mrb[0].mxu0 %v4339
  %v4341 = vpop.f32.mrb[0].mxu0
  %v4342 = vadd.f32 %v3988, %v4341
  %v4343 = vpop.f32.mrb[0].mxu0
  %4344 = vmatprep.mubr.f32.mxu0 0.0
  %v4345 = vand.u32 %v4048, 4294901760
  %v4346 = vsub.f32 %v4048, %v4345
  %v4347 = vand.u32 %v4346, 4294901760
  %v4348 = vsub.f32 %v4346, %v4347
  %v4349 = vand.u32 %v4348, 4294901760
  %4350 = vmatmul.mubr.f32.gmra.mrb[0].mxu0 %v4349
  %v4351 = vpop.f32.mrb[0].mxu0
  %v4352 = vadd.f32 %v3988, %v4351
  %v4353 = vpop.f32.mrb[0].mxu0
  %4354 = vmatprep.mubr.f32.mxu0 0.0
  %v4355 = vand.u32 %v4051, 4294901760
  %v4356 = vsub.f32 %v4051, %v4355
  %v4357 = vand.u32 %v4356, 4294901760
  %v4358 = vsub.f32 %v4356, %v4357
  %v4359 = vand.u32 %v4358, 4294901760
  %4360 = vmatmul.mubr.f32.gmra.mrb[0].mxu0 %v4359
  %v4361 = vpop.f32.mrb[0].mxu0
  %v4362 = vadd.f32 %v3988, %v4361
  %v4363 = vpop.f32.mrb[0].mxu0
  %4364 = vmatprep.mubr.f32.mxu0 0.0
  %v4365 = vand.u32 %v4054, 4294901760
  %v4366 = vsub.f32 %v4054, %v4365
  %v4367 = vand.u32 %v4366, 4294901760
  %v4368 = vsub.f32 %v4366, %v4367
  %v4369 = vand.u32 %v4368, 4294901760
  %4370 = vmatmul.mubr.f32.gmra.mrb[0].mxu0 %v4369
  %v4371 = vpop.f32.mrb[0].mxu0
  %v4372 = vadd.f32 %v3988, %v4371
  %v4373 = vpop.f32.mrb[0].mxu0
  %4374 = vmatprep.mubr.f32.mxu0 0.0
  %v4375 = vand.u32 %v4057, 4294901760
  %v4376 = vsub.f32 %v4057, %v4375
  %v4377 = vand.u32 %v4376, 4294901760
  %v4378 = vsub.f32 %v4376, %v4377
  %v4379 = vand.u32 %v4378, 4294901760
  %4380 = vmatmul.mubr.f32.gmra.mrb[0].mxu0 %v4379
  %v4381 = vpop.f32.mrb[0].mxu0
  %v4382 = vadd.f32 %v3988, %v4381
  %v4383 = vpop.f32.mrb[0].mxu0
  %4384 = vmatprep.mubr.f32.mxu0 0.0
  %v4385 = vand.u32 %v4060, 4294901760
  %v4386 = vsub.f32 %v4060, %v4385
  %v4387 = vand.u32 %v4386, 4294901760
  %v4388 = vsub.f32 %v4386, %v4387
  %v4389 = vand.u32 %v4388, 4294901760
  %4390 = vmatmul.mubr.f32.gmra.mrb[0].mxu0 %v4389
  %v4391 = vpop.f32.mrb[0].mxu0
  %v4392 = vadd.f32 %v3988, %v4391
  %v4393 = vpop.f32.mrb[0].mxu0
  %4394 = vmatprep.mubr.f32.mxu0 0.0
  %v4395 = vand.u32 %v4063, 4294901760
  %v4396 = vsub.f32 %v4063, %v4395
  %v4397 = vand.u32 %v4396, 4294901760
  %v4398 = vsub.f32 %v4396, %v4397
  %v4399 = vand.u32 %v4398, 4294901760
  %4400 = vmatmul.mubr.f32.gmra.mrb[0].mxu0 %v4399
  %v4401 = vpop.f32.mrb[0].mxu0
  %v4402 = vadd.f32 %v3988, %v4401
  %v4403 = vpop.f32.mrb[0].mxu0
  %4404 = vmatprep.mubr.f32.mxu0 0.0
  %v4405 = vand.u32 %v4066, 4294901760
  %v4406 = vsub.f32 %v4066, %v4405
  %v4407 = vand.u32 %v4406, 4294901760
  %v4408 = vsub.f32 %v4406, %v4407
  %v4409 = vand.u32 %v4408, 4294901760
  %4410 = vmatmul.mubr.f32.gmra.mrb[0].mxu0 %v4409
  %v4411 = vpop.f32.mrb[0].mxu0
  %v4412 = vadd.f32 %v3988, %v4411
  %v4413 = vpop.f32.mrb[0].mxu0
  %4414 = vmatprep.mubr.f32.mxu0 0.0
  %v4415 = vand.u32 %v4069, 4294901760
  %v4416 = vsub.f32 %v4069, %v4415
  %v4417 = vand.u32 %v4416, 4294901760
  %v4418 = vsub.f32 %v4416, %v4417
  %v4419 = vand.u32 %v4418, 4294901760
  %4420 = vmatmul.mubr.f32.gmra.mrb[0].mxu0 %v4419
  %v4421 = vpop.f32.mrb[0].mxu0
  %v4422 = vadd.f32 %v3988, %v4421
  %v4423 = vpop.f32.mrb[0].mxu0
  %4424 = vmatprep.mubr.f32.mxu0 0.0
  %v4425 = vand.u32 %v4072, 4294901760
  %v4426 = vsub.f32 %v4072, %v4425
  %v4427 = vand.u32 %v4426, 4294901760
  %v4428 = vsub.f32 %v4426, %v4427
  %v4429 = vand.u32 %v4428, 4294901760
  %4430 = vmatmul.mubr.f32.gmra.mrb[0].mxu0 %v4429
  %v4431 = vpop.f32.mrb[0].mxu0
  %v4432 = vadd.f32 %v3988, %v4431
  %v4433 = vpop.f32.mrb[0].mxu0
  %4434 = vmatprep.mubr.f32.mxu0 0.0
  %v4435 = vand.u32 %v4075, 4294901760
  %v4436 = vsub.f32 %v4075, %v4435
  %v4437 = vand.u32 %v4436, 4294901760
  %v4438 = vsub.f32 %v4436, %v4437
  %v4439 = vand.u32 %v4438, 4294901760
  %4440 = vmatmul.mubr.f32.gmra.mrb[0].mxu0 %v4439
  %v4441 = vpop.f32.mrb[0].mxu0
  %v4442 = vadd.f32 %v3988, %v4441
  %v4443 = vpop.f32.mrb[0].mxu0
  %4444 = vmatprep.mubr.f32.mxu0 0.0
  %v4445 = vand.u32 %v4078, 4294901760
  %v4446 = vsub.f32 %v4078, %v4445
  %v4447 = vand.u32 %v4446, 4294901760
  %v4448 = vsub.f32 %v4446, %v4447
  %v4449 = vand.u32 %v4448, 4294901760
  %4450 = vmatmul.mubr.f32.gmra.mrb[0].mxu0 %v4449
  %v4451 = vpop.f32.mrb[0].mxu0
  %v4452 = vadd.f32 %v3988, %v4451
  %v4453 = vpop.f32.mrb[0].mxu0
  %4454 = vmatprep.mubr.f32.mxu0 0.0
  %v4455 = vand.u32 %v4081, 4294901760
  %v4456 = vsub.f32 %v4081, %v4455
  %v4457 = vand.u32 %v4456, 4294901760
  %v4458 = vsub.f32 %v4456, %v4457
  %v4459 = vand.u32 %v4458, 4294901760
  %4460 = vmatmul.mubr.f32.gmra.mrb[0].mxu0 %v4459
  %v4461 = vpop.f32.mrb[0].mxu0
  %v4462 = vadd.f32 %v3988, %v4461
  %v4463 = vpop.f32.mrb[0].mxu0
  %4464 = vmatprep.mubr.f32.mxu0 0.0
  %v4465 = vand.u32 %v4084, 4294901760
  %v4466 = vsub.f32 %v4084, %v4465
  %v4467 = vand.u32 %v4466, 4294901760
  %v4468 = vsub.f32 %v4466, %v4467
  %v4469 = vand.u32 %v4468, 4294901760
  %4470 = vmatmul.mubr.f32.gmra.mrb[0].mxu0 %v4469
  %v4471 = vpop.f32.mrb[0].mxu0
  %v4472 = vadd.f32 %v3988, %v4471
  %v4473 = vpop.f32.mrb[0].mxu0
  %4474 = vdwg.mxu0
  %4475 = vmatprep.subr.mxu0 0.0
  %v4476 = vand.u32 %v3979, 4294901760
  %v4477 = vsub.f32 %v3979, %v4476
  %v4478 = vand.u32 %v4477, 4294901760
  %v4479 = vsub.f32 %v4477, %v4478
  %v4480 = vand.u32 %v4479, 4294901760
  %4481 = vmatpush1.msra.mxu0 %v4480
  %4482 = vmatprep.subr.mxu0 0.0
  %v4483 = vand.u32 %v3980, 4294901760
  %v4484 = vsub.f32 %v3980, %v4483
  %v4485 = vand.u32 %v4484, 4294901760
  %v4486 = vsub.f32 %v4484, %v4485
  %v4487 = vand.u32 %v4486, 4294901760
  %4488 = vmatpush1.msra.mxu0 %v4487
  %4489 = vmatprep.subr.mxu0 0.0
  %v4490 = vand.u32 %v3981, 4294901760
  %v4491 = vsub.f32 %v3981, %v4490
  %v4492 = vand.u32 %v4491, 4294901760
  %v4493 = vsub.f32 %v4491, %v4492
  %v4494 = vand.u32 %v4493, 4294901760
  %4495 = vmatpush1.msra.mxu0 %v4494
  %4496 = vmatprep.subr.mxu0 0.0
  %v4497 = vand.u32 %v3982, 4294901760
  %v4498 = vsub.f32 %v3982, %v4497
  %v4499 = vand.u32 %v4498, 4294901760
  %v4500 = vsub.f32 %v4498, %v4499
  %v4501 = vand.u32 %v4500, 4294901760
  %4502 = vmatpush1.msra.mxu0 %v4501
  %4503 = vmatprep.subr.mxu0 0.0
  %4504 = vmatpush1.msra.mxu0 0.0
  %4505 = vmatprep.subr.mxu0 0.0
  %4506 = vmatpush1.msra.mxu0 0.0
  %4507 = vmatprep.subr.mxu0 0.0
  %4508 = vmatpush1.msra.mxu0 0.0
  %4509 = vmatprep.subr.mxu0 0.0
  %4510 = vmatpush1.msra.mxu0 0.0
  %4511 = vmatprep.subr.mxu0 0.0
  %4512 = vmatpush1.msra.mxu0 0.0
  %4513 = vmatprep.subr.mxu0 0.0
  %4514 = vmatpush1.msra.mxu0 0.0
  %4515 = vmatprep.subr.mxu0 0.0
  %4516 = vmatpush1.msra.mxu0 0.0
  %4517 = vmatprep.subr.mxu0 0.0
  %4518 = vmatpush1.msra.mxu0 0.0
  %4519 = vmatprep.subr.mxu0 0.0
  %4520 = vmatpush1.msra.mxu0 0.0
  %4521 = vmatprep.subr.mxu0 0.0
  %4522 = vmatpush1.msra.mxu0 0.0
  %4523 = vmatprep.subr.mxu0 0.0
  %4524 = vmatpush1.msra.mxu0 0.0
  %4525 = vmatprep.subr.mxu0 0.0
  %4526 = vmatpush1.msra.mxu0 0.0
  %4527 = vmatprep.subr.mxu0 0.0
  %4528 = vmatpush1.msra.mxu0 0.0
  %4529 = vmatprep.subr.mxu0 0.0
  %4530 = vmatpush1.msra.mxu0 0.0
  %4531 = vmatprep.subr.mxu0 0.0
  %4532 = vmatpush1.msra.mxu0 0.0
  %4533 = vmatprep.subr.mxu0 0.0
  %4534 = vmatpush1.msra.mxu0 0.0
  %4535 = vmatprep.subr.mxu0 0.0
  %4536 = vmatpush1.msra.mxu0 0.0
  %4537 = vmatprep.subr.mxu0 0.0
  %4538 = vmatpush1.msra.mxu0 0.0
  %4539 = vmatprep.subr.mxu0 0.0
  %4540 = vmatpush1.msra.mxu0 0.0
  %4541 = vmatprep.subr.mxu0 0.0
  %4542 = vmatpush1.msra.mxu0 0.0
  %4543 = vmatprep.subr.mxu0 0.0
  %4544 = vmatpush1.msra.mxu0 0.0
  %4545 = vmatprep.subr.mxu0 0.0
  %4546 = vmatpush1.msra.mxu0 0.0
  %4547 = vmatprep.subr.mxu0 0.0
  %4548 = vmatpush1.msra.mxu0 0.0
  %4549 = vmatprep.subr.mxu0 0.0
  %4550 = vmatpush1.msra.mxu0 0.0
  %4551 = vmatprep.subr.mxu0 0.0
  %4552 = vmatpush1.msra.mxu0 0.0
  %4553 = vmatprep.subr.mxu0 0.0
  %4554 = vmatpush1.msra.mxu0 0.0
  %4555 = vmatprep.subr.mxu0 0.0
  %4556 = vmatpush1.msra.mxu0 0.0
  %4557 = vmatprep.subr.mxu0 0.0
  %4558 = vmatpush1.msra.mxu0 0.0
  %4559 = vmatprep.mubr.f32.mxu0 0.0
  %v4560 = vand.u32 %v3991, 4294901760
  %4561 = vmatmul.mubr.f32.gmra.mrb[0].mxu0 %v4560
  %v4562 = vpop.f32.mrb[0].mxu0
  %v4563 = vadd.f32 %v4162, %v4562
  %v4564 = vpop.f32.mrb[0].mxu0
  %4565 = vmatprep.mubr.f32.mxu0 0.0
  %v4566 = vand.u32 %v3994, 4294901760
  %4567 = vmatmul.mubr.f32.gmra.mrb[0].mxu0 %v4566
  %v4568 = vpop.f32.mrb[0].mxu0
  %v4569 = vadd.f32 %v4172, %v4568
  %v4570 = vpop.f32.mrb[0].mxu0
  %4571 = vmatprep.mubr.f32.mxu0 0.0
  %v4572 = vand.u32 %v3997, 4294901760
  %4573 = vmatmul.mubr.f32.gmra.mrb[0].mxu0 %v4572
  %v4574 = vpop.f32.mrb[0].mxu0
  %v4575 = vadd.f32 %v4182, %v4574
  %v4576 = vpop.f32.mrb[0].mxu0
  %4577 = vmatprep.mubr.f32.mxu0 0.0
  %v4578 = vand.u32 %v4000, 4294901760
  %4579 = vmatmul.mubr.f32.gmra.mrb[0].mxu0 %v4578
  %v4580 = vpop.f32.mrb[0].mxu0
  %v4581 = vadd.f32 %v4192, %v4580
  %v4582 = vpop.f32.mrb[0].mxu0
  %4583 = vmatprep.mubr.f32.mxu0 0.0
  %v4584 = vand.u32 %v4003, 4294901760
  %4585 = vmatmul.mubr.f32.gmra.mrb[0].mxu0 %v4584
  %v4586 = vpop.f32.mrb[0].mxu0
  %v4587 = vadd.f32 %v4202, %v4586
  %v4588 = vpop.f32.mrb[0].mxu0
  %4589 = vmatprep.mubr.f32.mxu0 0.0
  %v4590 = vand.u32 %v4006, 4294901760
  %4591 = vmatmul.mubr.f32.gmra.mrb[0].mxu0 %v4590
  %v4592 = vpop.f32.mrb[0].mxu0
  %v4593 = vadd.f32 %v4212, %v4592
  %v4594 = vpop.f32.mrb[0].mxu0
  %4595 = vmatprep.mubr.f32.mxu0 0.0
  %v4596 = vand.u32 %v4009, 4294901760
  %4597 = vmatmul.mubr.f32.gmra.mrb[0].mxu0 %v4596
  %v4598 = vpop.f32.mrb[0].mxu0
  %v4599 = vadd.f32 %v4222, %v4598
  %v4600 = vpop.f32.mrb[0].mxu0
  %4601 = vmatprep.mubr.f32.mxu0 0.0
  %v4602 = vand.u32 %v4012, 4294901760
  %4603 = vmatmul.mubr.f32.gmra.mrb[0].mxu0 %v4602
  %v4604 = vpop.f32.mrb[0].mxu0
  %v4605 = vadd.f32 %v4232, %v4604
  %v4606 = vpop.f32.mrb[0].mxu0
  %4607 = vmatprep.mubr.f32.mxu0 0.0
  %v4608 = vand.u32 %v4015, 4294901760
  %4609 = vmatmul.mubr.f32.gmra.mrb[0].mxu0 %v4608
  %v4610 = vpop.f32.mrb[0].mxu0
  %v4611 = vadd.f32 %v4242, %v4610
  %v4612 = vpop.f32.mrb[0].mxu0
  %4613 = vmatprep.mubr.f32.mxu0 0.0
  %v4614 = vand.u32 %v4018, 4294901760
  %4615 = vmatmul.mubr.f32.gmra.mrb[0].mxu0 %v4614
  %v4616 = vpop.f32.mrb[0].mxu0
  %v4617 = vadd.f32 %v4252, %v4616
  %v4618 = vpop.f32.mrb[0].mxu0
  %4619 = vmatprep.mubr.f32.mxu0 0.0
  %v4620 = vand.u32 %v4021, 4294901760
  %4621 = vmatmul.mubr.f32.gmra.mrb[0].mxu0 %v4620
  %v4622 = vpop.f32.mrb[0].mxu0
  %v4623 = vadd.f32 %v4262, %v4622
  %v4624 = vpop.f32.mrb[0].mxu0
  %4625 = vmatprep.mubr.f32.mxu0 0.0
  %v4626 = vand.u32 %v4024, 4294901760
  %4627 = vmatmul.mubr.f32.gmra.mrb[0].mxu0 %v4626
  %v4628 = vpop.f32.mrb[0].mxu0
  %v4629 = vadd.f32 %v4272, %v4628
  %v4630 = vpop.f32.mrb[0].mxu0
  %4631 = vmatprep.mubr.f32.mxu0 0.0
  %v4632 = vand.u32 %v4027, 4294901760
  %4633 = vmatmul.mubr.f32.gmra.mrb[0].mxu0 %v4632
  %v4634 = vpop.f32.mrb[0].mxu0
  %v4635 = vadd.f32 %v4282, %v4634
  %v4636 = vpop.f32.mrb[0].mxu0
  %4637 = vmatprep.mubr.f32.mxu0 0.0
  %v4638 = vand.u32 %v4030, 4294901760
  %4639 = vmatmul.mubr.f32.gmra.mrb[0].mxu0 %v4638
  %v4640 = vpop.f32.mrb[0].mxu0
  %v4641 = vadd.f32 %v4292, %v4640
  %v4642 = vpop.f32.mrb[0].mxu0
  %4643 = vmatprep.mubr.f32.mxu0 0.0
  %v4644 = vand.u32 %v4033, 4294901760
  %4645 = vmatmul.mubr.f32.gmra.mrb[0].mxu0 %v4644
  %v4646 = vpop.f32.mrb[0].mxu0
  %v4647 = vadd.f32 %v4302, %v4646
  %v4648 = vpop.f32.mrb[0].mxu0
  %4649 = vmatprep.mubr.f32.mxu0 0.0
  %v4650 = vand.u32 %v4036, 4294901760
  %4651 = vmatmul.mubr.f32.gmra.mrb[0].mxu0 %v4650
  %v4652 = vpop.f32.mrb[0].mxu0
  %v4653 = vadd.f32 %v4312, %v4652
  %v4654 = vpop.f32.mrb[0].mxu0
  %4655 = vmatprep.mubr.f32.mxu0 0.0
  %v4656 = vand.u32 %v4039, 4294901760
  %4657 = vmatmul.mubr.f32.gmra.mrb[0].mxu0 %v4656
  %v4658 = vpop.f32.mrb[0].mxu0
  %v4659 = vadd.f32 %v4322, %v4658
  %v4660 = vpop.f32.mrb[0].mxu0
  %4661 = vmatprep.mubr.f32.mxu0 0.0
  %v4662 = vand.u32 %v4042, 4294901760
  %4663 = vmatmul.mubr.f32.gmra.mrb[0].mxu0 %v4662
  %v4664 = vpop.f32.mrb[0].mxu0
  %v4665 = vadd.f32 %v4332, %v4664
  %v4666 = vpop.f32.mrb[0].mxu0
  %4667 = vmatprep.mubr.f32.mxu0 0.0
  %v4668 = vand.u32 %v4045, 4294901760
  %4669 = vmatmul.mubr.f32.gmra.mrb[0].mxu0 %v4668
  %v4670 = vpop.f32.mrb[0].mxu0
  %v4671 = vadd.f32 %v4342, %v4670
  %v4672 = vpop.f32.mrb[0].mxu0
  %4673 = vmatprep.mubr.f32.mxu0 0.0
  %v4674 = vand.u32 %v4048, 4294901760
  %4675 = vmatmul.mubr.f32.gmra.mrb[0].mxu0 %v4674
  %v4676 = vpop.f32.mrb[0].mxu0
  %v4677 = vadd.f32 %v4352, %v4676
  %v4678 = vpop.f32.mrb[0].mxu0
  %4679 = vmatprep.mubr.f32.mxu0 0.0
  %v4680 = vand.u32 %v4051, 4294901760
  %4681 = vmatmul.mubr.f32.gmra.mrb[0].mxu0 %v4680
  %v4682 = vpop.f32.mrb[0].mxu0
  %v4683 = vadd.f32 %v4362, %v4682
  %v4684 = vpop.f32.mrb[0].mxu0
  %4685 = vmatprep.mubr.f32.mxu0 0.0
  %v4686 = vand.u32 %v4054, 4294901760
  %4687 = vmatmul.mubr.f32.gmra.mrb[0].mxu0 %v4686
  %v4688 = vpop.f32.mrb[0].mxu0
  %v4689 = vadd.f32 %v4372, %v4688
  %v4690 = vpop.f32.mrb[0].mxu0
  %4691 = vmatprep.mubr.f32.mxu0 0.0
  %v4692 = vand.u32 %v4057, 4294901760
  %4693 = vmatmul.mubr.f32.gmra.mrb[0].mxu0 %v4692
  %v4694 = vpop.f32.mrb[0].mxu0
  %v4695 = vadd.f32 %v4382, %v4694
  %v4696 = vpop.f32.mrb[0].mxu0
  %4697 = vmatprep.mubr.f32.mxu0 0.0
  %v4698 = vand.u32 %v4060, 4294901760
  %4699 = vmatmul.mubr.f32.gmra.mrb[0].mxu0 %v4698
  %v4700 = vpop.f32.mrb[0].mxu0
  %v4701 = vadd.f32 %v4392, %v4700
  %v4702 = vpop.f32.mrb[0].mxu0
  %4703 = vmatprep.mubr.f32.mxu0 0.0
  %v4704 = vand.u32 %v4063, 4294901760
  %4705 = vmatmul.mubr.f32.gmra.mrb[0].mxu0 %v4704
  %v4706 = vpop.f32.mrb[0].mxu0
  %v4707 = vadd.f32 %v4402, %v4706
  %v4708 = vpop.f32.mrb[0].mxu0
  %4709 = vmatprep.mubr.f32.mxu0 0.0
  %v4710 = vand.u32 %v4066, 4294901760
  %4711 = vmatmul.mubr.f32.gmra.mrb[0].mxu0 %v4710
  %v4712 = vpop.f32.mrb[0].mxu0
  %v4713 = vadd.f32 %v4412, %v4712
  %v4714 = vpop.f32.mrb[0].mxu0
  %4715 = vmatprep.mubr.f32.mxu0 0.0
  %v4716 = vand.u32 %v4069, 4294901760
  %4717 = vmatmul.mubr.f32.gmra.mrb[0].mxu0 %v4716
  %v4718 = vpop.f32.mrb[0].mxu0
  %v4719 = vadd.f32 %v4422, %v4718
  %v4720 = vpop.f32.mrb[0].mxu0
  %4721 = vmatprep.mubr.f32.mxu0 0.0
  %v4722 = vand.u32 %v4072, 4294901760
  %4723 = vmatmul.mubr.f32.gmra.mrb[0].mxu0 %v4722
  %v4724 = vpop.f32.mrb[0].mxu0
  %v4725 = vadd.f32 %v4432, %v4724
  %v4726 = vpop.f32.mrb[0].mxu0
  %4727 = vmatprep.mubr.f32.mxu0 0.0
  %v4728 = vand.u32 %v4075, 4294901760
  %4729 = vmatmul.mubr.f32.gmra.mrb[0].mxu0 %v4728
  %v4730 = vpop.f32.mrb[0].mxu0
  %v4731 = vadd.f32 %v4442, %v4730
  %v4732 = vpop.f32.mrb[0].mxu0
  %4733 = vmatprep.mubr.f32.mxu0 0.0
  %v4734 = vand.u32 %v4078, 4294901760
  %4735 = vmatmul.mubr.f32.gmra.mrb[0].mxu0 %v4734
  %v4736 = vpop.f32.mrb[0].mxu0
  %v4737 = vadd.f32 %v4452, %v4736
  %v4738 = vpop.f32.mrb[0].mxu0
  %4739 = vmatprep.mubr.f32.mxu0 0.0
  %v4740 = vand.u32 %v4081, 4294901760
  %4741 = vmatmul.mubr.f32.gmra.mrb[0].mxu0 %v4740
  %v4742 = vpop.f32.mrb[0].mxu0
  %v4743 = vadd.f32 %v4462, %v4742
  %v4744 = vpop.f32.mrb[0].mxu0
  %4745 = vmatprep.mubr.f32.mxu0 0.0
  %v4746 = vand.u32 %v4084, 4294901760
  %4747 = vmatmul.mubr.f32.gmra.mrb[0].mxu0 %v4746
  %v4748 = vpop.f32.mrb[0].mxu0
  %v4749 = vadd.f32 %v4472, %v4748
  %v4750 = vpop.f32.mrb[0].mxu0
  %4751 = vdwg.mxu0
  %4752 = vmatprep.subr.mxu0 0.0
  %v4753 = vand.u32 %v3979, 4294901760
  %v4754 = vsub.f32 %v3979, %v4753
  %4755 = vmatpush1.msra.mxu0 %v4754
  %4756 = vmatprep.subr.mxu0 0.0
  %v4757 = vand.u32 %v3980, 4294901760
  %v4758 = vsub.f32 %v3980, %v4757
  %4759 = vmatpush1.msra.mxu0 %v4758
  %4760 = vmatprep.subr.mxu0 0.0
  %v4761 = vand.u32 %v3981, 4294901760
  %v4762 = vsub.f32 %v3981, %v4761
  %4763 = vmatpush1.msra.mxu0 %v4762
  %4764 = vmatprep.subr.mxu0 0.0
  %v4765 = vand.u32 %v3982, 4294901760
  %v4766 = vsub.f32 %v3982, %v4765
  %4767 = vmatpush1.msra.mxu0 %v4766
  %4768 = vmatprep.subr.mxu0 0.0
  %4769 = vmatpush1.msra.mxu0 0.0
  %4770 = vmatprep.subr.mxu0 0.0
  %4771 = vmatpush1.msra.mxu0 0.0
  %4772 = vmatprep.subr.mxu0 0.0
  %4773 = vmatpush1.msra.mxu0 0.0
  %4774 = vmatprep.subr.mxu0 0.0
  %4775 = vmatpush1.msra.mxu0 0.0
  %4776 = vmatprep.subr.mxu0 0.0
  %4777 = vmatpush1.msra.mxu0 0.0
  %4778 = vmatprep.subr.mxu0 0.0
  %4779 = vmatpush1.msra.mxu0 0.0
  %4780 = vmatprep.subr.mxu0 0.0
  %4781 = vmatpush1.msra.mxu0 0.0
  %4782 = vmatprep.subr.mxu0 0.0
  %4783 = vmatpush1.msra.mxu0 0.0
  %4784 = vmatprep.subr.mxu0 0.0
  %4785 = vmatpush1.msra.mxu0 0.0
  %4786 = vmatprep.subr.mxu0 0.0
  %4787 = vmatpush1.msra.mxu0 0.0
  %4788 = vmatprep.subr.mxu0 0.0
  %4789 = vmatpush1.msra.mxu0 0.0
  %4790 = vmatprep.subr.mxu0 0.0
  %4791 = vmatpush1.msra.mxu0 0.0
  %4792 = vmatprep.subr.mxu0 0.0
  %4793 = vmatpush1.msra.mxu0 0.0
  %4794 = vmatprep.subr.mxu0 0.0
  %4795 = vmatpush1.msra.mxu0 0.0
  %4796 = vmatprep.subr.mxu0 0.0
  %4797 = vmatpush1.msra.mxu0 0.0
  %4798 = vmatprep.subr.mxu0 0.0
  %4799 = vmatpush1.msra.mxu0 0.0
  %4800 = vmatprep.subr.mxu0 0.0
  %4801 = vmatpush1.msra.mxu0 0.0
  %4802 = vmatprep.subr.mxu0 0.0
  %4803 = vmatpush1.msra.mxu0 0.0
  %4804 = vmatprep.subr.mxu0 0.0
  %4805 = vmatpush1.msra.mxu0 0.0
  %4806 = vmatprep.subr.mxu0 0.0
  %4807 = vmatpush1.msra.mxu0 0.0
  %4808 = vmatprep.subr.mxu0 0.0
  %4809 = vmatpush1.msra.mxu0 0.0
  %4810 = vmatprep.subr.mxu0 0.0
  %4811 = vmatpush1.msra.mxu0 0.0
  %4812 = vmatprep.subr.mxu0 0.0
  %4813 = vmatpush1.msra.mxu0 0.0
  %4814 = vmatprep.subr.mxu0 0.0
  %4815 = vmatpush1.msra.mxu0 0.0
  %4816 = vmatprep.subr.mxu0 0.0
  %4817 = vmatpush1.msra.mxu0 0.0
  %4818 = vmatprep.subr.mxu0 0.0
  %4819 = vmatpush1.msra.mxu0 0.0
  %4820 = vmatprep.subr.mxu0 0.0
  %4821 = vmatpush1.msra.mxu0 0.0
  %4822 = vmatprep.subr.mxu0 0.0
  %4823 = vmatpush1.msra.mxu0 0.0
  %4824 = vmatprep.mubr.f32.mxu0 0.0
  %v4825 = vand.u32 %v3991, 4294901760
  %v4826 = vsub.f32 %v3991, %v4825
  %4827 = vmatmul.mubr.f32.gmra.mrb[0].mxu0 %v4826
  %v4828 = vpop.f32.mrb[0].mxu0
  %v4829 = vadd.f32 %v4563, %v4828
  %v4830 = vpop.f32.mrb[0].mxu0
  %4831 = vmatprep.mubr.f32.mxu0 0.0
  %v4832 = vand.u32 %v3994, 4294901760
  %v4833 = vsub.f32 %v3994, %v4832
  %4834 = vmatmul.mubr.f32.gmra.mrb[0].mxu0 %v4833
  %v4835 = vpop.f32.mrb[0].mxu0
  %v4836 = vadd.f32 %v4569, %v4835
  %v4837 = vpop.f32.mrb[0].mxu0
  %4838 = vmatprep.mubr.f32.mxu0 0.0
  %v4839 = vand.u32 %v3997, 4294901760
  %v4840 = vsub.f32 %v3997, %v4839
  %4841 = vmatmul.mubr.f32.gmra.mrb[0].mxu0 %v4840
  %v4842 = vpop.f32.mrb[0].mxu0
  %v4843 = vadd.f32 %v4575, %v4842
  %v4844 = vpop.f32.mrb[0].mxu0
  %4845 = vmatprep.mubr.f32.mxu0 0.0
  %v4846 = vand.u32 %v4000, 4294901760
  %v4847 = vsub.f32 %v4000, %v4846
  %4848 = vmatmul.mubr.f32.gmra.mrb[0].mxu0 %v4847
  %v4849 = vpop.f32.mrb[0].mxu0
  %v4850 = vadd.f32 %v4581, %v4849
  %v4851 = vpop.f32.mrb[0].mxu0
  %4852 = vmatprep.mubr.f32.mxu0 0.0
  %v4853 = vand.u32 %v4003, 4294901760
  %v4854 = vsub.f32 %v4003, %v4853
  %4855 = vmatmul.mubr.f32.gmra.mrb[0].mxu0 %v4854
  %v4856 = vpop.f32.mrb[0].mxu0
  %v4857 = vadd.f32 %v4587, %v4856
  %v4858 = vpop.f32.mrb[0].mxu0
  %4859 = vmatprep.mubr.f32.mxu0 0.0
  %v4860 = vand.u32 %v4006, 4294901760
  %v4861 = vsub.f32 %v4006, %v4860
  %4862 = vmatmul.mubr.f32.gmra.mrb[0].mxu0 %v4861
  %v4863 = vpop.f32.mrb[0].mxu0
  %v4864 = vadd.f32 %v4593, %v4863
  %v4865 = vpop.f32.mrb[0].mxu0
  %4866 = vmatprep.mubr.f32.mxu0 0.0
  %v4867 = vand.u32 %v4009, 4294901760
  %v4868 = vsub.f32 %v4009, %v4867
  %4869 = vmatmul.mubr.f32.gmra.mrb[0].mxu0 %v4868
  %v4870 = vpop.f32.mrb[0].mxu0
  %v4871 = vadd.f32 %v4599, %v4870
  %v4872 = vpop.f32.mrb[0].mxu0
  %4873 = vmatprep.mubr.f32.mxu0 0.0
  %v4874 = vand.u32 %v4012, 4294901760
  %v4875 = vsub.f32 %v4012, %v4874
  %4876 = vmatmul.mubr.f32.gmra.mrb[0].mxu0 %v4875
  %v4877 = vpop.f32.mrb[0].mxu0
  %v4878 = vadd.f32 %v4605, %v4877
  %v4879 = vpop.f32.mrb[0].mxu0
  %4880 = vmatprep.mubr.f32.mxu0 0.0
  %v4881 = vand.u32 %v4015, 4294901760
  %v4882 = vsub.f32 %v4015, %v4881
  %4883 = vmatmul.mubr.f32.gmra.mrb[0].mxu0 %v4882
  %v4884 = vpop.f32.mrb[0].mxu0
  %v4885 = vadd.f32 %v4611, %v4884
  %v4886 = vpop.f32.mrb[0].mxu0
  %4887 = vmatprep.mubr.f32.mxu0 0.0
  %v4888 = vand.u32 %v4018, 4294901760
  %v4889 = vsub.f32 %v4018, %v4888
  %4890 = vmatmul.mubr.f32.gmra.mrb[0].mxu0 %v4889
  %v4891 = vpop.f32.mrb[0].mxu0
  %v4892 = vadd.f32 %v4617, %v4891
  %v4893 = vpop.f32.mrb[0].mxu0
  %4894 = vmatprep.mubr.f32.mxu0 0.0
  %v4895 = vand.u32 %v4021, 4294901760
  %v4896 = vsub.f32 %v4021, %v4895
  %4897 = vmatmul.mubr.f32.gmra.mrb[0].mxu0 %v4896
  %v4898 = vpop.f32.mrb[0].mxu0
  %v4899 = vadd.f32 %v4623, %v4898
  %v4900 = vpop.f32.mrb[0].mxu0
  %4901 = vmatprep.mubr.f32.mxu0 0.0
  %v4902 = vand.u32 %v4024, 4294901760
  %v4903 = vsub.f32 %v4024, %v4902
  %4904 = vmatmul.mubr.f32.gmra.mrb[0].mxu0 %v4903
  %v4905 = vpop.f32.mrb[0].mxu0
  %v4906 = vadd.f32 %v4629, %v4905
  %v4907 = vpop.f32.mrb[0].mxu0
  %4908 = vmatprep.mubr.f32.mxu0 0.0
  %v4909 = vand.u32 %v4027, 4294901760
  %v4910 = vsub.f32 %v4027, %v4909
  %4911 = vmatmul.mubr.f32.gmra.mrb[0].mxu0 %v4910
  %v4912 = vpop.f32.mrb[0].mxu0
  %v4913 = vadd.f32 %v4635, %v4912
  %v4914 = vpop.f32.mrb[0].mxu0
  %4915 = vmatprep.mubr.f32.mxu0 0.0
  %v4916 = vand.u32 %v4030, 4294901760
  %v4917 = vsub.f32 %v4030, %v4916
  %4918 = vmatmul.mubr.f32.gmra.mrb[0].mxu0 %v4917
  %v4919 = vpop.f32.mrb[0].mxu0
  %v4920 = vadd.f32 %v4641, %v4919
  %v4921 = vpop.f32.mrb[0].mxu0
  %4922 = vmatprep.mubr.f32.mxu0 0.0
  %v4923 = vand.u32 %v4033, 4294901760
  %v4924 = vsub.f32 %v4033, %v4923
  %4925 = vmatmul.mubr.f32.gmra.mrb[0].mxu0 %v4924
  %v4926 = vpop.f32.mrb[0].mxu0
  %v4927 = vadd.f32 %v4647, %v4926
  %v4928 = vpop.f32.mrb[0].mxu0
  %4929 = vmatprep.mubr.f32.mxu0 0.0
  %v4930 = vand.u32 %v4036, 4294901760
  %v4931 = vsub.f32 %v4036, %v4930
  %4932 = vmatmul.mubr.f32.gmra.mrb[0].mxu0 %v4931
  %v4933 = vpop.f32.mrb[0].mxu0
  %v4934 = vadd.f32 %v4653, %v4933
  %v4935 = vpop.f32.mrb[0].mxu0
  %4936 = vmatprep.mubr.f32.mxu0 0.0
  %v4937 = vand.u32 %v4039, 4294901760
  %v4938 = vsub.f32 %v4039, %v4937
  %4939 = vmatmul.mubr.f32.gmra.mrb[0].mxu0 %v4938
  %v4940 = vpop.f32.mrb[0].mxu0
  %v4941 = vadd.f32 %v4659, %v4940
  %v4942 = vpop.f32.mrb[0].mxu0
  %4943 = vmatprep.mubr.f32.mxu0 0.0
  %v4944 = vand.u32 %v4042, 4294901760
  %v4945 = vsub.f32 %v4042, %v4944
  %4946 = vmatmul.mubr.f32.gmra.mrb[0].mxu0 %v4945
  %v4947 = vpop.f32.mrb[0].mxu0
  %v4948 = vadd.f32 %v4665, %v4947
  %v4949 = vpop.f32.mrb[0].mxu0
  %4950 = vmatprep.mubr.f32.mxu0 0.0
  %v4951 = vand.u32 %v4045, 4294901760
  %v4952 = vsub.f32 %v4045, %v4951
  %4953 = vmatmul.mubr.f32.gmra.mrb[0].mxu0 %v4952
  %v4954 = vpop.f32.mrb[0].mxu0
  %v4955 = vadd.f32 %v4671, %v4954
  %v4956 = vpop.f32.mrb[0].mxu0
  %4957 = vmatprep.mubr.f32.mxu0 0.0
  %v4958 = vand.u32 %v4048, 4294901760
  %v4959 = vsub.f32 %v4048, %v4958
  %4960 = vmatmul.mubr.f32.gmra.mrb[0].mxu0 %v4959
  %v4961 = vpop.f32.mrb[0].mxu0
  %v4962 = vadd.f32 %v4677, %v4961
  %v4963 = vpop.f32.mrb[0].mxu0
  %4964 = vmatprep.mubr.f32.mxu0 0.0
  %v4965 = vand.u32 %v4051, 4294901760
  %v4966 = vsub.f32 %v4051, %v4965
  %4967 = vmatmul.mubr.f32.gmra.mrb[0].mxu0 %v4966
  %v4968 = vpop.f32.mrb[0].mxu0
  %v4969 = vadd.f32 %v4683, %v4968
  %v4970 = vpop.f32.mrb[0].mxu0
  %4971 = vmatprep.mubr.f32.mxu0 0.0
  %v4972 = vand.u32 %v4054, 4294901760
  %v4973 = vsub.f32 %v4054, %v4972
  %4974 = vmatmul.mubr.f32.gmra.mrb[0].mxu0 %v4973
  %v4975 = vpop.f32.mrb[0].mxu0
  %v4976 = vadd.f32 %v4689, %v4975
  %v4977 = vpop.f32.mrb[0].mxu0
  %4978 = vmatprep.mubr.f32.mxu0 0.0
  %v4979 = vand.u32 %v4057, 4294901760
  %v4980 = vsub.f32 %v4057, %v4979
  %4981 = vmatmul.mubr.f32.gmra.mrb[0].mxu0 %v4980
  %v4982 = vpop.f32.mrb[0].mxu0
  %v4983 = vadd.f32 %v4695, %v4982
  %v4984 = vpop.f32.mrb[0].mxu0
  %4985 = vmatprep.mubr.f32.mxu0 0.0
  %v4986 = vand.u32 %v4060, 4294901760
  %v4987 = vsub.f32 %v4060, %v4986
  %4988 = vmatmul.mubr.f32.gmra.mrb[0].mxu0 %v4987
  %v4989 = vpop.f32.mrb[0].mxu0
  %v4990 = vadd.f32 %v4701, %v4989
  %v4991 = vpop.f32.mrb[0].mxu0
  %4992 = vmatprep.mubr.f32.mxu0 0.0
  %v4993 = vand.u32 %v4063, 4294901760
  %v4994 = vsub.f32 %v4063, %v4993
  %4995 = vmatmul.mubr.f32.gmra.mrb[0].mxu0 %v4994
  %v4996 = vpop.f32.mrb[0].mxu0
  %v4997 = vadd.f32 %v4707, %v4996
  %v4998 = vpop.f32.mrb[0].mxu0
  %4999 = vmatprep.mubr.f32.mxu0 0.0
  %v5000 = vand.u32 %v4066, 4294901760
  %v5001 = vsub.f32 %v4066, %v5000
  %5002 = vmatmul.mubr.f32.gmra.mrb[0].mxu0 %v5001
  %v5003 = vpop.f32.mrb[0].mxu0
  %v5004 = vadd.f32 %v4713, %v5003
  %v5005 = vpop.f32.mrb[0].mxu0
  %5006 = vmatprep.mubr.f32.mxu0 0.0
  %v5007 = vand.u32 %v4069, 4294901760
  %v5008 = vsub.f32 %v4069, %v5007
  %5009 = vmatmul.mubr.f32.gmra.mrb[0].mxu0 %v5008
  %v5010 = vpop.f32.mrb[0].mxu0
  %v5011 = vadd.f32 %v4719, %v5010
  %v5012 = vpop.f32.mrb[0].mxu0
  %5013 = vmatprep.mubr.f32.mxu0 0.0
  %v5014 = vand.u32 %v4072, 4294901760
  %v5015 = vsub.f32 %v4072, %v5014
  %5016 = vmatmul.mubr.f32.gmra.mrb[0].mxu0 %v5015
  %v5017 = vpop.f32.mrb[0].mxu0
  %v5018 = vadd.f32 %v4725, %v5017
  %v5019 = vpop.f32.mrb[0].mxu0
  %5020 = vmatprep.mubr.f32.mxu0 0.0
  %v5021 = vand.u32 %v4075, 4294901760
  %v5022 = vsub.f32 %v4075, %v5021
  %5023 = vmatmul.mubr.f32.gmra.mrb[0].mxu0 %v5022
  %v5024 = vpop.f32.mrb[0].mxu0
  %v5025 = vadd.f32 %v4731, %v5024
  %v5026 = vpop.f32.mrb[0].mxu0
  %5027 = vmatprep.mubr.f32.mxu0 0.0
  %v5028 = vand.u32 %v4078, 4294901760
  %v5029 = vsub.f32 %v4078, %v5028
  %5030 = vmatmul.mubr.f32.gmra.mrb[0].mxu0 %v5029
  %v5031 = vpop.f32.mrb[0].mxu0
  %v5032 = vadd.f32 %v4737, %v5031
  %v5033 = vpop.f32.mrb[0].mxu0
  %5034 = vmatprep.mubr.f32.mxu0 0.0
  %v5035 = vand.u32 %v4081, 4294901760
  %v5036 = vsub.f32 %v4081, %v5035
  %5037 = vmatmul.mubr.f32.gmra.mrb[0].mxu0 %v5036
  %v5038 = vpop.f32.mrb[0].mxu0
  %v5039 = vadd.f32 %v4743, %v5038
  %v5040 = vpop.f32.mrb[0].mxu0
  %5041 = vmatprep.mubr.f32.mxu0 0.0
  %v5042 = vand.u32 %v4084, 4294901760
  %v5043 = vsub.f32 %v4084, %v5042
  %5044 = vmatmul.mubr.f32.gmra.mrb[0].mxu0 %v5043
  %v5045 = vpop.f32.mrb[0].mxu0
  %v5046 = vadd.f32 %v4749, %v5045
  %v5047 = vpop.f32.mrb[0].mxu0
  %5048 = vdwg.mxu0
  %5049 = vmatprep.subr.mxu0 0.0
  %v5050 = vand.u32 %v3979, 4294901760
  %5051 = vmatpush1.msra.mxu0 %v5050
  %5052 = vmatprep.subr.mxu0 0.0
  %v5053 = vand.u32 %v3980, 4294901760
  %5054 = vmatpush1.msra.mxu0 %v5053
  %5055 = vmatprep.subr.mxu0 0.0
  %v5056 = vand.u32 %v3981, 4294901760
  %5057 = vmatpush1.msra.mxu0 %v5056
  %5058 = vmatprep.subr.mxu0 0.0
  %v5059 = vand.u32 %v3982, 4294901760
  %5060 = vmatpush1.msra.mxu0 %v5059
  %5061 = vmatprep.subr.mxu0 0.0
  %5062 = vmatpush1.msra.mxu0 0.0
  %5063 = vmatprep.subr.mxu0 0.0
  %5064 = vmatpush1.msra.mxu0 0.0
  %5065 = vmatprep.subr.mxu0 0.0
  %5066 = vmatpush1.msra.mxu0 0.0
  %5067 = vmatprep.subr.mxu0 0.0
  %5068 = vmatpush1.msra.mxu0 0.0
  %5069 = vmatprep.subr.mxu0 0.0
  %5070 = vmatpush1.msra.mxu0 0.0
  %5071 = vmatprep.subr.mxu0 0.0
  %5072 = vmatpush1.msra.mxu0 0.0
  %5073 = vmatprep.subr.mxu0 0.0
  %5074 = vmatpush1.msra.mxu0 0.0
  %5075 = vmatprep.subr.mxu0 0.0
  %5076 = vmatpush1.msra.mxu0 0.0
  %5077 = vmatprep.subr.mxu0 0.0
  %5078 = vmatpush1.msra.mxu0 0.0
  %5079 = vmatprep.subr.mxu0 0.0
  %5080 = vmatpush1.msra.mxu0 0.0
  %5081 = vmatprep.subr.mxu0 0.0
  %5082 = vmatpush1.msra.mxu0 0.0
  %5083 = vmatprep.subr.mxu0 0.0
  %5084 = vmatpush1.msra.mxu0 0.0
  %5085 = vmatprep.subr.mxu0 0.0
  %5086 = vmatpush1.msra.mxu0 0.0
  %5087 = vmatprep.subr.mxu0 0.0
  %5088 = vmatpush1.msra.mxu0 0.0
  %5089 = vmatprep.subr.mxu0 0.0
  %5090 = vmatpush1.msra.mxu0 0.0
  %5091 = vmatprep.subr.mxu0 0.0
  %5092 = vmatpush1.msra.mxu0 0.0
  %5093 = vmatprep.subr.mxu0 0.0
  %5094 = vmatpush1.msra.mxu0 0.0
  %5095 = vmatprep.subr.mxu0 0.0
  %5096 = vmatpush1.msra.mxu0 0.0
  %5097 = vmatprep.subr.mxu0 0.0
  %5098 = vmatpush1.msra.mxu0 0.0
  %5099 = vmatprep.subr.mxu0 0.0
  %5100 = vmatpush1.msra.mxu0 0.0
  %5101 = vmatprep.subr.mxu0 0.0
  %5102 = vmatpush1.msra.mxu0 0.0
  %5103 = vmatprep.subr.mxu0 0.0
  %5104 = vmatpush1.msra.mxu0 0.0
  %5105 = vmatprep.subr.mxu0 0.0
  %5106 = vmatpush1.msra.mxu0 0.0
  %5107 = vmatprep.subr.mxu0 0.0
  %5108 = vmatpush1.msra.mxu0 0.0
  %5109 = vmatprep.subr.mxu0 0.0
  %5110 = vmatpush1.msra.mxu0 0.0
  %5111 = vmatprep.subr.mxu0 0.0
  %5112 = vmatpush1.msra.mxu0 0.0
  %5113 = vmatprep.subr.mxu0 0.0
  %5114 = vmatpush1.msra.mxu0 0.0
  %5115 = vmatprep.subr.mxu0 0.0
  %5116 = vmatpush1.msra.mxu0 0.0
  %5117 = vmatprep.mubr.f32.mxu0 0.0
  %v5118 = vand.u32 %v3991, 4294901760
  %v5119 = vsub.f32 %v3991, %v5118
  %v5120 = vand.u32 %v5119, 4294901760
  %5121 = vmatmul.mubr.f32.gmra.mrb[0].mxu0 %v5120
  %v5122 = vpop.f32.mrb[0].mxu0
  %v5123 = vadd.f32 %v4829, %v5122
  %v5124 = vpop.f32.mrb[0].mxu0
  %5125 = vmatprep.mubr.f32.mxu0 0.0
  %v5126 = vand.u32 %v3994, 4294901760
  %v5127 = vsub.f32 %v3994, %v5126
  %v5128 = vand.u32 %v5127, 4294901760
  %5129 = vmatmul.mubr.f32.gmra.mrb[0].mxu0 %v5128
  %v5130 = vpop.f32.mrb[0].mxu0
  %v5131 = vadd.f32 %v4836, %v5130
  %v5132 = vpop.f32.mrb[0].mxu0
  %5133 = vmatprep.mubr.f32.mxu0 0.0
  %v5134 = vand.u32 %v3997, 4294901760
  %v5135 = vsub.f32 %v3997, %v5134
  %v5136 = vand.u32 %v5135, 4294901760
  %5137 = vmatmul.mubr.f32.gmra.mrb[0].mxu0 %v5136
  %v5138 = vpop.f32.mrb[0].mxu0
  %v5139 = vadd.f32 %v4843, %v5138
  %v5140 = vpop.f32.mrb[0].mxu0
  %5141 = vmatprep.mubr.f32.mxu0 0.0
  %v5142 = vand.u32 %v4000, 4294901760
  %v5143 = vsub.f32 %v4000, %v5142
  %v5144 = vand.u32 %v5143, 4294901760
  %5145 = vmatmul.mubr.f32.gmra.mrb[0].mxu0 %v5144
  %v5146 = vpop.f32.mrb[0].mxu0
  %v5147 = vadd.f32 %v4850, %v5146
  %v5148 = vpop.f32.mrb[0].mxu0
  %5149 = vmatprep.mubr.f32.mxu0 0.0
  %v5150 = vand.u32 %v4003, 4294901760
  %v5151 = vsub.f32 %v4003, %v5150
  %v5152 = vand.u32 %v5151, 4294901760
  %5153 = vmatmul.mubr.f32.gmra.mrb[0].mxu0 %v5152
  %v5154 = vpop.f32.mrb[0].mxu0
  %v5155 = vadd.f32 %v4857, %v5154
  %v5156 = vpop.f32.mrb[0].mxu0
  %5157 = vmatprep.mubr.f32.mxu0 0.0
  %v5158 = vand.u32 %v4006, 4294901760
  %v5159 = vsub.f32 %v4006, %v5158
  %v5160 = vand.u32 %v5159, 4294901760
  %5161 = vmatmul.mubr.f32.gmra.mrb[0].mxu0 %v5160
  %v5162 = vpop.f32.mrb[0].mxu0
  %v5163 = vadd.f32 %v4864, %v5162
  %v5164 = vpop.f32.mrb[0].mxu0
  %5165 = vmatprep.mubr.f32.mxu0 0.0
  %v5166 = vand.u32 %v4009, 4294901760
  %v5167 = vsub.f32 %v4009, %v5166
  %v5168 = vand.u32 %v5167, 4294901760
  %5169 = vmatmul.mubr.f32.gmra.mrb[0].mxu0 %v5168
  %v5170 = vpop.f32.mrb[0].mxu0
  %v5171 = vadd.f32 %v4871, %v5170
  %v5172 = vpop.f32.mrb[0].mxu0
  %5173 = vmatprep.mubr.f32.mxu0 0.0
  %v5174 = vand.u32 %v4012, 4294901760
  %v5175 = vsub.f32 %v4012, %v5174
  %v5176 = vand.u32 %v5175, 4294901760
  %5177 = vmatmul.mubr.f32.gmra.mrb[0].mxu0 %v5176
  %v5178 = vpop.f32.mrb[0].mxu0
  %v5179 = vadd.f32 %v4878, %v5178
  %v5180 = vpop.f32.mrb[0].mxu0
  %5181 = vmatprep.mubr.f32.mxu0 0.0
  %v5182 = vand.u32 %v4015, 4294901760
  %v5183 = vsub.f32 %v4015, %v5182
  %v5184 = vand.u32 %v5183, 4294901760
  %5185 = vmatmul.mubr.f32.gmra.mrb[0].mxu0 %v5184
  %v5186 = vpop.f32.mrb[0].mxu0
  %v5187 = vadd.f32 %v4885, %v5186
  %v5188 = vpop.f32.mrb[0].mxu0
  %5189 = vmatprep.mubr.f32.mxu0 0.0
  %v5190 = vand.u32 %v4018, 4294901760
  %v5191 = vsub.f32 %v4018, %v5190
  %v5192 = vand.u32 %v5191, 4294901760
  %5193 = vmatmul.mubr.f32.gmra.mrb[0].mxu0 %v5192
  %v5194 = vpop.f32.mrb[0].mxu0
  %v5195 = vadd.f32 %v4892, %v5194
  %v5196 = vpop.f32.mrb[0].mxu0
  %5197 = vmatprep.mubr.f32.mxu0 0.0
  %v5198 = vand.u32 %v4021, 4294901760
  %v5199 = vsub.f32 %v4021, %v5198
  %v5200 = vand.u32 %v5199, 4294901760
  %5201 = vmatmul.mubr.f32.gmra.mrb[0].mxu0 %v5200
  %v5202 = vpop.f32.mrb[0].mxu0
  %v5203 = vadd.f32 %v4899, %v5202
  %v5204 = vpop.f32.mrb[0].mxu0
  %5205 = vmatprep.mubr.f32.mxu0 0.0
  %v5206 = vand.u32 %v4024, 4294901760
  %v5207 = vsub.f32 %v4024, %v5206
  %v5208 = vand.u32 %v5207, 4294901760
  %5209 = vmatmul.mubr.f32.gmra.mrb[0].mxu0 %v5208
  %v5210 = vpop.f32.mrb[0].mxu0
  %v5211 = vadd.f32 %v4906, %v5210
  %v5212 = vpop.f32.mrb[0].mxu0
  %5213 = vmatprep.mubr.f32.mxu0 0.0
  %v5214 = vand.u32 %v4027, 4294901760
  %v5215 = vsub.f32 %v4027, %v5214
  %v5216 = vand.u32 %v5215, 4294901760
  %5217 = vmatmul.mubr.f32.gmra.mrb[0].mxu0 %v5216
  %v5218 = vpop.f32.mrb[0].mxu0
  %v5219 = vadd.f32 %v4913, %v5218
  %v5220 = vpop.f32.mrb[0].mxu0
  %5221 = vmatprep.mubr.f32.mxu0 0.0
  %v5222 = vand.u32 %v4030, 4294901760
  %v5223 = vsub.f32 %v4030, %v5222
  %v5224 = vand.u32 %v5223, 4294901760
  %5225 = vmatmul.mubr.f32.gmra.mrb[0].mxu0 %v5224
  %v5226 = vpop.f32.mrb[0].mxu0
  %v5227 = vadd.f32 %v4920, %v5226
  %v5228 = vpop.f32.mrb[0].mxu0
  %5229 = vmatprep.mubr.f32.mxu0 0.0
  %v5230 = vand.u32 %v4033, 4294901760
  %v5231 = vsub.f32 %v4033, %v5230
  %v5232 = vand.u32 %v5231, 4294901760
  %5233 = vmatmul.mubr.f32.gmra.mrb[0].mxu0 %v5232
  %v5234 = vpop.f32.mrb[0].mxu0
  %v5235 = vadd.f32 %v4927, %v5234
  %v5236 = vpop.f32.mrb[0].mxu0
  %5237 = vmatprep.mubr.f32.mxu0 0.0
  %v5238 = vand.u32 %v4036, 4294901760
  %v5239 = vsub.f32 %v4036, %v5238
  %v5240 = vand.u32 %v5239, 4294901760
  %5241 = vmatmul.mubr.f32.gmra.mrb[0].mxu0 %v5240
  %v5242 = vpop.f32.mrb[0].mxu0
  %v5243 = vadd.f32 %v4934, %v5242
  %v5244 = vpop.f32.mrb[0].mxu0
  %5245 = vmatprep.mubr.f32.mxu0 0.0
  %v5246 = vand.u32 %v4039, 4294901760
  %v5247 = vsub.f32 %v4039, %v5246
  %v5248 = vand.u32 %v5247, 4294901760
  %5249 = vmatmul.mubr.f32.gmra.mrb[0].mxu0 %v5248
  %v5250 = vpop.f32.mrb[0].mxu0
  %v5251 = vadd.f32 %v4941, %v5250
  %v5252 = vpop.f32.mrb[0].mxu0
  %5253 = vmatprep.mubr.f32.mxu0 0.0
  %v5254 = vand.u32 %v4042, 4294901760
  %v5255 = vsub.f32 %v4042, %v5254
  %v5256 = vand.u32 %v5255, 4294901760
  %5257 = vmatmul.mubr.f32.gmra.mrb[0].mxu0 %v5256
  %v5258 = vpop.f32.mrb[0].mxu0
  %v5259 = vadd.f32 %v4948, %v5258
  %v5260 = vpop.f32.mrb[0].mxu0
  %5261 = vmatprep.mubr.f32.mxu0 0.0
  %v5262 = vand.u32 %v4045, 4294901760
  %v5263 = vsub.f32 %v4045, %v5262
  %v5264 = vand.u32 %v5263, 4294901760
  %5265 = vmatmul.mubr.f32.gmra.mrb[0].mxu0 %v5264
  %v5266 = vpop.f32.mrb[0].mxu0
  %v5267 = vadd.f32 %v4955, %v5266
  %v5268 = vpop.f32.mrb[0].mxu0
  %5269 = vmatprep.mubr.f32.mxu0 0.0
  %v5270 = vand.u32 %v4048, 4294901760
  %v5271 = vsub.f32 %v4048, %v5270
  %v5272 = vand.u32 %v5271, 4294901760
  %5273 = vmatmul.mubr.f32.gmra.mrb[0].mxu0 %v5272
  %v5274 = vpop.f32.mrb[0].mxu0
  %v5275 = vadd.f32 %v4962, %v5274
  %v5276 = vpop.f32.mrb[0].mxu0
  %5277 = vmatprep.mubr.f32.mxu0 0.0
  %v5278 = vand.u32 %v4051, 4294901760
  %v5279 = vsub.f32 %v4051, %v5278
  %v5280 = vand.u32 %v5279, 4294901760
  %5281 = vmatmul.mubr.f32.gmra.mrb[0].mxu0 %v5280
  %v5282 = vpop.f32.mrb[0].mxu0
  %v5283 = vadd.f32 %v4969, %v5282
  %v5284 = vpop.f32.mrb[0].mxu0
  %5285 = vmatprep.mubr.f32.mxu0 0.0
  %v5286 = vand.u32 %v4054, 4294901760
  %v5287 = vsub.f32 %v4054, %v5286
  %v5288 = vand.u32 %v5287, 4294901760
  %5289 = vmatmul.mubr.f32.gmra.mrb[0].mxu0 %v5288
  %v5290 = vpop.f32.mrb[0].mxu0
  %v5291 = vadd.f32 %v4976, %v5290
  %v5292 = vpop.f32.mrb[0].mxu0
  %5293 = vmatprep.mubr.f32.mxu0 0.0
  %v5294 = vand.u32 %v4057, 4294901760
  %v5295 = vsub.f32 %v4057, %v5294
  %v5296 = vand.u32 %v5295, 4294901760
  %5297 = vmatmul.mubr.f32.gmra.mrb[0].mxu0 %v5296
  %v5298 = vpop.f32.mrb[0].mxu0
  %v5299 = vadd.f32 %v4983, %v5298
  %v5300 = vpop.f32.mrb[0].mxu0
  %5301 = vmatprep.mubr.f32.mxu0 0.0
  %v5302 = vand.u32 %v4060, 4294901760
  %v5303 = vsub.f32 %v4060, %v5302
  %v5304 = vand.u32 %v5303, 4294901760
  %5305 = vmatmul.mubr.f32.gmra.mrb[0].mxu0 %v5304
  %v5306 = vpop.f32.mrb[0].mxu0
  %v5307 = vadd.f32 %v4990, %v5306
  %v5308 = vpop.f32.mrb[0].mxu0
  %5309 = vmatprep.mubr.f32.mxu0 0.0
  %v5310 = vand.u32 %v4063, 4294901760
  %v5311 = vsub.f32 %v4063, %v5310
  %v5312 = vand.u32 %v5311, 4294901760
  %5313 = vmatmul.mubr.f32.gmra.mrb[0].mxu0 %v5312
  %v5314 = vpop.f32.mrb[0].mxu0
  %v5315 = vadd.f32 %v4997, %v5314
  %v5316 = vpop.f32.mrb[0].mxu0
  %5317 = vmatprep.mubr.f32.mxu0 0.0
  %v5318 = vand.u32 %v4066, 4294901760
  %v5319 = vsub.f32 %v4066, %v5318
  %v5320 = vand.u32 %v5319, 4294901760
  %5321 = vmatmul.mubr.f32.gmra.mrb[0].mxu0 %v5320
  %v5322 = vpop.f32.mrb[0].mxu0
  %v5323 = vadd.f32 %v5004, %v5322
  %v5324 = vpop.f32.mrb[0].mxu0
  %5325 = vmatprep.mubr.f32.mxu0 0.0
  %v5326 = vand.u32 %v4069, 4294901760
  %v5327 = vsub.f32 %v4069, %v5326
  %v5328 = vand.u32 %v5327, 4294901760
  %5329 = vmatmul.mubr.f32.gmra.mrb[0].mxu0 %v5328
  %v5330 = vpop.f32.mrb[0].mxu0
  %v5331 = vadd.f32 %v5011, %v5330
  %v5332 = vpop.f32.mrb[0].mxu0
  %5333 = vmatprep.mubr.f32.mxu0 0.0
  %v5334 = vand.u32 %v4072, 4294901760
  %v5335 = vsub.f32 %v4072, %v5334
  %v5336 = vand.u32 %v5335, 4294901760
  %5337 = vmatmul.mubr.f32.gmra.mrb[0].mxu0 %v5336
  %v5338 = vpop.f32.mrb[0].mxu0
  %v5339 = vadd.f32 %v5018, %v5338
  %v5340 = vpop.f32.mrb[0].mxu0
  %5341 = vmatprep.mubr.f32.mxu0 0.0
  %v5342 = vand.u32 %v4075, 4294901760
  %v5343 = vsub.f32 %v4075, %v5342
  %v5344 = vand.u32 %v5343, 4294901760
  %5345 = vmatmul.mubr.f32.gmra.mrb[0].mxu0 %v5344
  %v5346 = vpop.f32.mrb[0].mxu0
  %v5347 = vadd.f32 %v5025, %v5346
  %v5348 = vpop.f32.mrb[0].mxu0
  %5349 = vmatprep.mubr.f32.mxu0 0.0
  %v5350 = vand.u32 %v4078, 4294901760
  %v5351 = vsub.f32 %v4078, %v5350
  %v5352 = vand.u32 %v5351, 4294901760
  %5353 = vmatmul.mubr.f32.gmra.mrb[0].mxu0 %v5352
  %v5354 = vpop.f32.mrb[0].mxu0
  %v5355 = vadd.f32 %v5032, %v5354
  %v5356 = vpop.f32.mrb[0].mxu0
  %5357 = vmatprep.mubr.f32.mxu0 0.0
  %v5358 = vand.u32 %v4081, 4294901760
  %v5359 = vsub.f32 %v4081, %v5358
  %v5360 = vand.u32 %v5359, 4294901760
  %5361 = vmatmul.mubr.f32.gmra.mrb[0].mxu0 %v5360
  %v5362 = vpop.f32.mrb[0].mxu0
  %v5363 = vadd.f32 %v5039, %v5362
  %v5364 = vpop.f32.mrb[0].mxu0
  %5365 = vmatprep.mubr.f32.mxu0 0.0
  %v5366 = vand.u32 %v4084, 4294901760
  %v5367 = vsub.f32 %v4084, %v5366
  %v5368 = vand.u32 %v5367, 4294901760
  %5369 = vmatmul.mubr.f32.gmra.mrb[0].mxu0 %v5368
  %v5370 = vpop.f32.mrb[0].mxu0
  %v5371 = vadd.f32 %v5046, %v5370
  %v5372 = vpop.f32.mrb[0].mxu0
  %5373 = vdwg.mxu0
  %5374 = vmatprep.subr.mxu0 0.0
  %v5375 = vand.u32 %v3979, 4294901760
  %v5376 = vsub.f32 %v3979, %v5375
  %v5377 = vand.u32 %v5376, 4294901760
  %5378 = vmatpush1.msra.mxu0 %v5377
  %5379 = vmatprep.subr.mxu0 0.0
  %v5380 = vand.u32 %v3980, 4294901760
  %v5381 = vsub.f32 %v3980, %v5380
  %v5382 = vand.u32 %v5381, 4294901760
  %5383 = vmatpush1.msra.mxu0 %v5382
  %5384 = vmatprep.subr.mxu0 0.0
  %v5385 = vand.u32 %v3981, 4294901760
  %v5386 = vsub.f32 %v3981, %v5385
  %v5387 = vand.u32 %v5386, 4294901760
  %5388 = vmatpush1.msra.mxu0 %v5387
  %5389 = vmatprep.subr.mxu0 0.0
  %v5390 = vand.u32 %v3982, 4294901760
  %v5391 = vsub.f32 %v3982, %v5390
  %v5392 = vand.u32 %v5391, 4294901760
  %5393 = vmatpush1.msra.mxu0 %v5392
  %5394 = vmatprep.subr.mxu0 0.0
  %5395 = vmatpush1.msra.mxu0 0.0
  %5396 = vmatprep.subr.mxu0 0.0
  %5397 = vmatpush1.msra.mxu0 0.0
  %5398 = vmatprep.subr.mxu0 0.0
  %5399 = vmatpush1.msra.mxu0 0.0
  %5400 = vmatprep.subr.mxu0 0.0
  %5401 = vmatpush1.msra.mxu0 0.0
  %5402 = vmatprep.subr.mxu0 0.0
  %5403 = vmatpush1.msra.mxu0 0.0
  %5404 = vmatprep.subr.mxu0 0.0
  %5405 = vmatpush1.msra.mxu0 0.0
  %5406 = vmatprep.subr.mxu0 0.0
  %5407 = vmatpush1.msra.mxu0 0.0
  %5408 = vmatprep.subr.mxu0 0.0
  %5409 = vmatpush1.msra.mxu0 0.0
  %5410 = vmatprep.subr.mxu0 0.0
  %5411 = vmatpush1.msra.mxu0 0.0
  %5412 = vmatprep.subr.mxu0 0.0
  %5413 = vmatpush1.msra.mxu0 0.0
  %5414 = vmatprep.subr.mxu0 0.0
  %5415 = vmatpush1.msra.mxu0 0.0
  %5416 = vmatprep.subr.mxu0 0.0
  %5417 = vmatpush1.msra.mxu0 0.0
  %5418 = vmatprep.subr.mxu0 0.0
  %5419 = vmatpush1.msra.mxu0 0.0
  %5420 = vmatprep.subr.mxu0 0.0
  %5421 = vmatpush1.msra.mxu0 0.0
  %5422 = vmatprep.subr.mxu0 0.0
  %5423 = vmatpush1.msra.mxu0 0.0
  %5424 = vmatprep.subr.mxu0 0.0
  %5425 = vmatpush1.msra.mxu0 0.0
  %5426 = vmatprep.subr.mxu0 0.0
  %5427 = vmatpush1.msra.mxu0 0.0
  %5428 = vmatprep.subr.mxu0 0.0
  %5429 = vmatpush1.msra.mxu0 0.0
  %5430 = vmatprep.subr.mxu0 0.0
  %5431 = vmatpush1.msra.mxu0 0.0
  %5432 = vmatprep.subr.mxu0 0.0
  %5433 = vmatpush1.msra.mxu0 0.0
  %5434 = vmatprep.subr.mxu0 0.0
  %5435 = vmatpush1.msra.mxu0 0.0
  %5436 = vmatprep.subr.mxu0 0.0
  %5437 = vmatpush1.msra.mxu0 0.0
  %5438 = vmatprep.subr.mxu0 0.0
  %5439 = vmatpush1.msra.mxu0 0.0
  %5440 = vmatprep.subr.mxu0 0.0
  %5441 = vmatpush1.msra.mxu0 0.0
  %5442 = vmatprep.subr.mxu0 0.0
  %5443 = vmatpush1.msra.mxu0 0.0
  %5444 = vmatprep.subr.mxu0 0.0
  %5445 = vmatpush1.msra.mxu0 0.0
  %5446 = vmatprep.subr.mxu0 0.0
  %5447 = vmatpush1.msra.mxu0 0.0
  %5448 = vmatprep.subr.mxu0 0.0
  %5449 = vmatpush1.msra.mxu0 0.0
  %5450 = vmatprep.mubr.f32.mxu0 0.0
  %v5451 = vand.u32 %v3991, 4294901760
  %5452 = vmatmul.mubr.f32.gmra.mrb[0].mxu0 %v5451
  %v5453 = vpop.f32.mrb[0].mxu0
  %v5454 = vadd.f32 %v5123, %v5453
  %v5455 = vpop.f32.mrb[0].mxu0
  %5456 = vmatprep.mubr.f32.mxu0 0.0
  %v5457 = vand.u32 %v3994, 4294901760
  %5458 = vmatmul.mubr.f32.gmra.mrb[0].mxu0 %v5457
  %v5459 = vpop.f32.mrb[0].mxu0
  %v5460 = vadd.f32 %v5131, %v5459
  %v5461 = vpop.f32.mrb[0].mxu0
  %5462 = vmatprep.mubr.f32.mxu0 0.0
  %v5463 = vand.u32 %v3997, 4294901760
  %5464 = vmatmul.mubr.f32.gmra.mrb[0].mxu0 %v5463
  %v5465 = vpop.f32.mrb[0].mxu0
  %v5466 = vadd.f32 %v5139, %v5465
  %v5467 = vpop.f32.mrb[0].mxu0
  %5468 = vmatprep.mubr.f32.mxu0 0.0
  %v5469 = vand.u32 %v4000, 4294901760
  %5470 = vmatmul.mubr.f32.gmra.mrb[0].mxu0 %v5469
  %v5471 = vpop.f32.mrb[0].mxu0
  %v5472 = vadd.f32 %v5147, %v5471
  %v5473 = vpop.f32.mrb[0].mxu0
  %5474 = vmatprep.mubr.f32.mxu0 0.0
  %v5475 = vand.u32 %v4003, 4294901760
  %5476 = vmatmul.mubr.f32.gmra.mrb[0].mxu0 %v5475
  %v5477 = vpop.f32.mrb[0].mxu0
  %v5478 = vadd.f32 %v5155, %v5477
  %v5479 = vpop.f32.mrb[0].mxu0
  %5480 = vmatprep.mubr.f32.mxu0 0.0
  %v5481 = vand.u32 %v4006, 4294901760
  %5482 = vmatmul.mubr.f32.gmra.mrb[0].mxu0 %v5481
  %v5483 = vpop.f32.mrb[0].mxu0
  %v5484 = vadd.f32 %v5163, %v5483
  %v5485 = vpop.f32.mrb[0].mxu0
  %5486 = vmatprep.mubr.f32.mxu0 0.0
  %v5487 = vand.u32 %v4009, 4294901760
  %5488 = vmatmul.mubr.f32.gmra.mrb[0].mxu0 %v5487
  %v5489 = vpop.f32.mrb[0].mxu0
  %v5490 = vadd.f32 %v5171, %v5489
  %v5491 = vpop.f32.mrb[0].mxu0
  %5492 = vmatprep.mubr.f32.mxu0 0.0
  %v5493 = vand.u32 %v4012, 4294901760
  %5494 = vmatmul.mubr.f32.gmra.mrb[0].mxu0 %v5493
  %v5495 = vpop.f32.mrb[0].mxu0
  %v5496 = vadd.f32 %v5179, %v5495
  %v5497 = vpop.f32.mrb[0].mxu0
  %5498 = vmatprep.mubr.f32.mxu0 0.0
  %v5499 = vand.u32 %v4015, 4294901760
  %5500 = vmatmul.mubr.f32.gmra.mrb[0].mxu0 %v5499
  %v5501 = vpop.f32.mrb[0].mxu0
  %v5502 = vadd.f32 %v5187, %v5501
  %v5503 = vpop.f32.mrb[0].mxu0
  %5504 = vmatprep.mubr.f32.mxu0 0.0
  %v5505 = vand.u32 %v4018, 4294901760
  %5506 = vmatmul.mubr.f32.gmra.mrb[0].mxu0 %v5505
  %v5507 = vpop.f32.mrb[0].mxu0
  %v5508 = vadd.f32 %v5195, %v5507
  %v5509 = vpop.f32.mrb[0].mxu0
  %5510 = vmatprep.mubr.f32.mxu0 0.0
  %v5511 = vand.u32 %v4021, 4294901760
  %5512 = vmatmul.mubr.f32.gmra.mrb[0].mxu0 %v5511
  %v5513 = vpop.f32.mrb[0].mxu0
  %v5514 = vadd.f32 %v5203, %v5513
  %v5515 = vpop.f32.mrb[0].mxu0
  %5516 = vmatprep.mubr.f32.mxu0 0.0
  %v5517 = vand.u32 %v4024, 4294901760
  %5518 = vmatmul.mubr.f32.gmra.mrb[0].mxu0 %v5517
  %v5519 = vpop.f32.mrb[0].mxu0
  %v5520 = vadd.f32 %v5211, %v5519
  %v5521 = vpop.f32.mrb[0].mxu0
  %5522 = vmatprep.mubr.f32.mxu0 0.0
  %v5523 = vand.u32 %v4027, 4294901760
  %5524 = vmatmul.mubr.f32.gmra.mrb[0].mxu0 %v5523
  %v5525 = vpop.f32.mrb[0].mxu0
  %v5526 = vadd.f32 %v5219, %v5525
  %v5527 = vpop.f32.mrb[0].mxu0
  %5528 = vmatprep.mubr.f32.mxu0 0.0
  %v5529 = vand.u32 %v4030, 4294901760
  %5530 = vmatmul.mubr.f32.gmra.mrb[0].mxu0 %v5529
  %v5531 = vpop.f32.mrb[0].mxu0
  %v5532 = vadd.f32 %v5227, %v5531
  %v5533 = vpop.f32.mrb[0].mxu0
  %5534 = vmatprep.mubr.f32.mxu0 0.0
  %v5535 = vand.u32 %v4033, 4294901760
  %5536 = vmatmul.mubr.f32.gmra.mrb[0].mxu0 %v5535
  %v5537 = vpop.f32.mrb[0].mxu0
  %v5538 = vadd.f32 %v5235, %v5537
  %v5539 = vpop.f32.mrb[0].mxu0
  %5540 = vmatprep.mubr.f32.mxu0 0.0
  %v5541 = vand.u32 %v4036, 4294901760
  %5542 = vmatmul.mubr.f32.gmra.mrb[0].mxu0 %v5541
  %v5543 = vpop.f32.mrb[0].mxu0
  %v5544 = vadd.f32 %v5243, %v5543
  %v5545 = vpop.f32.mrb[0].mxu0
  %5546 = vmatprep.mubr.f32.mxu0 0.0
  %v5547 = vand.u32 %v4039, 4294901760
  %5548 = vmatmul.mubr.f32.gmra.mrb[0].mxu0 %v5547
  %v5549 = vpop.f32.mrb[0].mxu0
  %v5550 = vadd.f32 %v5251, %v5549
  %v5551 = vpop.f32.mrb[0].mxu0
  %5552 = vmatprep.mubr.f32.mxu0 0.0
  %v5553 = vand.u32 %v4042, 4294901760
  %5554 = vmatmul.mubr.f32.gmra.mrb[0].mxu0 %v5553
  %v5555 = vpop.f32.mrb[0].mxu0
  %v5556 = vadd.f32 %v5259, %v5555
  %v5557 = vpop.f32.mrb[0].mxu0
  %5558 = vmatprep.mubr.f32.mxu0 0.0
  %v5559 = vand.u32 %v4045, 4294901760
  %5560 = vmatmul.mubr.f32.gmra.mrb[0].mxu0 %v5559
  %v5561 = vpop.f32.mrb[0].mxu0
  %v5562 = vadd.f32 %v5267, %v5561
  %v5563 = vpop.f32.mrb[0].mxu0
  %5564 = vmatprep.mubr.f32.mxu0 0.0
  %v5565 = vand.u32 %v4048, 4294901760
  %5566 = vmatmul.mubr.f32.gmra.mrb[0].mxu0 %v5565
  %v5567 = vpop.f32.mrb[0].mxu0
  %v5568 = vadd.f32 %v5275, %v5567
  %v5569 = vpop.f32.mrb[0].mxu0
  %5570 = vmatprep.mubr.f32.mxu0 0.0
  %v5571 = vand.u32 %v4051, 4294901760
  %5572 = vmatmul.mubr.f32.gmra.mrb[0].mxu0 %v5571
  %v5573 = vpop.f32.mrb[0].mxu0
  %v5574 = vadd.f32 %v5283, %v5573
  %v5575 = vpop.f32.mrb[0].mxu0
  %5576 = vmatprep.mubr.f32.mxu0 0.0
  %v5577 = vand.u32 %v4054, 4294901760
  %5578 = vmatmul.mubr.f32.gmra.mrb[0].mxu0 %v5577
  %v5579 = vpop.f32.mrb[0].mxu0
  %v5580 = vadd.f32 %v5291, %v5579
  %v5581 = vpop.f32.mrb[0].mxu0
  %5582 = vmatprep.mubr.f32.mxu0 0.0
  %v5583 = vand.u32 %v4057, 4294901760
  %5584 = vmatmul.mubr.f32.gmra.mrb[0].mxu0 %v5583
  %v5585 = vpop.f32.mrb[0].mxu0
  %v5586 = vadd.f32 %v5299, %v5585
  %v5587 = vpop.f32.mrb[0].mxu0
  %5588 = vmatprep.mubr.f32.mxu0 0.0
  %v5589 = vand.u32 %v4060, 4294901760
  %5590 = vmatmul.mubr.f32.gmra.mrb[0].mxu0 %v5589
  %v5591 = vpop.f32.mrb[0].mxu0
  %v5592 = vadd.f32 %v5307, %v5591
  %v5593 = vpop.f32.mrb[0].mxu0
  %5594 = vmatprep.mubr.f32.mxu0 0.0
  %v5595 = vand.u32 %v4063, 4294901760
  %5596 = vmatmul.mubr.f32.gmra.mrb[0].mxu0 %v5595
  %v5597 = vpop.f32.mrb[0].mxu0
  %v5598 = vadd.f32 %v5315, %v5597
  %v5599 = vpop.f32.mrb[0].mxu0
  %5600 = vmatprep.mubr.f32.mxu0 0.0
  %v5601 = vand.u32 %v4066, 4294901760
  %5602 = vmatmul.mubr.f32.gmra.mrb[0].mxu0 %v5601
  %v5603 = vpop.f32.mrb[0].mxu0
  %v5604 = vadd.f32 %v5323, %v5603
  %v5605 = vpop.f32.mrb[0].mxu0
  %5606 = vmatprep.mubr.f32.mxu0 0.0
  %v5607 = vand.u32 %v4069, 4294901760
  %5608 = vmatmul.mubr.f32.gmra.mrb[0].mxu0 %v5607
  %v5609 = vpop.f32.mrb[0].mxu0
  %v5610 = vadd.f32 %v5331, %v5609
  %v5611 = vpop.f32.mrb[0].mxu0
  %5612 = vmatprep.mubr.f32.mxu0 0.0
  %v5613 = vand.u32 %v4072, 4294901760
  %5614 = vmatmul.mubr.f32.gmra.mrb[0].mxu0 %v5613
  %v5615 = vpop.f32.mrb[0].mxu0
  %v5616 = vadd.f32 %v5339, %v5615
  %v5617 = vpop.f32.mrb[0].mxu0
  %5618 = vmatprep.mubr.f32.mxu0 0.0
  %v5619 = vand.u32 %v4075, 4294901760
  %5620 = vmatmul.mubr.f32.gmra.mrb[0].mxu0 %v5619
  %v5621 = vpop.f32.mrb[0].mxu0
  %v5622 = vadd.f32 %v5347, %v5621
  %v5623 = vpop.f32.mrb[0].mxu0
  %5624 = vmatprep.mubr.f32.mxu0 0.0
  %v5625 = vand.u32 %v4078, 4294901760
  %5626 = vmatmul.mubr.f32.gmra.mrb[0].mxu0 %v5625
  %v5627 = vpop.f32.mrb[0].mxu0
  %v5628 = vadd.f32 %v5355, %v5627
  %v5629 = vpop.f32.mrb[0].mxu0
  %5630 = vmatprep.mubr.f32.mxu0 0.0
  %v5631 = vand.u32 %v4081, 4294901760
  %5632 = vmatmul.mubr.f32.gmra.mrb[0].mxu0 %v5631
  %v5633 = vpop.f32.mrb[0].mxu0
  %v5634 = vadd.f32 %v5363, %v5633
  %v5635 = vpop.f32.mrb[0].mxu0
  %5636 = vmatprep.mubr.f32.mxu0 0.0
  %v5637 = vand.u32 %v4084, 4294901760
  %5638 = vmatmul.mubr.f32.gmra.mrb[0].mxu0 %v5637
  %v5639 = vpop.f32.mrb[0].mxu0
  %v5640 = vadd.f32 %v5371, %v5639
  %v5641 = vpop.f32.mrb[0].mxu0
  %5642 = vdwg.mxu0
  %5643 = vmatprep.subr.mxu0 0.0
  %v5644 = vand.u32 %v3979, 4294901760
  %5645 = vmatpush1.msra.mxu0 %v5644
  %5646 = vmatprep.subr.mxu0 0.0
  %v5647 = vand.u32 %v3980, 4294901760
  %5648 = vmatpush1.msra.mxu0 %v5647
  %5649 = vmatprep.subr.mxu0 0.0
  %v5650 = vand.u32 %v3981, 4294901760
  %5651 = vmatpush1.msra.mxu0 %v5650
  %5652 = vmatprep.subr.mxu0 0.0
  %v5653 = vand.u32 %v3982, 4294901760
  %5654 = vmatpush1.msra.mxu0 %v5653
  %5655 = vmatprep.subr.mxu0 0.0
  %5656 = vmatpush1.msra.mxu0 0.0
  %5657 = vmatprep.subr.mxu0 0.0
  %5658 = vmatpush1.msra.mxu0 0.0
  %5659 = vmatprep.subr.mxu0 0.0
  %5660 = vmatpush1.msra.mxu0 0.0
  %5661 = vmatprep.subr.mxu0 0.0
  %5662 = vmatpush1.msra.mxu0 0.0
  %5663 = vmatprep.subr.mxu0 0.0
  %5664 = vmatpush1.msra.mxu0 0.0
  %5665 = vmatprep.subr.mxu0 0.0
  %5666 = vmatpush1.msra.mxu0 0.0
  %5667 = vmatprep.subr.mxu0 0.0
  %5668 = vmatpush1.msra.mxu0 0.0
  %5669 = vmatprep.subr.mxu0 0.0
  %5670 = vmatpush1.msra.mxu0 0.0
  %5671 = vmatprep.subr.mxu0 0.0
  %5672 = vmatpush1.msra.mxu0 0.0
  %5673 = vmatprep.subr.mxu0 0.0
  %5674 = vmatpush1.msra.mxu0 0.0
  %5675 = vmatprep.subr.mxu0 0.0
  %5676 = vmatpush1.msra.mxu0 0.0
  %5677 = vmatprep.subr.mxu0 0.0
  %5678 = vmatpush1.msra.mxu0 0.0
  %5679 = vmatprep.subr.mxu0 0.0
  %5680 = vmatpush1.msra.mxu0 0.0
  %5681 = vmatprep.subr.mxu0 0.0
  %5682 = vmatpush1.msra.mxu0 0.0
  %5683 = vmatprep.subr.mxu0 0.0
  %5684 = vmatpush1.msra.mxu0 0.0
  %5685 = vmatprep.subr.mxu0 0.0
  %5686 = vmatpush1.msra.mxu0 0.0
  %5687 = vmatprep.subr.mxu0 0.0
  %5688 = vmatpush1.msra.mxu0 0.0
  %5689 = vmatprep.subr.mxu0 0.0
  %5690 = vmatpush1.msra.mxu0 0.0
  %5691 = vmatprep.subr.mxu0 0.0
  %5692 = vmatpush1.msra.mxu0 0.0
  %5693 = vmatprep.subr.mxu0 0.0
  %5694 = vmatpush1.msra.mxu0 0.0
  %5695 = vmatprep.subr.mxu0 0.0
  %5696 = vmatpush1.msra.mxu0 0.0
  %5697 = vmatprep.subr.mxu0 0.0
  %5698 = vmatpush1.msra.mxu0 0.0
  %5699 = vmatprep.subr.mxu0 0.0
  %5700 = vmatpush1.msra.mxu0 0.0
  %5701 = vmatprep.subr.mxu0 0.0
  %5702 = vmatpush1.msra.mxu0 0.0
  %5703 = vmatprep.subr.mxu0 0.0
  %5704 = vmatpush1.msra.mxu0 0.0
  %5705 = vmatprep.subr.mxu0 0.0
  %5706 = vmatpush1.msra.mxu0 0.0
  %5707 = vmatprep.subr.mxu0 0.0
  %5708 = vmatpush1.msra.mxu0 0.0
  %5709 = vmatprep.subr.mxu0 0.0
  %5710 = vmatpush1.msra.mxu0 0.0
  %5711 = vmatprep.mubr.f32.mxu0 0.0
  %v5712 = vand.u32 %v3991, 4294901760
  %5713 = vmatmul.mubr.f32.gmra.mrb[0].mxu0 %v5712
  %v5714 = vpop.f32.mrb[0].mxu0
  %v5715 = vadd.f32 %v5454, %v5714
  %v5716 = vpop.f32.mrb[0].mxu0
  %5717 = vmatprep.mubr.f32.mxu0 0.0
  %v5718 = vand.u32 %v3994, 4294901760
  %5719 = vmatmul.mubr.f32.gmra.mrb[0].mxu0 %v5718
  %v5720 = vpop.f32.mrb[0].mxu0
  %v5721 = vadd.f32 %v5460, %v5720
  %v5722 = vpop.f32.mrb[0].mxu0
  %5723 = vmatprep.mubr.f32.mxu0 0.0
  %v5724 = vand.u32 %v3997, 4294901760
  %5725 = vmatmul.mubr.f32.gmra.mrb[0].mxu0 %v5724
  %v5726 = vpop.f32.mrb[0].mxu0
  %v5727 = vadd.f32 %v5466, %v5726
  %v5728 = vpop.f32.mrb[0].mxu0
  %5729 = vmatprep.mubr.f32.mxu0 0.0
  %v5730 = vand.u32 %v4000, 4294901760
  %5731 = vmatmul.mubr.f32.gmra.mrb[0].mxu0 %v5730
  %v5732 = vpop.f32.mrb[0].mxu0
  %v5733 = vadd.f32 %v5472, %v5732
  %v5734 = vpop.f32.mrb[0].mxu0
  %5735 = vmatprep.mubr.f32.mxu0 0.0
  %v5736 = vand.u32 %v4003, 4294901760
  %5737 = vmatmul.mubr.f32.gmra.mrb[0].mxu0 %v5736
  %v5738 = vpop.f32.mrb[0].mxu0
  %v5739 = vadd.f32 %v5478, %v5738
  %v5740 = vpop.f32.mrb[0].mxu0
  %5741 = vmatprep.mubr.f32.mxu0 0.0
  %v5742 = vand.u32 %v4006, 4294901760
  %5743 = vmatmul.mubr.f32.gmra.mrb[0].mxu0 %v5742
  %v5744 = vpop.f32.mrb[0].mxu0
  %v5745 = vadd.f32 %v5484, %v5744
  %v5746 = vpop.f32.mrb[0].mxu0
  %5747 = vmatprep.mubr.f32.mxu0 0.0
  %v5748 = vand.u32 %v4009, 4294901760
  %5749 = vmatmul.mubr.f32.gmra.mrb[0].mxu0 %v5748
  %v5750 = vpop.f32.mrb[0].mxu0
  %v5751 = vadd.f32 %v5490, %v5750
  %v5752 = vpop.f32.mrb[0].mxu0
  %5753 = vmatprep.mubr.f32.mxu0 0.0
  %v5754 = vand.u32 %v4012, 4294901760
  %5755 = vmatmul.mubr.f32.gmra.mrb[0].mxu0 %v5754
  %v5756 = vpop.f32.mrb[0].mxu0
  %v5757 = vadd.f32 %v5496, %v5756
  %v5758 = vpop.f32.mrb[0].mxu0
  %5759 = vmatprep.mubr.f32.mxu0 0.0
  %v5760 = vand.u32 %v4015, 4294901760
  %5761 = vmatmul.mubr.f32.gmra.mrb[0].mxu0 %v5760
  %v5762 = vpop.f32.mrb[0].mxu0
  %v5763 = vadd.f32 %v5502, %v5762
  %v5764 = vpop.f32.mrb[0].mxu0
  %5765 = vmatprep.mubr.f32.mxu0 0.0
  %v5766 = vand.u32 %v4018, 4294901760
  %5767 = vmatmul.mubr.f32.gmra.mrb[0].mxu0 %v5766
  %v5768 = vpop.f32.mrb[0].mxu0
  %v5769 = vadd.f32 %v5508, %v5768
  %v5770 = vpop.f32.mrb[0].mxu0
  %5771 = vmatprep.mubr.f32.mxu0 0.0
  %v5772 = vand.u32 %v4021, 4294901760
  %5773 = vmatmul.mubr.f32.gmra.mrb[0].mxu0 %v5772
  %v5774 = vpop.f32.mrb[0].mxu0
  %v5775 = vadd.f32 %v5514, %v5774
  %v5776 = vpop.f32.mrb[0].mxu0
  %5777 = vmatprep.mubr.f32.mxu0 0.0
  %v5778 = vand.u32 %v4024, 4294901760
  %5779 = vmatmul.mubr.f32.gmra.mrb[0].mxu0 %v5778
  %v5780 = vpop.f32.mrb[0].mxu0
  %v5781 = vadd.f32 %v5520, %v5780
  %v5782 = vpop.f32.mrb[0].mxu0
  %5783 = vmatprep.mubr.f32.mxu0 0.0
  %v5784 = vand.u32 %v4027, 4294901760
  %5785 = vmatmul.mubr.f32.gmra.mrb[0].mxu0 %v5784
  %v5786 = vpop.f32.mrb[0].mxu0
  %v5787 = vadd.f32 %v5526, %v5786
  %v5788 = vpop.f32.mrb[0].mxu0
  %5789 = vmatprep.mubr.f32.mxu0 0.0
  %v5790 = vand.u32 %v4030, 4294901760
  %5791 = vmatmul.mubr.f32.gmra.mrb[0].mxu0 %v5790
  %v5792 = vpop.f32.mrb[0].mxu0
  %v5793 = vadd.f32 %v5532, %v5792
  %v5794 = vpop.f32.mrb[0].mxu0
  %5795 = vmatprep.mubr.f32.mxu0 0.0
  %v5796 = vand.u32 %v4033, 4294901760
  %5797 = vmatmul.mubr.f32.gmra.mrb[0].mxu0 %v5796
  %v5798 = vpop.f32.mrb[0].mxu0
  %v5799 = vadd.f32 %v5538, %v5798
  %v5800 = vpop.f32.mrb[0].mxu0
  %5801 = vmatprep.mubr.f32.mxu0 0.0
  %v5802 = vand.u32 %v4036, 4294901760
  %5803 = vmatmul.mubr.f32.gmra.mrb[0].mxu0 %v5802
  %v5804 = vpop.f32.mrb[0].mxu0
  %v5805 = vadd.f32 %v5544, %v5804
  %v5806 = vpop.f32.mrb[0].mxu0
  %5807 = vmatprep.mubr.f32.mxu0 0.0
  %v5808 = vand.u32 %v4039, 4294901760
  %5809 = vmatmul.mubr.f32.gmra.mrb[0].mxu0 %v5808
  %v5810 = vpop.f32.mrb[0].mxu0
  %v5811 = vadd.f32 %v5550, %v5810
  %v5812 = vpop.f32.mrb[0].mxu0
  %5813 = vmatprep.mubr.f32.mxu0 0.0
  %v5814 = vand.u32 %v4042, 4294901760
  %5815 = vmatmul.mubr.f32.gmra.mrb[0].mxu0 %v5814
  %v5816 = vpop.f32.mrb[0].mxu0
  %v5817 = vadd.f32 %v5556, %v5816
  %v5818 = vpop.f32.mrb[0].mxu0
  %5819 = vmatprep.mubr.f32.mxu0 0.0
  %v5820 = vand.u32 %v4045, 4294901760
  %5821 = vmatmul.mubr.f32.gmra.mrb[0].mxu0 %v5820
  %v5822 = vpop.f32.mrb[0].mxu0
  %v5823 = vadd.f32 %v5562, %v5822
  %v5824 = vpop.f32.mrb[0].mxu0
  %5825 = vmatprep.mubr.f32.mxu0 0.0
  %v5826 = vand.u32 %v4048, 4294901760
  %5827 = vmatmul.mubr.f32.gmra.mrb[0].mxu0 %v5826
  %v5828 = vpop.f32.mrb[0].mxu0
  %v5829 = vadd.f32 %v5568, %v5828
  %v5830 = vpop.f32.mrb[0].mxu0
  %5831 = vmatprep.mubr.f32.mxu0 0.0
  %v5832 = vand.u32 %v4051, 4294901760
  %5833 = vmatmul.mubr.f32.gmra.mrb[0].mxu0 %v5832
  %v5834 = vpop.f32.mrb[0].mxu0
  %v5835 = vadd.f32 %v5574, %v5834
  %v5836 = vpop.f32.mrb[0].mxu0
  %5837 = vmatprep.mubr.f32.mxu0 0.0
  %v5838 = vand.u32 %v4054, 4294901760
  %5839 = vmatmul.mubr.f32.gmra.mrb[0].mxu0 %v5838
  %v5840 = vpop.f32.mrb[0].mxu0
  %v5841 = vadd.f32 %v5580, %v5840
  %v5842 = vpop.f32.mrb[0].mxu0
  %5843 = vmatprep.mubr.f32.mxu0 0.0
  %v5844 = vand.u32 %v4057, 4294901760
  %5845 = vmatmul.mubr.f32.gmra.mrb[0].mxu0 %v5844
  %v5846 = vpop.f32.mrb[0].mxu0
  %v5847 = vadd.f32 %v5586, %v5846
  %v5848 = vpop.f32.mrb[0].mxu0
  %5849 = vmatprep.mubr.f32.mxu0 0.0
  %v5850 = vand.u32 %v4060, 4294901760
  %5851 = vmatmul.mubr.f32.gmra.mrb[0].mxu0 %v5850
  %v5852 = vpop.f32.mrb[0].mxu0
  %v5853 = vadd.f32 %v5592, %v5852
  %v5854 = vpop.f32.mrb[0].mxu0
  %5855 = vmatprep.mubr.f32.mxu0 0.0
  %v5856 = vand.u32 %v4063, 4294901760
  %5857 = vmatmul.mubr.f32.gmra.mrb[0].mxu0 %v5856
  %v5858 = vpop.f32.mrb[0].mxu0
  %v5859 = vadd.f32 %v5598, %v5858
  %v5860 = vpop.f32.mrb[0].mxu0
  %5861 = vmatprep.mubr.f32.mxu0 0.0
  %v5862 = vand.u32 %v4066, 4294901760
  %5863 = vmatmul.mubr.f32.gmra.mrb[0].mxu0 %v5862
  %v5864 = vpop.f32.mrb[0].mxu0
  %v5865 = vadd.f32 %v5604, %v5864
  %v5866 = vpop.f32.mrb[0].mxu0
  %5867 = vmatprep.mubr.f32.mxu0 0.0
  %v5868 = vand.u32 %v4069, 4294901760
  %5869 = vmatmul.mubr.f32.gmra.mrb[0].mxu0 %v5868
  %v5870 = vpop.f32.mrb[0].mxu0
  %v5871 = vadd.f32 %v5610, %v5870
  %v5872 = vpop.f32.mrb[0].mxu0
  %5873 = vmatprep.mubr.f32.mxu0 0.0
  %v5874 = vand.u32 %v4072, 4294901760
  %5875 = vmatmul.mubr.f32.gmra.mrb[0].mxu0 %v5874
  %v5876 = vpop.f32.mrb[0].mxu0
  %v5877 = vadd.f32 %v5616, %v5876
  %v5878 = vpop.f32.mrb[0].mxu0
  %5879 = vmatprep.mubr.f32.mxu0 0.0
  %v5880 = vand.u32 %v4075, 4294901760
  %5881 = vmatmul.mubr.f32.gmra.mrb[0].mxu0 %v5880
  %v5882 = vpop.f32.mrb[0].mxu0
  %v5883 = vadd.f32 %v5622, %v5882
  %v5884 = vpop.f32.mrb[0].mxu0
  %5885 = vmatprep.mubr.f32.mxu0 0.0
  %v5886 = vand.u32 %v4078, 4294901760
  %5887 = vmatmul.mubr.f32.gmra.mrb[0].mxu0 %v5886
  %v5888 = vpop.f32.mrb[0].mxu0
  %v5889 = vadd.f32 %v5628, %v5888
  %v5890 = vpop.f32.mrb[0].mxu0
  %5891 = vmatprep.mubr.f32.mxu0 0.0
  %v5892 = vand.u32 %v4081, 4294901760
  %5893 = vmatmul.mubr.f32.gmra.mrb[0].mxu0 %v5892
  %v5894 = vpop.f32.mrb[0].mxu0
  %v5895 = vadd.f32 %v5634, %v5894
  %v5896 = vpop.f32.mrb[0].mxu0
  %5897 = vmatprep.mubr.f32.mxu0 0.0
  %v5898 = vand.u32 %v4084, 4294901760
  %5899 = vmatmul.mubr.f32.gmra.mrb[0].mxu0 %v5898
  %v5900 = vpop.f32.mrb[0].mxu0
  %v5901 = vadd.f32 %v5640, %v5900
  %v5902 = vpop.f32.mrb[0].mxu0
  %5903 = vdwg.mxu0
  %v5904 = vmax.f32 %v1801, -1.0
  %v5905 = vmax.f32 %v1807, -1.0
  %v5906 = vmax.f32 %v1813, -1.0
  %v5907 = vmax.f32 %v1819, -1.0
  %v5908 = vmax.f32 %v1825, -1.0
  %v5909 = vmax.f32 %v1831, -1.0
  %v5910 = vmax.f32 %v1837, -1.0
  %v5911 = vmax.f32 %v1843, -1.0
  %v5912 = vmax.f32 %v1849, -1.0
  %v5913 = vmax.f32 %v1855, -1.0
  %v5914 = vmax.f32 %v1861, -1.0
  %v5915 = vmax.f32 %v1867, -1.0
  %v5916 = vmax.f32 %v1873, -1.0
  %v5917 = vmax.f32 %v1879, -1.0
  %v5918 = vmax.f32 %v1885, -1.0
  %v5919 = vmax.f32 %v1891, -1.0
  %v5920 = vmax.f32 %v1897, -1.0
  %v5921 = vmax.f32 %v1903, -1.0
  %v5922 = vmax.f32 %v1909, -1.0
  %v5923 = vmax.f32 %v1915, -1.0
  %v5924 = vmax.f32 %v1921, -1.0
  %v5925 = vmax.f32 %v1927, -1.0
  %v5926 = vmax.f32 %v1933, -1.0
  %v5927 = vmax.f32 %v1939, -1.0
  %v5928 = vmax.f32 %v1945, -1.0
  %v5929 = vmax.f32 %v1951, -1.0
  %v5930 = vmax.f32 %v1957, -1.0
  %v5931 = vmax.f32 %v1963, -1.0
  %v5932 = vmax.f32 %v1969, -1.0
  %v5933 = vmax.f32 %v1975, -1.0
  %v5934 = vmax.f32 %v1981, -1.0
  %v5935 = vmax.f32 %v1987, -1.0
  %v5936 = vmin.f32 %v5904, 1.0
  %v5937 = vmin.f32 %v5905, 1.0
  %v5938 = vmin.f32 %v5906, 1.0
  %v5939 = vmin.f32 %v5907, 1.0
  %v5940 = vmin.f32 %v5908, 1.0
  %v5941 = vmin.f32 %v5909, 1.0
  %v5942 = vmin.f32 %v5910, 1.0
  %v5943 = vmin.f32 %v5911, 1.0
  %v5944 = vmin.f32 %v5912, 1.0
  %v5945 = vmin.f32 %v5913, 1.0
  %v5946 = vmin.f32 %v5914, 1.0
  %v5947 = vmin.f32 %v5915, 1.0
  %v5948 = vmin.f32 %v5916, 1.0
  %v5949 = vmin.f32 %v5917, 1.0
  %v5950 = vmin.f32 %v5918, 1.0
  %v5951 = vmin.f32 %v5919, 1.0
  %v5952 = vmin.f32 %v5920, 1.0
  %v5953 = vmin.f32 %v5921, 1.0
  %v5954 = vmin.f32 %v5922, 1.0
  %v5955 = vmin.f32 %v5923, 1.0
  %v5956 = vmin.f32 %v5924, 1.0
  %v5957 = vmin.f32 %v5925, 1.0
  %v5958 = vmin.f32 %v5926, 1.0
  %v5959 = vmin.f32 %v5927, 1.0
  %v5960 = vmin.f32 %v5928, 1.0
  %v5961 = vmin.f32 %v5929, 1.0
  %v5962 = vmin.f32 %v5930, 1.0
  %v5963 = vmin.f32 %v5931, 1.0
  %v5964 = vmin.f32 %v5932, 1.0
  %v5965 = vmin.f32 %v5933, 1.0
  %v5966 = vmin.f32 %v5934, 1.0
  %v5967 = vmin.f32 %v5935, 1.0
  %v5968 = vmax.f32 %v3758, -1.0
  %v5969 = vmax.f32 %v3764, -1.0
  %v5970 = vmax.f32 %v3770, -1.0
  %v5971 = vmax.f32 %v3776, -1.0
  %v5972 = vmax.f32 %v3782, -1.0
  %v5973 = vmax.f32 %v3788, -1.0
  %v5974 = vmax.f32 %v3794, -1.0
  %v5975 = vmax.f32 %v3800, -1.0
  %v5976 = vmax.f32 %v3806, -1.0
  %v5977 = vmax.f32 %v3812, -1.0
  %v5978 = vmax.f32 %v3818, -1.0
  %v5979 = vmax.f32 %v3824, -1.0
  %v5980 = vmax.f32 %v3830, -1.0
  %v5981 = vmax.f32 %v3836, -1.0
  %v5982 = vmax.f32 %v3842, -1.0
  %v5983 = vmax.f32 %v3848, -1.0
  %v5984 = vmax.f32 %v3854, -1.0
  %v5985 = vmax.f32 %v3860, -1.0
  %v5986 = vmax.f32 %v3866, -1.0
  %v5987 = vmax.f32 %v3872, -1.0
  %v5988 = vmax.f32 %v3878, -1.0
  %v5989 = vmax.f32 %v3884, -1.0
  %v5990 = vmax.f32 %v3890, -1.0
  %v5991 = vmax.f32 %v3896, -1.0
  %v5992 = vmax.f32 %v3902, -1.0
  %v5993 = vmax.f32 %v3908, -1.0
  %v5994 = vmax.f32 %v3914, -1.0
  %v5995 = vmax.f32 %v3920, -1.0
  %v5996 = vmax.f32 %v3926, -1.0
  %v5997 = vmax.f32 %v3932, -1.0
  %v5998 = vmax.f32 %v3938, -1.0
  %v5999 = vmax.f32 %v3944, -1.0
  %v6000 = vmin.f32 %v5968, 1.0
  %v6001 = vmin.f32 %v5969, 1.0
  %v6002 = vmin.f32 %v5970, 1.0
  %v6003 = vmin.f32 %v5971, 1.0
  %v6004 = vmin.f32 %v5972, 1.0
  %v6005 = vmin.f32 %v5973, 1.0
  %v6006 = vmin.f32 %v5974, 1.0
  %v6007 = vmin.f32 %v5975, 1.0
  %v6008 = vmin.f32 %v5976, 1.0
  %v6009 = vmin.f32 %v5977, 1.0
  %v6010 = vmin.f32 %v5978, 1.0
  %v6011 = vmin.f32 %v5979, 1.0
  %v6012 = vmin.f32 %v5980, 1.0
  %v6013 = vmin.f32 %v5981, 1.0
  %v6014 = vmin.f32 %v5982, 1.0
  %v6015 = vmin.f32 %v5983, 1.0
  %v6016 = vmin.f32 %v5984, 1.0
  %v6017 = vmin.f32 %v5985, 1.0
  %v6018 = vmin.f32 %v5986, 1.0
  %v6019 = vmin.f32 %v5987, 1.0
  %v6020 = vmin.f32 %v5988, 1.0
  %v6021 = vmin.f32 %v5989, 1.0
  %v6022 = vmin.f32 %v5990, 1.0
  %v6023 = vmin.f32 %v5991, 1.0
  %v6024 = vmin.f32 %v5992, 1.0
  %v6025 = vmin.f32 %v5993, 1.0
  %v6026 = vmin.f32 %v5994, 1.0
  %v6027 = vmin.f32 %v5995, 1.0
  %v6028 = vmin.f32 %v5996, 1.0
  %v6029 = vmin.f32 %v5997, 1.0
  %v6030 = vmin.f32 %v5998, 1.0
  %v6031 = vmin.f32 %v5999, 1.0
  %v6032 = vxor.u32 %v5715, 2147483648
  %v6033 = vxor.u32 %v5721, 2147483648
  %v6034 = vxor.u32 %v5727, 2147483648
  %v6035 = vxor.u32 %v5733, 2147483648
  %v6036 = vxor.u32 %v5739, 2147483648
  %v6037 = vxor.u32 %v5745, 2147483648
  %v6038 = vxor.u32 %v5751, 2147483648
  %v6039 = vxor.u32 %v5757, 2147483648
  %v6040 = vxor.u32 %v5763, 2147483648
  %v6041 = vxor.u32 %v5769, 2147483648
  %v6042 = vxor.u32 %v5775, 2147483648
  %v6043 = vxor.u32 %v5781, 2147483648
  %v6044 = vxor.u32 %v5787, 2147483648
  %v6045 = vxor.u32 %v5793, 2147483648
  %v6046 = vxor.u32 %v5799, 2147483648
  %v6047 = vxor.u32 %v5805, 2147483648
  %v6048 = vxor.u32 %v5811, 2147483648
  %v6049 = vxor.u32 %v5817, 2147483648
  %v6050 = vxor.u32 %v5823, 2147483648
  %v6051 = vxor.u32 %v5829, 2147483648
  %v6052 = vxor.u32 %v5835, 2147483648
  %v6053 = vxor.u32 %v5841, 2147483648
  %v6054 = vxor.u32 %v5847, 2147483648
  %v6055 = vxor.u32 %v5853, 2147483648
  %v6056 = vxor.u32 %v5859, 2147483648
  %v6057 = vxor.u32 %v5865, 2147483648
  %v6058 = vxor.u32 %v5871, 2147483648
  %v6059 = vxor.u32 %v5877, 2147483648
  %v6060 = vxor.u32 %v5883, 2147483648
  %v6061 = vxor.u32 %v5889, 2147483648
  %v6062 = vxor.u32 %v5895, 2147483648
  %v6063 = vxor.u32 %v5901, 2147483648
  %v6064 = vmul.f32 %v6032, 1.442695
  %v6065 = vpow.pop %v6064
  %v6066 = vmul.f32 %v6033, 1.442695
  %v6067 = vpow.pop %v6066
  %v6068 = vmul.f32 %v6034, 1.442695
  %v6069 = vpow.pop %v6068
  %v6070 = vmul.f32 %v6035, 1.442695
  %v6071 = vpow.pop %v6070
  %v6072 = vmul.f32 %v6036, 1.442695
  %v6073 = vpow.pop %v6072
  %v6074 = vmul.f32 %v6037, 1.442695
  %v6075 = vpow.pop %v6074
  %v6076 = vmul.f32 %v6038, 1.442695
  %v6077 = vpow.pop %v6076
  %v6078 = vmul.f32 %v6039, 1.442695
  %v6079 = vpow.pop %v6078
  %v6080 = vmul.f32 %v6040, 1.442695
  %v6081 = vpow.pop %v6080
  %v6082 = vmul.f32 %v6041, 1.442695
  %v6083 = vpow.pop %v6082
  %v6084 = vmul.f32 %v6042, 1.442695
  %v6085 = vpow.pop %v6084
  %v6086 = vmul.f32 %v6043, 1.442695
  %v6087 = vpow.pop %v6086
  %v6088 = vmul.f32 %v6044, 1.442695
  %v6089 = vpow.pop %v6088
  %v6090 = vmul.f32 %v6045, 1.442695
  %v6091 = vpow.pop %v6090
  %v6092 = vmul.f32 %v6046, 1.442695
  %v6093 = vpow.pop %v6092
  %v6094 = vmul.f32 %v6047, 1.442695
  %v6095 = vpow.pop %v6094
  %v6096 = vmul.f32 %v6048, 1.442695
  %v6097 = vpow.pop %v6096
  %v6098 = vmul.f32 %v6049, 1.442695
  %v6099 = vpow.pop %v6098
  %v6100 = vmul.f32 %v6050, 1.442695
  %v6101 = vpow.pop %v6100
  %v6102 = vmul.f32 %v6051, 1.442695
  %v6103 = vpow.pop %v6102
  %v6104 = vmul.f32 %v6052, 1.442695
  %v6105 = vpow.pop %v6104
  %v6106 = vmul.f32 %v6053, 1.442695
  %v6107 = vpow.pop %v6106
  %v6108 = vmul.f32 %v6054, 1.442695
  %v6109 = vpow.pop %v6108
  %v6110 = vmul.f32 %v6055, 1.442695
  %v6111 = vpow.pop %v6110
  %v6112 = vmul.f32 %v6056, 1.442695
  %v6113 = vpow.pop %v6112
  %v6114 = vmul.f32 %v6057, 1.442695
  %v6115 = vpow.pop %v6114
  %v6116 = vmul.f32 %v6058, 1.442695
  %v6117 = vpow.pop %v6116
  %v6118 = vmul.f32 %v6059, 1.442695
  %v6119 = vpow.pop %v6118
  %v6120 = vmul.f32 %v6060, 1.442695
  %v6121 = vpow.pop %v6120
  %v6122 = vmul.f32 %v6061, 1.442695
  %v6123 = vpow.pop %v6122
  %v6124 = vmul.f32 %v6062, 1.442695
  %v6125 = vpow.pop %v6124
  %v6126 = vmul.f32 %v6063, 1.442695
  %v6127 = vpow.pop %v6126
  %v6128 = vadd.f32 %v6065, 1.0
  %v6129 = vadd.f32 %v6067, 1.0
  %v6130 = vadd.f32 %v6069, 1.0
  %v6131 = vadd.f32 %v6071, 1.0
  %v6132 = vadd.f32 %v6073, 1.0
  %v6133 = vadd.f32 %v6075, 1.0
  %v6134 = vadd.f32 %v6077, 1.0
  %v6135 = vadd.f32 %v6079, 1.0
  %v6136 = vadd.f32 %v6081, 1.0
  %v6137 = vadd.f32 %v6083, 1.0
  %v6138 = vadd.f32 %v6085, 1.0
  %v6139 = vadd.f32 %v6087, 1.0
  %v6140 = vadd.f32 %v6089, 1.0
  %v6141 = vadd.f32 %v6091, 1.0
  %v6142 = vadd.f32 %v6093, 1.0
  %v6143 = vadd.f32 %v6095, 1.0
  %v6144 = vadd.f32 %v6097, 1.0
  %v6145 = vadd.f32 %v6099, 1.0
  %v6146 = vadd.f32 %v6101, 1.0
  %v6147 = vadd.f32 %v6103, 1.0
  %v6148 = vadd.f32 %v6105, 1.0
  %v6149 = vadd.f32 %v6107, 1.0
  %v6150 = vadd.f32 %v6109, 1.0
  %v6151 = vadd.f32 %v6111, 1.0
  %v6152 = vadd.f32 %v6113, 1.0
  %v6153 = vadd.f32 %v6115, 1.0
  %v6154 = vadd.f32 %v6117, 1.0
  %v6155 = vadd.f32 %v6119, 1.0
  %v6156 = vadd.f32 %v6121, 1.0
  %v6157 = vadd.f32 %v6123, 1.0
  %v6158 = vadd.f32 %v6125, 1.0
  %v6159 = vadd.f32 %v6127, 1.0
  %v6160 = vrcp.pop %v6128
  %v6161 = vmul.f32 1.0, %v6160
  %v6162 = vrcp.pop %v6129
  %v6163 = vmul.f32 1.0, %v6162
  %v6164 = vrcp.pop %v6130
  %v6165 = vmul.f32 1.0, %v6164
  %v6166 = vrcp.pop %v6131
  %v6167 = vmul.f32 1.0, %v6166
  %v6168 = vrcp.pop %v6132
  %v6169 = vmul.f32 1.0, %v6168
  %v6170 = vrcp.pop %v6133
  %v6171 = vmul.f32 1.0, %v6170
  %v6172 = vrcp.pop %v6134
  %v6173 = vmul.f32 1.0, %v6172
  %v6174 = vrcp.pop %v6135
  %v6175 = vmul.f32 1.0, %v6174
  %v6176 = vrcp.pop %v6136
  %v6177 = vmul.f32 1.0, %v6176
  %v6178 = vrcp.pop %v6137
  %v6179 = vmul.f32 1.0, %v6178
  %v6180 = vrcp.pop %v6138
  %v6181 = vmul.f32 1.0, %v6180
  %v6182 = vrcp.pop %v6139
  %v6183 = vmul.f32 1.0, %v6182
  %v6184 = vrcp.pop %v6140
  %v6185 = vmul.f32 1.0, %v6184
  %v6186 = vrcp.pop %v6141
  %v6187 = vmul.f32 1.0, %v6186
  %v6188 = vrcp.pop %v6142
  %v6189 = vmul.f32 1.0, %v6188
  %v6190 = vrcp.pop %v6143
  %v6191 = vmul.f32 1.0, %v6190
  %v6192 = vrcp.pop %v6144
  %v6193 = vmul.f32 1.0, %v6192
  %v6194 = vrcp.pop %v6145
  %v6195 = vmul.f32 1.0, %v6194
  %v6196 = vrcp.pop %v6146
  %v6197 = vmul.f32 1.0, %v6196
  %v6198 = vrcp.pop %v6147
  %v6199 = vmul.f32 1.0, %v6198
  %v6200 = vrcp.pop %v6148
  %v6201 = vmul.f32 1.0, %v6200
  %v6202 = vrcp.pop %v6149
  %v6203 = vmul.f32 1.0, %v6202
  %v6204 = vrcp.pop %v6150
  %v6205 = vmul.f32 1.0, %v6204
  %v6206 = vrcp.pop %v6151
  %v6207 = vmul.f32 1.0, %v6206
  %v6208 = vrcp.pop %v6152
  %v6209 = vmul.f32 1.0, %v6208
  %v6210 = vrcp.pop %v6153
  %v6211 = vmul.f32 1.0, %v6210
  %v6212 = vrcp.pop %v6154
  %v6213 = vmul.f32 1.0, %v6212
  %v6214 = vrcp.pop %v6155
  %v6215 = vmul.f32 1.0, %v6214
  %v6216 = vrcp.pop %v6156
  %v6217 = vmul.f32 1.0, %v6216
  %v6218 = vrcp.pop %v6157
  %v6219 = vmul.f32 1.0, %v6218
  %v6220 = vrcp.pop %v6158
  %v6221 = vmul.f32 1.0, %v6220
  %v6222 = vrcp.pop %v6159
  %v6223 = vmul.f32 1.0, %v6222
  %v6224 = vmul.f32 %v5936, %v6000
  %v6225 = vmul.f32 %v5937, %v6001
  %v6226 = vmul.f32 %v5938, %v6002
  %v6227 = vmul.f32 %v5939, %v6003
  %v6228 = vmul.f32 %v5940, %v6004
  %v6229 = vmul.f32 %v5941, %v6005
  %v6230 = vmul.f32 %v5942, %v6006
  %v6231 = vmul.f32 %v5943, %v6007
  %v6232 = vmul.f32 %v5944, %v6008
  %v6233 = vmul.f32 %v5945, %v6009
  %v6234 = vmul.f32 %v5946, %v6010
  %v6235 = vmul.f32 %v5947, %v6011
  %v6236 = vmul.f32 %v5948, %v6012
  %v6237 = vmul.f32 %v5949, %v6013
  %v6238 = vmul.f32 %v5950, %v6014
  %v6239 = vmul.f32 %v5951, %v6015
  %v6240 = vmul.f32 %v5952, %v6016
  %v6241 = vmul.f32 %v5953, %v6017
  %v6242 = vmul.f32 %v5954, %v6018
  %v6243 = vmul.f32 %v5955, %v6019
  %v6244 = vmul.f32 %v5956, %v6020
  %v6245 = vmul.f32 %v5957, %v6021
  %v6246 = vmul.f32 %v5958, %v6022
  %v6247 = vmul.f32 %v5959, %v6023
  %v6248 = vmul.f32 %v5960, %v6024
  %v6249 = vmul.f32 %v5961, %v6025
  %v6250 = vmul.f32 %v5962, %v6026
  %v6251 = vmul.f32 %v5963, %v6027
  %v6252 = vmul.f32 %v5964, %v6028
  %v6253 = vmul.f32 %v5965, %v6029
  %v6254 = vmul.f32 %v5966, %v6030
  %v6255 = vmul.f32 %v5967, %v6031
  %v6256 = vmul.f32 %v6224, %v6161
  %v6257 = vmul.f32 %v6225, %v6163
  %v6258 = vmul.f32 %v6226, %v6165
  %v6259 = vmul.f32 %v6227, %v6167
  %v6260 = vmul.f32 %v6228, %v6169
  %v6261 = vmul.f32 %v6229, %v6171
  %v6262 = vmul.f32 %v6230, %v6173
  %v6263 = vmul.f32 %v6231, %v6175
  %v6264 = vmul.f32 %v6232, %v6177
  %v6265 = vmul.f32 %v6233, %v6179
  %v6266 = vmul.f32 %v6234, %v6181
  %v6267 = vmul.f32 %v6235, %v6183
  %v6268 = vmul.f32 %v6236, %v6185
  %v6269 = vmul.f32 %v6237, %v6187
  %v6270 = vmul.f32 %v6238, %v6189
  %v6271 = vmul.f32 %v6239, %v6191
  %v6272 = vmul.f32 %v6240, %v6193
  %v6273 = vmul.f32 %v6241, %v6195
  %v6274 = vmul.f32 %v6242, %v6197
  %v6275 = vmul.f32 %v6243, %v6199
  %v6276 = vmul.f32 %v6244, %v6201
  %v6277 = vmul.f32 %v6245, %v6203
  %v6278 = vmul.f32 %v6246, %v6205
  %v6279 = vmul.f32 %v6247, %v6207
  %v6280 = vmul.f32 %v6248, %v6209
  %v6281 = vmul.f32 %v6249, %v6211
  %v6282 = vmul.f32 %v6250, %v6213
  %v6283 = vmul.f32 %v6251, %v6215
  %v6284 = vmul.f32 %v6252, %v6217
  %v6285 = vmul.f32 %v6253, %v6219
  %v6286 = vmul.f32 %v6254, %v6221
  %v6287 = vmul.f32 %v6255, %v6223
  %v6288 = vsel %vm75, %v6256, 0.0
  %6289 = vadd.xlane.f32.xlu0 %v6288
  %v6290 = vpop.xlane.xlu0 %6289
  %v6291 = vsel %vm75, %v6257, 0.0
  %6292 = vadd.xlane.f32.xlu0 %v6291
  %v6293 = vpop.xlane.xlu0 %6292
  %v6294 = vsel %vm75, %v6258, 0.0
  %6295 = vadd.xlane.f32.xlu0 %v6294
  %v6296 = vpop.xlane.xlu0 %6295
  %v6297 = vsel %vm75, %v6259, 0.0
  %6298 = vadd.xlane.f32.xlu0 %v6297
  %v6299 = vpop.xlane.xlu0 %6298
  %v6300 = vsel %vm75, %v6260, 0.0
  %6301 = vadd.xlane.f32.xlu0 %v6300
  %v6302 = vpop.xlane.xlu0 %6301
  %v6303 = vsel %vm75, %v6261, 0.0
  %6304 = vadd.xlane.f32.xlu0 %v6303
  %v6305 = vpop.xlane.xlu0 %6304
  %v6306 = vsel %vm75, %v6262, 0.0
  %6307 = vadd.xlane.f32.xlu0 %v6306
  %v6308 = vpop.xlane.xlu0 %6307
  %v6309 = vsel %vm75, %v6263, 0.0
  %6310 = vadd.xlane.f32.xlu0 %v6309
  %v6311 = vpop.xlane.xlu0 %6310
  %v6312 = vsel %vm75, %v6264, 0.0
  %6313 = vadd.xlane.f32.xlu0 %v6312
  %v6314 = vpop.xlane.xlu0 %6313
  %v6315 = vsel %vm75, %v6265, 0.0
  %6316 = vadd.xlane.f32.xlu0 %v6315
  %v6317 = vpop.xlane.xlu0 %6316
  %v6318 = vsel %vm75, %v6266, 0.0
  %6319 = vadd.xlane.f32.xlu0 %v6318
  %v6320 = vpop.xlane.xlu0 %6319
  %v6321 = vsel %vm75, %v6267, 0.0
  %6322 = vadd.xlane.f32.xlu0 %v6321
  %v6323 = vpop.xlane.xlu0 %6322
  %v6324 = vsel %vm75, %v6268, 0.0
  %6325 = vadd.xlane.f32.xlu0 %v6324
  %v6326 = vpop.xlane.xlu0 %6325
  %v6327 = vsel %vm75, %v6269, 0.0
  %6328 = vadd.xlane.f32.xlu0 %v6327
  %v6329 = vpop.xlane.xlu0 %6328
  %v6330 = vsel %vm75, %v6270, 0.0
  %6331 = vadd.xlane.f32.xlu0 %v6330
  %v6332 = vpop.xlane.xlu0 %6331
  %v6333 = vsel %vm75, %v6271, 0.0
  %6334 = vadd.xlane.f32.xlu0 %v6333
  %v6335 = vpop.xlane.xlu0 %6334
  %v6336 = vsel %vm75, %v6272, 0.0
  %6337 = vadd.xlane.f32.xlu0 %v6336
  %v6338 = vpop.xlane.xlu0 %6337
  %v6339 = vsel %vm75, %v6273, 0.0
  %6340 = vadd.xlane.f32.xlu0 %v6339
  %v6341 = vpop.xlane.xlu0 %6340
  %v6342 = vsel %vm75, %v6274, 0.0
  %6343 = vadd.xlane.f32.xlu0 %v6342
  %v6344 = vpop.xlane.xlu0 %6343
  %v6345 = vsel %vm75, %v6275, 0.0
  %6346 = vadd.xlane.f32.xlu0 %v6345
  %v6347 = vpop.xlane.xlu0 %6346
  %v6348 = vsel %vm75, %v6276, 0.0
  %6349 = vadd.xlane.f32.xlu0 %v6348
  %v6350 = vpop.xlane.xlu0 %6349
  %v6351 = vsel %vm75, %v6277, 0.0
  %6352 = vadd.xlane.f32.xlu0 %v6351
  %v6353 = vpop.xlane.xlu0 %6352
  %v6354 = vsel %vm75, %v6278, 0.0
  %6355 = vadd.xlane.f32.xlu0 %v6354
  %v6356 = vpop.xlane.xlu0 %6355
  %v6357 = vsel %vm75, %v6279, 0.0
  %6358 = vadd.xlane.f32.xlu0 %v6357
  %v6359 = vpop.xlane.xlu0 %6358
  %v6360 = vsel %vm75, %v6280, 0.0
  %6361 = vadd.xlane.f32.xlu0 %v6360
  %v6362 = vpop.xlane.xlu0 %6361
  %v6363 = vsel %vm75, %v6281, 0.0
  %6364 = vadd.xlane.f32.xlu0 %v6363
  %v6365 = vpop.xlane.xlu0 %6364
  %v6366 = vsel %vm75, %v6282, 0.0
  %6367 = vadd.xlane.f32.xlu0 %v6366
  %v6368 = vpop.xlane.xlu0 %6367
  %v6369 = vsel %vm75, %v6283, 0.0
  %6370 = vadd.xlane.f32.xlu0 %v6369
  %v6371 = vpop.xlane.xlu0 %6370
  %v6372 = vsel %vm75, %v6284, 0.0
  %6373 = vadd.xlane.f32.xlu0 %v6372
  %v6374 = vpop.xlane.xlu0 %6373
  %v6375 = vsel %vm75, %v6285, 0.0
  %6376 = vadd.xlane.f32.xlu0 %v6375
  %v6377 = vpop.xlane.xlu0 %6376
  %v6378 = vsel %vm75, %v6286, 0.0
  %6379 = vadd.xlane.f32.xlu0 %v6378
  %v6380 = vpop.xlane.xlu0 %6379
  %v6381 = vsel %vm75, %v6287, 0.0
  %6382 = vadd.xlane.f32.xlu0 %v6381
  %v6383 = vpop.xlane.xlu0 %6382
  %v6384 = vxor.u32 %v6290, 2147483648
  %v6385 = vxor.u32 %v6293, 2147483648
  %v6386 = vxor.u32 %v6296, 2147483648
  %v6387 = vxor.u32 %v6299, 2147483648
  %v6388 = vxor.u32 %v6302, 2147483648
  %v6389 = vxor.u32 %v6305, 2147483648
  %v6390 = vxor.u32 %v6308, 2147483648
  %v6391 = vxor.u32 %v6311, 2147483648
  %v6392 = vxor.u32 %v6314, 2147483648
  %v6393 = vxor.u32 %v6317, 2147483648
  %v6394 = vxor.u32 %v6320, 2147483648
  %v6395 = vxor.u32 %v6323, 2147483648
  %v6396 = vxor.u32 %v6326, 2147483648
  %v6397 = vxor.u32 %v6329, 2147483648
  %v6398 = vxor.u32 %v6332, 2147483648
  %v6399 = vxor.u32 %v6335, 2147483648
  %v6400 = vxor.u32 %v6338, 2147483648
  %v6401 = vxor.u32 %v6341, 2147483648
  %v6402 = vxor.u32 %v6344, 2147483648
  %v6403 = vxor.u32 %v6347, 2147483648
  %v6404 = vxor.u32 %v6350, 2147483648
  %v6405 = vxor.u32 %v6353, 2147483648
  %v6406 = vxor.u32 %v6356, 2147483648
  %v6407 = vxor.u32 %v6359, 2147483648
  %v6408 = vxor.u32 %v6362, 2147483648
  %v6409 = vxor.u32 %v6365, 2147483648
  %v6410 = vxor.u32 %v6368, 2147483648
  %v6411 = vxor.u32 %v6371, 2147483648
  %v6412 = vxor.u32 %v6374, 2147483648
  %v6413 = vxor.u32 %v6377, 2147483648
  %v6414 = vxor.u32 %v6380, 2147483648
  %v6415 = vxor.u32 %v6383, 2147483648
  %v6416 = vmul.f32 %v6384, 1.442695
  %v6417 = vpow.pop %v6416
  %v6418 = vmul.f32 %v6385, 1.442695
  %v6419 = vpow.pop %v6418
  %v6420 = vmul.f32 %v6386, 1.442695
  %v6421 = vpow.pop %v6420
  %v6422 = vmul.f32 %v6387, 1.442695
  %v6423 = vpow.pop %v6422
  %v6424 = vmul.f32 %v6388, 1.442695
  %v6425 = vpow.pop %v6424
  %v6426 = vmul.f32 %v6389, 1.442695
  %v6427 = vpow.pop %v6426
  %v6428 = vmul.f32 %v6390, 1.442695
  %v6429 = vpow.pop %v6428
  %v6430 = vmul.f32 %v6391, 1.442695
  %v6431 = vpow.pop %v6430
  %v6432 = vmul.f32 %v6392, 1.442695
  %v6433 = vpow.pop %v6432
  %v6434 = vmul.f32 %v6393, 1.442695
  %v6435 = vpow.pop %v6434
  %v6436 = vmul.f32 %v6394, 1.442695
  %v6437 = vpow.pop %v6436
  %v6438 = vmul.f32 %v6395, 1.442695
  %v6439 = vpow.pop %v6438
  %v6440 = vmul.f32 %v6396, 1.442695
  %v6441 = vpow.pop %v6440
  %v6442 = vmul.f32 %v6397, 1.442695
  %v6443 = vpow.pop %v6442
  %v6444 = vmul.f32 %v6398, 1.442695
  %v6445 = vpow.pop %v6444
  %v6446 = vmul.f32 %v6399, 1.442695
  %v6447 = vpow.pop %v6446
  %v6448 = vmul.f32 %v6400, 1.442695
  %v6449 = vpow.pop %v6448
  %v6450 = vmul.f32 %v6401, 1.442695
  %v6451 = vpow.pop %v6450
  %v6452 = vmul.f32 %v6402, 1.442695
  %v6453 = vpow.pop %v6452
  %v6454 = vmul.f32 %v6403, 1.442695
  %v6455 = vpow.pop %v6454
  %v6456 = vmul.f32 %v6404, 1.442695
  %v6457 = vpow.pop %v6456
  %v6458 = vmul.f32 %v6405, 1.442695
  %v6459 = vpow.pop %v6458
  %v6460 = vmul.f32 %v6406, 1.442695
  %v6461 = vpow.pop %v6460
  %v6462 = vmul.f32 %v6407, 1.442695
  %v6463 = vpow.pop %v6462
  %v6464 = vmul.f32 %v6408, 1.442695
  %v6465 = vpow.pop %v6464
  %v6466 = vmul.f32 %v6409, 1.442695
  %v6467 = vpow.pop %v6466
  %v6468 = vmul.f32 %v6410, 1.442695
  %v6469 = vpow.pop %v6468
  %v6470 = vmul.f32 %v6411, 1.442695
  %v6471 = vpow.pop %v6470
  %v6472 = vmul.f32 %v6412, 1.442695
  %v6473 = vpow.pop %v6472
  %v6474 = vmul.f32 %v6413, 1.442695
  %v6475 = vpow.pop %v6474
  %v6476 = vmul.f32 %v6414, 1.442695
  %v6477 = vpow.pop %v6476
  %v6478 = vmul.f32 %v6415, 1.442695
  %v6479 = vpow.pop %v6478
  %v6480 = vadd.f32 %v6417, 1.0
  %v6481 = vadd.f32 %v6419, 1.0
  %v6482 = vadd.f32 %v6421, 1.0
  %v6483 = vadd.f32 %v6423, 1.0
  %v6484 = vadd.f32 %v6425, 1.0
  %v6485 = vadd.f32 %v6427, 1.0
  %v6486 = vadd.f32 %v6429, 1.0
  %v6487 = vadd.f32 %v6431, 1.0
  %v6488 = vadd.f32 %v6433, 1.0
  %v6489 = vadd.f32 %v6435, 1.0
  %v6490 = vadd.f32 %v6437, 1.0
  %v6491 = vadd.f32 %v6439, 1.0
  %v6492 = vadd.f32 %v6441, 1.0
  %v6493 = vadd.f32 %v6443, 1.0
  %v6494 = vadd.f32 %v6445, 1.0
  %v6495 = vadd.f32 %v6447, 1.0
  %v6496 = vadd.f32 %v6449, 1.0
  %v6497 = vadd.f32 %v6451, 1.0
  %v6498 = vadd.f32 %v6453, 1.0
  %v6499 = vadd.f32 %v6455, 1.0
  %v6500 = vadd.f32 %v6457, 1.0
  %v6501 = vadd.f32 %v6459, 1.0
  %v6502 = vadd.f32 %v6461, 1.0
  %v6503 = vadd.f32 %v6463, 1.0
  %v6504 = vadd.f32 %v6465, 1.0
  %v6505 = vadd.f32 %v6467, 1.0
  %v6506 = vadd.f32 %v6469, 1.0
  %v6507 = vadd.f32 %v6471, 1.0
  %v6508 = vadd.f32 %v6473, 1.0
  %v6509 = vadd.f32 %v6475, 1.0
  %v6510 = vadd.f32 %v6477, 1.0
  %v6511 = vadd.f32 %v6479, 1.0
  %v6512 = vrcp.pop %v6480
  %v6513 = vmul.f32 1.0, %v6512
  %v6514 = vrcp.pop %v6481
  %v6515 = vmul.f32 1.0, %v6514
  %v6516 = vrcp.pop %v6482
  %v6517 = vmul.f32 1.0, %v6516
  %v6518 = vrcp.pop %v6483
  %v6519 = vmul.f32 1.0, %v6518
  %v6520 = vrcp.pop %v6484
  %v6521 = vmul.f32 1.0, %v6520
  %v6522 = vrcp.pop %v6485
  %v6523 = vmul.f32 1.0, %v6522
  %v6524 = vrcp.pop %v6486
  %v6525 = vmul.f32 1.0, %v6524
  %v6526 = vrcp.pop %v6487
  %v6527 = vmul.f32 1.0, %v6526
  %v6528 = vrcp.pop %v6488
  %v6529 = vmul.f32 1.0, %v6528
  %v6530 = vrcp.pop %v6489
  %v6531 = vmul.f32 1.0, %v6530
  %v6532 = vrcp.pop %v6490
  %v6533 = vmul.f32 1.0, %v6532
  %v6534 = vrcp.pop %v6491
  %v6535 = vmul.f32 1.0, %v6534
  %v6536 = vrcp.pop %v6492
  %v6537 = vmul.f32 1.0, %v6536
  %v6538 = vrcp.pop %v6493
  %v6539 = vmul.f32 1.0, %v6538
  %v6540 = vrcp.pop %v6494
  %v6541 = vmul.f32 1.0, %v6540
  %v6542 = vrcp.pop %v6495
  %v6543 = vmul.f32 1.0, %v6542
  %v6544 = vrcp.pop %v6496
  %v6545 = vmul.f32 1.0, %v6544
  %v6546 = vrcp.pop %v6497
  %v6547 = vmul.f32 1.0, %v6546
  %v6548 = vrcp.pop %v6498
  %v6549 = vmul.f32 1.0, %v6548
  %v6550 = vrcp.pop %v6499
  %v6551 = vmul.f32 1.0, %v6550
  %v6552 = vrcp.pop %v6500
  %v6553 = vmul.f32 1.0, %v6552
  %v6554 = vrcp.pop %v6501
  %v6555 = vmul.f32 1.0, %v6554
  %v6556 = vrcp.pop %v6502
  %v6557 = vmul.f32 1.0, %v6556
  %v6558 = vrcp.pop %v6503
  %v6559 = vmul.f32 1.0, %v6558
  %v6560 = vrcp.pop %v6504
  %v6561 = vmul.f32 1.0, %v6560
  %v6562 = vrcp.pop %v6505
  %v6563 = vmul.f32 1.0, %v6562
  %v6564 = vrcp.pop %v6506
  %v6565 = vmul.f32 1.0, %v6564
  %v6566 = vrcp.pop %v6507
  %v6567 = vmul.f32 1.0, %v6566
  %v6568 = vrcp.pop %v6508
  %v6569 = vmul.f32 1.0, %v6568
  %v6570 = vrcp.pop %v6509
  %v6571 = vmul.f32 1.0, %v6570
  %v6572 = vrcp.pop %v6510
  %v6573 = vmul.f32 1.0, %v6572
  %v6574 = vrcp.pop %v6511
  %v6575 = vmul.f32 1.0, %v6574
  %vm6576 = vcmask 7168
  %6577 = vst.msk [vmem:[%s9] sm:$0xff] %vm6576, %v6513
  %6578 = vst.msk [vmem:[%s9 + $0x8] sm:$0xff] %vm6576, %v6515
  %6579 = vst.msk [vmem:[%s9 + $0x10] sm:$0xff] %vm6576, %v6517
  %6580 = vst.msk [vmem:[%s9 + $0x18] sm:$0xff] %vm6576, %v6519
  %6581 = vst.msk [vmem:[%s9 + $0x20] sm:$0xff] %vm6576, %v6521
  %6582 = vst.msk [vmem:[%s9 + $0x28] sm:$0xff] %vm6576, %v6523
  %6583 = vst.msk [vmem:[%s9 + $0x30] sm:$0xff] %vm6576, %v6525
  %6584 = vst.msk [vmem:[%s9 + $0x38] sm:$0xff] %vm6576, %v6527
  %6585 = vst.msk [vmem:[%s9 + $0x40] sm:$0xff] %vm6576, %v6529
  %6586 = vst.msk [vmem:[%s9 + $0x48] sm:$0xff] %vm6576, %v6531
  %6587 = vst.msk [vmem:[%s9 + $0x50] sm:$0xff] %vm6576, %v6533
  %6588 = vst.msk [vmem:[%s9 + $0x58] sm:$0xff] %vm6576, %v6535
  %6589 = vst.msk [vmem:[%s9 + $0x60] sm:$0xff] %vm6576, %v6537
  %6590 = vst.msk [vmem:[%s9 + $0x68] sm:$0xff] %vm6576, %v6539
  %6591 = vst.msk [vmem:[%s9 + $0x70] sm:$0xff] %vm6576, %v6541
  %6592 = vst.msk [vmem:[%s9 + $0x78] sm:$0xff] %vm6576, %v6543
  %6593 = vst.msk [vmem:[%s9 + $0x80] sm:$0xff] %vm6576, %v6545
  %6594 = vst.msk [vmem:[%s9 + $0x88] sm:$0xff] %vm6576, %v6547
  %6595 = vst.msk [vmem:[%s9 + $0x90] sm:$0xff] %vm6576, %v6549
  %6596 = vst.msk [vmem:[%s9 + $0x98] sm:$0xff] %vm6576, %v6551
  %6597 = vst.msk [vmem:[%s9 + $0xa0] sm:$0xff] %vm6576, %v6553
  %6598 = vst.msk [vmem:[%s9 + $0xa8] sm:$0xff] %vm6576, %v6555
  %6599 = vst.msk [vmem:[%s9 + $0xb0] sm:$0xff] %vm6576, %v6557
  %6600 = vst.msk [vmem:[%s9 + $0xb8] sm:$0xff] %vm6576, %v6559
  %6601 = vst.msk [vmem:[%s9 + $0xc0] sm:$0xff] %vm6576, %v6561
  %6602 = vst.msk [vmem:[%s9 + $0xc8] sm:$0xff] %vm6576, %v6563
  %6603 = vst.msk [vmem:[%s9 + $0xd0] sm:$0xff] %vm6576, %v6565
  %6604 = vst.msk [vmem:[%s9 + $0xd8] sm:$0xff] %vm6576, %v6567
  %6605 = vst.msk [vmem:[%s9 + $0xe0] sm:$0xff] %vm6576, %v6569
  %6606 = vst.msk [vmem:[%s9 + $0xe8] sm:$0xff] %vm6576, %v6571
  %6607 = vst.msk [vmem:[%s9 + $0xf0] sm:$0xff] %vm6576, %v6573
  %6608 = vst.msk [vmem:[%s9 + $0xf8] sm:$0xff] %vm6576, %v6575
  // Predicated region
  $region38: #{tpu_custom_call.1} parent=0 // pred_check
    _
  $region39: #{tpu_custom_call.1} parent=0 // pred_check_branch
    %6610 = sbr.rel (0) target = $region41
  $region40: #{tpu_custom_call.1} parent=0 // pred_region
    _
  $region41: #{tpu_custom_call.1} parent=0 // pred_fallthru
    _
  // Predicated region
  $region42: #{tpu_custom_call.1} parent=0 // pred_check
    _
  $region43: #{tpu_custom_call.1} parent=0 // pred_check_branch
    %6612 = sbr.rel (0) target = $region45
  $region44: #{tpu_custom_call.1} parent=0 // pred_region
    _
  $region45: #{tpu_custom_call.1} parent=0 // pred_fallthru
    _

</llo_original>
